<compile_context>
chip_gen: v7x
topology: tpu7x:2x2x1
jax: 0.10.0
libtpu: 0.0.40
codegen_flags: <defaults>
</compile_context>

<pallas_src>
import functools

import numpy as np
import jax
import jax.numpy as jnp
from jax.experimental import pallas as pl
from jax.experimental.pallas import tpu as pltpu

BN_EPS = 1e-5


def _round_up(x, m):
    return ((x + m - 1) // m) * m


# ---------------------------------------------------------------------------
# Pallas kernels
# ---------------------------------------------------------------------------
def _conv_stats_kernel(x_ref, w_ref, mask_ref, z_ref, stats_ref, *, wp, r_out):
    """3x3 conv as 9 shifted matmuls over flattened padded rows + masked BN stats.

    x_ref:    (r_in, c_in)   one image, spatially padded, rows flattened as i*wp + j
    w_ref:    (9, c_in, c_out) per-tap weights (tap = kh*3 + kw)
    mask_ref: (r_out, 1)      1.0 on valid output rows, 0.0 on wrap-around/skip rows
    z_ref:    (r_out, c_out)  raw conv output (pre-BN)
    stats_ref:(2, c_out)      resident per-shard accumulator: row0 = sum, row1 = sumsq
    """
    step = pl.program_id(1)

    @pl.when(step == 0)
    def _init():
        stats_ref[...] = jnp.zeros_like(stats_ref)

    cout = w_ref.shape[2]
    acc = jnp.zeros((r_out, cout), jnp.float32)
    for kh in range(3):
        for kw in range(3):
            off = kh * wp + kw
            acc += jnp.dot(x_ref[off:off + r_out, :], w_ref[kh * 3 + kw],
                           preferred_element_type=jnp.float32)
    z_ref[...] = acc.astype(z_ref.dtype)

    zm = acc * mask_ref[...]
    # Single full-block accumulator update (sum / sum-of-squares).
    stats_ref[...] += jnp.concatenate(
        [jnp.sum(zm, axis=0, keepdims=True),
         jnp.sum(zm * zm, axis=0, keepdims=True)], axis=0)


def _bn_relu_conv_stats_kernel(zin_ref, scale_ref, shift_ref, mask_ref, w_ref,
                               z_ref, stats_ref, ypad_ref, *,
                               wp, r_out, lead, sps, n_real):
    """Fused: BN1-apply + ReLU (from z1) -> zero-padded VMEM image -> 3x3 conv2
    (9 shifted matmuls) + masked BN2 stats.  y1 never leaves VMEM."""
    shard = pl.program_id(0)
    step = pl.program_id(1)

    @pl.when(step == 0)
    def _init():
        stats_ref[...] = jnp.zeros_like(stats_ref)

    # BN1 (folded scale/shift) + ReLU; mask zeroes wrap-around rows so they land
    # exactly on conv2's spatial-padding positions in the scratch image.
    ypad_ref[...] = jnp.zeros_like(ypad_ref)
    y = jnp.maximum(zin_ref[...].astype(jnp.float32) * scale_ref[...]
                    + shift_ref[...], 0.0)
    y = y * mask_ref[...]
    base = lead + wp + 1                      # 8-aligned interior start (by choice of lead)
    ypad_ref[base:base + r_out, :] = y.astype(ypad_ref.dtype)

    cout = w_ref.shape[2]
    acc = jnp.zeros((r_out, cout), jnp.float32)
    for kh in range(3):
        for kw in range(3):
            off = lead + kh * wp + kw
            acc += jnp.dot(ypad_ref[off:off + r_out, :], w_ref[kh * 3 + kw],
                           preferred_element_type=jnp.float32)
    z_ref[...] = acc.astype(z_ref.dtype)

    zm = acc * mask_ref[...]
    upd = jnp.concatenate([jnp.sum(zm, axis=0, keepdims=True),
                           jnp.sum(zm * zm, axis=0, keepdims=True)], axis=0)

    @pl.when(shard * sps + step < n_real)     # skip batch-padding (fake) images
    def _acc():
        stats_ref[...] += upd


def _bn_add_act_kernel(z_ref, scale_ref, shift_ref, res_ref, o_ref):
    """Folded BN2 + residual add + ReLU (per image)."""
    y = (z_ref[...].astype(jnp.float32) * scale_ref[...] + shift_ref[...]
         + res_ref[...].astype(jnp.float32))
    o_ref[...] = jnp.maximum(y, 0.0).astype(o_ref.dtype)


# ---------------------------------------------------------------------------
# pallas_call wrappers
# ---------------------------------------------------------------------------
def _conv_bn_stats(x_flat, w_taps, mask, *, wp, r_out, n_shards, sps, z_dtype):
    n_pad, r_in, cin = x_flat.shape
    cout = w_taps.shape[2]
    kernel = functools.partial(_conv_stats_kernel, wp=wp, r_out=r_out)

    flops = 2 * n_pad * r_out * 9 * cin * cout
    bytes_accessed = (x_flat.size * x_flat.dtype.itemsize
                      + w_taps.size * w_taps.dtype.itemsize
                      + n_pad * r_out * cout * jnp.dtype(z_dtype).itemsize
                      + n_shards * 2 * cout * 4)

    return pl.pallas_call(
        kernel,
        out_shape=(jax.ShapeDtypeStruct((n_pad, r_out, cout), z_dtype),
                   jax.ShapeDtypeStruct((n_shards, 2, cout), jnp.float32)),
        grid_spec=pltpu.PrefetchScalarGridSpec(
            num_scalar_prefetch=0,
            grid=(n_shards, sps),
            in_specs=[
                pl.BlockSpec((None, r_in, cin), lambda s, i: (s * sps + i, 0, 0)),
                pl.BlockSpec((9, cin, cout), lambda s, i: (0, 0, 0)),
                pl.BlockSpec((r_out, 1), lambda s, i: (0, 0)),
            ],
            out_specs=(
                pl.BlockSpec((None, r_out, cout), lambda s, i: (s * sps + i, 0, 0)),
                pl.BlockSpec((None, 2, cout), lambda s, i: (s, 0, 0)),
            ),
        ),
        compiler_params=pltpu.CompilerParams(
            dimension_semantics=("parallel", "arbitrary")),
        cost_estimate=pl.CostEstimate(flops=flops, transcendentals=0,
                                      bytes_accessed=bytes_accessed),
    )(x_flat, w_taps, mask)


def _bn_relu_conv_bn_stats(zin, scale, shift, mask, w_taps, *, wp, r_out,
                           n_shards, sps, n_real, z_dtype, compute_dtype):
    n_pad, r_z, cin = zin.shape
    cout = w_taps.shape[2]
    lead = (-(wp + 1)) % 8                        # aligns the interior scratch store
    r_buf = _round_up(lead + r_out + 2 * wp + 3, 8)
    kernel = functools.partial(_bn_relu_conv_stats_kernel, wp=wp, r_out=r_out,
                               lead=lead, sps=sps, n_real=n_real)

    flops = 2 * n_pad * r_out * 9 * cin * cout + 4 * n_pad * r_out * cin
    bytes_accessed = (zin.size * zin.dtype.itemsize
                      + w_taps.size * w_taps.dtype.itemsize
                      + n_pad * r_out * cout * jnp.dtype(z_dtype).itemsize
                      + n_shards * 2 * cout * 4)

    return pl.pallas_call(
        kernel,
        out_shape=(jax.ShapeDtypeStruct((n_pad, r_out, cout), z_dtype),
                   jax.ShapeDtypeStruct((n_shards, 2, cout), jnp.float32)),
        grid_spec=pltpu.PrefetchScalarGridSpec(
            num_scalar_prefetch=0,
            grid=(n_shards, sps),
            in_specs=[
                pl.BlockSpec((None, r_z, cin), lambda s, i: (s * sps + i, 0, 0)),
                pl.BlockSpec((1, cin), lambda s, i: (0, 0)),
                pl.BlockSpec((1, cin), lambda s, i: (0, 0)),
                pl.BlockSpec((r_out, 1), lambda s, i: (0, 0)),
                pl.BlockSpec((9, cin, cout), lambda s, i: (0, 0, 0)),
            ],
            out_specs=(
                pl.BlockSpec((None, r_out, cout), lambda s, i: (s * sps + i, 0, 0)),
                pl.BlockSpec((None, 2, cout), lambda s, i: (s, 0, 0)),
            ),
            scratch_shapes=[pltpu.VMEM((r_buf, cin), compute_dtype)],
        ),
        compiler_params=pltpu.CompilerParams(
            dimension_semantics=("parallel", "arbitrary")),
        cost_estimate=pl.CostEstimate(flops=flops, transcendentals=0,
                                      bytes_accessed=bytes_accessed),
    )(zin, scale, shift, mask, w_taps)


def _bn_add_act(z, scale, shift, res, *, out_dtype):
    n_pad, r, c = z.shape
    bytes_accessed = (z.size * z.dtype.itemsize + res.size * res.dtype.itemsize
                      + z.size * jnp.dtype(out_dtype).itemsize)
    return pl.pallas_call(
        _bn_add_act_kernel,
        out_shape=jax.ShapeDtypeStruct((n_pad, r, c), out_dtype),
        grid_spec=pltpu.PrefetchScalarGridSpec(
            num_scalar_prefetch=0,
            grid=(n_pad,),
            in_specs=[
                pl.BlockSpec((None, r, c), lambda i: (i, 0, 0)),
                pl.BlockSpec((1, c), lambda i: (0, 0)),
                pl.BlockSpec((1, c), lambda i: (0, 0)),
                pl.BlockSpec((None, r, c), lambda i: (i, 0, 0)),
            ],
            out_specs=pl.BlockSpec((None, r, c), lambda i: (i, 0, 0)),
        ),
        compiler_params=pltpu.CompilerParams(dimension_semantics=("parallel",)),
        cost_estimate=pl.CostEstimate(flops=4 * z.size, transcendentals=0,
                                      bytes_accessed=bytes_accessed),
    )(z, scale, shift, res)


# ---------------------------------------------------------------------------
# Glue: flattened layouts, masks, weight/bn reshaping (tiny / indexing only)
# ---------------------------------------------------------------------------
def _valid_mask(h_valid, w_valid, wp, rows, stride=1):
    """(rows, 1) f32 mask: 1.0 for rows m = h*wp + w with h<h_valid, w<w_valid
    (and h,w on the stride lattice), else 0.0.  Built with numpy (constant)."""
    m = np.arange(rows)
    hh, ww = m // wp, m % wp
    ok = (hh < h_valid) & (ww < w_valid)
    if stride > 1:
        ok &= (hh % stride == 0) & (ww % stride == 0)
    return jnp.asarray(ok.astype(np.float32).reshape(rows, 1))


def _weight_taps(w, dtype):
    """PyTorch (Cout, Cin, 3, 3) -> (9, Cin, Cout), tap index = kh*3 + kw."""
    return jnp.transpose(w.astype(jnp.float32), (2, 3, 1, 0)).reshape(
        9, w.shape[1], w.shape[0]).astype(dtype)


def _flatten_padded_rows(a_nhwc, wp, rows, n_pad, dtype):
    """(N, Hv, Wv, C) -> (n_pad, rows, C): zero-pad width to wp, flatten (Hv, wp)
    into rows i*wp + j, zero-pad rows / batch."""
    n, hv, wv, c = a_nhwc.shape
    a = jnp.pad(a_nhwc, ((0, n_pad - n), (0, 0), (0, wp - wv), (0, 0)))
    a = a.reshape(n_pad, hv * wp, c)
    a = jnp.pad(a, ((0, 0), (0, rows - hv * wp), (0, 0)))
    return a.astype(dtype)


def _unflatten_valid(flat, n, hv, wv, wp):
    c = flat.shape[-1]
    out = flat[:n, :hv * wp, :].reshape(n, hv, wp, c)
    return out[:, :, :wv, :]


def _bn_fold(stats, gamma, beta, count):
    """Per-shard (sum, sumsq) -> fused BN (scale, shift) rows of shape (1, C)."""
    s = jnp.sum(stats.astype(jnp.float32), axis=0)          # combine megacore shards
    mean = s[0] / count
    # TODO(synk): E[x^2]-E[x]^2 can cancel for very large batches; consider centered sums.
    var = jnp.maximum(s[1] / count - mean * mean, 0.0)
    inv_std = jax.lax.rsqrt(var + BN_EPS)
    scale = gamma.astype(jnp.float32) * inv_std
    shift = beta.astype(jnp.float32) - mean * scale
    return scale.reshape(1, -1), shift.reshape(1, -1)


# ---------------------------------------------------------------------------
# Full CIFARBasicBlock forward
# ---------------------------------------------------------------------------
def cifar_basic_block_forward(x_nchw, params, *, stride=1, downsample=False,
                              compute_dtype=jnp.bfloat16, out_dtype=jnp.float32,
                              num_shards=2):
    w1, g1, b1 = params["w1"], params["g1"], params["b1"]
    w2, g2, b2 = params["w2"], params["g2"], params["b2"]
    n, in_c, h, w = x_nchw.shape
    out_c = w1.shape[0]
    if not downsample:
        assert stride == 1 and in_c == out_c, \
            "identity path requires stride == 1 and in_channels == out_channels"

    x = x_nchw.astype(jnp.float32)
    x_nhwc = jnp.transpose(x, (0, 2, 3, 1))

    ho = (h - 1) // stride + 1
    wo = (w - 1) // stride + 1

    n_shards = max(1, min(num_shards, n))          # megacore sharding on v7x
    sps = pl.cdiv(n, n_shards)
    n_pad = n_shards * sps
    cnt = n * ho * wo                              # true BN element count (both BNs)

    # ---- conv1 + bn1 batch-stats (in-kernel shifted-matmul conv) ------------
    # TODO(synk): batch multiple images per grid step for very large batches to
    # amortize the ~0.35us per-step overhead further.
    wp1 = w + 2
    r_out1 = _round_up(h * wp1, 8)
    r_in1 = _round_up(r_out1 + 2 * wp1 + 2, 8)
    xp = jnp.pad(x_nhwc, ((0, 0), (1, 1), (1, 1), (0, 0)))
    x_flat = _flatten_padded_rows(xp, wp1, r_in1, n_pad, compute_dtype)
    mask1 = _valid_mask(h, w, wp1, r_out1, stride)
    w1_taps = _weight_taps(w1, compute_dtype)

    z1, stats1 = _conv_bn_stats(x_flat, w1_taps, mask1, wp=wp1, r_out=r_out1,
                                n_shards=n_shards, sps=sps, z_dtype=compute_dtype)
    scale1, shift1 = _bn_fold(stats1, g1, b1, cnt)

    # ---- bn1-apply + relu fused into conv2 (+ bn2 stats) ---------------------
    wp2 = wo + 2
    r_out2 = _round_up(ho * wp2, 8)
    mask2 = _valid_mask(ho, wo, wp2, r_out2, 1)
    w2_taps = _weight_taps(w2, compute_dtype)

    if stride == 1:
        zin = z1          # identical flattened layout -> consumed directly, no re-layout
    else:
        # TODO(synk): stride-2 conv1 computes a full-res z1 and subsamples here; a
        # phase-split input layout would avoid the extra matmul work and this copy.
        z1v = _unflatten_valid(z1, n, h, w, wp1)[:, ::stride, ::stride, :]
        zin = _flatten_padded_rows(z1v, wp2, r_out2, n_pad, compute_dtype)

    z2, stats2 = _bn_relu_conv_bn_stats(
        zin, scale1, shift1, mask2, w2_taps, wp=wp2, r_out=r_out2,
        n_shards=n_shards, sps=sps, n_real=n, z_dtype=compute_dtype,
        compute_dtype=compute_dtype)
    scale2, shift2 = _bn_fold(stats2, g2, b2, cnt)

    # ---- identity / downsample path ------------------------------------------
    if downsample:
        ident = x_nhwc[:, ::2, ::2, :]
        cpad = in_c // 2
        ident = jnp.pad(ident, ((0, 0), (0, 0), (0, 0), (cpad, cpad)))
    else:
        ident = x_nhwc
    ident_flat = _flatten_padded_rows(ident, wp2, r_out2, n_pad, compute_dtype)

    # ---- bn2-apply + residual add + relu --------------------------------------
    out_flat = _bn_add_act(z2, scale2, shift2, ident_flat, out_dtype=out_dtype)

    out = _unflatten_valid(out_flat, n, ho, wo, wp2)
    return jnp.transpose(out, (0, 3, 1, 2))                  # back to NCHW


# ---------------------------------------------------------------------------
# Pure-JAX reference (for self-check)
# ---------------------------------------------------------------------------
def _reference_forward(x, params, stride, downsample):
    def conv(x, w, s):
        return jax.lax.conv_general_dilated(
            x, w, (s, s), ((1, 1), (1, 1)),
            dimension_numbers=("NCHW", "OIHW", "NCHW"))

    def bn(x, g, b):
        mu = jnp.mean(x, axis=(0, 2, 3), keepdims=True)
        var = jnp.mean((x - mu) ** 2, axis=(0, 2, 3), keepdims=True)
        return ((x - mu) * jax.lax.rsqrt(var + BN_EPS)
                * g.reshape(1, -1, 1, 1) + b.reshape(1, -1, 1, 1))

    y = jax.nn.relu(bn(conv(x, params["w1"], stride), params["g1"], params["b1"]))
    y = bn(conv(y, params["w2"], 1), params["g2"], params["b2"])
    if downsample:
        i = x[:, :, ::2, ::2]
        cpad = x.shape[1] // 2
        i = jnp.pad(i, ((0, 0), (cpad, cpad), (0, 0), (0, 0)))
    else:
        i = x
    return jax.nn.relu(y + i)


# ---------------------------------------------------------------------------
if __name__ == "__main__":
    key = jax.random.PRNGKey(0)
    kx1, kp1a, kp1b, kx2, kp2a, kp2b = jax.random.split(key, 6)

    def make_params(ka, kb, c_in, c_out):
        return dict(
            w1=0.1 * jax.random.normal(ka, (c_out, c_in, 3, 3), jnp.float32),
            g1=jnp.ones((c_out,), jnp.float32),      # BatchNorm2d default gamma
            b1=jnp.zeros((c_out,), jnp.float32),     # BatchNorm2d default beta
            w2=0.1 * jax.random.normal(kb, (c_out, c_out, 3, 3), jnp.float32),
            g2=jnp.ones((c_out,), jnp.float32),
            b2=jnp.zeros((c_out,), jnp.float32),
        )

    # --- Config 1: downsampling block (in=4 -> out=8, stride=2) -------------
    x1 = jax.random.normal(kx1, (2, 4, 16, 16), jnp.float32)
    params1 = make_params(kp1a, kp1b, 4, 8)
    ref1 = _reference_forward(x1, params1, 2, True)

    # strict numerics check with f32 matmuls / f32 intermediates
    fwd1_f32 = jax.jit(functools.partial(
        cifar_basic_block_forward, stride=2, downsample=True,
        compute_dtype=jnp.float32))
    out1_f32 = jax.block_until_ready(fwd1_f32(x1, params1))
    assert out1_f32.shape == (2, 8, 8, 8), out1_f32.shape
    assert jnp.allclose(out1_f32, ref1, atol=1e-3, rtol=1e-3), \
        float(jnp.max(jnp.abs(out1_f32 - ref1)))

    # fast path: bf16 MXU operands + bf16 intermediates, f32 accumulation/BN
    fwd1_bf16 = jax.jit(functools.partial(
        cifar_basic_block_forward, stride=2, downsample=True,
        compute_dtype=jnp.bfloat16))
    out1_bf16 = jax.block_until_ready(fwd1_bf16(x1, params1))
    assert out1_bf16.shape == (2, 8, 8, 8), out1_bf16.shape
    assert bool(jnp.all(jnp.isfinite(out1_bf16)))
    assert jnp.allclose(out1_bf16, ref1, atol=1e-1, rtol=1e-1), \
        float(jnp.max(jnp.abs(out1_bf16 - ref1)))

    # --- Config 2: identity block (in=out=8, stride=1, no downsample) -------
    x2 = jax.random.normal(kx2, (2, 8, 8, 8), jnp.float32)
    params2 = make_params(kp2a, kp2b, 8, 8)
    ref2 = _reference_forward(x2, params2, 1, False)
    fwd2 = jax.jit(functools.partial(
        cifar_basic_block_forward, stride=1, downsample=False,
        compute_dtype=jnp.float32))
    out2 = jax.block_until_ready(fwd2(x2, params2))
    assert out2.shape == (2, 8, 8, 8), out2.shape
    assert jnp.allclose(out2, ref2, atol=1e-3, rtol=1e-3), \
        float(jnp.max(jnp.abs(out2 - ref2)))

    print("KERNEL_OK")
</pallas_src>

<mosaic_0001>
module attributes {stable_mosaic.version = 11 : i64} {
  func.func @_conv_stats_kernel(%arg0: i32, %arg1: i32, %arg2: memref<1x328x4xf32, #tpu.memory_space<vmem>>, %arg3: memref<9x4x8xf32, #tpu.memory_space<vmem>>, %arg4: memref<288x1xf32, #tpu.memory_space<vmem>>, %arg5: memref<1x288x8xf32, #tpu.memory_space<vmem>>, %arg6: memref<1x2x8xf32, #tpu.memory_space<vmem>>) attributes {dimension_semantics = [#tpu.dimension_semantics<parallel>, #tpu.dimension_semantics<arbitrary>], iteration_bounds = array<i64: 2, 1>, scalar_prefetch = 0 : i64, scratch_operands = 0 : i64, tpu.core_type = #tpu.core_type<tc>, window_params = [{transform_indices = @transform_0, window_bounds = array<i64: 1, 328, 4>}, {pipeline_mode = #tpu.pipeline_mode<synchronous>, transform_indices = @transform_1, window_bounds = array<i64: 9, 4, 8>}, {pipeline_mode = #tpu.pipeline_mode<synchronous>, transform_indices = @transform_2, window_bounds = array<i64: 288, 1>}, {transform_indices = @transform_3, window_bounds = array<i64: 1, 288, 8>}, {transform_indices = @transform_4, window_bounds = array<i64: 1, 2, 8>}]} {
    %c0_i32 = arith.constant 0 : i32
    %0 = arith.cmpi eq, %arg1, %c0_i32 : i32
    %1 = arith.extui %0 : i1 to i32
    %c0_i32_0 = arith.constant 0 : i32
    %2 = arith.cmpi ne, %1, %c0_i32_0 : i32
    scf.if %2 {
      %cst_62 = arith.constant 0.000000e+00 : f32
      %76 = vector.broadcast %cst_62 : f32 to vector<2x8xf32>
      %c0_63 = arith.constant 0 : index
      %c0_64 = arith.constant 0 : index
      %c0_65 = arith.constant 0 : index
      %77 = vector.load %arg6[%c0_63, %c0_64, %c0_65] : memref<1x2x8xf32, #tpu.memory_space<vmem>>, vector<1x2x8xf32>
      %78 = vector.shape_cast %77 : vector<1x2x8xf32> to vector<2x8xf32>
      %79 = vector.shape_cast %76 : vector<2x8xf32> to vector<1x2x8xf32>
      tpu.vector_store %arg6[%c0_63, %c0_64, %c0_65], %79 {strides = array<i32>} : memref<1x2x8xf32, #tpu.memory_space<vmem>>, vector<1x2x8xf32>,
    } else {
    }
    %cst = arith.constant 0.000000e+00 : f32
    %3 = vector.broadcast %cst : f32 to vector<288x8xf32>
    %c0 = arith.constant 0 : index
    %c0_1 = arith.constant 0 : index
    %c0_2 = arith.constant 0 : index
    %4 = vector.load %arg2[%c0, %c0_1, %c0_2] : memref<1x328x4xf32, #tpu.memory_space<vmem>>, vector<1x288x4xf32>
    %5 = vector.shape_cast %4 : vector<1x288x4xf32> to vector<288x4xf32>
    %c0_3 = arith.constant 0 : index
    %c0_4 = arith.constant 0 : index
    %c0_5 = arith.constant 0 : index
    %6 = vector.load %arg3[%c0_3, %c0_4, %c0_5] : memref<9x4x8xf32, #tpu.memory_space<vmem>>, vector<1x4x8xf32>
    %7 = vector.shape_cast %6 : vector<1x4x8xf32> to vector<4x8xf32>
    %cst_6 = arith.constant dense<0.000000e+00> : vector<288x8xf32>
    %8 = tpu.matmul %5, %7, %cst_6 {dimension_numbers = #tpu.dot_dimension_numbers<[1], [0], [0], [1], [0, 0, 1, 1], [], []>} : vector<288x4xf32>, vector<4x8xf32>, vector<288x8xf32> -> vector<288x8xf32>
    %9 = arith.addf %3, %8 : vector<288x8xf32>
    %c0_7 = arith.constant 0 : index
    %c1 = arith.constant 1 : index
    %c0_8 = arith.constant 0 : index
    %10 = vector.load %arg2[%c0_7, %c1, %c0_8] : memref<1x328x4xf32, #tpu.memory_space<vmem>>, vector<1x288x4xf32>
    %11 = vector.shape_cast %10 : vector<1x288x4xf32> to vector<288x4xf32>
    %c1_9 = arith.constant 1 : index
    %c0_10 = arith.constant 0 : index
    %c0_11 = arith.constant 0 : index
    %12 = vector.load %arg3[%c1_9, %c0_10, %c0_11] : memref<9x4x8xf32, #tpu.memory_space<vmem>>, vector<1x4x8xf32>
    %13 = vector.shape_cast %12 : vector<1x4x8xf32> to vector<4x8xf32>
    %cst_12 = arith.constant dense<0.000000e+00> : vector<288x8xf32>
    %14 = tpu.matmul %11, %13, %cst_12 {dimension_numbers = #tpu.dot_dimension_numbers<[1], [0], [0], [1], [0, 0, 1, 1], [], []>} : vector<288x4xf32>, vector<4x8xf32>, vector<288x8xf32> -> vector<288x8xf32>
    %15 = arith.addf %9, %14 : vector<288x8xf32>
    %c0_13 = arith.constant 0 : index
    %c2 = arith.constant 2 : index
    %c0_14 = arith.constant 0 : index
    %16 = vector.load %arg2[%c0_13, %c2, %c0_14] : memref<1x328x4xf32, #tpu.memory_space<vmem>>, vector<1x288x4xf32>
    %17 = vector.shape_cast %16 : vector<1x288x4xf32> to vector<288x4xf32>
    %c2_15 = arith.constant 2 : index
    %c0_16 = arith.constant 0 : index
    %c0_17 = arith.constant 0 : index
    %18 = vector.load %arg3[%c2_15, %c0_16, %c0_17] : memref<9x4x8xf32, #tpu.memory_space<vmem>>, vector<1x4x8xf32>
    %19 = vector.shape_cast %18 : vector<1x4x8xf32> to vector<4x8xf32>
    %cst_18 = arith.constant dense<0.000000e+00> : vector<288x8xf32>
    %20 = tpu.matmul %17, %19, %cst_18 {dimension_numbers = #tpu.dot_dimension_numbers<[1], [0], [0], [1], [0, 0, 1, 1], [], []>} : vector<288x4xf32>, vector<4x8xf32>, vector<288x8xf32> -> vector<288x8xf32>
    %21 = arith.addf %15, %20 : vector<288x8xf32>
    %c0_19 = arith.constant 0 : index
    %c18 = arith.constant 18 : index
    %c0_20 = arith.constant 0 : index
    %22 = vector.load %arg2[%c0_19, %c18, %c0_20] : memref<1x328x4xf32, #tpu.memory_space<vmem>>, vector<1x288x4xf32>
    %23 = vector.shape_cast %22 : vector<1x288x4xf32> to vector<288x4xf32>
    %c3 = arith.constant 3 : index
    %c0_21 = arith.constant 0 : index
    %c0_22 = arith.constant 0 : index
    %24 = vector.load %arg3[%c3, %c0_21, %c0_22] : memref<9x4x8xf32, #tpu.memory_space<vmem>>, vector<1x4x8xf32>
    %25 = vector.shape_cast %24 : vector<1x4x8xf32> to vector<4x8xf32>
    %cst_23 = arith.constant dense<0.000000e+00> : vector<288x8xf32>
    %26 = tpu.matmul %23, %25, %cst_23 {dimension_numbers = #tpu.dot_dimension_numbers<[1], [0], [0], [1], [0, 0, 1, 1], [], []>} : vector<288x4xf32>, vector<4x8xf32>, vector<288x8xf32> -> vector<288x8xf32>
    %27 = arith.addf %21, %26 : vector<288x8xf32>
    %c0_24 = arith.constant 0 : index
    %c19 = arith.constant 19 : index
    %c0_25 = arith.constant 0 : index
    %28 = vector.load %arg2[%c0_24, %c19, %c0_25] : memref<1x328x4xf32, #tpu.memory_space<vmem>>, vector<1x288x4xf32>
    %29 = vector.shape_cast %28 : vector<1x288x4xf32> to vector<288x4xf32>
    %c4 = arith.constant 4 : index
    %c0_26 = arith.constant 0 : index
    %c0_27 = arith.constant 0 : index
    %30 = vector.load %arg3[%c4, %c0_26, %c0_27] : memref<9x4x8xf32, #tpu.memory_space<vmem>>, vector<1x4x8xf32>
    %31 = vector.shape_cast %30 : vector<1x4x8xf32> to vector<4x8xf32>
    %cst_28 = arith.constant dense<0.000000e+00> : vector<288x8xf32>
    %32 = tpu.matmul %29, %31, %cst_28 {dimension_numbers = #tpu.dot_dimension_numbers<[1], [0], [0], [1], [0, 0, 1, 1], [], []>} : vector<288x4xf32>, vector<4x8xf32>, vector<288x8xf32> -> vector<288x8xf32>
    %33 = arith.addf %27, %32 : vector<288x8xf32>
    %c0_29 = arith.constant 0 : index
    %c20 = arith.constant 20 : index
    %c0_30 = arith.constant 0 : index
    %34 = vector.load %arg2[%c0_29, %c20, %c0_30] : memref<1x328x4xf32, #tpu.memory_space<vmem>>, vector<1x288x4xf32>
    %35 = vector.shape_cast %34 : vector<1x288x4xf32> to vector<288x4xf32>
    %c5 = arith.constant 5 : index
    %c0_31 = arith.constant 0 : index
    %c0_32 = arith.constant 0 : index
    %36 = vector.load %arg3[%c5, %c0_31, %c0_32] : memref<9x4x8xf32, #tpu.memory_space<vmem>>, vector<1x4x8xf32>
    %37 = vector.shape_cast %36 : vector<1x4x8xf32> to vector<4x8xf32>
    %cst_33 = arith.constant dense<0.000000e+00> : vector<288x8xf32>
    %38 = tpu.matmul %35, %37, %cst_33 {dimension_numbers = #tpu.dot_dimension_numbers<[1], [0], [0], [1], [0, 0, 1, 1], [], []>} : vector<288x4xf32>, vector<4x8xf32>, vector<288x8xf32> -> vector<288x8xf32>
    %39 = arith.addf %33, %38 : vector<288x8xf32>
    %c0_34 = arith.constant 0 : index
    %c36 = arith.constant 36 : index
    %c0_35 = arith.constant 0 : index
    %40 = vector.load %arg2[%c0_34, %c36, %c0_35] : memref<1x328x4xf32, #tpu.memory_space<vmem>>, vector<1x288x4xf32>
    %41 = vector.shape_cast %40 : vector<1x288x4xf32> to vector<288x4xf32>
    %c6 = arith.constant 6 : index
    %c0_36 = arith.constant 0 : index
    %c0_37 = arith.constant 0 : index
    %42 = vector.load %arg3[%c6, %c0_36, %c0_37] : memref<9x4x8xf32, #tpu.memory_space<vmem>>, vector<1x4x8xf32>
    %43 = vector.shape_cast %42 : vector<1x4x8xf32> to vector<4x8xf32>
    %cst_38 = arith.constant dense<0.000000e+00> : vector<288x8xf32>
    %44 = tpu.matmul %41, %43, %cst_38 {dimension_numbers = #tpu.dot_dimension_numbers<[1], [0], [0], [1], [0, 0, 1, 1], [], []>} : vector<288x4xf32>, vector<4x8xf32>, vector<288x8xf32> -> vector<288x8xf32>
    %45 = arith.addf %39, %44 : vector<288x8xf32>
    %c0_39 = arith.constant 0 : index
    %c37 = arith.constant 37 : index
    %c0_40 = arith.constant 0 : index
    %46 = vector.load %arg2[%c0_39, %c37, %c0_40] : memref<1x328x4xf32, #tpu.memory_space<vmem>>, vector<1x288x4xf32>
    %47 = vector.shape_cast %46 : vector<1x288x4xf32> to vector<288x4xf32>
    %c7 = arith.constant 7 : index
    %c0_41 = arith.constant 0 : index
    %c0_42 = arith.constant 0 : index
    %48 = vector.load %arg3[%c7, %c0_41, %c0_42] : memref<9x4x8xf32, #tpu.memory_space<vmem>>, vector<1x4x8xf32>
    %49 = vector.shape_cast %48 : vector<1x4x8xf32> to vector<4x8xf32>
    %cst_43 = arith.constant dense<0.000000e+00> : vector<288x8xf32>
    %50 = tpu.matmul %47, %49, %cst_43 {dimension_numbers = #tpu.dot_dimension_numbers<[1], [0], [0], [1], [0, 0, 1, 1], [], []>} : vector<288x4xf32>, vector<4x8xf32>, vector<288x8xf32> -> vector<288x8xf32>
    %51 = arith.addf %45, %50 : vector<288x8xf32>
    %c0_44 = arith.constant 0 : index
    %c38 = arith.constant 38 : index
    %c0_45 = arith.constant 0 : index
    %52 = vector.load %arg2[%c0_44, %c38, %c0_45] : memref<1x328x4xf32, #tpu.memory_space<vmem>>, vector<1x288x4xf32>
    %53 = vector.shape_cast %52 : vector<1x288x4xf32> to vector<288x4xf32>
    %c8 = arith.constant 8 : index
    %c0_46 = arith.constant 0 : index
    %c0_47 = arith.constant 0 : index
    %54 = vector.load %arg3[%c8, %c0_46, %c0_47] : memref<9x4x8xf32, #tpu.memory_space<vmem>>, vector<1x4x8xf32>
    %55 = vector.shape_cast %54 : vector<1x4x8xf32> to vector<4x8xf32>
    %cst_48 = arith.constant dense<0.000000e+00> : vector<288x8xf32>
    %56 = tpu.matmul %53, %55, %cst_48 {dimension_numbers = #tpu.dot_dimension_numbers<[1], [0], [0], [1], [0, 0, 1, 1], [], []>} : vector<288x4xf32>, vector<4x8xf32>, vector<288x8xf32> -> vector<288x8xf32>
    %57 = arith.addf %51, %56 : vector<288x8xf32>
    %c0_49 = arith.constant 0 : index
    %c0_50 = arith.constant 0 : index
    %c0_51 = arith.constant 0 : index
    %58 = vector.load %arg5[%c0_49, %c0_50, %c0_51] : memref<1x288x8xf32, #tpu.memory_space<vmem>>, vector<1x288x8xf32>
    %59 = vector.shape_cast %58 : vector<1x288x8xf32> to vector<288x8xf32>
    %60 = vector.shape_cast %57 : vector<288x8xf32> to vector<1x288x8xf32>
    tpu.vector_store %arg5[%c0_49, %c0_50, %c0_51], %60 {strides = array<i32>} : memref<1x288x8xf32, #tpu.memory_space<vmem>>, vector<1x288x8xf32>,
    %c0_52 = arith.constant 0 : index
    %c0_53 = arith.constant 0 : index
    %61 = vector.load %arg4[%c0_52, %c0_53] : memref<288x1xf32, #tpu.memory_space<vmem>>, vector<288x1xf32>
    %62 = vector.broadcast %61 : vector<288x1xf32> to vector<288x8xf32>
    %63 = arith.mulf %57, %62 : vector<288x8xf32>
    %c0_54 = arith.constant 0 : index
    %c0_55 = arith.constant 0 : index
    %c0_56 = arith.constant 0 : index
    %64 = vector.load %arg6[%c0_54, %c0_55, %c0_56] : memref<1x2x8xf32, #tpu.memory_space<vmem>>, vector<1x2x8xf32>
    %65 = vector.shape_cast %64 : vector<1x2x8xf32> to vector<2x8xf32>
    %cst_57 = arith.constant dense<0.000000e+00> : vector<8xf32>
    %66 = vector.multi_reduction <add>, %63, %cst_57 [0] : vector<288x8xf32> to vector<8xf32>
    %67 = vector.shape_cast %66 : vector<8xf32> to vector<1x8xf32>
    %68 = arith.mulf %63, %63 : vector<288x8xf32>
    %cst_58 = arith.constant dense<0.000000e+00> : vector<8xf32>
    %69 = vector.multi_reduction <add>, %68, %cst_58 [0] : vector<288x8xf32> to vector<8xf32>
    %70 = vector.shape_cast %69 : vector<8xf32> to vector<1x8xf32>
    %71 = tpu.concatenate %67, %70 in 0 : vector<1x8xf32>, vector<1x8xf32> -> vector<2x8xf32>
    %72 = arith.addf %65, %71 : vector<2x8xf32>
    %c0_59 = arith.constant 0 : index
    %c0_60 = arith.constant 0 : index
    %c0_61 = arith.constant 0 : index
    %73 = vector.load %arg6[%c0_59, %c0_60, %c0_61] : memref<1x2x8xf32, #tpu.memory_space<vmem>>, vector<1x2x8xf32>
    %74 = vector.shape_cast %73 : vector<1x2x8xf32> to vector<2x8xf32>
    %75 = vector.shape_cast %72 : vector<2x8xf32> to vector<1x2x8xf32>
    tpu.vector_store %arg6[%c0_59, %c0_60, %c0_61], %75 {strides = array<i32>} : memref<1x2x8xf32, #tpu.memory_space<vmem>>, vector<1x2x8xf32>,
    return
  }
  func.func @transform_0(%arg0: i32, %arg1: i32) -> (i32, i32, i32) {
    %c1_i32 = arith.constant 1 : i32
    %0 = arith.muli %arg0, %c1_i32 : i32
    %1 = arith.addi %0, %arg1 : i32
    %c0_i32 = arith.constant 0 : i32
    %c0_i32_0 = arith.constant 0 : i32
    %c0_i32_1 = arith.constant 0 : i32
    return %1, %c0_i32, %c0_i32_0 : i32, i32, i32
  }
  func.func @transform_1(%arg0: i32, %arg1: i32) -> (i32, i32, i32) {
    %c0_i32 = arith.constant 0 : i32
    %c0_i32_0 = arith.constant 0 : i32
    %c0_i32_1 = arith.constant 0 : i32
    %c0_i32_2 = arith.constant 0 : i32
    return %c0_i32, %c0_i32_0, %c0_i32_1 : i32, i32, i32
  }
  func.func @transform_2(%arg0: i32, %arg1: i32) -> (i32, i32) {
    %c0_i32 = arith.constant 0 : i32
    %c0_i32_0 = arith.constant 0 : i32
    %c0_i32_1 = arith.constant 0 : i32
    return %c0_i32, %c0_i32_0 : i32, i32
  }
  func.func @transform_3(%arg0: i32, %arg1: i32) -> (i32, i32, i32) {
    %c1_i32 = arith.constant 1 : i32
    %0 = arith.muli %arg0, %c1_i32 : i32
    %1 = arith.addi %0, %arg1 : i32
    %c0_i32 = arith.constant 0 : i32
    %c0_i32_0 = arith.constant 0 : i32
    %c0_i32_1 = arith.constant 0 : i32
    return %1, %c0_i32, %c0_i32_0 : i32, i32, i32
  }
  func.func @transform_4(%arg0: i32, %arg1: i32) -> (i32, i32, i32) {
    %c0_i32 = arith.constant 0 : i32
    %c0_i32_0 = arith.constant 0 : i32
    %c0_i32_1 = arith.constant 0 : i32
    return %arg0, %c0_i32, %c0_i32_0 : i32, i32, i32
  }
}

module attributes {stable_mosaic.version = 11 : i64} {
  func.func @_bn_relu_conv_stats_kernel(%arg0: i32, %arg1: i32, %arg2: memref<1x80x8xf32, #tpu.memory_space<vmem>>, %arg3: memref<1x8xf32, #tpu.memory_space<vmem>>, %arg4: memref<1x8xf32, #tpu.memory_space<vmem>>, %arg5: memref<80x1xf32, #tpu.memory_space<vmem>>, %arg6: memref<9x8x8xf32, #tpu.memory_space<vmem>>, %arg7: memref<1x80x8xf32, #tpu.memory_space<vmem>>, %arg8: memref<1x2x8xf32, #tpu.memory_space<vmem>>, %arg9: memref<112x8xf32, #tpu.memory_space<vmem>>) attributes {dimension_semantics = [#tpu.dimension_semantics<parallel>, #tpu.dimension_semantics<arbitrary>], iteration_bounds = array<i64: 2, 1>, scalar_prefetch = 0 : i64, scratch_operands = 1 : i64, tpu.core_type = #tpu.core_type<tc>, window_params = [{transform_indices = @transform_0, window_bounds = array<i64: 1, 80, 8>}, {pipeline_mode = #tpu.pipeline_mode<synchronous>, transform_indices = @transform_1, window_bounds = array<i64: 1, 8>}, {pipeline_mode = #tpu.pipeline_mode<synchronous>, transform_indices = @transform_2, window_bounds = array<i64: 1, 8>}, {pipeline_mode = #tpu.pipeline_mode<synchronous>, transform_indices = @transform_3, window_bounds = array<i64: 80, 1>}, {pipeline_mode = #tpu.pipeline_mode<synchronous>, transform_indices = @transform_4, window_bounds = array<i64: 9, 8, 8>}, {transform_indices = @transform_5, window_bounds = array<i64: 1, 80, 8>}, {transform_indices = @transform_6, window_bounds = array<i64: 1, 2, 8>}]} {
    %c0_i32 = arith.constant 0 : i32
    %0 = arith.cmpi eq, %arg1, %c0_i32 : i32
    %1 = arith.extui %0 : i1 to i32
    %c0_i32_0 = arith.constant 0 : i32
    %2 = arith.cmpi ne, %1, %c0_i32_0 : i32
    scf.if %2 {
      %cst_63 = arith.constant 0.000000e+00 : f32
      %82 = vector.broadcast %cst_63 : f32 to vector<2x8xf32>
      %c0_64 = arith.constant 0 : index
      %c0_65 = arith.constant 0 : index
      %c0_66 = arith.constant 0 : index
      %83 = vector.load %arg8[%c0_64, %c0_65, %c0_66] : memref<1x2x8xf32, #tpu.memory_space<vmem>>, vector<1x2x8xf32>
      %84 = vector.shape_cast %83 : vector<1x2x8xf32> to vector<2x8xf32>
      %85 = vector.shape_cast %82 : vector<2x8xf32> to vector<1x2x8xf32>
      tpu.vector_store %arg8[%c0_64, %c0_65, %c0_66], %85 {strides = array<i32>} : memref<1x2x8xf32, #tpu.memory_space<vmem>>, vector<1x2x8xf32>,
    } else {
    }
    %cst = arith.constant 0.000000e+00 : f32
    %3 = vector.broadcast %cst : f32 to vector<112x8xf32>
    %c0 = arith.constant 0 : index
    %c0_1 = arith.constant 0 : index
    %4 = vector.load %arg9[%c0, %c0_1] : memref<112x8xf32, #tpu.memory_space<vmem>>, vector<112x8xf32>
    tpu.vector_store %arg9[%c0, %c0_1], %3 {strides = array<i32>} : memref<112x8xf32, #tpu.memory_space<vmem>>, vector<112x8xf32>,
    %c0_2 = arith.constant 0 : index
    %c0_3 = arith.constant 0 : index
    %c0_4 = arith.constant 0 : index
    %5 = vector.load %arg2[%c0_2, %c0_3, %c0_4] : memref<1x80x8xf32, #tpu.memory_space<vmem>>, vector<1x80x8xf32>
    %6 = vector.shape_cast %5 : vector<1x80x8xf32> to vector<80x8xf32>
    %c0_5 = arith.constant 0 : index
    %c0_6 = arith.constant 0 : index
    %7 = vector.load %arg3[%c0_5, %c0_6] : memref<1x8xf32, #tpu.memory_space<vmem>>, vector<1x8xf32>
    %8 = vector.broadcast %7 : vector<1x8xf32> to vector<80x8xf32>
    %9 = arith.mulf %6, %8 : vector<80x8xf32>
    %c0_7 = arith.constant 0 : index
    %c0_8 = arith.constant 0 : index
    %10 = vector.load %arg4[%c0_7, %c0_8] : memref<1x8xf32, #tpu.memory_space<vmem>>, vector<1x8xf32>
    %11 = vector.broadcast %10 : vector<1x8xf32> to vector<80x8xf32>
    %12 = arith.addf %9, %11 : vector<80x8xf32>
    %cst_9 = arith.constant 0.000000e+00 : f32
    %13 = vector.broadcast %cst_9 : f32 to vector<80x8xf32>
    %14 = arith.maximumf %12, %13 : vector<80x8xf32>
    %c0_10 = arith.constant 0 : index
    %c0_11 = arith.constant 0 : index
    %15 = vector.load %arg5[%c0_10, %c0_11] : memref<80x1xf32, #tpu.memory_space<vmem>>, vector<80x1xf32>
    %16 = vector.broadcast %15 : vector<80x1xf32> to vector<80x8xf32>
    %17 = arith.mulf %14, %16 : vector<80x8xf32>
    %c16 = arith.constant 16 : index
    %c0_12 = arith.constant 0 : index
    %18 = vector.load %arg9[%c16, %c0_12] : memref<112x8xf32, #tpu.memory_space<vmem>>, vector<80x8xf32>
    tpu.vector_store %arg9[%c16, %c0_12], %17 {strides = array<i32>} : memref<112x8xf32, #tpu.memory_space<vmem>>, vector<80x8xf32>,
    %cst_13 = arith.constant 0.000000e+00 : f32
    %19 = vector.broadcast %cst_13 : f32 to vector<80x8xf32>
    %c5 = arith.constant 5 : index
    %c0_14 = arith.constant 0 : index
    %20 = vector.load %arg9[%c5, %c0_14] : memref<112x8xf32, #tpu.memory_space<vmem>>, vector<80x8xf32>
    %c0_15 = arith.constant 0 : index
    %c0_16 = arith.constant 0 : index
    %c0_17 = arith.constant 0 : index
    %21 = vector.load %arg6[%c0_15, %c0_16, %c0_17] : memref<9x8x8xf32, #tpu.memory_space<vmem>>, vector<1x8x8xf32>
    %22 = vector.shape_cast %21 : vector<1x8x8xf32> to vector<8x8xf32>
    %cst_18 = arith.constant dense<0.000000e+00> : vector<80x8xf32>
    %23 = tpu.matmul %20, %22, %cst_18 {dimension_numbers = #tpu.dot_dimension_numbers<[1], [0], [0], [1], [0, 0, 1, 1], [], []>} : vector<80x8xf32>, vector<8x8xf32>, vector<80x8xf32> -> vector<80x8xf32>
    %24 = arith.addf %19, %23 : vector<80x8xf32>
    %c6 = arith.constant 6 : index
    %c0_19 = arith.constant 0 : index
    %25 = vector.load %arg9[%c6, %c0_19] : memref<112x8xf32, #tpu.memory_space<vmem>>, vector<80x8xf32>
    %c1 = arith.constant 1 : index
    %c0_20 = arith.constant 0 : index
    %c0_21 = arith.constant 0 : index
    %26 = vector.load %arg6[%c1, %c0_20, %c0_21] : memref<9x8x8xf32, #tpu.memory_space<vmem>>, vector<1x8x8xf32>
    %27 = vector.shape_cast %26 : vector<1x8x8xf32> to vector<8x8xf32>
    %cst_22 = arith.constant dense<0.000000e+00> : vector<80x8xf32>
    %28 = tpu.matmul %25, %27, %cst_22 {dimension_numbers = #tpu.dot_dimension_numbers<[1], [0], [0], [1], [0, 0, 1, 1], [], []>} : vector<80x8xf32>, vector<8x8xf32>, vector<80x8xf32> -> vector<80x8xf32>
    %29 = arith.addf %24, %28 : vector<80x8xf32>
    %c7 = arith.constant 7 : index
    %c0_23 = arith.constant 0 : index
    %30 = vector.load %arg9[%c7, %c0_23] : memref<112x8xf32, #tpu.memory_space<vmem>>, vector<80x8xf32>
    %c2 = arith.constant 2 : index
    %c0_24 = arith.constant 0 : index
    %c0_25 = arith.constant 0 : index
    %31 = vector.load %arg6[%c2, %c0_24, %c0_25] : memref<9x8x8xf32, #tpu.memory_space<vmem>>, vector<1x8x8xf32>
    %32 = vector.shape_cast %31 : vector<1x8x8xf32> to vector<8x8xf32>
    %cst_26 = arith.constant dense<0.000000e+00> : vector<80x8xf32>
    %33 = tpu.matmul %30, %32, %cst_26 {dimension_numbers = #tpu.dot_dimension_numbers<[1], [0], [0], [1], [0, 0, 1, 1], [], []>} : vector<80x8xf32>, vector<8x8xf32>, vector<80x8xf32> -> vector<80x8xf32>
    %34 = arith.addf %29, %33 : vector<80x8xf32>
    %c15 = arith.constant 15 : index
    %c0_27 = arith.constant 0 : index
    %35 = vector.load %arg9[%c15, %c0_27] : memref<112x8xf32, #tpu.memory_space<vmem>>, vector<80x8xf32>
    %c3 = arith.constant 3 : index
    %c0_28 = arith.constant 0 : index
    %c0_29 = arith.constant 0 : index
    %36 = vector.load %arg6[%c3, %c0_28, %c0_29] : memref<9x8x8xf32, #tpu.memory_space<vmem>>, vector<1x8x8xf32>
    %37 = vector.shape_cast %36 : vector<1x8x8xf32> to vector<8x8xf32>
    %cst_30 = arith.constant dense<0.000000e+00> : vector<80x8xf32>
    %38 = tpu.matmul %35, %37, %cst_30 {dimension_numbers = #tpu.dot_dimension_numbers<[1], [0], [0], [1], [0, 0, 1, 1], [], []>} : vector<80x8xf32>, vector<8x8xf32>, vector<80x8xf32> -> vector<80x8xf32>
    %39 = arith.addf %34, %38 : vector<80x8xf32>
    %c16_31 = arith.constant 16 : index
    %c0_32 = arith.constant 0 : index
    %40 = vector.load %arg9[%c16_31, %c0_32] : memref<112x8xf32, #tpu.memory_space<vmem>>, vector<80x8xf32>
    %c4 = arith.constant 4 : index
    %c0_33 = arith.constant 0 : index
    %c0_34 = arith.constant 0 : index
    %41 = vector.load %arg6[%c4, %c0_33, %c0_34] : memref<9x8x8xf32, #tpu.memory_space<vmem>>, vector<1x8x8xf32>
    %42 = vector.shape_cast %41 : vector<1x8x8xf32> to vector<8x8xf32>
    %cst_35 = arith.constant dense<0.000000e+00> : vector<80x8xf32>
    %43 = tpu.matmul %40, %42, %cst_35 {dimension_numbers = #tpu.dot_dimension_numbers<[1], [0], [0], [1], [0, 0, 1, 1], [], []>} : vector<80x8xf32>, vector<8x8xf32>, vector<80x8xf32> -> vector<80x8xf32>
    %44 = arith.addf %39, %43 : vector<80x8xf32>
    %c17 = arith.constant 17 : index
    %c0_36 = arith.constant 0 : index
    %45 = vector.load %arg9[%c17, %c0_36] : memref<112x8xf32, #tpu.memory_space<vmem>>, vector<80x8xf32>
    %c5_37 = arith.constant 5 : index
    %c0_38 = arith.constant 0 : index
    %c0_39 = arith.constant 0 : index
    %46 = vector.load %arg6[%c5_37, %c0_38, %c0_39] : memref<9x8x8xf32, #tpu.memory_space<vmem>>, vector<1x8x8xf32>
    %47 = vector.shape_cast %46 : vector<1x8x8xf32> to vector<8x8xf32>
    %cst_40 = arith.constant dense<0.000000e+00> : vector<80x8xf32>
    %48 = tpu.matmul %45, %47, %cst_40 {dimension_numbers = #tpu.dot_dimension_numbers<[1], [0], [0], [1], [0, 0, 1, 1], [], []>} : vector<80x8xf32>, vector<8x8xf32>, vector<80x8xf32> -> vector<80x8xf32>
    %49 = arith.addf %44, %48 : vector<80x8xf32>
    %c25 = arith.constant 25 : index
    %c0_41 = arith.constant 0 : index
    %50 = vector.load %arg9[%c25, %c0_41] : memref<112x8xf32, #tpu.memory_space<vmem>>, vector<80x8xf32>
    %c6_42 = arith.constant 6 : index
    %c0_43 = arith.constant 0 : index
    %c0_44 = arith.constant 0 : index
    %51 = vector.load %arg6[%c6_42, %c0_43, %c0_44] : memref<9x8x8xf32, #tpu.memory_space<vmem>>, vector<1x8x8xf32>
    %52 = vector.shape_cast %51 : vector<1x8x8xf32> to vector<8x8xf32>
    %cst_45 = arith.constant dense<0.000000e+00> : vector<80x8xf32>
    %53 = tpu.matmul %50, %52, %cst_45 {dimension_numbers = #tpu.dot_dimension_numbers<[1], [0], [0], [1], [0, 0, 1, 1], [], []>} : vector<80x8xf32>, vector<8x8xf32>, vector<80x8xf32> -> vector<80x8xf32>
    %54 = arith.addf %49, %53 : vector<80x8xf32>
    %c26 = arith.constant 26 : index
    %c0_46 = arith.constant 0 : index
    %55 = vector.load %arg9[%c26, %c0_46] : memref<112x8xf32, #tpu.memory_space<vmem>>, vector<80x8xf32>
    %c7_47 = arith.constant 7 : index
    %c0_48 = arith.constant 0 : index
    %c0_49 = arith.constant 0 : index
    %56 = vector.load %arg6[%c7_47, %c0_48, %c0_49] : memref<9x8x8xf32, #tpu.memory_space<vmem>>, vector<1x8x8xf32>
    %57 = vector.shape_cast %56 : vector<1x8x8xf32> to vector<8x8xf32>
    %cst_50 = arith.constant dense<0.000000e+00> : vector<80x8xf32>
    %58 = tpu.matmul %55, %57, %cst_50 {dimension_numbers = #tpu.dot_dimension_numbers<[1], [0], [0], [1], [0, 0, 1, 1], [], []>} : vector<80x8xf32>, vector<8x8xf32>, vector<80x8xf32> -> vector<80x8xf32>
    %59 = arith.addf %54, %58 : vector<80x8xf32>
    %c27 = arith.constant 27 : index
    %c0_51 = arith.constant 0 : index
    %60 = vector.load %arg9[%c27, %c0_51] : memref<112x8xf32, #tpu.memory_space<vmem>>, vector<80x8xf32>
    %c8 = arith.constant 8 : index
    %c0_52 = arith.constant 0 : index
    %c0_53 = arith.constant 0 : index
    %61 = vector.load %arg6[%c8, %c0_52, %c0_53] : memref<9x8x8xf32, #tpu.memory_space<vmem>>, vector<1x8x8xf32>
    %62 = vector.shape_cast %61 : vector<1x8x8xf32> to vector<8x8xf32>
    %cst_54 = arith.constant dense<0.000000e+00> : vector<80x8xf32>
    %63 = tpu.matmul %60, %62, %cst_54 {dimension_numbers = #tpu.dot_dimension_numbers<[1], [0], [0], [1], [0, 0, 1, 1], [], []>} : vector<80x8xf32>, vector<8x8xf32>, vector<80x8xf32> -> vector<80x8xf32>
    %64 = arith.addf %59, %63 : vector<80x8xf32>
    %c0_55 = arith.constant 0 : index
    %c0_56 = arith.constant 0 : index
    %c0_57 = arith.constant 0 : index
    %65 = vector.load %arg7[%c0_55, %c0_56, %c0_57] : memref<1x80x8xf32, #tpu.memory_space<vmem>>, vector<1x80x8xf32>
    %66 = vector.shape_cast %65 : vector<1x80x8xf32> to vector<80x8xf32>
    %67 = vector.shape_cast %64 : vector<80x8xf32> to vector<1x80x8xf32>
    tpu.vector_store %arg7[%c0_55, %c0_56, %c0_57], %67 {strides = array<i32>} : memref<1x80x8xf32, #tpu.memory_space<vmem>>, vector<1x80x8xf32>,
    %c0_58 = arith.constant 0 : index
    %c0_59 = arith.constant 0 : index
    %68 = vector.load %arg5[%c0_58, %c0_59] : memref<80x1xf32, #tpu.memory_space<vmem>>, vector<80x1xf32>
    %69 = vector.broadcast %68 : vector<80x1xf32> to vector<80x8xf32>
    %70 = arith.mulf %64, %69 : vector<80x8xf32>
    %cst_60 = arith.constant dense<0.000000e+00> : vector<8xf32>
    %71 = vector.multi_reduction <add>, %70, %cst_60 [0] : vector<80x8xf32> to vector<8xf32>
    %72 = vector.shape_cast %71 : vector<8xf32> to vector<1x8xf32>
    %73 = arith.mulf %70, %70 : vector<80x8xf32>
    %cst_61 = arith.constant dense<0.000000e+00> : vector<8xf32>
    %74 = vector.multi_reduction <add>, %73, %cst_61 [0] : vector<80x8xf32> to vector<8xf32>
    %75 = vector.shape_cast %74 : vector<8xf32> to vector<1x8xf32>
    %76 = tpu.concatenate %72, %75 in 0 : vector<1x8xf32>, vector<1x8xf32> -> vector<2x8xf32>
    %c1_i32 = arith.constant 1 : i32
    %77 = arith.muli %arg0, %c1_i32 : i32
    %78 = arith.addi %77, %arg1 : i32
    %c2_i32 = arith.constant 2 : i32
    %79 = arith.cmpi slt, %78, %c2_i32 : i32
    %80 = arith.extui %79 : i1 to i32
    %c0_i32_62 = arith.constant 0 : i32
    %81 = arith.cmpi ne, %80, %c0_i32_62 : i32
    scf.if %81 {
      %c0_63 = arith.constant 0 : index
      %c0_64 = arith.constant 0 : index
      %c0_65 = arith.constant 0 : index
      %82 = vector.load %arg8[%c0_63, %c0_64, %c0_65] : memref<1x2x8xf32, #tpu.memory_space<vmem>>, vector<1x2x8xf32>
      %83 = vector.shape_cast %82 : vector<1x2x8xf32> to vector<2x8xf32>
      %84 = arith.addf %83, %76 : vector<2x8xf32>
      %c0_66 = arith.constant 0 : index
      %c0_67 = arith.constant 0 : index
      %c0_68 = arith.constant 0 : index
      %85 = vector.load %arg8[%c0_66, %c0_67, %c0_68] : memref<1x2x8xf32, #tpu.memory_space<vmem>>, vector<1x2x8xf32>
      %86 = vector.shape_cast %85 : vector<1x2x8xf32> to vector<2x8xf32>
      %87 = vector.shape_cast %84 : vector<2x8xf32> to vector<1x2x8xf32>
      tpu.vector_store %arg8[%c0_66, %c0_67, %c0_68], %87 {strides = array<i32>} : memref<1x2x8xf32, #tpu.memory_space<vmem>>, vector<1x2x8xf32>,
    } else {
    }
    return
  }
  func.func @transform_0(%arg0: i32, %arg1: i32) -> (i32, i32, i32) {
    %c1_i32 = arith.constant 1 : i32
    %0 = arith.muli %arg0, %c1_i32 : i32
    %1 = arith.addi %0, %arg1 : i32
    %c0_i32 = arith.constant 0 : i32
    %c0_i32_0 = arith.constant 0 : i32
    %c0_i32_1 = arith.constant 0 : i32
    return %1, %c0_i32, %c0_i32_0 : i32, i32, i32
  }
  func.func @transform_1(%arg0: i32, %arg1: i32) -> (i32, i32) {
    %c0_i32 = arith.constant 0 : i32
    %c0_i32_0 = arith.constant 0 : i32
    %c0_i32_1 = arith.constant 0 : i32
    return %c0_i32, %c0_i32_0 : i32, i32
  }
  func.func @transform_2(%arg0: i32, %arg1: i32) -> (i32, i32) {
    %c0_i32 = arith.constant 0 : i32
    %c0_i32_0 = arith.constant 0 : i32
    %c0_i32_1 = arith.constant 0 : i32
    return %c0_i32, %c0_i32_0 : i32, i32
  }
  func.func @transform_3(%arg0: i32, %arg1: i32) -> (i32, i32) {
    %c0_i32 = arith.constant 0 : i32
    %c0_i32_0 = arith.constant 0 : i32
    %c0_i32_1 = arith.constant 0 : i32
    return %c0_i32, %c0_i32_0 : i32, i32
  }
  func.func @transform_4(%arg0: i32, %arg1: i32) -> (i32, i32, i32) {
    %c0_i32 = arith.constant 0 : i32
    %c0_i32_0 = arith.constant 0 : i32
    %c0_i32_1 = arith.constant 0 : i32
    %c0_i32_2 = arith.constant 0 : i32
    return %c0_i32, %c0_i32_0, %c0_i32_1 : i32, i32, i32
  }
  func.func @transform_5(%arg0: i32, %arg1: i32) -> (i32, i32, i32) {
    %c1_i32 = arith.constant 1 : i32
    %0 = arith.muli %arg0, %c1_i32 : i32
    %1 = arith.addi %0, %arg1 : i32
    %c0_i32 = arith.constant 0 : i32
    %c0_i32_0 = arith.constant 0 : i32
    %c0_i32_1 = arith.constant 0 : i32
    return %1, %c0_i32, %c0_i32_0 : i32, i32, i32
  }
  func.func @transform_6(%arg0: i32, %arg1: i32) -> (i32, i32, i32) {
    %c0_i32 = arith.constant 0 : i32
    %c0_i32_0 = arith.constant 0 : i32
    %c0_i32_1 = arith.constant 0 : i32
    return %arg0, %c0_i32, %c0_i32_0 : i32, i32, i32
  }
}

module attributes {stable_mosaic.version = 11 : i64} {
  func.func @_bn_add_act_kernel(%arg0: i32, %arg1: memref<1x80x8xf32, #tpu.memory_space<vmem>>, %arg2: memref<1x8xf32, #tpu.memory_space<vmem>>, %arg3: memref<1x8xf32, #tpu.memory_space<vmem>>, %arg4: memref<1x80x8xf32, #tpu.memory_space<vmem>>, %arg5: memref<1x80x8xf32, #tpu.memory_space<vmem>>) attributes {dimension_semantics = [#tpu.dimension_semantics<parallel>], iteration_bounds = array<i64: 2>, scalar_prefetch = 0 : i64, scratch_operands = 0 : i64, tpu.core_type = #tpu.core_type<tc>, window_params = [{transform_indices = @transform_0, window_bounds = array<i64: 1, 80, 8>}, {pipeline_mode = #tpu.pipeline_mode<synchronous>, transform_indices = @transform_1, window_bounds = array<i64: 1, 8>}, {pipeline_mode = #tpu.pipeline_mode<synchronous>, transform_indices = @transform_2, window_bounds = array<i64: 1, 8>}, {transform_indices = @transform_3, window_bounds = array<i64: 1, 80, 8>}, {transform_indices = @transform_4, window_bounds = array<i64: 1, 80, 8>}]} {
    %c0 = arith.constant 0 : index
    %c0_0 = arith.constant 0 : index
    %c0_1 = arith.constant 0 : index
    %0 = vector.load %arg1[%c0, %c0_0, %c0_1] : memref<1x80x8xf32, #tpu.memory_space<vmem>>, vector<1x80x8xf32>
    %1 = vector.shape_cast %0 : vector<1x80x8xf32> to vector<80x8xf32>
    %c0_2 = arith.constant 0 : index
    %c0_3 = arith.constant 0 : index
    %2 = vector.load %arg2[%c0_2, %c0_3] : memref<1x8xf32, #tpu.memory_space<vmem>>, vector<1x8xf32>
    %3 = vector.broadcast %2 : vector<1x8xf32> to vector<80x8xf32>
    %4 = arith.mulf %1, %3 : vector<80x8xf32>
    %c0_4 = arith.constant 0 : index
    %c0_5 = arith.constant 0 : index
    %5 = vector.load %arg3[%c0_4, %c0_5] : memref<1x8xf32, #tpu.memory_space<vmem>>, vector<1x8xf32>
    %6 = vector.broadcast %5 : vector<1x8xf32> to vector<80x8xf32>
    %7 = arith.addf %4, %6 : vector<80x8xf32>
    %c0_6 = arith.constant 0 : index
    %c0_7 = arith.constant 0 : index
    %c0_8 = arith.constant 0 : index
    %8 = vector.load %arg4[%c0_6, %c0_7, %c0_8] : memref<1x80x8xf32, #tpu.memory_space<vmem>>, vector<1x80x8xf32>
    %9 = vector.shape_cast %8 : vector<1x80x8xf32> to vector<80x8xf32>
    %10 = arith.addf %7, %9 : vector<80x8xf32>
    %cst = arith.constant 0.000000e+00 : f32
    %11 = vector.broadcast %cst : f32 to vector<80x8xf32>
    %12 = arith.maximumf %10, %11 : vector<80x8xf32>
    %c0_9 = arith.constant 0 : index
    %c0_10 = arith.constant 0 : index
    %c0_11 = arith.constant 0 : index
    %13 = vector.load %arg5[%c0_9, %c0_10, %c0_11] : memref<1x80x8xf32, #tpu.memory_space<vmem>>, vector<1x80x8xf32>
    %14 = vector.shape_cast %13 : vector<1x80x8xf32> to vector<80x8xf32>
    %15 = vector.shape_cast %12 : vector<80x8xf32> to vector<1x80x8xf32>
    tpu.vector_store %arg5[%c0_9, %c0_10, %c0_11], %15 {strides = array<i32>} : memref<1x80x8xf32, #tpu.memory_space<vmem>>, vector<1x80x8xf32>,
    return
  }
  func.func @transform_0(%arg0: i32) -> (i32, i32, i32) {
    %c0_i32 = arith.constant 0 : i32
    %c0_i32_0 = arith.constant 0 : i32
    %c0_i32_1 = arith.constant 0 : i32
    return %arg0, %c0_i32, %c0_i32_0 : i32, i32, i32
  }
  func.func @transform_1(%arg0: i32) -> (i32, i32) {
    %c0_i32 = arith.constant 0 : i32
    %c0_i32_0 = arith.constant 0 : i32
    %c0_i32_1 = arith.constant 0 : i32
    return %c0_i32, %c0_i32_0 : i32, i32
  }
  func.func @transform_2(%arg0: i32) -> (i32, i32) {
    %c0_i32 = arith.constant 0 : i32
    %c0_i32_0 = arith.constant 0 : i32
    %c0_i32_1 = arith.constant 0 : i32
    return %c0_i32, %c0_i32_0 : i32, i32
  }
  func.func @transform_3(%arg0: i32) -> (i32, i32, i32) {
    %c0_i32 = arith.constant 0 : i32
    %c0_i32_0 = arith.constant 0 : i32
    %c0_i32_1 = arith.constant 0 : i32
    return %arg0, %c0_i32, %c0_i32_0 : i32, i32, i32
  }
  func.func @transform_4(%arg0: i32) -> (i32, i32, i32) {
    %c0_i32 = arith.constant 0 : i32
    %c0_i32_0 = arith.constant 0 : i32
    %c0_i32_1 = arith.constant 0 : i32
    return %arg0, %c0_i32, %c0_i32_0 : i32, i32, i32
  }
}

</mosaic_0001>

<llo_original>
// kernel: cifar_basic_block_forward.5
$region0: #{cifar_basic_block_forward.5}
  #allocation0 [shape = 'u32[]', space=smem, size = 0x4, offset = 0x4, fixed_abs, tag = 'smem constant byte address 0x4 - core index']
  #allocation1 [shape = 'u32[144,128]{1,0:T(1,128)}', space=vmem, size = 0x12000, scoped, tag = 'internal scratch']
  %s0 = inlined_call_operand.vmem [shape: f32[2,80,8], index: 0, kind: input, shape index: {}]
  %s1 = inlined_call_operand.vmem [shape: f32[1,8], index: 1, kind: input, shape index: {}]
  %s2 = inlined_call_operand.vmem [shape: f32[1,8], index: 2, kind: input, shape index: {}]
  %s3 = inlined_call_operand.vmem [shape: f32[2,80,8], index: 3, kind: input, shape index: {}]
  %s4 = inlined_call_operand.vmem [shape: f32[2,80,8], index: 4, kind: output, shape index: {}]
  %s5 = sld [smem:[#allocation0]]
  $region49: #{cifar_basic_block_forward.5} parent=0
    _
  %s7 = ssub.s32 1, %s5
  %s8 = scalar_select 0, %s7, %s5
  loop: start=0, step=1, limit=4
  $region2: #{cifar_basic_block_forward.5} parent=0 // loop_pre_header
    _
  $region3: #{cifar_basic_block_forward.5} parent=0 // loop_header
    %s10 = sphi 0, %s14
    %p11 = scmp.ge.s32.totalorder %s10, 4
    %s20 = sphi 0, %s22
    %s23 = sphi 0, %s20
    %s24 = sphi 0, %s23
    %s40 = sphi 0, %s24
    %s44 = sphi 0, %s44
    %s46 = sphi 0, %s44
    %s47 = sphi 0, %s46
    %s61 = sphi 0, %s47
    %s65 = sphi 0, %s65
    %s67 = sphi 0, %s65
    %s68 = sphi 0, %s67
    %s82 = sphi 0, %s68
    %s88 = sphi 0, %s90
    %s91 = sphi 0, %s88
    %s92 = sphi 0, %s91
    %s108 = sphi 0, %s92
    %s114 = sphi 0, %s116
    %s117 = sphi 0, %s114
    %s118 = sphi 0, %s117
    %s134 = sphi 0, %s118
  $region4: #{cifar_basic_block_forward.5} parent=0 // loop_header_branch
    %13 = sbr.rel (%p11) target = $region8
  $region5: #{cifar_basic_block_forward.5} parent=0 // loop_body
    %s15 = ssub.s32 %s10, 1
    %s16 = ssub.s32 %s10, 2
    %s17 = sadd.s32 %s10, 1
    %s18 = ssub.s32 %s10, %s17
    %p19 = scmp.eq.s32.totalorder %s18, 0
    %s21 = sadd.s32 %s20, 1
    %s22 = scalar_select %p19, %s20, %s21
    %p25 = pneg %p19
    %p26 = scmp.eq.s32.totalorder %s10, 1
    %p27 = por %p25, %p26
    %p28 = scmp.ne.s32.totalorder %s20, %s23
    %p29 = scmp.eq.s32.totalorder %s10, 0
    %p30 = por %p28, %p29
    %p31 = scmp.ne.s32.totalorder %s20, %s23
    %p32 = scmp.eq.s32.totalorder %s15, 1
    %p33 = por %p31, %p32
    %p34 = scmp.ne.s32.totalorder %s23, %s24
    %p35 = scmp.eq.s32.totalorder %s15, 0
    %p36 = por %p34, %p35
    %p37 = scmp.ne.s32.totalorder %s23, %s24
    %p38 = scmp.eq.s32.totalorder %s16, 1
    %p39 = por %p37, %p38
    %p41 = scmp.ne.s32.totalorder %s24, %s40
    %p42 = scmp.eq.s32.totalorder %s16, 0
    %p43 = por %p41, %p42
    %s45 = sadd.s32 %s44, 1
    %p48 = scmp.eq.s32.totalorder %s10, 1
    %p49 = scmp.ne.s32.totalorder %s44, %s46
    %p50 = scmp.eq.s32.totalorder %s10, 0
    %p51 = por %p49, %p50
    %p52 = scmp.ne.s32.totalorder %s44, %s46
    %p53 = scmp.eq.s32.totalorder %s15, 1
    %p54 = por %p52, %p53
    %p55 = scmp.ne.s32.totalorder %s46, %s47
    %p56 = scmp.eq.s32.totalorder %s15, 0
    %p57 = por %p55, %p56
    %p58 = scmp.ne.s32.totalorder %s46, %s47
    %p59 = scmp.eq.s32.totalorder %s16, 1
    %p60 = por %p58, %p59
    %p62 = scmp.ne.s32.totalorder %s47, %s61
    %p63 = scmp.eq.s32.totalorder %s16, 0
    %p64 = por %p62, %p63
    %s66 = sadd.s32 %s65, 1
    %p69 = scmp.eq.s32.totalorder %s10, 1
    %p70 = scmp.ne.s32.totalorder %s65, %s67
    %p71 = scmp.eq.s32.totalorder %s10, 0
    %p72 = por %p70, %p71
    %p73 = scmp.ne.s32.totalorder %s65, %s67
    %p74 = scmp.eq.s32.totalorder %s15, 1
    %p75 = por %p73, %p74
    %p76 = scmp.ne.s32.totalorder %s67, %s68
    %p77 = scmp.eq.s32.totalorder %s15, 0
    %p78 = por %p76, %p77
    %p79 = scmp.ne.s32.totalorder %s67, %s68
    %p80 = scmp.eq.s32.totalorder %s16, 1
    %p81 = por %p79, %p80
    %p83 = scmp.ne.s32.totalorder %s68, %s82
    %p84 = scmp.eq.s32.totalorder %s16, 0
    %p85 = por %p83, %p84
    %s86 = ssub.s32 %s10, %s17
    %p87 = scmp.eq.s32.totalorder %s86, 0
    %s89 = sadd.s32 %s88, 1
    %s90 = scalar_select %p87, %s88, %s89
    %p93 = pneg %p87
    %p94 = scmp.eq.s32.totalorder %s10, 1
    %p95 = por %p93, %p94
    %p96 = scmp.ne.s32.totalorder %s88, %s91
    %p97 = scmp.eq.s32.totalorder %s10, 0
    %p98 = por %p96, %p97
    %p99 = scmp.ne.s32.totalorder %s88, %s91
    %p100 = scmp.eq.s32.totalorder %s15, 1
    %p101 = por %p99, %p100
    %p102 = scmp.ne.s32.totalorder %s91, %s92
    %p103 = scmp.eq.s32.totalorder %s15, 0
    %p104 = por %p102, %p103
    %p105 = scmp.ne.s32.totalorder %s91, %s92
    %p106 = scmp.eq.s32.totalorder %s16, 1
    %p107 = por %p105, %p106
    %p109 = scmp.ne.s32.totalorder %s92, %s108
    %p110 = scmp.eq.s32.totalorder %s16, 0
    %p111 = por %p109, %p110
    %s112 = ssub.s32 %s10, %s17
    %p113 = scmp.eq.s32.totalorder %s112, 0
    %s115 = sadd.s32 %s114, 1
    %s116 = scalar_select %p113, %s114, %s115
    %p119 = pneg %p113
    %p120 = scmp.eq.s32.totalorder %s10, 1
    %p121 = por %p119, %p120
    %p122 = scmp.ne.s32.totalorder %s114, %s117
    %p123 = scmp.eq.s32.totalorder %s10, 0
    %p124 = por %p122, %p123
    %p125 = scmp.ne.s32.totalorder %s114, %s117
    %p126 = scmp.eq.s32.totalorder %s15, 1
    %p127 = por %p125, %p126
    %p128 = scmp.ne.s32.totalorder %s117, %s118
    %p129 = scmp.eq.s32.totalorder %s15, 0
    %p130 = por %p128, %p129
    %p131 = scmp.ne.s32.totalorder %s117, %s118
    %p132 = scmp.eq.s32.totalorder %s16, 1
    %p133 = por %p131, %p132
    %p135 = scmp.ne.s32.totalorder %s118, %s134
    %p136 = scmp.eq.s32.totalorder %s16, 0
    %p137 = por %p135, %p136
    %p138 = scmp.le.s32.totalorder 1, %s10
    %p139 = scmp.lt.s32.totalorder %s10, 3
    %p140 = pnand %p138, %p139
    %p141 = pneg %p140
    // Predicated region
    $region9: #{cifar_basic_block_forward.5} parent=5 // pred_check
      _
    $region10: #{cifar_basic_block_forward.5} parent=5 // pred_check_branch
      %143 = sbr.rel (%p140) target = $region12
    $region11: #{cifar_basic_block_forward.5} parent=5 // pred_region
      %s144 = ssub.s32 %s10, 1
      // Predicated region
      $region13: #{cifar_basic_block_forward.5} parent=11 // pred_check
        %p145 = pneg %p57
      $region14: #{cifar_basic_block_forward.5} parent=11 // pred_check_branch
        %147 = sbr.rel (%p145) target = $region16
      $region15: #{cifar_basic_block_forward.5} parent=11 // pred_region
        _
      $region16: #{cifar_basic_block_forward.5} parent=11 // pred_fallthru
        _
      // Predicated region
      $region17: #{cifar_basic_block_forward.5} parent=11 // pred_check
        %p148 = pneg %p78
      $region18: #{cifar_basic_block_forward.5} parent=11 // pred_check_branch
        %150 = sbr.rel (%p148) target = $region20
      $region19: #{cifar_basic_block_forward.5} parent=11 // pred_region
        _
      $region20: #{cifar_basic_block_forward.5} parent=11 // pred_fallthru
        _
    $region12: #{cifar_basic_block_forward.5} parent=5 // pred_fallthru
      _
    %p151 = scmp.lt.s32.totalorder %s10, 2
    // Predicated region
    $region21: #{cifar_basic_block_forward.5} parent=5 // pred_check
      %p152 = pneg %p151
    $region22: #{cifar_basic_block_forward.5} parent=5 // pred_check_branch
      %154 = sbr.rel (%p152) target = $region24
    $region23: #{cifar_basic_block_forward.5} parent=5 // pred_region
      // Predicated region
      $region25: #{cifar_basic_block_forward.5} parent=23 // pred_check
        %p155 = pneg %p30
      $region26: #{cifar_basic_block_forward.5} parent=23 // pred_check_branch
        %157 = sbr.rel (%p155) target = $region28
      $region27: #{cifar_basic_block_forward.5} parent=23 // pred_region
        %p158 = scmp.lt.s32.totalorder %s10, 1
        %s159 = scalar_select %p158, %s10, 1
        %s160 = smul.addr %s159, 10
        %s161 = smul.addr %s160, 8
        %s162 = scalar_lea.vmem %s0, %s161
      $region28: #{cifar_basic_block_forward.5} parent=23 // pred_fallthru
        _
      // Predicated region
      $region29: #{cifar_basic_block_forward.5} parent=23 // pred_check
        %p163 = pneg %p98
      $region30: #{cifar_basic_block_forward.5} parent=23 // pred_check_branch
        %165 = sbr.rel (%p163) target = $region32
      $region31: #{cifar_basic_block_forward.5} parent=23 // pred_region
        %p166 = scmp.lt.s32.totalorder %s10, 1
        %s167 = scalar_select %p166, %s10, 1
        %s168 = smul.addr %s167, 10
        %s169 = smul.addr %s168, 8
        %s170 = scalar_lea.vmem %s3, %s169
      $region32: #{cifar_basic_block_forward.5} parent=23 // pred_fallthru
        _
    $region24: #{cifar_basic_block_forward.5} parent=5 // pred_fallthru
      _
    %p171 = scmp.le.s32.totalorder 1, %s10
    %p172 = scmp.lt.s32.totalorder %s10, 3
    %p173 = pnand %p171, %p172
    %p174 = pneg %p173
    // Predicated region
    $region33: #{cifar_basic_block_forward.5} parent=5 // pred_check
      _
    $region34: #{cifar_basic_block_forward.5} parent=5 // pred_check_branch
      %176 = sbr.rel (%p173) target = $region36
    $region35: #{cifar_basic_block_forward.5} parent=5 // pred_region
      %s177 = ssub.s32 %s10, 1
      %p178 = scmp.lt.s32.totalorder %s15, 1
      %s179 = scalar_select %p178, %s15, 1
      %s180 = smul.addr %s179, 10
      %s181 = smul.addr %s180, 8
      %s182 = scalar_lea.vmem %s0, %s181
      %p183 = pneg %p36
      %p184 = pneg %p33
      %p185 = pneg %p57
      %p186 = pneg %p54
      %p187 = pneg %p78
      %p188 = pneg %p75
      %p189 = scmp.lt.s32.totalorder %s15, 1
      %s190 = scalar_select %p189, %s15, 1
      %s191 = smul.addr %s190, 10
      %s192 = smul.addr %s191, 8
      %s193 = scalar_lea.vmem %s3, %s192
      %p194 = pneg %p104
      %p195 = pneg %p101
      %p196 = pneg %p130
      %p197 = pneg %p127
      %p198 = scmp.lt.s32.totalorder %s15, 1
      %s199 = scalar_select %p198, %s15, 1
      %s200 = smul.addr %s199, 10
      %s201 = smul.addr %s200, 8
      %s202 = scalar_lea.vmem %s4, %s201
      %p203 = scmp.lt.s32.totalorder %s15, 1
      %s204 = scalar_select %p203, %s15, 1
      %s205 = smul.addr %s204, 10
      %s206 = smul.addr %s205, 8
      %s207 = scalar_lea.vmem %s0, %s206
      %p208 = scmp.lt.s32.totalorder %s15, 1
      %s209 = scalar_select %p208, %s15, 1
      %s210 = smul.addr %s209, 10
      %s211 = smul.addr %s210, 8
      %s212 = scalar_lea.vmem %s3, %s211
      %p213 = scmp.lt.s32.totalorder %s15, 1
      %s214 = scalar_select %p213, %s15, 1
      %s215 = smul.addr %s214, 10
      %s216 = smul.addr %s215, 8
      %s217 = scalar_lea.vmem %s4, %s216
      %v218 = vld [vmem:[%s207] sm:$0xff]
      %v219 = vld [vmem:[%s207 + $0x8] sm:$0xff]
      %v220 = vld [vmem:[%s207 + $0x10] sm:$0xff]
      %v221 = vld [vmem:[%s207 + $0x18] sm:$0xff]
      %v222 = vld [vmem:[%s207 + $0x20] sm:$0xff]
      %v223 = vld [vmem:[%s207 + $0x28] sm:$0xff]
      %v224 = vld [vmem:[%s207 + $0x30] sm:$0xff]
      %v225 = vld [vmem:[%s207 + $0x38] sm:$0xff]
      %v226 = vld [vmem:[%s207 + $0x40] sm:$0xff]
      %v227 = vld [vmem:[%s207 + $0x48] sm:$0xff]
      %v228 = vld [vmem:[%s1] sm:$0x1]
      %v230 = vlaneseq
      %v231 = vshrl.u32 %v230, 7
      %v232 = vsub.s32 0, %v231
      %v233 = vrot.slane %v228, %v232
      %v235 = vmul.f32 %v218, %v233
      %v236 = vmul.f32 %v219, %v233
      %v237 = vmul.f32 %v220, %v233
      %v238 = vmul.f32 %v221, %v233
      %v239 = vmul.f32 %v222, %v233
      %v240 = vmul.f32 %v223, %v233
      %v241 = vmul.f32 %v224, %v233
      %v242 = vmul.f32 %v225, %v233
      %v243 = vmul.f32 %v226, %v233
      %v244 = vmul.f32 %v227, %v233
      %v245 = vld [vmem:[%s2] sm:$0x1]
      %v247 = vlaneseq
      %v248 = vshrl.u32 %v247, 7
      %v249 = vsub.s32 0, %v248
      %v250 = vrot.slane %v245, %v249
      %v252 = vadd.f32 %v235, %v250
      %v253 = vadd.f32 %v236, %v250
      %v254 = vadd.f32 %v237, %v250
      %v255 = vadd.f32 %v238, %v250
      %v256 = vadd.f32 %v239, %v250
      %v257 = vadd.f32 %v240, %v250
      %v258 = vadd.f32 %v241, %v250
      %v259 = vadd.f32 %v242, %v250
      %v260 = vadd.f32 %v243, %v250
      %v261 = vadd.f32 %v244, %v250
      %v262 = vld [vmem:[%s212] sm:$0xff]
      %v263 = vld [vmem:[%s212 + $0x8] sm:$0xff]
      %v264 = vld [vmem:[%s212 + $0x10] sm:$0xff]
      %v265 = vld [vmem:[%s212 + $0x18] sm:$0xff]
      %v266 = vld [vmem:[%s212 + $0x20] sm:$0xff]
      %v267 = vld [vmem:[%s212 + $0x28] sm:$0xff]
      %v268 = vld [vmem:[%s212 + $0x30] sm:$0xff]
      %v269 = vld [vmem:[%s212 + $0x38] sm:$0xff]
      %v270 = vld [vmem:[%s212 + $0x40] sm:$0xff]
      %v271 = vld [vmem:[%s212 + $0x48] sm:$0xff]
      %v272 = vadd.f32 %v252, %v262
      %v273 = vadd.f32 %v253, %v263
      %v274 = vadd.f32 %v254, %v264
      %v275 = vadd.f32 %v255, %v265
      %v276 = vadd.f32 %v256, %v266
      %v277 = vadd.f32 %v257, %v267
      %v278 = vadd.f32 %v258, %v268
      %v279 = vadd.f32 %v259, %v269
      %v280 = vadd.f32 %v260, %v270
      %v281 = vadd.f32 %v261, %v271
      %v282 = vmax.f32 %v272, 0.0
      %v283 = vmax.f32 %v273, 0.0
      %v284 = vmax.f32 %v274, 0.0
      %v285 = vmax.f32 %v275, 0.0
      %v286 = vmax.f32 %v276, 0.0
      %v287 = vmax.f32 %v277, 0.0
      %v288 = vmax.f32 %v278, 0.0
      %v289 = vmax.f32 %v279, 0.0
      %v290 = vmax.f32 %v280, 0.0
      %v291 = vmax.f32 %v281, 0.0
      %vm292 = vcmask 64512
      %293 = vst.msk [vmem:[%s217] sm:$0xff] %vm292, %v282
      %294 = vst.msk [vmem:[%s217 + $0x8] sm:$0xff] %vm292, %v283
      %295 = vst.msk [vmem:[%s217 + $0x10] sm:$0xff] %vm292, %v284
      %296 = vst.msk [vmem:[%s217 + $0x18] sm:$0xff] %vm292, %v285
      %297 = vst.msk [vmem:[%s217 + $0x20] sm:$0xff] %vm292, %v286
      %298 = vst.msk [vmem:[%s217 + $0x28] sm:$0xff] %vm292, %v287
      %299 = vst.msk [vmem:[%s217 + $0x30] sm:$0xff] %vm292, %v288
      %300 = vst.msk [vmem:[%s217 + $0x38] sm:$0xff] %vm292, %v289
      %301 = vst.msk [vmem:[%s217 + $0x40] sm:$0xff] %vm292, %v290
      %302 = vst.msk [vmem:[%s217 + $0x48] sm:$0xff] %vm292, %v291
      %p303 = scmp.lt.s32.totalorder %s15, 1
      %s304 = scalar_select %p303, %s15, 1
      %s305 = smul.addr %s304, 10
      %s306 = smul.addr %s305, 8
      %s307 = scalar_lea.vmem %s4, %s306
      // Predicated region
      $region37: #{cifar_basic_block_forward.5} parent=35 // pred_check
        %p308 = pneg %p127
      $region38: #{cifar_basic_block_forward.5} parent=35 // pred_check_branch
        %310 = sbr.rel (%p308) target = $region40
      $region39: #{cifar_basic_block_forward.5} parent=35 // pred_region
        _
      $region40: #{cifar_basic_block_forward.5} parent=35 // pred_fallthru
        _
    $region36: #{cifar_basic_block_forward.5} parent=5 // pred_fallthru
      _
    %p311 = scmp.le.s32.totalorder 2, %s10
    // Predicated region
    $region41: #{cifar_basic_block_forward.5} parent=5 // pred_check
      %p312 = pneg %p311
    $region42: #{cifar_basic_block_forward.5} parent=5 // pred_check_branch
      %314 = sbr.rel (%p312) target = $region44
    $region43: #{cifar_basic_block_forward.5} parent=5 // pred_region
      %s315 = ssub.s32 %s10, 2
      // Predicated region
      $region45: #{cifar_basic_block_forward.5} parent=43 // pred_check
        %p316 = pneg %p133
      $region46: #{cifar_basic_block_forward.5} parent=43 // pred_check_branch
        %318 = sbr.rel (%p316) target = $region48
      $region47: #{cifar_basic_block_forward.5} parent=43 // pred_region
        %p319 = scmp.lt.s32.totalorder %s16, 1
        %s320 = scalar_select %p319, %s16, 1
        %s321 = smul.addr %s320, 10
        %s322 = smul.addr %s321, 8
        %s323 = scalar_lea.vmem %s4, %s322
      $region48: #{cifar_basic_block_forward.5} parent=43 // pred_fallthru
        _
    $region44: #{cifar_basic_block_forward.5} parent=5 // pred_fallthru
      _
  $region6: #{cifar_basic_block_forward.5} parent=0 // loop_footer
    %s14 = sadd.s32 1, %s10
  $region7: #{cifar_basic_block_forward.5} parent=0 // loop_footer_branch
    %9 = sbr.rel target = $region3
  $region8: #{cifar_basic_block_forward.5} parent=0 // loop_exit
    _

// kernel: cifar_basic_block_forward.4
$region0: #{cifar_basic_block_forward.4}
  #allocation0 [shape = 'u32[]', space=smem, size = 0x4, offset = 0x4, fixed_abs, tag = 'smem constant byte address 0x4 - core index']
  #allocation1 [shape = 'u32[144,128]{1,0:T(1,128)}', space=vmem, size = 0x12000, scoped, tag = 'internal scratch']
  #allocation2 [shape = 'f32[112,8]{1,0:T(8,128)}', space=vmem, size = 0xe000, scoped, tag = 'scratch operand']
  %s0 = inlined_call_operand.vmem [shape: f32[2,80,8], index: 0, kind: input, shape index: {}]
  %s1 = inlined_call_operand.vmem [shape: f32[1,8], index: 1, kind: input, shape index: {}]
  %s2 = inlined_call_operand.vmem [shape: f32[1,8], index: 2, kind: input, shape index: {}]
  %s3 = inlined_call_operand.vmem [shape: f32[80,1], index: 3, kind: input, shape index: {}]
  %s4 = inlined_call_operand.vmem [shape: f32[9,8,8], index: 4, kind: input, shape index: {}]
  %s5 = inlined_call_operand.vmem [shape: f32[2,80,8], index: 5, kind: output, shape index: {0}]
  %s6 = inlined_call_operand.vmem [shape: f32[2,2,8], index: 6, kind: output, shape index: {1}]
  %7 = xla_tuple %s5, %s6
  %s8 = sld [smem:[#allocation0]]
  $region69: #{cifar_basic_block_forward.4} parent=0
    _
  %s10 = ssub.s32 1, %s8
  %s11 = scalar_select 0, %s10, %s8
  loop: start=0, step=1, limit=4
  $region2: #{cifar_basic_block_forward.4} parent=0 // loop_pre_header
    _
  $region3: #{cifar_basic_block_forward.4} parent=0 // loop_header
    %s13 = sphi 0, %s17
    %p14 = scmp.ge.s32.totalorder %s13, 4
    %s20 = sphi 0, %s32
    %s21 = sphi 0, %s28
    %s22 = sphi 0, %s20
    %s23 = sphi 0, %s21
    %s24 = sphi 0, %s22
    %s25 = sphi 0, %s23
    %s37 = sphi 0, %s39
    %s40 = sphi 0, %s37
    %s41 = sphi 0, %s40
    %s57 = sphi 0, %s41
    %s61 = sphi 0, %s61
    %s63 = sphi 0, %s61
    %s64 = sphi 0, %s63
    %s78 = sphi 0, %s64
    %s82 = sphi 0, %s82
    %s84 = sphi 0, %s82
    %s85 = sphi 0, %s84
    %s99 = sphi 0, %s85
    %s103 = sphi 0, %s103
    %s105 = sphi 0, %s103
    %s106 = sphi 0, %s105
    %s120 = sphi 0, %s106
    %s124 = sphi 0, %s124
    %s126 = sphi 0, %s124
    %s127 = sphi 0, %s126
    %s141 = sphi 0, %s127
    %s149 = sphi 0, %s151
    %s152 = sphi 0, %s149
    %s153 = sphi 0, %s152
    %s169 = sphi 0, %s153
    %s175 = sphi 0, %s177
    %s178 = sphi 0, %s175
    %s179 = sphi 0, %s178
    %s195 = sphi 0, %s179
  $region4: #{cifar_basic_block_forward.4} parent=0 // loop_header_branch
    %16 = sbr.rel (%p14) target = $region8
  $region5: #{cifar_basic_block_forward.4} parent=0 // loop_body
    %s18 = ssub.s32 %s13, 1
    %s19 = ssub.s32 %s13, 2
    %s26 = sadd.s32 1, %s21
    %p27 = scmp.ge.s32.totalorder %s26, 1
    %s28 = scalar_select %p27, 0, %s26
    %s29 = sadd.s32 1, %s20
    %s30 = scalar_select %p27, %s29, %s20
    %p31 = scmp.ge.s32.totalorder %s30, 2
    %s32 = scalar_select %p31, 0, %s30
    %s33 = sadd.s32 %s20, %s21
    %s34 = sadd.s32 %s32, %s28
    %s35 = ssub.s32 %s33, %s34
    %p36 = scmp.eq.s32.totalorder %s35, 0
    %s38 = sadd.s32 %s37, 1
    %s39 = scalar_select %p36, %s37, %s38
    %p42 = pneg %p36
    %p43 = scmp.eq.s32.totalorder %s13, 1
    %p44 = por %p42, %p43
    %p45 = scmp.ne.s32.totalorder %s37, %s40
    %p46 = scmp.eq.s32.totalorder %s13, 0
    %p47 = por %p45, %p46
    %p48 = scmp.ne.s32.totalorder %s37, %s40
    %p49 = scmp.eq.s32.totalorder %s18, 1
    %p50 = por %p48, %p49
    %p51 = scmp.ne.s32.totalorder %s40, %s41
    %p52 = scmp.eq.s32.totalorder %s18, 0
    %p53 = por %p51, %p52
    %p54 = scmp.ne.s32.totalorder %s40, %s41
    %p55 = scmp.eq.s32.totalorder %s19, 1
    %p56 = por %p54, %p55
    %p58 = scmp.ne.s32.totalorder %s41, %s57
    %p59 = scmp.eq.s32.totalorder %s19, 0
    %p60 = por %p58, %p59
    %s62 = sadd.s32 %s61, 1
    %p65 = scmp.eq.s32.totalorder %s13, 1
    %p66 = scmp.ne.s32.totalorder %s61, %s63
    %p67 = scmp.eq.s32.totalorder %s13, 0
    %p68 = por %p66, %p67
    %p69 = scmp.ne.s32.totalorder %s61, %s63
    %p70 = scmp.eq.s32.totalorder %s18, 1
    %p71 = por %p69, %p70
    %p72 = scmp.ne.s32.totalorder %s63, %s64
    %p73 = scmp.eq.s32.totalorder %s18, 0
    %p74 = por %p72, %p73
    %p75 = scmp.ne.s32.totalorder %s63, %s64
    %p76 = scmp.eq.s32.totalorder %s19, 1
    %p77 = por %p75, %p76
    %p79 = scmp.ne.s32.totalorder %s64, %s78
    %p80 = scmp.eq.s32.totalorder %s19, 0
    %p81 = por %p79, %p80
    %s83 = sadd.s32 %s82, 1
    %p86 = scmp.eq.s32.totalorder %s13, 1
    %p87 = scmp.ne.s32.totalorder %s82, %s84
    %p88 = scmp.eq.s32.totalorder %s13, 0
    %p89 = por %p87, %p88
    %p90 = scmp.ne.s32.totalorder %s82, %s84
    %p91 = scmp.eq.s32.totalorder %s18, 1
    %p92 = por %p90, %p91
    %p93 = scmp.ne.s32.totalorder %s84, %s85
    %p94 = scmp.eq.s32.totalorder %s18, 0
    %p95 = por %p93, %p94
    %p96 = scmp.ne.s32.totalorder %s84, %s85
    %p97 = scmp.eq.s32.totalorder %s19, 1
    %p98 = por %p96, %p97
    %p100 = scmp.ne.s32.totalorder %s85, %s99
    %p101 = scmp.eq.s32.totalorder %s19, 0
    %p102 = por %p100, %p101
    %s104 = sadd.s32 %s103, 1
    %p107 = scmp.eq.s32.totalorder %s13, 1
    %p108 = scmp.ne.s32.totalorder %s103, %s105
    %p109 = scmp.eq.s32.totalorder %s13, 0
    %p110 = por %p108, %p109
    %p111 = scmp.ne.s32.totalorder %s103, %s105
    %p112 = scmp.eq.s32.totalorder %s18, 1
    %p113 = por %p111, %p112
    %p114 = scmp.ne.s32.totalorder %s105, %s106
    %p115 = scmp.eq.s32.totalorder %s18, 0
    %p116 = por %p114, %p115
    %p117 = scmp.ne.s32.totalorder %s105, %s106
    %p118 = scmp.eq.s32.totalorder %s19, 1
    %p119 = por %p117, %p118
    %p121 = scmp.ne.s32.totalorder %s106, %s120
    %p122 = scmp.eq.s32.totalorder %s19, 0
    %p123 = por %p121, %p122
    %s125 = sadd.s32 %s124, 1
    %p128 = scmp.eq.s32.totalorder %s13, 1
    %p129 = scmp.ne.s32.totalorder %s124, %s126
    %p130 = scmp.eq.s32.totalorder %s13, 0
    %p131 = por %p129, %p130
    %p132 = scmp.ne.s32.totalorder %s124, %s126
    %p133 = scmp.eq.s32.totalorder %s18, 1
    %p134 = por %p132, %p133
    %p135 = scmp.ne.s32.totalorder %s126, %s127
    %p136 = scmp.eq.s32.totalorder %s18, 0
    %p137 = por %p135, %p136
    %p138 = scmp.ne.s32.totalorder %s126, %s127
    %p139 = scmp.eq.s32.totalorder %s19, 1
    %p140 = por %p138, %p139
    %p142 = scmp.ne.s32.totalorder %s127, %s141
    %p143 = scmp.eq.s32.totalorder %s19, 0
    %p144 = por %p142, %p143
    %s145 = sadd.s32 %s20, %s21
    %s146 = sadd.s32 %s32, %s28
    %s147 = ssub.s32 %s145, %s146
    %p148 = scmp.eq.s32.totalorder %s147, 0
    %s150 = sadd.s32 %s149, 1
    %s151 = scalar_select %p148, %s149, %s150
    %p154 = pneg %p148
    %p155 = scmp.eq.s32.totalorder %s13, 1
    %p156 = por %p154, %p155
    %p157 = scmp.ne.s32.totalorder %s149, %s152
    %p158 = scmp.eq.s32.totalorder %s13, 0
    %p159 = por %p157, %p158
    %p160 = scmp.ne.s32.totalorder %s149, %s152
    %p161 = scmp.eq.s32.totalorder %s18, 1
    %p162 = por %p160, %p161
    %p163 = scmp.ne.s32.totalorder %s152, %s153
    %p164 = scmp.eq.s32.totalorder %s18, 0
    %p165 = por %p163, %p164
    %p166 = scmp.ne.s32.totalorder %s152, %s153
    %p167 = scmp.eq.s32.totalorder %s19, 1
    %p168 = por %p166, %p167
    %p170 = scmp.ne.s32.totalorder %s153, %s169
    %p171 = scmp.eq.s32.totalorder %s19, 0
    %p172 = por %p170, %p171
    %s173 = ssub.s32 %s20, %s32
    %p174 = scmp.eq.s32.totalorder %s173, 0
    %s176 = sadd.s32 %s175, 1
    %s177 = scalar_select %p174, %s175, %s176
    %p180 = pneg %p174
    %p181 = scmp.eq.s32.totalorder %s13, 1
    %p182 = por %p180, %p181
    %p183 = scmp.ne.s32.totalorder %s175, %s178
    %p184 = scmp.eq.s32.totalorder %s13, 0
    %p185 = por %p183, %p184
    %p186 = scmp.ne.s32.totalorder %s175, %s178
    %p187 = scmp.eq.s32.totalorder %s18, 1
    %p188 = por %p186, %p187
    %p189 = scmp.ne.s32.totalorder %s178, %s179
    %p190 = scmp.eq.s32.totalorder %s18, 0
    %p191 = por %p189, %p190
    %p192 = scmp.ne.s32.totalorder %s178, %s179
    %p193 = scmp.eq.s32.totalorder %s19, 1
    %p194 = por %p192, %p193
    %p196 = scmp.ne.s32.totalorder %s179, %s195
    %p197 = scmp.eq.s32.totalorder %s19, 0
    %p198 = por %p196, %p197
    %p199 = scmp.le.s32.totalorder 1, %s13
    %p200 = scmp.lt.s32.totalorder %s13, 3
    %p201 = pnand %p199, %p200
    %p202 = pneg %p201
    // Predicated region
    $region9: #{cifar_basic_block_forward.4} parent=5 // pred_check
      _
    $region10: #{cifar_basic_block_forward.4} parent=5 // pred_check_branch
      %204 = sbr.rel (%p201) target = $region12
    $region11: #{cifar_basic_block_forward.4} parent=5 // pred_region
      %s205 = ssub.s32 %s13, 1
      // Predicated region
      $region13: #{cifar_basic_block_forward.4} parent=11 // pred_check
        %p206 = pneg %p74
      $region14: #{cifar_basic_block_forward.4} parent=11 // pred_check_branch
        %208 = sbr.rel (%p206) target = $region16
      $region15: #{cifar_basic_block_forward.4} parent=11 // pred_region
        _
      $region16: #{cifar_basic_block_forward.4} parent=11 // pred_fallthru
        _
      // Predicated region
      $region17: #{cifar_basic_block_forward.4} parent=11 // pred_check
        %p209 = pneg %p95
      $region18: #{cifar_basic_block_forward.4} parent=11 // pred_check_branch
        %211 = sbr.rel (%p209) target = $region20
      $region19: #{cifar_basic_block_forward.4} parent=11 // pred_region
        _
      $region20: #{cifar_basic_block_forward.4} parent=11 // pred_fallthru
        _
      // Predicated region
      $region21: #{cifar_basic_block_forward.4} parent=11 // pred_check
        %p212 = pneg %p116
      $region22: #{cifar_basic_block_forward.4} parent=11 // pred_check_branch
        %214 = sbr.rel (%p212) target = $region24
      $region23: #{cifar_basic_block_forward.4} parent=11 // pred_region
        _
      $region24: #{cifar_basic_block_forward.4} parent=11 // pred_fallthru
        _
      // Predicated region
      $region25: #{cifar_basic_block_forward.4} parent=11 // pred_check
        %p215 = pneg %p137
      $region26: #{cifar_basic_block_forward.4} parent=11 // pred_check_branch
        %217 = sbr.rel (%p215) target = $region28
      $region27: #{cifar_basic_block_forward.4} parent=11 // pred_region
        _
      $region28: #{cifar_basic_block_forward.4} parent=11 // pred_fallthru
        _
    $region12: #{cifar_basic_block_forward.4} parent=5 // pred_fallthru
      _
    %p218 = scmp.lt.s32.totalorder %s13, 2
    // Predicated region
    $region29: #{cifar_basic_block_forward.4} parent=5 // pred_check
      %p219 = pneg %p218
    $region30: #{cifar_basic_block_forward.4} parent=5 // pred_check_branch
      %221 = sbr.rel (%p219) target = $region32
    $region31: #{cifar_basic_block_forward.4} parent=5 // pred_region
      // Predicated region
      $region33: #{cifar_basic_block_forward.4} parent=31 // pred_check
        %p222 = pneg %p47
      $region34: #{cifar_basic_block_forward.4} parent=31 // pred_check_branch
        %224 = sbr.rel (%p222) target = $region36
      $region35: #{cifar_basic_block_forward.4} parent=31 // pred_region
        %s225 = sadd.s32 %s20, %s21
        %p226 = scmp.lt.s32.totalorder %s225, 1
        %s227 = scalar_select %p226, %s225, 1
        %s228 = smul.addr %s227, 10
        %s229 = smul.addr %s228, 8
        %s230 = scalar_lea.vmem %s0, %s229
        %s231 = sadd.s32 %s20, %s21
      $region36: #{cifar_basic_block_forward.4} parent=31 // pred_fallthru
        _
    $region32: #{cifar_basic_block_forward.4} parent=5 // pred_fallthru
      _
    %p232 = scmp.le.s32.totalorder 1, %s13
    %p233 = scmp.lt.s32.totalorder %s13, 3
    %p234 = pnand %p232, %p233
    %p235 = pneg %p234
    // Predicated region
    $region37: #{cifar_basic_block_forward.4} parent=5 // pred_check
      _
    $region38: #{cifar_basic_block_forward.4} parent=5 // pred_check_branch
      %237 = sbr.rel (%p234) target = $region40
    $region39: #{cifar_basic_block_forward.4} parent=5 // pred_region
      %s238 = ssub.s32 %s13, 1
      %s239 = sadd.s32 %s22, %s23
      %p240 = scmp.lt.s32.totalorder %s239, 1
      %s241 = scalar_select %p240, %s239, 1
      %s242 = smul.addr %s241, 10
      %s243 = smul.addr %s242, 8
      %s244 = scalar_lea.vmem %s0, %s243
      %p245 = pneg %p53
      %p246 = pneg %p50
      %p247 = pneg %p74
      %p248 = pneg %p71
      %p249 = pneg %p95
      %p250 = pneg %p92
      %p251 = pneg %p116
      %p252 = pneg %p113
      %p253 = pneg %p137
      %p254 = pneg %p134
      %p255 = pneg %p165
      %p256 = pneg %p162
      %s257 = sadd.s32 %s22, %s23
      %p258 = scmp.lt.s32.totalorder %s257, 1
      %s259 = scalar_select %p258, %s257, 1
      %s260 = smul.addr %s259, 10
      %s261 = smul.addr %s260, 8
      %s262 = scalar_lea.vmem %s5, %s261
      %p263 = pneg %p191
      %p264 = pneg %p188
      %p265 = scmp.lt.s32.totalorder %s22, 1
      %s266 = scalar_select %p265, %s22, 1
      %s267 = smul.addr %s266, 2
      %s268 = scalar_lea.vmem %s6, %s267
      %s269 = sadd.s32 %s22, %s23
      %p270 = scmp.lt.s32.totalorder %s269, 1
      %s271 = scalar_select %p270, %s269, 1
      %s272 = smul.addr %s271, 10
      %s273 = smul.addr %s272, 8
      %s274 = scalar_lea.vmem %s0, %s273
      %s275 = sadd.s32 %s22, %s23
      %s276 = sadd.s32 %s22, %s23
      %p277 = scmp.lt.s32.totalorder %s276, 1
      %s278 = scalar_select %p277, %s276, 1
      %s279 = smul.addr %s278, 10
      %s280 = smul.addr %s279, 8
      %s281 = scalar_lea.vmem %s5, %s280
      %s282 = sadd.s32 %s22, %s23
      %p283 = scmp.lt.s32.totalorder %s22, 1
      %s284 = scalar_select %p283, %s22, 1
      %s285 = smul.addr %s284, 2
      %s286 = scalar_lea.vmem %s6, %s285
      %p287 = scmp.eq.s32.totalorder %s23, 0
      // Predicated region
      $region41: #{cifar_basic_block_forward.4} parent=39 // pred_check
        %p288 = pneg %p287
      $region42: #{cifar_basic_block_forward.4} parent=39 // pred_check_branch
        %290 = sbr.rel (%p288) target = $region44
      $region43: #{cifar_basic_block_forward.4} parent=39 // pred_region
        %vm291 = vcmask 58368
        %292 = vst.msk [vmem:[%s286] sm:$0x3] %vm291, 0.0
      $region44: #{cifar_basic_block_forward.4} parent=39 // pred_fallthru
        _
      %vm293 = vcmask 64512
      %294 = vst.msk [vmem:[#allocation2] sm:$0xff] %vm293, 0.0
      %295 = vst.msk [vmem:[#allocation2 + $0x8] sm:$0xff] %vm293, 0.0
      %296 = vst.msk [vmem:[#allocation2 + $0x10] sm:$0xff] %vm293, 0.0
      %297 = vst.msk [vmem:[#allocation2 + $0x18] sm:$0xff] %vm293, 0.0
      %298 = vst.msk [vmem:[#allocation2 + $0x20] sm:$0xff] %vm293, 0.0
      %299 = vst.msk [vmem:[#allocation2 + $0x28] sm:$0xff] %vm293, 0.0
      %300 = vst.msk [vmem:[#allocation2 + $0x30] sm:$0xff] %vm293, 0.0
      %301 = vst.msk [vmem:[#allocation2 + $0x38] sm:$0xff] %vm293, 0.0
      %302 = vst.msk [vmem:[#allocation2 + $0x40] sm:$0xff] %vm293, 0.0
      %303 = vst.msk [vmem:[#allocation2 + $0x48] sm:$0xff] %vm293, 0.0
      %304 = vst.msk [vmem:[#allocation2 + $0x50] sm:$0xff] %vm293, 0.0
      %305 = vst.msk [vmem:[#allocation2 + $0x58] sm:$0xff] %vm293, 0.0
      %306 = vst.msk [vmem:[#allocation2 + $0x60] sm:$0xff] %vm293, 0.0
      %307 = vst.msk [vmem:[#allocation2 + $0x68] sm:$0xff] %vm293, 0.0
      %v308 = vld [vmem:[%s274] sm:$0xff]
      %v309 = vld [vmem:[%s274 + $0x8] sm:$0xff]
      %v310 = vld [vmem:[%s274 + $0x10] sm:$0xff]
      %v311 = vld [vmem:[%s274 + $0x18] sm:$0xff]
      %v312 = vld [vmem:[%s274 + $0x20] sm:$0xff]
      %v313 = vld [vmem:[%s274 + $0x28] sm:$0xff]
      %v314 = vld [vmem:[%s274 + $0x30] sm:$0xff]
      %v315 = vld [vmem:[%s274 + $0x38] sm:$0xff]
      %v316 = vld [vmem:[%s274 + $0x40] sm:$0xff]
      %v317 = vld [vmem:[%s274 + $0x48] sm:$0xff]
      %v318 = vld [vmem:[%s1] sm:$0x1]
      %v320 = vlaneseq
      %v321 = vshrl.u32 %v320, 7
      %v322 = vsub.s32 0, %v321
      %v323 = vrot.slane %v318, %v322
      %v325 = vmul.f32 %v308, %v323
      %v326 = vmul.f32 %v309, %v323
      %v327 = vmul.f32 %v310, %v323
      %v328 = vmul.f32 %v311, %v323
      %v329 = vmul.f32 %v312, %v323
      %v330 = vmul.f32 %v313, %v323
      %v331 = vmul.f32 %v314, %v323
      %v332 = vmul.f32 %v315, %v323
      %v333 = vmul.f32 %v316, %v323
      %v334 = vmul.f32 %v317, %v323
      %v335 = vld [vmem:[%s2] sm:$0x1]
      %v337 = vlaneseq
      %v338 = vshrl.u32 %v337, 7
      %v339 = vsub.s32 0, %v338
      %v340 = vrot.slane %v335, %v339
      %v342 = vadd.f32 %v325, %v340
      %v343 = vadd.f32 %v326, %v340
      %v344 = vadd.f32 %v327, %v340
      %v345 = vadd.f32 %v328, %v340
      %v346 = vadd.f32 %v329, %v340
      %v347 = vadd.f32 %v330, %v340
      %v348 = vadd.f32 %v331, %v340
      %v349 = vadd.f32 %v332, %v340
      %v350 = vadd.f32 %v333, %v340
      %v351 = vadd.f32 %v334, %v340
      %v352 = vmax.f32 %v342, 0.0
      %v353 = vmax.f32 %v343, 0.0
      %v354 = vmax.f32 %v344, 0.0
      %v355 = vmax.f32 %v345, 0.0
      %v356 = vmax.f32 %v346, 0.0
      %v357 = vmax.f32 %v347, 0.0
      %v358 = vmax.f32 %v348, 0.0
      %v359 = vmax.f32 %v349, 0.0
      %v360 = vmax.f32 %v350, 0.0
      %v361 = vmax.f32 %v351, 0.0
      %v362 = vld [vmem:[%s3] sm:$0xff]
      %v363 = vld [vmem:[%s3 + $0x8] sm:$0xff]
      %v364 = vld [vmem:[%s3 + $0x10] sm:$0xff]
      %v365 = vld [vmem:[%s3 + $0x18] sm:$0xff]
      %v366 = vld [vmem:[%s3 + $0x20] sm:$0xff]
      %v367 = vld [vmem:[%s3 + $0x28] sm:$0xff]
      %v368 = vld [vmem:[%s3 + $0x30] sm:$0xff]
      %v369 = vld [vmem:[%s3 + $0x38] sm:$0xff]
      %v370 = vld [vmem:[%s3 + $0x40] sm:$0xff]
      %v371 = vld [vmem:[%s3 + $0x48] sm:$0xff]
      %373 = vset.pattern.permute.xlu0 0
      %374 = vperm.xlu0 %373, %v362
      %v375 = vpop.permute.xlu0 %374
      %378 = vset.pattern.permute.xlu0 0
      %379 = vperm.xlu0 %378, %v363
      %v380 = vpop.permute.xlu0 %379
      %383 = vset.pattern.permute.xlu0 0
      %384 = vperm.xlu0 %383, %v364
      %v385 = vpop.permute.xlu0 %384
      %388 = vset.pattern.permute.xlu0 0
      %389 = vperm.xlu0 %388, %v365
      %v390 = vpop.permute.xlu0 %389
      %393 = vset.pattern.permute.xlu0 0
      %394 = vperm.xlu0 %393, %v366
      %v395 = vpop.permute.xlu0 %394
      %398 = vset.pattern.permute.xlu0 0
      %399 = vperm.xlu0 %398, %v367
      %v400 = vpop.permute.xlu0 %399
      %403 = vset.pattern.permute.xlu0 0
      %404 = vperm.xlu0 %403, %v368
      %v405 = vpop.permute.xlu0 %404
      %408 = vset.pattern.permute.xlu0 0
      %409 = vperm.xlu0 %408, %v369
      %v410 = vpop.permute.xlu0 %409
      %413 = vset.pattern.permute.xlu0 0
      %414 = vperm.xlu0 %413, %v370
      %v415 = vpop.permute.xlu0 %414
      %418 = vset.pattern.permute.xlu0 0
      %419 = vperm.xlu0 %418, %v371
      %v420 = vpop.permute.xlu0 %419
      %v422 = vmul.f32 %v352, %v375
      %v423 = vmul.f32 %v353, %v380
      %v424 = vmul.f32 %v354, %v385
      %v425 = vmul.f32 %v355, %v390
      %v426 = vmul.f32 %v356, %v395
      %v427 = vmul.f32 %v357, %v400
      %v428 = vmul.f32 %v358, %v405
      %v429 = vmul.f32 %v359, %v410
      %v430 = vmul.f32 %v360, %v415
      %v431 = vmul.f32 %v361, %v420
      %432 = vst.msk [vmem:[#allocation2 + $0x10] sm:$0xff] %vm293, %v422
      %433 = vst.msk [vmem:[#allocation2 + $0x18] sm:$0xff] %vm293, %v423
      %434 = vst.msk [vmem:[#allocation2 + $0x20] sm:$0xff] %vm293, %v424
      %435 = vst.msk [vmem:[#allocation2 + $0x28] sm:$0xff] %vm293, %v425
      %436 = vst.msk [vmem:[#allocation2 + $0x30] sm:$0xff] %vm293, %v426
      %437 = vst.msk [vmem:[#allocation2 + $0x38] sm:$0xff] %vm293, %v427
      %438 = vst.msk [vmem:[#allocation2 + $0x40] sm:$0xff] %vm293, %v428
      %439 = vst.msk [vmem:[#allocation2 + $0x48] sm:$0xff] %vm293, %v429
      %440 = vst.msk [vmem:[#allocation2 + $0x50] sm:$0xff] %vm293, %v430
      %441 = vst.msk [vmem:[#allocation2 + $0x58] sm:$0xff] %vm293, %v431
      %v442 = vld [vmem:[#allocation2 + $0x5] sm:$0xff]
      %v443 = vld [vmem:[#allocation2 + $0xd] sm:$0xff]
      %v444 = vld [vmem:[#allocation2 + $0x15] sm:$0xff]
      %v445 = vld [vmem:[#allocation2 + $0x1d] sm:$0xff]
      %v446 = vld [vmem:[#allocation2 + $0x25] sm:$0xff]
      %v447 = vld [vmem:[#allocation2 + $0x2d] sm:$0xff]
      %v448 = vld [vmem:[#allocation2 + $0x35] sm:$0xff]
      %v449 = vld [vmem:[#allocation2 + $0x3d] sm:$0xff]
      %v450 = vld [vmem:[#allocation2 + $0x45] sm:$0xff]
      %v451 = vld [vmem:[#allocation2 + $0x4d] sm:$0xff]
      %v452 = vld [vmem:[%s4] sm:$0xff]
      %v453 = vld [vmem:[#allocation2 + $0x6] sm:$0xff]
      %v454 = vld [vmem:[#allocation2 + $0xe] sm:$0xff]
      %v455 = vld [vmem:[#allocation2 + $0x16] sm:$0xff]
      %v456 = vld [vmem:[#allocation2 + $0x1e] sm:$0xff]
      %v457 = vld [vmem:[#allocation2 + $0x26] sm:$0xff]
      %v458 = vld [vmem:[#allocation2 + $0x2e] sm:$0xff]
      %v459 = vld [vmem:[#allocation2 + $0x36] sm:$0xff]
      %v460 = vld [vmem:[#allocation2 + $0x3e] sm:$0xff]
      %v461 = vld [vmem:[#allocation2 + $0x46] sm:$0xff]
      %v462 = vld [vmem:[#allocation2 + $0x4e] sm:$0xff]
      %s463 = scalar_lea.vmem %s4, 8
      %v464 = vld [vmem:[%s463] sm:$0xff]
      %v466 = vsel %vm293, %v453, 0
      %v469 = vsel %vm293, %v454, 0
      %v472 = vsel %vm293, %v455, 0
      %v475 = vsel %vm293, %v456, 0
      %v478 = vsel %vm293, %v457, 0
      %v481 = vsel %vm293, %v458, 0
      %v484 = vsel %vm293, %v459, 0
      %v487 = vsel %vm293, %v460, 0
      %v490 = vsel %vm293, %v461, 0
      %v493 = vsel %vm293, %v462, 0
      %495 = vmatprep.subr.mxu0 0.0
      %496 = vmatpush1.msra.mxu0 %v464
      %497 = vmatprep.subr.mxu0 0.0
      %498 = vmatpush1.msra.mxu0 0.0
      %499 = vmatprep.subr.mxu0 0.0
      %500 = vmatpush1.msra.mxu0 0.0
      %501 = vmatprep.subr.mxu0 0.0
      %502 = vmatpush1.msra.mxu0 0.0
      %503 = vmatprep.subr.mxu0 0.0
      %504 = vmatpush1.msra.mxu0 0.0
      %505 = vmatprep.subr.mxu0 0.0
      %506 = vmatpush1.msra.mxu0 0.0
      %507 = vmatprep.subr.mxu0 0.0
      %508 = vmatpush1.msra.mxu0 0.0
      %509 = vmatprep.subr.mxu0 0.0
      %510 = vmatpush1.msra.mxu0 0.0
      %511 = vmatprep.subr.mxu0 0.0
      %512 = vmatpush1.msra.mxu0 0.0
      %513 = vmatprep.subr.mxu0 0.0
      %514 = vmatpush1.msra.mxu0 0.0
      %515 = vmatprep.subr.mxu0 0.0
      %516 = vmatpush1.msra.mxu0 0.0
      %517 = vmatprep.subr.mxu0 0.0
      %518 = vmatpush1.msra.mxu0 0.0
      %519 = vmatprep.subr.mxu0 0.0
      %520 = vmatpush1.msra.mxu0 0.0
      %521 = vmatprep.subr.mxu0 0.0
      %522 = vmatpush1.msra.mxu0 0.0
      %523 = vmatprep.subr.mxu0 0.0
      %524 = vmatpush1.msra.mxu0 0.0
      %525 = vmatprep.subr.mxu0 0.0
      %526 = vmatpush1.msra.mxu0 0.0
      %527 = vmatprep.subr.mxu0 0.0
      %528 = vmatpush1.msra.mxu0 0.0
      %529 = vmatprep.subr.mxu0 0.0
      %530 = vmatpush1.msra.mxu0 0.0
      %531 = vmatprep.subr.mxu0 0.0
      %532 = vmatpush1.msra.mxu0 0.0
      %533 = vmatprep.subr.mxu0 0.0
      %534 = vmatpush1.msra.mxu0 0.0
      %535 = vmatprep.subr.mxu0 0.0
      %536 = vmatpush1.msra.mxu0 0.0
      %537 = vmatprep.subr.mxu0 0.0
      %538 = vmatpush1.msra.mxu0 0.0
      %539 = vmatprep.subr.mxu0 0.0
      %540 = vmatpush1.msra.mxu0 0.0
      %541 = vmatprep.subr.mxu0 0.0
      %542 = vmatpush1.msra.mxu0 0.0
      %543 = vmatprep.subr.mxu0 0.0
      %544 = vmatpush1.msra.mxu0 0.0
      %545 = vmatprep.subr.mxu0 0.0
      %546 = vmatpush1.msra.mxu0 0.0
      %547 = vmatprep.subr.mxu0 0.0
      %548 = vmatpush1.msra.mxu0 0.0
      %549 = vmatprep.subr.mxu0 0.0
      %550 = vmatpush1.msra.mxu0 0.0
      %551 = vmatprep.subr.mxu0 0.0
      %552 = vmatpush1.msra.mxu0 0.0
      %553 = vmatprep.subr.mxu0 0.0
      %554 = vmatpush1.msra.mxu0 0.0
      %555 = vmatprep.subr.mxu0 0.0
      %556 = vmatpush1.msra.mxu0 0.0
      %557 = vmatprep.subr.mxu0 0.0
      %558 = vmatpush1.msra.mxu0 0.0
      %559 = vmatprep.mubr.f32.mxu0 0.0
      %560 = vmatmul.mubr.f32.gmra.mrb[0].mxu0 %v466
      %v561 = vpop.f32.mrb[0].mxu0
      %v562 = vadd.f32 0.0, %v561
      %v563 = vpop.f32.mrb[0].mxu0
      %564 = vmatprep.mubr.f32.mxu0 0.0
      %565 = vmatmul.mubr.f32.gmra.mrb[0].mxu0 %v469
      %v566 = vpop.f32.mrb[0].mxu0
      %v567 = vadd.f32 0.0, %v566
      %v568 = vpop.f32.mrb[0].mxu0
      %569 = vmatprep.mubr.f32.mxu0 0.0
      %570 = vmatmul.mubr.f32.gmra.mrb[0].mxu0 %v472
      %v571 = vpop.f32.mrb[0].mxu0
      %v572 = vadd.f32 0.0, %v571
      %v573 = vpop.f32.mrb[0].mxu0
      %574 = vmatprep.mubr.f32.mxu0 0.0
      %575 = vmatmul.mubr.f32.gmra.mrb[0].mxu0 %v475
      %v576 = vpop.f32.mrb[0].mxu0
      %v577 = vadd.f32 0.0, %v576
      %v578 = vpop.f32.mrb[0].mxu0
      %579 = vmatprep.mubr.f32.mxu0 0.0
      %580 = vmatmul.mubr.f32.gmra.mrb[0].mxu0 %v478
      %v581 = vpop.f32.mrb[0].mxu0
      %v582 = vadd.f32 0.0, %v581
      %v583 = vpop.f32.mrb[0].mxu0
      %584 = vmatprep.mubr.f32.mxu0 0.0
      %585 = vmatmul.mubr.f32.gmra.mrb[0].mxu0 %v481
      %v586 = vpop.f32.mrb[0].mxu0
      %v587 = vadd.f32 0.0, %v586
      %v588 = vpop.f32.mrb[0].mxu0
      %589 = vmatprep.mubr.f32.mxu0 0.0
      %590 = vmatmul.mubr.f32.gmra.mrb[0].mxu0 %v484
      %v591 = vpop.f32.mrb[0].mxu0
      %v592 = vadd.f32 0.0, %v591
      %v593 = vpop.f32.mrb[0].mxu0
      %594 = vmatprep.mubr.f32.mxu0 0.0
      %595 = vmatmul.mubr.f32.gmra.mrb[0].mxu0 %v487
      %v596 = vpop.f32.mrb[0].mxu0
      %v597 = vadd.f32 0.0, %v596
      %v598 = vpop.f32.mrb[0].mxu0
      %599 = vmatprep.mubr.f32.mxu0 0.0
      %600 = vmatmul.mubr.f32.gmra.mrb[0].mxu0 %v490
      %v601 = vpop.f32.mrb[0].mxu0
      %v602 = vadd.f32 0.0, %v601
      %v603 = vpop.f32.mrb[0].mxu0
      %604 = vmatprep.mubr.f32.mxu0 0.0
      %605 = vmatmul.mubr.f32.gmra.mrb[0].mxu0 %v493
      %v606 = vpop.f32.mrb[0].mxu0
      %v607 = vadd.f32 0.0, %v606
      %v608 = vpop.f32.mrb[0].mxu0
      %609 = vdwg.mxu0
      %v611 = vsel %vm293, %v442, 0
      %v614 = vsel %vm293, %v443, 0
      %v617 = vsel %vm293, %v444, 0
      %v620 = vsel %vm293, %v445, 0
      %v623 = vsel %vm293, %v446, 0
      %v626 = vsel %vm293, %v447, 0
      %v629 = vsel %vm293, %v448, 0
      %v632 = vsel %vm293, %v449, 0
      %v635 = vsel %vm293, %v450, 0
      %v638 = vsel %vm293, %v451, 0
      %640 = vmatprep.subr.mxu0 0.0
      %641 = vmatpush1.msra.mxu0 %v452
      %642 = vmatprep.subr.mxu0 0.0
      %643 = vmatpush1.msra.mxu0 0.0
      %644 = vmatprep.subr.mxu0 0.0
      %645 = vmatpush1.msra.mxu0 0.0
      %646 = vmatprep.subr.mxu0 0.0
      %647 = vmatpush1.msra.mxu0 0.0
      %648 = vmatprep.subr.mxu0 0.0
      %649 = vmatpush1.msra.mxu0 0.0
      %650 = vmatprep.subr.mxu0 0.0
      %651 = vmatpush1.msra.mxu0 0.0
      %652 = vmatprep.subr.mxu0 0.0
      %653 = vmatpush1.msra.mxu0 0.0
      %654 = vmatprep.subr.mxu0 0.0
      %655 = vmatpush1.msra.mxu0 0.0
      %656 = vmatprep.subr.mxu0 0.0
      %657 = vmatpush1.msra.mxu0 0.0
      %658 = vmatprep.subr.mxu0 0.0
      %659 = vmatpush1.msra.mxu0 0.0
      %660 = vmatprep.subr.mxu0 0.0
      %661 = vmatpush1.msra.mxu0 0.0
      %662 = vmatprep.subr.mxu0 0.0
      %663 = vmatpush1.msra.mxu0 0.0
      %664 = vmatprep.subr.mxu0 0.0
      %665 = vmatpush1.msra.mxu0 0.0
      %666 = vmatprep.subr.mxu0 0.0
      %667 = vmatpush1.msra.mxu0 0.0
      %668 = vmatprep.subr.mxu0 0.0
      %669 = vmatpush1.msra.mxu0 0.0
      %670 = vmatprep.subr.mxu0 0.0
      %671 = vmatpush1.msra.mxu0 0.0
      %672 = vmatprep.subr.mxu0 0.0
      %673 = vmatpush1.msra.mxu0 0.0
      %674 = vmatprep.subr.mxu0 0.0
      %675 = vmatpush1.msra.mxu0 0.0
      %676 = vmatprep.subr.mxu0 0.0
      %677 = vmatpush1.msra.mxu0 0.0
      %678 = vmatprep.subr.mxu0 0.0
      %679 = vmatpush1.msra.mxu0 0.0
      %680 = vmatprep.subr.mxu0 0.0
      %681 = vmatpush1.msra.mxu0 0.0
      %682 = vmatprep.subr.mxu0 0.0
      %683 = vmatpush1.msra.mxu0 0.0
      %684 = vmatprep.subr.mxu0 0.0
      %685 = vmatpush1.msra.mxu0 0.0
      %686 = vmatprep.subr.mxu0 0.0
      %687 = vmatpush1.msra.mxu0 0.0
      %688 = vmatprep.subr.mxu0 0.0
      %689 = vmatpush1.msra.mxu0 0.0
      %690 = vmatprep.subr.mxu0 0.0
      %691 = vmatpush1.msra.mxu0 0.0
      %692 = vmatprep.subr.mxu0 0.0
      %693 = vmatpush1.msra.mxu0 0.0
      %694 = vmatprep.subr.mxu0 0.0
      %695 = vmatpush1.msra.mxu0 0.0
      %696 = vmatprep.subr.mxu0 0.0
      %697 = vmatpush1.msra.mxu0 0.0
      %698 = vmatprep.subr.mxu0 0.0
      %699 = vmatpush1.msra.mxu0 0.0
      %700 = vmatprep.subr.mxu0 0.0
      %701 = vmatpush1.msra.mxu0 0.0
      %702 = vmatprep.subr.mxu0 0.0
      %703 = vmatpush1.msra.mxu0 0.0
      %704 = vmatprep.mubr.f32.mxu0 0.0
      %705 = vmatmul.mubr.f32.gmra.mrb[0].mxu0 %v611
      %v706 = vpop.f32.mrb[0].mxu0
      %v707 = vadd.f32 %v562, %v706
      %v708 = vpop.f32.mrb[0].mxu0
      %709 = vmatprep.mubr.f32.mxu0 0.0
      %710 = vmatmul.mubr.f32.gmra.mrb[0].mxu0 %v614
      %v711 = vpop.f32.mrb[0].mxu0
      %v712 = vadd.f32 %v567, %v711
      %v713 = vpop.f32.mrb[0].mxu0
      %714 = vmatprep.mubr.f32.mxu0 0.0
      %715 = vmatmul.mubr.f32.gmra.mrb[0].mxu0 %v617
      %v716 = vpop.f32.mrb[0].mxu0
      %v717 = vadd.f32 %v572, %v716
      %v718 = vpop.f32.mrb[0].mxu0
      %719 = vmatprep.mubr.f32.mxu0 0.0
      %720 = vmatmul.mubr.f32.gmra.mrb[0].mxu0 %v620
      %v721 = vpop.f32.mrb[0].mxu0
      %v722 = vadd.f32 %v577, %v721
      %v723 = vpop.f32.mrb[0].mxu0
      %724 = vmatprep.mubr.f32.mxu0 0.0
      %725 = vmatmul.mubr.f32.gmra.mrb[0].mxu0 %v623
      %v726 = vpop.f32.mrb[0].mxu0
      %v727 = vadd.f32 %v582, %v726
      %v728 = vpop.f32.mrb[0].mxu0
      %729 = vmatprep.mubr.f32.mxu0 0.0
      %730 = vmatmul.mubr.f32.gmra.mrb[0].mxu0 %v626
      %v731 = vpop.f32.mrb[0].mxu0
      %v732 = vadd.f32 %v587, %v731
      %v733 = vpop.f32.mrb[0].mxu0
      %734 = vmatprep.mubr.f32.mxu0 0.0
      %735 = vmatmul.mubr.f32.gmra.mrb[0].mxu0 %v629
      %v736 = vpop.f32.mrb[0].mxu0
      %v737 = vadd.f32 %v592, %v736
      %v738 = vpop.f32.mrb[0].mxu0
      %739 = vmatprep.mubr.f32.mxu0 0.0
      %740 = vmatmul.mubr.f32.gmra.mrb[0].mxu0 %v632
      %v741 = vpop.f32.mrb[0].mxu0
      %v742 = vadd.f32 %v597, %v741
      %v743 = vpop.f32.mrb[0].mxu0
      %744 = vmatprep.mubr.f32.mxu0 0.0
      %745 = vmatmul.mubr.f32.gmra.mrb[0].mxu0 %v635
      %v746 = vpop.f32.mrb[0].mxu0
      %v747 = vadd.f32 %v602, %v746
      %v748 = vpop.f32.mrb[0].mxu0
      %749 = vmatprep.mubr.f32.mxu0 0.0
      %750 = vmatmul.mubr.f32.gmra.mrb[0].mxu0 %v638
      %v751 = vpop.f32.mrb[0].mxu0
      %v752 = vadd.f32 %v607, %v751
      %v753 = vpop.f32.mrb[0].mxu0
      %754 = vdwg.mxu0
      %v755 = vld [vmem:[#allocation2 + $0x7] sm:$0xff]
      %v756 = vld [vmem:[#allocation2 + $0xf] sm:$0xff]
      %v757 = vld [vmem:[#allocation2 + $0x17] sm:$0xff]
      %v758 = vld [vmem:[#allocation2 + $0x1f] sm:$0xff]
      %v759 = vld [vmem:[#allocation2 + $0x27] sm:$0xff]
      %v760 = vld [vmem:[#allocation2 + $0x2f] sm:$0xff]
      %v761 = vld [vmem:[#allocation2 + $0x37] sm:$0xff]
      %v762 = vld [vmem:[#allocation2 + $0x3f] sm:$0xff]
      %v763 = vld [vmem:[#allocation2 + $0x47] sm:$0xff]
      %v764 = vld [vmem:[#allocation2 + $0x4f] sm:$0xff]
      %s765 = scalar_lea.vmem %s4, 16
      %v766 = vld [vmem:[%s765] sm:$0xff]
      %v768 = vsel %vm293, %v755, 0
      %v771 = vsel %vm293, %v756, 0
      %v774 = vsel %vm293, %v757, 0
      %v777 = vsel %vm293, %v758, 0
      %v780 = vsel %vm293, %v759, 0
      %v783 = vsel %vm293, %v760, 0
      %v786 = vsel %vm293, %v761, 0
      %v789 = vsel %vm293, %v762, 0
      %v792 = vsel %vm293, %v763, 0
      %v795 = vsel %vm293, %v764, 0
      %797 = vmatprep.subr.mxu0 0.0
      %798 = vmatpush1.msra.mxu0 %v766
      %799 = vmatprep.subr.mxu0 0.0
      %800 = vmatpush1.msra.mxu0 0.0
      %801 = vmatprep.subr.mxu0 0.0
      %802 = vmatpush1.msra.mxu0 0.0
      %803 = vmatprep.subr.mxu0 0.0
      %804 = vmatpush1.msra.mxu0 0.0
      %805 = vmatprep.subr.mxu0 0.0
      %806 = vmatpush1.msra.mxu0 0.0
      %807 = vmatprep.subr.mxu0 0.0
      %808 = vmatpush1.msra.mxu0 0.0
      %809 = vmatprep.subr.mxu0 0.0
      %810 = vmatpush1.msra.mxu0 0.0
      %811 = vmatprep.subr.mxu0 0.0
      %812 = vmatpush1.msra.mxu0 0.0
      %813 = vmatprep.subr.mxu0 0.0
      %814 = vmatpush1.msra.mxu0 0.0
      %815 = vmatprep.subr.mxu0 0.0
      %816 = vmatpush1.msra.mxu0 0.0
      %817 = vmatprep.subr.mxu0 0.0
      %818 = vmatpush1.msra.mxu0 0.0
      %819 = vmatprep.subr.mxu0 0.0
      %820 = vmatpush1.msra.mxu0 0.0
      %821 = vmatprep.subr.mxu0 0.0
      %822 = vmatpush1.msra.mxu0 0.0
      %823 = vmatprep.subr.mxu0 0.0
      %824 = vmatpush1.msra.mxu0 0.0
      %825 = vmatprep.subr.mxu0 0.0
      %826 = vmatpush1.msra.mxu0 0.0
      %827 = vmatprep.subr.mxu0 0.0
      %828 = vmatpush1.msra.mxu0 0.0
      %829 = vmatprep.subr.mxu0 0.0
      %830 = vmatpush1.msra.mxu0 0.0
      %831 = vmatprep.subr.mxu0 0.0
      %832 = vmatpush1.msra.mxu0 0.0
      %833 = vmatprep.subr.mxu0 0.0
      %834 = vmatpush1.msra.mxu0 0.0
      %835 = vmatprep.subr.mxu0 0.0
      %836 = vmatpush1.msra.mxu0 0.0
      %837 = vmatprep.subr.mxu0 0.0
      %838 = vmatpush1.msra.mxu0 0.0
      %839 = vmatprep.subr.mxu0 0.0
      %840 = vmatpush1.msra.mxu0 0.0
      %841 = vmatprep.subr.mxu0 0.0
      %842 = vmatpush1.msra.mxu0 0.0
      %843 = vmatprep.subr.mxu0 0.0
      %844 = vmatpush1.msra.mxu0 0.0
      %845 = vmatprep.subr.mxu0 0.0
      %846 = vmatpush1.msra.mxu0 0.0
      %847 = vmatprep.subr.mxu0 0.0
      %848 = vmatpush1.msra.mxu0 0.0
      %849 = vmatprep.subr.mxu0 0.0
      %850 = vmatpush1.msra.mxu0 0.0
      %851 = vmatprep.subr.mxu0 0.0
      %852 = vmatpush1.msra.mxu0 0.0
      %853 = vmatprep.subr.mxu0 0.0
      %854 = vmatpush1.msra.mxu0 0.0
      %855 = vmatprep.subr.mxu0 0.0
      %856 = vmatpush1.msra.mxu0 0.0
      %857 = vmatprep.subr.mxu0 0.0
      %858 = vmatpush1.msra.mxu0 0.0
      %859 = vmatprep.subr.mxu0 0.0
      %860 = vmatpush1.msra.mxu0 0.0
      %861 = vmatprep.mubr.f32.mxu0 0.0
      %862 = vmatmul.mubr.f32.gmra.mrb[0].mxu0 %v768
      %v863 = vpop.f32.mrb[0].mxu0
      %v864 = vadd.f32 0.0, %v863
      %v865 = vpop.f32.mrb[0].mxu0
      %866 = vmatprep.mubr.f32.mxu0 0.0
      %867 = vmatmul.mubr.f32.gmra.mrb[0].mxu0 %v771
      %v868 = vpop.f32.mrb[0].mxu0
      %v869 = vadd.f32 0.0, %v868
      %v870 = vpop.f32.mrb[0].mxu0
      %871 = vmatprep.mubr.f32.mxu0 0.0
      %872 = vmatmul.mubr.f32.gmra.mrb[0].mxu0 %v774
      %v873 = vpop.f32.mrb[0].mxu0
      %v874 = vadd.f32 0.0, %v873
      %v875 = vpop.f32.mrb[0].mxu0
      %876 = vmatprep.mubr.f32.mxu0 0.0
      %877 = vmatmul.mubr.f32.gmra.mrb[0].mxu0 %v777
      %v878 = vpop.f32.mrb[0].mxu0
      %v879 = vadd.f32 0.0, %v878
      %v880 = vpop.f32.mrb[0].mxu0
      %881 = vmatprep.mubr.f32.mxu0 0.0
      %882 = vmatmul.mubr.f32.gmra.mrb[0].mxu0 %v780
      %v883 = vpop.f32.mrb[0].mxu0
      %v884 = vadd.f32 0.0, %v883
      %v885 = vpop.f32.mrb[0].mxu0
      %886 = vmatprep.mubr.f32.mxu0 0.0
      %887 = vmatmul.mubr.f32.gmra.mrb[0].mxu0 %v783
      %v888 = vpop.f32.mrb[0].mxu0
      %v889 = vadd.f32 0.0, %v888
      %v890 = vpop.f32.mrb[0].mxu0
      %891 = vmatprep.mubr.f32.mxu0 0.0
      %892 = vmatmul.mubr.f32.gmra.mrb[0].mxu0 %v786
      %v893 = vpop.f32.mrb[0].mxu0
      %v894 = vadd.f32 0.0, %v893
      %v895 = vpop.f32.mrb[0].mxu0
      %896 = vmatprep.mubr.f32.mxu0 0.0
      %897 = vmatmul.mubr.f32.gmra.mrb[0].mxu0 %v789
      %v898 = vpop.f32.mrb[0].mxu0
      %v899 = vadd.f32 0.0, %v898
      %v900 = vpop.f32.mrb[0].mxu0
      %901 = vmatprep.mubr.f32.mxu0 0.0
      %902 = vmatmul.mubr.f32.gmra.mrb[0].mxu0 %v792
      %v903 = vpop.f32.mrb[0].mxu0
      %v904 = vadd.f32 0.0, %v903
      %v905 = vpop.f32.mrb[0].mxu0
      %906 = vmatprep.mubr.f32.mxu0 0.0
      %907 = vmatmul.mubr.f32.gmra.mrb[0].mxu0 %v795
      %v908 = vpop.f32.mrb[0].mxu0
      %v909 = vadd.f32 0.0, %v908
      %v910 = vpop.f32.mrb[0].mxu0
      %911 = vdwg.mxu0
      %v912 = vadd.f32 %v707, %v864
      %v913 = vadd.f32 %v712, %v869
      %v914 = vadd.f32 %v717, %v874
      %v915 = vadd.f32 %v722, %v879
      %v916 = vadd.f32 %v727, %v884
      %v917 = vadd.f32 %v732, %v889
      %v918 = vadd.f32 %v737, %v894
      %v919 = vadd.f32 %v742, %v899
      %v920 = vadd.f32 %v747, %v904
      %v921 = vadd.f32 %v752, %v909
      %v922 = vld [vmem:[#allocation2 + $0xf] sm:$0xff]
      %v923 = vld [vmem:[#allocation2 + $0x17] sm:$0xff]
      %v924 = vld [vmem:[#allocation2 + $0x1f] sm:$0xff]
      %v925 = vld [vmem:[#allocation2 + $0x27] sm:$0xff]
      %v926 = vld [vmem:[#allocation2 + $0x2f] sm:$0xff]
      %v927 = vld [vmem:[#allocation2 + $0x37] sm:$0xff]
      %v928 = vld [vmem:[#allocation2 + $0x3f] sm:$0xff]
      %v929 = vld [vmem:[#allocation2 + $0x47] sm:$0xff]
      %v930 = vld [vmem:[#allocation2 + $0x4f] sm:$0xff]
      %v931 = vld [vmem:[#allocation2 + $0x57] sm:$0xff]
      %s932 = scalar_lea.vmem %s4, 24
      %v933 = vld [vmem:[%s932] sm:$0xff]
      %v935 = vsel %vm293, %v922, 0
      %v938 = vsel %vm293, %v923, 0
      %v941 = vsel %vm293, %v924, 0
      %v944 = vsel %vm293, %v925, 0
      %v947 = vsel %vm293, %v926, 0
      %v950 = vsel %vm293, %v927, 0
      %v953 = vsel %vm293, %v928, 0
      %v956 = vsel %vm293, %v929, 0
      %v959 = vsel %vm293, %v930, 0
      %v962 = vsel %vm293, %v931, 0
      %964 = vmatprep.subr.mxu0 0.0
      %965 = vmatpush1.msra.mxu0 %v933
      %966 = vmatprep.subr.mxu0 0.0
      %967 = vmatpush1.msra.mxu0 0.0
      %968 = vmatprep.subr.mxu0 0.0
      %969 = vmatpush1.msra.mxu0 0.0
      %970 = vmatprep.subr.mxu0 0.0
      %971 = vmatpush1.msra.mxu0 0.0
      %972 = vmatprep.subr.mxu0 0.0
      %973 = vmatpush1.msra.mxu0 0.0
      %974 = vmatprep.subr.mxu0 0.0
      %975 = vmatpush1.msra.mxu0 0.0
      %976 = vmatprep.subr.mxu0 0.0
      %977 = vmatpush1.msra.mxu0 0.0
      %978 = vmatprep.subr.mxu0 0.0
      %979 = vmatpush1.msra.mxu0 0.0
      %980 = vmatprep.subr.mxu0 0.0
      %981 = vmatpush1.msra.mxu0 0.0
      %982 = vmatprep.subr.mxu0 0.0
      %983 = vmatpush1.msra.mxu0 0.0
      %984 = vmatprep.subr.mxu0 0.0
      %985 = vmatpush1.msra.mxu0 0.0
      %986 = vmatprep.subr.mxu0 0.0
      %987 = vmatpush1.msra.mxu0 0.0
      %988 = vmatprep.subr.mxu0 0.0
      %989 = vmatpush1.msra.mxu0 0.0
      %990 = vmatprep.subr.mxu0 0.0
      %991 = vmatpush1.msra.mxu0 0.0
      %992 = vmatprep.subr.mxu0 0.0
      %993 = vmatpush1.msra.mxu0 0.0
      %994 = vmatprep.subr.mxu0 0.0
      %995 = vmatpush1.msra.mxu0 0.0
      %996 = vmatprep.subr.mxu0 0.0
      %997 = vmatpush1.msra.mxu0 0.0
      %998 = vmatprep.subr.mxu0 0.0
      %999 = vmatpush1.msra.mxu0 0.0
      %1000 = vmatprep.subr.mxu0 0.0
      %1001 = vmatpush1.msra.mxu0 0.0
      %1002 = vmatprep.subr.mxu0 0.0
      %1003 = vmatpush1.msra.mxu0 0.0
      %1004 = vmatprep.subr.mxu0 0.0
      %1005 = vmatpush1.msra.mxu0 0.0
      %1006 = vmatprep.subr.mxu0 0.0
      %1007 = vmatpush1.msra.mxu0 0.0
      %1008 = vmatprep.subr.mxu0 0.0
      %1009 = vmatpush1.msra.mxu0 0.0
      %1010 = vmatprep.subr.mxu0 0.0
      %1011 = vmatpush1.msra.mxu0 0.0
      %1012 = vmatprep.subr.mxu0 0.0
      %1013 = vmatpush1.msra.mxu0 0.0
      %1014 = vmatprep.subr.mxu0 0.0
      %1015 = vmatpush1.msra.mxu0 0.0
      %1016 = vmatprep.subr.mxu0 0.0
      %1017 = vmatpush1.msra.mxu0 0.0
      %1018 = vmatprep.subr.mxu0 0.0
      %1019 = vmatpush1.msra.mxu0 0.0
      %1020 = vmatprep.subr.mxu0 0.0
      %1021 = vmatpush1.msra.mxu0 0.0
      %1022 = vmatprep.subr.mxu0 0.0
      %1023 = vmatpush1.msra.mxu0 0.0
      %1024 = vmatprep.subr.mxu0 0.0
      %1025 = vmatpush1.msra.mxu0 0.0
      %1026 = vmatprep.subr.mxu0 0.0
      %1027 = vmatpush1.msra.mxu0 0.0
      %1028 = vmatprep.mubr.f32.mxu0 0.0
      %1029 = vmatmul.mubr.f32.gmra.mrb[0].mxu0 %v935
      %v1030 = vpop.f32.mrb[0].mxu0
      %v1031 = vadd.f32 0.0, %v1030
      %v1032 = vpop.f32.mrb[0].mxu0
      %1033 = vmatprep.mubr.f32.mxu0 0.0
      %1034 = vmatmul.mubr.f32.gmra.mrb[0].mxu0 %v938
      %v1035 = vpop.f32.mrb[0].mxu0
      %v1036 = vadd.f32 0.0, %v1035
      %v1037 = vpop.f32.mrb[0].mxu0
      %1038 = vmatprep.mubr.f32.mxu0 0.0
      %1039 = vmatmul.mubr.f32.gmra.mrb[0].mxu0 %v941
      %v1040 = vpop.f32.mrb[0].mxu0
      %v1041 = vadd.f32 0.0, %v1040
      %v1042 = vpop.f32.mrb[0].mxu0
      %1043 = vmatprep.mubr.f32.mxu0 0.0
      %1044 = vmatmul.mubr.f32.gmra.mrb[0].mxu0 %v944
      %v1045 = vpop.f32.mrb[0].mxu0
      %v1046 = vadd.f32 0.0, %v1045
      %v1047 = vpop.f32.mrb[0].mxu0
      %1048 = vmatprep.mubr.f32.mxu0 0.0
      %1049 = vmatmul.mubr.f32.gmra.mrb[0].mxu0 %v947
      %v1050 = vpop.f32.mrb[0].mxu0
      %v1051 = vadd.f32 0.0, %v1050
      %v1052 = vpop.f32.mrb[0].mxu0
      %1053 = vmatprep.mubr.f32.mxu0 0.0
      %1054 = vmatmul.mubr.f32.gmra.mrb[0].mxu0 %v950
      %v1055 = vpop.f32.mrb[0].mxu0
      %v1056 = vadd.f32 0.0, %v1055
      %v1057 = vpop.f32.mrb[0].mxu0
      %1058 = vmatprep.mubr.f32.mxu0 0.0
      %1059 = vmatmul.mubr.f32.gmra.mrb[0].mxu0 %v953
      %v1060 = vpop.f32.mrb[0].mxu0
      %v1061 = vadd.f32 0.0, %v1060
      %v1062 = vpop.f32.mrb[0].mxu0
      %1063 = vmatprep.mubr.f32.mxu0 0.0
      %1064 = vmatmul.mubr.f32.gmra.mrb[0].mxu0 %v956
      %v1065 = vpop.f32.mrb[0].mxu0
      %v1066 = vadd.f32 0.0, %v1065
      %v1067 = vpop.f32.mrb[0].mxu0
      %1068 = vmatprep.mubr.f32.mxu0 0.0
      %1069 = vmatmul.mubr.f32.gmra.mrb[0].mxu0 %v959
      %v1070 = vpop.f32.mrb[0].mxu0
      %v1071 = vadd.f32 0.0, %v1070
      %v1072 = vpop.f32.mrb[0].mxu0
      %1073 = vmatprep.mubr.f32.mxu0 0.0
      %1074 = vmatmul.mubr.f32.gmra.mrb[0].mxu0 %v962
      %v1075 = vpop.f32.mrb[0].mxu0
      %v1076 = vadd.f32 0.0, %v1075
      %v1077 = vpop.f32.mrb[0].mxu0
      %1078 = vdwg.mxu0
      %v1079 = vadd.f32 %v912, %v1031
      %v1080 = vadd.f32 %v913, %v1036
      %v1081 = vadd.f32 %v914, %v1041
      %v1082 = vadd.f32 %v915, %v1046
      %v1083 = vadd.f32 %v916, %v1051
      %v1084 = vadd.f32 %v917, %v1056
      %v1085 = vadd.f32 %v918, %v1061
      %v1086 = vadd.f32 %v919, %v1066
      %v1087 = vadd.f32 %v920, %v1071
      %v1088 = vadd.f32 %v921, %v1076
      %v1089 = vld [vmem:[#allocation2 + $0x10] sm:$0xff]
      %v1090 = vld [vmem:[#allocation2 + $0x18] sm:$0xff]
      %v1091 = vld [vmem:[#allocation2 + $0x20] sm:$0xff]
      %v1092 = vld [vmem:[#allocation2 + $0x28] sm:$0xff]
      %v1093 = vld [vmem:[#allocation2 + $0x30] sm:$0xff]
      %v1094 = vld [vmem:[#allocation2 + $0x38] sm:$0xff]
      %v1095 = vld [vmem:[#allocation2 + $0x40] sm:$0xff]
      %v1096 = vld [vmem:[#allocation2 + $0x48] sm:$0xff]
      %v1097 = vld [vmem:[#allocation2 + $0x50] sm:$0xff]
      %v1098 = vld [vmem:[#allocation2 + $0x58] sm:$0xff]
      %s1099 = scalar_lea.vmem %s4, 32
      %v1100 = vld [vmem:[%s1099] sm:$0xff]
      %v1102 = vsel %vm293, %v1089, 0
      %v1105 = vsel %vm293, %v1090, 0
      %v1108 = vsel %vm293, %v1091, 0
      %v1111 = vsel %vm293, %v1092, 0
      %v1114 = vsel %vm293, %v1093, 0
      %v1117 = vsel %vm293, %v1094, 0
      %v1120 = vsel %vm293, %v1095, 0
      %v1123 = vsel %vm293, %v1096, 0
      %v1126 = vsel %vm293, %v1097, 0
      %v1129 = vsel %vm293, %v1098, 0
      %1131 = vmatprep.subr.mxu0 0.0
      %1132 = vmatpush1.msra.mxu0 %v1100
      %1133 = vmatprep.subr.mxu0 0.0
      %1134 = vmatpush1.msra.mxu0 0.0
      %1135 = vmatprep.subr.mxu0 0.0
      %1136 = vmatpush1.msra.mxu0 0.0
      %1137 = vmatprep.subr.mxu0 0.0
      %1138 = vmatpush1.msra.mxu0 0.0
      %1139 = vmatprep.subr.mxu0 0.0
      %1140 = vmatpush1.msra.mxu0 0.0
      %1141 = vmatprep.subr.mxu0 0.0
      %1142 = vmatpush1.msra.mxu0 0.0
      %1143 = vmatprep.subr.mxu0 0.0
      %1144 = vmatpush1.msra.mxu0 0.0
      %1145 = vmatprep.subr.mxu0 0.0
      %1146 = vmatpush1.msra.mxu0 0.0
      %1147 = vmatprep.subr.mxu0 0.0
      %1148 = vmatpush1.msra.mxu0 0.0
      %1149 = vmatprep.subr.mxu0 0.0
      %1150 = vmatpush1.msra.mxu0 0.0
      %1151 = vmatprep.subr.mxu0 0.0
      %1152 = vmatpush1.msra.mxu0 0.0
      %1153 = vmatprep.subr.mxu0 0.0
      %1154 = vmatpush1.msra.mxu0 0.0
      %1155 = vmatprep.subr.mxu0 0.0
      %1156 = vmatpush1.msra.mxu0 0.0
      %1157 = vmatprep.subr.mxu0 0.0
      %1158 = vmatpush1.msra.mxu0 0.0
      %1159 = vmatprep.subr.mxu0 0.0
      %1160 = vmatpush1.msra.mxu0 0.0
      %1161 = vmatprep.subr.mxu0 0.0
      %1162 = vmatpush1.msra.mxu0 0.0
      %1163 = vmatprep.subr.mxu0 0.0
      %1164 = vmatpush1.msra.mxu0 0.0
      %1165 = vmatprep.subr.mxu0 0.0
      %1166 = vmatpush1.msra.mxu0 0.0
      %1167 = vmatprep.subr.mxu0 0.0
      %1168 = vmatpush1.msra.mxu0 0.0
      %1169 = vmatprep.subr.mxu0 0.0
      %1170 = vmatpush1.msra.mxu0 0.0
      %1171 = vmatprep.subr.mxu0 0.0
      %1172 = vmatpush1.msra.mxu0 0.0
      %1173 = vmatprep.subr.mxu0 0.0
      %1174 = vmatpush1.msra.mxu0 0.0
      %1175 = vmatprep.subr.mxu0 0.0
      %1176 = vmatpush1.msra.mxu0 0.0
      %1177 = vmatprep.subr.mxu0 0.0
      %1178 = vmatpush1.msra.mxu0 0.0
      %1179 = vmatprep.subr.mxu0 0.0
      %1180 = vmatpush1.msra.mxu0 0.0
      %1181 = vmatprep.subr.mxu0 0.0
      %1182 = vmatpush1.msra.mxu0 0.0
      %1183 = vmatprep.subr.mxu0 0.0
      %1184 = vmatpush1.msra.mxu0 0.0
      %1185 = vmatprep.subr.mxu0 0.0
      %1186 = vmatpush1.msra.mxu0 0.0
      %1187 = vmatprep.subr.mxu0 0.0
      %1188 = vmatpush1.msra.mxu0 0.0
      %1189 = vmatprep.subr.mxu0 0.0
      %1190 = vmatpush1.msra.mxu0 0.0
      %1191 = vmatprep.subr.mxu0 0.0
      %1192 = vmatpush1.msra.mxu0 0.0
      %1193 = vmatprep.subr.mxu0 0.0
      %1194 = vmatpush1.msra.mxu0 0.0
      %1195 = vmatprep.mubr.f32.mxu0 0.0
      %1196 = vmatmul.mubr.f32.gmra.mrb[0].mxu0 %v1102
      %v1197 = vpop.f32.mrb[0].mxu0
      %v1198 = vadd.f32 0.0, %v1197
      %v1199 = vpop.f32.mrb[0].mxu0
      %1200 = vmatprep.mubr.f32.mxu0 0.0
      %1201 = vmatmul.mubr.f32.gmra.mrb[0].mxu0 %v1105
      %v1202 = vpop.f32.mrb[0].mxu0
      %v1203 = vadd.f32 0.0, %v1202
      %v1204 = vpop.f32.mrb[0].mxu0
      %1205 = vmatprep.mubr.f32.mxu0 0.0
      %1206 = vmatmul.mubr.f32.gmra.mrb[0].mxu0 %v1108
      %v1207 = vpop.f32.mrb[0].mxu0
      %v1208 = vadd.f32 0.0, %v1207
      %v1209 = vpop.f32.mrb[0].mxu0
      %1210 = vmatprep.mubr.f32.mxu0 0.0
      %1211 = vmatmul.mubr.f32.gmra.mrb[0].mxu0 %v1111
      %v1212 = vpop.f32.mrb[0].mxu0
      %v1213 = vadd.f32 0.0, %v1212
      %v1214 = vpop.f32.mrb[0].mxu0
      %1215 = vmatprep.mubr.f32.mxu0 0.0
      %1216 = vmatmul.mubr.f32.gmra.mrb[0].mxu0 %v1114
      %v1217 = vpop.f32.mrb[0].mxu0
      %v1218 = vadd.f32 0.0, %v1217
      %v1219 = vpop.f32.mrb[0].mxu0
      %1220 = vmatprep.mubr.f32.mxu0 0.0
      %1221 = vmatmul.mubr.f32.gmra.mrb[0].mxu0 %v1117
      %v1222 = vpop.f32.mrb[0].mxu0
      %v1223 = vadd.f32 0.0, %v1222
      %v1224 = vpop.f32.mrb[0].mxu0
      %1225 = vmatprep.mubr.f32.mxu0 0.0
      %1226 = vmatmul.mubr.f32.gmra.mrb[0].mxu0 %v1120
      %v1227 = vpop.f32.mrb[0].mxu0
      %v1228 = vadd.f32 0.0, %v1227
      %v1229 = vpop.f32.mrb[0].mxu0
      %1230 = vmatprep.mubr.f32.mxu0 0.0
      %1231 = vmatmul.mubr.f32.gmra.mrb[0].mxu0 %v1123
      %v1232 = vpop.f32.mrb[0].mxu0
      %v1233 = vadd.f32 0.0, %v1232
      %v1234 = vpop.f32.mrb[0].mxu0
      %1235 = vmatprep.mubr.f32.mxu0 0.0
      %1236 = vmatmul.mubr.f32.gmra.mrb[0].mxu0 %v1126
      %v1237 = vpop.f32.mrb[0].mxu0
      %v1238 = vadd.f32 0.0, %v1237
      %v1239 = vpop.f32.mrb[0].mxu0
      %1240 = vmatprep.mubr.f32.mxu0 0.0
      %1241 = vmatmul.mubr.f32.gmra.mrb[0].mxu0 %v1129
      %v1242 = vpop.f32.mrb[0].mxu0
      %v1243 = vadd.f32 0.0, %v1242
      %v1244 = vpop.f32.mrb[0].mxu0
      %1245 = vdwg.mxu0
      %v1246 = vadd.f32 %v1079, %v1198
      %v1247 = vadd.f32 %v1080, %v1203
      %v1248 = vadd.f32 %v1081, %v1208
      %v1249 = vadd.f32 %v1082, %v1213
      %v1250 = vadd.f32 %v1083, %v1218
      %v1251 = vadd.f32 %v1084, %v1223
      %v1252 = vadd.f32 %v1085, %v1228
      %v1253 = vadd.f32 %v1086, %v1233
      %v1254 = vadd.f32 %v1087, %v1238
      %v1255 = vadd.f32 %v1088, %v1243
      %v1256 = vld [vmem:[#allocation2 + $0x11] sm:$0xff]
      %v1257 = vld [vmem:[#allocation2 + $0x19] sm:$0xff]
      %v1258 = vld [vmem:[#allocation2 + $0x21] sm:$0xff]
      %v1259 = vld [vmem:[#allocation2 + $0x29] sm:$0xff]
      %v1260 = vld [vmem:[#allocation2 + $0x31] sm:$0xff]
      %v1261 = vld [vmem:[#allocation2 + $0x39] sm:$0xff]
      %v1262 = vld [vmem:[#allocation2 + $0x41] sm:$0xff]
      %v1263 = vld [vmem:[#allocation2 + $0x49] sm:$0xff]
      %v1264 = vld [vmem:[#allocation2 + $0x51] sm:$0xff]
      %v1265 = vld [vmem:[#allocation2 + $0x59] sm:$0xff]
      %s1266 = scalar_lea.vmem %s4, 40
      %v1267 = vld [vmem:[%s1266] sm:$0xff]
      %v1269 = vsel %vm293, %v1256, 0
      %v1272 = vsel %vm293, %v1257, 0
      %v1275 = vsel %vm293, %v1258, 0
      %v1278 = vsel %vm293, %v1259, 0
      %v1281 = vsel %vm293, %v1260, 0
      %v1284 = vsel %vm293, %v1261, 0
      %v1287 = vsel %vm293, %v1262, 0
      %v1290 = vsel %vm293, %v1263, 0
      %v1293 = vsel %vm293, %v1264, 0
      %v1296 = vsel %vm293, %v1265, 0
      %1298 = vmatprep.subr.mxu0 0.0
      %1299 = vmatpush1.msra.mxu0 %v1267
      %1300 = vmatprep.subr.mxu0 0.0
      %1301 = vmatpush1.msra.mxu0 0.0
      %1302 = vmatprep.subr.mxu0 0.0
      %1303 = vmatpush1.msra.mxu0 0.0
      %1304 = vmatprep.subr.mxu0 0.0
      %1305 = vmatpush1.msra.mxu0 0.0
      %1306 = vmatprep.subr.mxu0 0.0
      %1307 = vmatpush1.msra.mxu0 0.0
      %1308 = vmatprep.subr.mxu0 0.0
      %1309 = vmatpush1.msra.mxu0 0.0
      %1310 = vmatprep.subr.mxu0 0.0
      %1311 = vmatpush1.msra.mxu0 0.0
      %1312 = vmatprep.subr.mxu0 0.0
      %1313 = vmatpush1.msra.mxu0 0.0
      %1314 = vmatprep.subr.mxu0 0.0
      %1315 = vmatpush1.msra.mxu0 0.0
      %1316 = vmatprep.subr.mxu0 0.0
      %1317 = vmatpush1.msra.mxu0 0.0
      %1318 = vmatprep.subr.mxu0 0.0
      %1319 = vmatpush1.msra.mxu0 0.0
      %1320 = vmatprep.subr.mxu0 0.0
      %1321 = vmatpush1.msra.mxu0 0.0
      %1322 = vmatprep.subr.mxu0 0.0
      %1323 = vmatpush1.msra.mxu0 0.0
      %1324 = vmatprep.subr.mxu0 0.0
      %1325 = vmatpush1.msra.mxu0 0.0
      %1326 = vmatprep.subr.mxu0 0.0
      %1327 = vmatpush1.msra.mxu0 0.0
      %1328 = vmatprep.subr.mxu0 0.0
      %1329 = vmatpush1.msra.mxu0 0.0
      %1330 = vmatprep.subr.mxu0 0.0
      %1331 = vmatpush1.msra.mxu0 0.0
      %1332 = vmatprep.subr.mxu0 0.0
      %1333 = vmatpush1.msra.mxu0 0.0
      %1334 = vmatprep.subr.mxu0 0.0
      %1335 = vmatpush1.msra.mxu0 0.0
      %1336 = vmatprep.subr.mxu0 0.0
      %1337 = vmatpush1.msra.mxu0 0.0
      %1338 = vmatprep.subr.mxu0 0.0
      %1339 = vmatpush1.msra.mxu0 0.0
      %1340 = vmatprep.subr.mxu0 0.0
      %1341 = vmatpush1.msra.mxu0 0.0
      %1342 = vmatprep.subr.mxu0 0.0
      %1343 = vmatpush1.msra.mxu0 0.0
      %1344 = vmatprep.subr.mxu0 0.0
      %1345 = vmatpush1.msra.mxu0 0.0
      %1346 = vmatprep.subr.mxu0 0.0
      %1347 = vmatpush1.msra.mxu0 0.0
      %1348 = vmatprep.subr.mxu0 0.0
      %1349 = vmatpush1.msra.mxu0 0.0
      %1350 = vmatprep.subr.mxu0 0.0
      %1351 = vmatpush1.msra.mxu0 0.0
      %1352 = vmatprep.subr.mxu0 0.0
      %1353 = vmatpush1.msra.mxu0 0.0
      %1354 = vmatprep.subr.mxu0 0.0
      %1355 = vmatpush1.msra.mxu0 0.0
      %1356 = vmatprep.subr.mxu0 0.0
      %1357 = vmatpush1.msra.mxu0 0.0
      %1358 = vmatprep.subr.mxu0 0.0
      %1359 = vmatpush1.msra.mxu0 0.0
      %1360 = vmatprep.subr.mxu0 0.0
      %1361 = vmatpush1.msra.mxu0 0.0
      %1362 = vmatprep.mubr.f32.mxu0 0.0
      %1363 = vmatmul.mubr.f32.gmra.mrb[0].mxu0 %v1269
      %v1364 = vpop.f32.mrb[0].mxu0
      %v1365 = vadd.f32 0.0, %v1364
      %v1366 = vpop.f32.mrb[0].mxu0
      %1367 = vmatprep.mubr.f32.mxu0 0.0
      %1368 = vmatmul.mubr.f32.gmra.mrb[0].mxu0 %v1272
      %v1369 = vpop.f32.mrb[0].mxu0
      %v1370 = vadd.f32 0.0, %v1369
      %v1371 = vpop.f32.mrb[0].mxu0
      %1372 = vmatprep.mubr.f32.mxu0 0.0
      %1373 = vmatmul.mubr.f32.gmra.mrb[0].mxu0 %v1275
      %v1374 = vpop.f32.mrb[0].mxu0
      %v1375 = vadd.f32 0.0, %v1374
      %v1376 = vpop.f32.mrb[0].mxu0
      %1377 = vmatprep.mubr.f32.mxu0 0.0
      %1378 = vmatmul.mubr.f32.gmra.mrb[0].mxu0 %v1278
      %v1379 = vpop.f32.mrb[0].mxu0
      %v1380 = vadd.f32 0.0, %v1379
      %v1381 = vpop.f32.mrb[0].mxu0
      %1382 = vmatprep.mubr.f32.mxu0 0.0
      %1383 = vmatmul.mubr.f32.gmra.mrb[0].mxu0 %v1281
      %v1384 = vpop.f32.mrb[0].mxu0
      %v1385 = vadd.f32 0.0, %v1384
      %v1386 = vpop.f32.mrb[0].mxu0
      %1387 = vmatprep.mubr.f32.mxu0 0.0
      %1388 = vmatmul.mubr.f32.gmra.mrb[0].mxu0 %v1284
      %v1389 = vpop.f32.mrb[0].mxu0
      %v1390 = vadd.f32 0.0, %v1389
      %v1391 = vpop.f32.mrb[0].mxu0
      %1392 = vmatprep.mubr.f32.mxu0 0.0
      %1393 = vmatmul.mubr.f32.gmra.mrb[0].mxu0 %v1287
      %v1394 = vpop.f32.mrb[0].mxu0
      %v1395 = vadd.f32 0.0, %v1394
      %v1396 = vpop.f32.mrb[0].mxu0
      %1397 = vmatprep.mubr.f32.mxu0 0.0
      %1398 = vmatmul.mubr.f32.gmra.mrb[0].mxu0 %v1290
      %v1399 = vpop.f32.mrb[0].mxu0
      %v1400 = vadd.f32 0.0, %v1399
      %v1401 = vpop.f32.mrb[0].mxu0
      %1402 = vmatprep.mubr.f32.mxu0 0.0
      %1403 = vmatmul.mubr.f32.gmra.mrb[0].mxu0 %v1293
      %v1404 = vpop.f32.mrb[0].mxu0
      %v1405 = vadd.f32 0.0, %v1404
      %v1406 = vpop.f32.mrb[0].mxu0
      %1407 = vmatprep.mubr.f32.mxu0 0.0
      %1408 = vmatmul.mubr.f32.gmra.mrb[0].mxu0 %v1296
      %v1409 = vpop.f32.mrb[0].mxu0
      %v1410 = vadd.f32 0.0, %v1409
      %v1411 = vpop.f32.mrb[0].mxu0
      %1412 = vdwg.mxu0
      %v1413 = vadd.f32 %v1246, %v1365
      %v1414 = vadd.f32 %v1247, %v1370
      %v1415 = vadd.f32 %v1248, %v1375
      %v1416 = vadd.f32 %v1249, %v1380
      %v1417 = vadd.f32 %v1250, %v1385
      %v1418 = vadd.f32 %v1251, %v1390
      %v1419 = vadd.f32 %v1252, %v1395
      %v1420 = vadd.f32 %v1253, %v1400
      %v1421 = vadd.f32 %v1254, %v1405
      %v1422 = vadd.f32 %v1255, %v1410
      %v1423 = vld [vmem:[#allocation2 + $0x19] sm:$0xff]
      %v1424 = vld [vmem:[#allocation2 + $0x21] sm:$0xff]
      %v1425 = vld [vmem:[#allocation2 + $0x29] sm:$0xff]
      %v1426 = vld [vmem:[#allocation2 + $0x31] sm:$0xff]
      %v1427 = vld [vmem:[#allocation2 + $0x39] sm:$0xff]
      %v1428 = vld [vmem:[#allocation2 + $0x41] sm:$0xff]
      %v1429 = vld [vmem:[#allocation2 + $0x49] sm:$0xff]
      %v1430 = vld [vmem:[#allocation2 + $0x51] sm:$0xff]
      %v1431 = vld [vmem:[#allocation2 + $0x59] sm:$0xff]
      %v1432 = vld [vmem:[#allocation2 + $0x61] sm:$0xff]
      %s1433 = scalar_lea.vmem %s4, 48
      %v1434 = vld [vmem:[%s1433] sm:$0xff]
      %v1436 = vsel %vm293, %v1423, 0
      %v1439 = vsel %vm293, %v1424, 0
      %v1442 = vsel %vm293, %v1425, 0
      %v1445 = vsel %vm293, %v1426, 0
      %v1448 = vsel %vm293, %v1427, 0
      %v1451 = vsel %vm293, %v1428, 0
      %v1454 = vsel %vm293, %v1429, 0
      %v1457 = vsel %vm293, %v1430, 0
      %v1460 = vsel %vm293, %v1431, 0
      %v1463 = vsel %vm293, %v1432, 0
      %1465 = vmatprep.subr.mxu0 0.0
      %1466 = vmatpush1.msra.mxu0 %v1434
      %1467 = vmatprep.subr.mxu0 0.0
      %1468 = vmatpush1.msra.mxu0 0.0
      %1469 = vmatprep.subr.mxu0 0.0
      %1470 = vmatpush1.msra.mxu0 0.0
      %1471 = vmatprep.subr.mxu0 0.0
      %1472 = vmatpush1.msra.mxu0 0.0
      %1473 = vmatprep.subr.mxu0 0.0
      %1474 = vmatpush1.msra.mxu0 0.0
      %1475 = vmatprep.subr.mxu0 0.0
      %1476 = vmatpush1.msra.mxu0 0.0
      %1477 = vmatprep.subr.mxu0 0.0
      %1478 = vmatpush1.msra.mxu0 0.0
      %1479 = vmatprep.subr.mxu0 0.0
      %1480 = vmatpush1.msra.mxu0 0.0
      %1481 = vmatprep.subr.mxu0 0.0
      %1482 = vmatpush1.msra.mxu0 0.0
      %1483 = vmatprep.subr.mxu0 0.0
      %1484 = vmatpush1.msra.mxu0 0.0
      %1485 = vmatprep.subr.mxu0 0.0
      %1486 = vmatpush1.msra.mxu0 0.0
      %1487 = vmatprep.subr.mxu0 0.0
      %1488 = vmatpush1.msra.mxu0 0.0
      %1489 = vmatprep.subr.mxu0 0.0
      %1490 = vmatpush1.msra.mxu0 0.0
      %1491 = vmatprep.subr.mxu0 0.0
      %1492 = vmatpush1.msra.mxu0 0.0
      %1493 = vmatprep.subr.mxu0 0.0
      %1494 = vmatpush1.msra.mxu0 0.0
      %1495 = vmatprep.subr.mxu0 0.0
      %1496 = vmatpush1.msra.mxu0 0.0
      %1497 = vmatprep.subr.mxu0 0.0
      %1498 = vmatpush1.msra.mxu0 0.0
      %1499 = vmatprep.subr.mxu0 0.0
      %1500 = vmatpush1.msra.mxu0 0.0
      %1501 = vmatprep.subr.mxu0 0.0
      %1502 = vmatpush1.msra.mxu0 0.0
      %1503 = vmatprep.subr.mxu0 0.0
      %1504 = vmatpush1.msra.mxu0 0.0
      %1505 = vmatprep.subr.mxu0 0.0
      %1506 = vmatpush1.msra.mxu0 0.0
      %1507 = vmatprep.subr.mxu0 0.0
      %1508 = vmatpush1.msra.mxu0 0.0
      %1509 = vmatprep.subr.mxu0 0.0
      %1510 = vmatpush1.msra.mxu0 0.0
      %1511 = vmatprep.subr.mxu0 0.0
      %1512 = vmatpush1.msra.mxu0 0.0
      %1513 = vmatprep.subr.mxu0 0.0
      %1514 = vmatpush1.msra.mxu0 0.0
      %1515 = vmatprep.subr.mxu0 0.0
      %1516 = vmatpush1.msra.mxu0 0.0
      %1517 = vmatprep.subr.mxu0 0.0
      %1518 = vmatpush1.msra.mxu0 0.0
      %1519 = vmatprep.subr.mxu0 0.0
      %1520 = vmatpush1.msra.mxu0 0.0
      %1521 = vmatprep.subr.mxu0 0.0
      %1522 = vmatpush1.msra.mxu0 0.0
      %1523 = vmatprep.subr.mxu0 0.0
      %1524 = vmatpush1.msra.mxu0 0.0
      %1525 = vmatprep.subr.mxu0 0.0
      %1526 = vmatpush1.msra.mxu0 0.0
      %1527 = vmatprep.subr.mxu0 0.0
      %1528 = vmatpush1.msra.mxu0 0.0
      %1529 = vmatprep.mubr.f32.mxu0 0.0
      %1530 = vmatmul.mubr.f32.gmra.mrb[0].mxu0 %v1436
      %v1531 = vpop.f32.mrb[0].mxu0
      %v1532 = vadd.f32 0.0, %v1531
      %v1533 = vpop.f32.mrb[0].mxu0
      %1534 = vmatprep.mubr.f32.mxu0 0.0
      %1535 = vmatmul.mubr.f32.gmra.mrb[0].mxu0 %v1439
      %v1536 = vpop.f32.mrb[0].mxu0
      %v1537 = vadd.f32 0.0, %v1536
      %v1538 = vpop.f32.mrb[0].mxu0
      %1539 = vmatprep.mubr.f32.mxu0 0.0
      %1540 = vmatmul.mubr.f32.gmra.mrb[0].mxu0 %v1442
      %v1541 = vpop.f32.mrb[0].mxu0
      %v1542 = vadd.f32 0.0, %v1541
      %v1543 = vpop.f32.mrb[0].mxu0
      %1544 = vmatprep.mubr.f32.mxu0 0.0
      %1545 = vmatmul.mubr.f32.gmra.mrb[0].mxu0 %v1445
      %v1546 = vpop.f32.mrb[0].mxu0
      %v1547 = vadd.f32 0.0, %v1546
      %v1548 = vpop.f32.mrb[0].mxu0
      %1549 = vmatprep.mubr.f32.mxu0 0.0
      %1550 = vmatmul.mubr.f32.gmra.mrb[0].mxu0 %v1448
      %v1551 = vpop.f32.mrb[0].mxu0
      %v1552 = vadd.f32 0.0, %v1551
      %v1553 = vpop.f32.mrb[0].mxu0
      %1554 = vmatprep.mubr.f32.mxu0 0.0
      %1555 = vmatmul.mubr.f32.gmra.mrb[0].mxu0 %v1451
      %v1556 = vpop.f32.mrb[0].mxu0
      %v1557 = vadd.f32 0.0, %v1556
      %v1558 = vpop.f32.mrb[0].mxu0
      %1559 = vmatprep.mubr.f32.mxu0 0.0
      %1560 = vmatmul.mubr.f32.gmra.mrb[0].mxu0 %v1454
      %v1561 = vpop.f32.mrb[0].mxu0
      %v1562 = vadd.f32 0.0, %v1561
      %v1563 = vpop.f32.mrb[0].mxu0
      %1564 = vmatprep.mubr.f32.mxu0 0.0
      %1565 = vmatmul.mubr.f32.gmra.mrb[0].mxu0 %v1457
      %v1566 = vpop.f32.mrb[0].mxu0
      %v1567 = vadd.f32 0.0, %v1566
      %v1568 = vpop.f32.mrb[0].mxu0
      %1569 = vmatprep.mubr.f32.mxu0 0.0
      %1570 = vmatmul.mubr.f32.gmra.mrb[0].mxu0 %v1460
      %v1571 = vpop.f32.mrb[0].mxu0
      %v1572 = vadd.f32 0.0, %v1571
      %v1573 = vpop.f32.mrb[0].mxu0
      %1574 = vmatprep.mubr.f32.mxu0 0.0
      %1575 = vmatmul.mubr.f32.gmra.mrb[0].mxu0 %v1463
      %v1576 = vpop.f32.mrb[0].mxu0
      %v1577 = vadd.f32 0.0, %v1576
      %v1578 = vpop.f32.mrb[0].mxu0
      %1579 = vdwg.mxu0
      %v1580 = vadd.f32 %v1413, %v1532
      %v1581 = vadd.f32 %v1414, %v1537
      %v1582 = vadd.f32 %v1415, %v1542
      %v1583 = vadd.f32 %v1416, %v1547
      %v1584 = vadd.f32 %v1417, %v1552
      %v1585 = vadd.f32 %v1418, %v1557
      %v1586 = vadd.f32 %v1419, %v1562
      %v1587 = vadd.f32 %v1420, %v1567
      %v1588 = vadd.f32 %v1421, %v1572
      %v1589 = vadd.f32 %v1422, %v1577
      %v1590 = vld [vmem:[#allocation2 + $0x1a] sm:$0xff]
      %v1591 = vld [vmem:[#allocation2 + $0x22] sm:$0xff]
      %v1592 = vld [vmem:[#allocation2 + $0x2a] sm:$0xff]
      %v1593 = vld [vmem:[#allocation2 + $0x32] sm:$0xff]
      %v1594 = vld [vmem:[#allocation2 + $0x3a] sm:$0xff]
      %v1595 = vld [vmem:[#allocation2 + $0x42] sm:$0xff]
      %v1596 = vld [vmem:[#allocation2 + $0x4a] sm:$0xff]
      %v1597 = vld [vmem:[#allocation2 + $0x52] sm:$0xff]
      %v1598 = vld [vmem:[#allocation2 + $0x5a] sm:$0xff]
      %v1599 = vld [vmem:[#allocation2 + $0x62] sm:$0xff]
      %s1600 = scalar_lea.vmem %s4, 56
      %v1601 = vld [vmem:[%s1600] sm:$0xff]
      %v1603 = vsel %vm293, %v1590, 0
      %v1606 = vsel %vm293, %v1591, 0
      %v1609 = vsel %vm293, %v1592, 0
      %v1612 = vsel %vm293, %v1593, 0
      %v1615 = vsel %vm293, %v1594, 0
      %v1618 = vsel %vm293, %v1595, 0
      %v1621 = vsel %vm293, %v1596, 0
      %v1624 = vsel %vm293, %v1597, 0
      %v1627 = vsel %vm293, %v1598, 0
      %v1630 = vsel %vm293, %v1599, 0
      %1632 = vmatprep.subr.mxu0 0.0
      %1633 = vmatpush1.msra.mxu0 %v1601
      %1634 = vmatprep.subr.mxu0 0.0
      %1635 = vmatpush1.msra.mxu0 0.0
      %1636 = vmatprep.subr.mxu0 0.0
      %1637 = vmatpush1.msra.mxu0 0.0
      %1638 = vmatprep.subr.mxu0 0.0
      %1639 = vmatpush1.msra.mxu0 0.0
      %1640 = vmatprep.subr.mxu0 0.0
      %1641 = vmatpush1.msra.mxu0 0.0
      %1642 = vmatprep.subr.mxu0 0.0
      %1643 = vmatpush1.msra.mxu0 0.0
      %1644 = vmatprep.subr.mxu0 0.0
      %1645 = vmatpush1.msra.mxu0 0.0
      %1646 = vmatprep.subr.mxu0 0.0
      %1647 = vmatpush1.msra.mxu0 0.0
      %1648 = vmatprep.subr.mxu0 0.0
      %1649 = vmatpush1.msra.mxu0 0.0
      %1650 = vmatprep.subr.mxu0 0.0
      %1651 = vmatpush1.msra.mxu0 0.0
      %1652 = vmatprep.subr.mxu0 0.0
      %1653 = vmatpush1.msra.mxu0 0.0
      %1654 = vmatprep.subr.mxu0 0.0
      %1655 = vmatpush1.msra.mxu0 0.0
      %1656 = vmatprep.subr.mxu0 0.0
      %1657 = vmatpush1.msra.mxu0 0.0
      %1658 = vmatprep.subr.mxu0 0.0
      %1659 = vmatpush1.msra.mxu0 0.0
      %1660 = vmatprep.subr.mxu0 0.0
      %1661 = vmatpush1.msra.mxu0 0.0
      %1662 = vmatprep.subr.mxu0 0.0
      %1663 = vmatpush1.msra.mxu0 0.0
      %1664 = vmatprep.subr.mxu0 0.0
      %1665 = vmatpush1.msra.mxu0 0.0
      %1666 = vmatprep.subr.mxu0 0.0
      %1667 = vmatpush1.msra.mxu0 0.0
      %1668 = vmatprep.subr.mxu0 0.0
      %1669 = vmatpush1.msra.mxu0 0.0
      %1670 = vmatprep.subr.mxu0 0.0
      %1671 = vmatpush1.msra.mxu0 0.0
      %1672 = vmatprep.subr.mxu0 0.0
      %1673 = vmatpush1.msra.mxu0 0.0
      %1674 = vmatprep.subr.mxu0 0.0
      %1675 = vmatpush1.msra.mxu0 0.0
      %1676 = vmatprep.subr.mxu0 0.0
      %1677 = vmatpush1.msra.mxu0 0.0
      %1678 = vmatprep.subr.mxu0 0.0
      %1679 = vmatpush1.msra.mxu0 0.0
      %1680 = vmatprep.subr.mxu0 0.0
      %1681 = vmatpush1.msra.mxu0 0.0
      %1682 = vmatprep.subr.mxu0 0.0
      %1683 = vmatpush1.msra.mxu0 0.0
      %1684 = vmatprep.subr.mxu0 0.0
      %1685 = vmatpush1.msra.mxu0 0.0
      %1686 = vmatprep.subr.mxu0 0.0
      %1687 = vmatpush1.msra.mxu0 0.0
      %1688 = vmatprep.subr.mxu0 0.0
      %1689 = vmatpush1.msra.mxu0 0.0
      %1690 = vmatprep.subr.mxu0 0.0
      %1691 = vmatpush1.msra.mxu0 0.0
      %1692 = vmatprep.subr.mxu0 0.0
      %1693 = vmatpush1.msra.mxu0 0.0
      %1694 = vmatprep.subr.mxu0 0.0
      %1695 = vmatpush1.msra.mxu0 0.0
      %1696 = vmatprep.mubr.f32.mxu0 0.0
      %1697 = vmatmul.mubr.f32.gmra.mrb[0].mxu0 %v1603
      %v1698 = vpop.f32.mrb[0].mxu0
      %v1699 = vadd.f32 0.0, %v1698
      %v1700 = vpop.f32.mrb[0].mxu0
      %1701 = vmatprep.mubr.f32.mxu0 0.0
      %1702 = vmatmul.mubr.f32.gmra.mrb[0].mxu0 %v1606
      %v1703 = vpop.f32.mrb[0].mxu0
      %v1704 = vadd.f32 0.0, %v1703
      %v1705 = vpop.f32.mrb[0].mxu0
      %1706 = vmatprep.mubr.f32.mxu0 0.0
      %1707 = vmatmul.mubr.f32.gmra.mrb[0].mxu0 %v1609
      %v1708 = vpop.f32.mrb[0].mxu0
      %v1709 = vadd.f32 0.0, %v1708
      %v1710 = vpop.f32.mrb[0].mxu0
      %1711 = vmatprep.mubr.f32.mxu0 0.0
      %1712 = vmatmul.mubr.f32.gmra.mrb[0].mxu0 %v1612
      %v1713 = vpop.f32.mrb[0].mxu0
      %v1714 = vadd.f32 0.0, %v1713
      %v1715 = vpop.f32.mrb[0].mxu0
      %1716 = vmatprep.mubr.f32.mxu0 0.0
      %1717 = vmatmul.mubr.f32.gmra.mrb[0].mxu0 %v1615
      %v1718 = vpop.f32.mrb[0].mxu0
      %v1719 = vadd.f32 0.0, %v1718
      %v1720 = vpop.f32.mrb[0].mxu0
      %1721 = vmatprep.mubr.f32.mxu0 0.0
      %1722 = vmatmul.mubr.f32.gmra.mrb[0].mxu0 %v1618
      %v1723 = vpop.f32.mrb[0].mxu0
      %v1724 = vadd.f32 0.0, %v1723
      %v1725 = vpop.f32.mrb[0].mxu0
      %1726 = vmatprep.mubr.f32.mxu0 0.0
      %1727 = vmatmul.mubr.f32.gmra.mrb[0].mxu0 %v1621
      %v1728 = vpop.f32.mrb[0].mxu0
      %v1729 = vadd.f32 0.0, %v1728
      %v1730 = vpop.f32.mrb[0].mxu0
      %1731 = vmatprep.mubr.f32.mxu0 0.0
      %1732 = vmatmul.mubr.f32.gmra.mrb[0].mxu0 %v1624
      %v1733 = vpop.f32.mrb[0].mxu0
      %v1734 = vadd.f32 0.0, %v1733
      %v1735 = vpop.f32.mrb[0].mxu0
      %1736 = vmatprep.mubr.f32.mxu0 0.0
      %1737 = vmatmul.mubr.f32.gmra.mrb[0].mxu0 %v1627
      %v1738 = vpop.f32.mrb[0].mxu0
      %v1739 = vadd.f32 0.0, %v1738
      %v1740 = vpop.f32.mrb[0].mxu0
      %1741 = vmatprep.mubr.f32.mxu0 0.0
      %1742 = vmatmul.mubr.f32.gmra.mrb[0].mxu0 %v1630
      %v1743 = vpop.f32.mrb[0].mxu0
      %v1744 = vadd.f32 0.0, %v1743
      %v1745 = vpop.f32.mrb[0].mxu0
      %1746 = vdwg.mxu0
      %v1747 = vadd.f32 %v1580, %v1699
      %v1748 = vadd.f32 %v1581, %v1704
      %v1749 = vadd.f32 %v1582, %v1709
      %v1750 = vadd.f32 %v1583, %v1714
      %v1751 = vadd.f32 %v1584, %v1719
      %v1752 = vadd.f32 %v1585, %v1724
      %v1753 = vadd.f32 %v1586, %v1729
      %v1754 = vadd.f32 %v1587, %v1734
      %v1755 = vadd.f32 %v1588, %v1739
      %v1756 = vadd.f32 %v1589, %v1744
      %v1757 = vld [vmem:[#allocation2 + $0x1b] sm:$0xff]
      %v1758 = vld [vmem:[#allocation2 + $0x23] sm:$0xff]
      %v1759 = vld [vmem:[#allocation2 + $0x2b] sm:$0xff]
      %v1760 = vld [vmem:[#allocation2 + $0x33] sm:$0xff]
      %v1761 = vld [vmem:[#allocation2 + $0x3b] sm:$0xff]
      %v1762 = vld [vmem:[#allocation2 + $0x43] sm:$0xff]
      %v1763 = vld [vmem:[#allocation2 + $0x4b] sm:$0xff]
      %v1764 = vld [vmem:[#allocation2 + $0x53] sm:$0xff]
      %v1765 = vld [vmem:[#allocation2 + $0x5b] sm:$0xff]
      %v1766 = vld [vmem:[#allocation2 + $0x63] sm:$0xff]
      %s1767 = scalar_lea.vmem %s4, 64
      %v1768 = vld [vmem:[%s1767] sm:$0xff]
      %v1770 = vsel %vm293, %v1757, 0
      %v1773 = vsel %vm293, %v1758, 0
      %v1776 = vsel %vm293, %v1759, 0
      %v1779 = vsel %vm293, %v1760, 0
      %v1782 = vsel %vm293, %v1761, 0
      %v1785 = vsel %vm293, %v1762, 0
      %v1788 = vsel %vm293, %v1763, 0
      %v1791 = vsel %vm293, %v1764, 0
      %v1794 = vsel %vm293, %v1765, 0
      %v1797 = vsel %vm293, %v1766, 0
      %1799 = vmatprep.subr.mxu0 0.0
      %1800 = vmatpush1.msra.mxu0 %v1768
      %1801 = vmatprep.subr.mxu0 0.0
      %1802 = vmatpush1.msra.mxu0 0.0
      %1803 = vmatprep.subr.mxu0 0.0
      %1804 = vmatpush1.msra.mxu0 0.0
      %1805 = vmatprep.subr.mxu0 0.0
      %1806 = vmatpush1.msra.mxu0 0.0
      %1807 = vmatprep.subr.mxu0 0.0
      %1808 = vmatpush1.msra.mxu0 0.0
      %1809 = vmatprep.subr.mxu0 0.0
      %1810 = vmatpush1.msra.mxu0 0.0
      %1811 = vmatprep.subr.mxu0 0.0
      %1812 = vmatpush1.msra.mxu0 0.0
      %1813 = vmatprep.subr.mxu0 0.0
      %1814 = vmatpush1.msra.mxu0 0.0
      %1815 = vmatprep.subr.mxu0 0.0
      %1816 = vmatpush1.msra.mxu0 0.0
      %1817 = vmatprep.subr.mxu0 0.0
      %1818 = vmatpush1.msra.mxu0 0.0
      %1819 = vmatprep.subr.mxu0 0.0
      %1820 = vmatpush1.msra.mxu0 0.0
      %1821 = vmatprep.subr.mxu0 0.0
      %1822 = vmatpush1.msra.mxu0 0.0
      %1823 = vmatprep.subr.mxu0 0.0
      %1824 = vmatpush1.msra.mxu0 0.0
      %1825 = vmatprep.subr.mxu0 0.0
      %1826 = vmatpush1.msra.mxu0 0.0
      %1827 = vmatprep.subr.mxu0 0.0
      %1828 = vmatpush1.msra.mxu0 0.0
      %1829 = vmatprep.subr.mxu0 0.0
      %1830 = vmatpush1.msra.mxu0 0.0
      %1831 = vmatprep.subr.mxu0 0.0
      %1832 = vmatpush1.msra.mxu0 0.0
      %1833 = vmatprep.subr.mxu0 0.0
      %1834 = vmatpush1.msra.mxu0 0.0
      %1835 = vmatprep.subr.mxu0 0.0
      %1836 = vmatpush1.msra.mxu0 0.0
      %1837 = vmatprep.subr.mxu0 0.0
      %1838 = vmatpush1.msra.mxu0 0.0
      %1839 = vmatprep.subr.mxu0 0.0
      %1840 = vmatpush1.msra.mxu0 0.0
      %1841 = vmatprep.subr.mxu0 0.0
      %1842 = vmatpush1.msra.mxu0 0.0
      %1843 = vmatprep.subr.mxu0 0.0
      %1844 = vmatpush1.msra.mxu0 0.0
      %1845 = vmatprep.subr.mxu0 0.0
      %1846 = vmatpush1.msra.mxu0 0.0
      %1847 = vmatprep.subr.mxu0 0.0
      %1848 = vmatpush1.msra.mxu0 0.0
      %1849 = vmatprep.subr.mxu0 0.0
      %1850 = vmatpush1.msra.mxu0 0.0
      %1851 = vmatprep.subr.mxu0 0.0
      %1852 = vmatpush1.msra.mxu0 0.0
      %1853 = vmatprep.subr.mxu0 0.0
      %1854 = vmatpush1.msra.mxu0 0.0
      %1855 = vmatprep.subr.mxu0 0.0
      %1856 = vmatpush1.msra.mxu0 0.0
      %1857 = vmatprep.subr.mxu0 0.0
      %1858 = vmatpush1.msra.mxu0 0.0
      %1859 = vmatprep.subr.mxu0 0.0
      %1860 = vmatpush1.msra.mxu0 0.0
      %1861 = vmatprep.subr.mxu0 0.0
      %1862 = vmatpush1.msra.mxu0 0.0
      %1863 = vmatprep.mubr.f32.mxu0 0.0
      %1864 = vmatmul.mubr.f32.gmra.mrb[0].mxu0 %v1770
      %v1865 = vpop.f32.mrb[0].mxu0
      %v1866 = vadd.f32 0.0, %v1865
      %v1867 = vpop.f32.mrb[0].mxu0
      %1868 = vmatprep.mubr.f32.mxu0 0.0
      %1869 = vmatmul.mubr.f32.gmra.mrb[0].mxu0 %v1773
      %v1870 = vpop.f32.mrb[0].mxu0
      %v1871 = vadd.f32 0.0, %v1870
      %v1872 = vpop.f32.mrb[0].mxu0
      %1873 = vmatprep.mubr.f32.mxu0 0.0
      %1874 = vmatmul.mubr.f32.gmra.mrb[0].mxu0 %v1776
      %v1875 = vpop.f32.mrb[0].mxu0
      %v1876 = vadd.f32 0.0, %v1875
      %v1877 = vpop.f32.mrb[0].mxu0
      %1878 = vmatprep.mubr.f32.mxu0 0.0
      %1879 = vmatmul.mubr.f32.gmra.mrb[0].mxu0 %v1779
      %v1880 = vpop.f32.mrb[0].mxu0
      %v1881 = vadd.f32 0.0, %v1880
      %v1882 = vpop.f32.mrb[0].mxu0
      %1883 = vmatprep.mubr.f32.mxu0 0.0
      %1884 = vmatmul.mubr.f32.gmra.mrb[0].mxu0 %v1782
      %v1885 = vpop.f32.mrb[0].mxu0
      %v1886 = vadd.f32 0.0, %v1885
      %v1887 = vpop.f32.mrb[0].mxu0
      %1888 = vmatprep.mubr.f32.mxu0 0.0
      %1889 = vmatmul.mubr.f32.gmra.mrb[0].mxu0 %v1785
      %v1890 = vpop.f32.mrb[0].mxu0
      %v1891 = vadd.f32 0.0, %v1890
      %v1892 = vpop.f32.mrb[0].mxu0
      %1893 = vmatprep.mubr.f32.mxu0 0.0
      %1894 = vmatmul.mubr.f32.gmra.mrb[0].mxu0 %v1788
      %v1895 = vpop.f32.mrb[0].mxu0
      %v1896 = vadd.f32 0.0, %v1895
      %v1897 = vpop.f32.mrb[0].mxu0
      %1898 = vmatprep.mubr.f32.mxu0 0.0
      %1899 = vmatmul.mubr.f32.gmra.mrb[0].mxu0 %v1791
      %v1900 = vpop.f32.mrb[0].mxu0
      %v1901 = vadd.f32 0.0, %v1900
      %v1902 = vpop.f32.mrb[0].mxu0
      %1903 = vmatprep.mubr.f32.mxu0 0.0
      %1904 = vmatmul.mubr.f32.gmra.mrb[0].mxu0 %v1794
      %v1905 = vpop.f32.mrb[0].mxu0
      %v1906 = vadd.f32 0.0, %v1905
      %v1907 = vpop.f32.mrb[0].mxu0
      %1908 = vmatprep.mubr.f32.mxu0 0.0
      %1909 = vmatmul.mubr.f32.gmra.mrb[0].mxu0 %v1797
      %v1910 = vpop.f32.mrb[0].mxu0
      %v1911 = vadd.f32 0.0, %v1910
      %v1912 = vpop.f32.mrb[0].mxu0
      %1913 = vdwg.mxu0
      %v1914 = vadd.f32 %v1747, %v1866
      %v1915 = vadd.f32 %v1748, %v1871
      %v1916 = vadd.f32 %v1749, %v1876
      %v1917 = vadd.f32 %v1750, %v1881
      %v1918 = vadd.f32 %v1751, %v1886
      %v1919 = vadd.f32 %v1752, %v1891
      %v1920 = vadd.f32 %v1753, %v1896
      %v1921 = vadd.f32 %v1754, %v1901
      %v1922 = vadd.f32 %v1755, %v1906
      %v1923 = vadd.f32 %v1756, %v1911
      %1924 = vst.msk [vmem:[%s281] sm:$0xff] %vm293, %v1914
      %1925 = vst.msk [vmem:[%s281 + $0x8] sm:$0xff] %vm293, %v1915
      %1926 = vst.msk [vmem:[%s281 + $0x10] sm:$0xff] %vm293, %v1916
      %1927 = vst.msk [vmem:[%s281 + $0x18] sm:$0xff] %vm293, %v1917
      %1928 = vst.msk [vmem:[%s281 + $0x20] sm:$0xff] %vm293, %v1918
      %1929 = vst.msk [vmem:[%s281 + $0x28] sm:$0xff] %vm293, %v1919
      %1930 = vst.msk [vmem:[%s281 + $0x30] sm:$0xff] %vm293, %v1920
      %1931 = vst.msk [vmem:[%s281 + $0x38] sm:$0xff] %vm293, %v1921
      %1932 = vst.msk [vmem:[%s281 + $0x40] sm:$0xff] %vm293, %v1922
      %1933 = vst.msk [vmem:[%s281 + $0x48] sm:$0xff] %vm293, %v1923
      %v1934 = vld [vmem:[%s3] sm:$0xff]
      %v1935 = vld [vmem:[%s3 + $0x8] sm:$0xff]
      %v1936 = vld [vmem:[%s3 + $0x10] sm:$0xff]
      %v1937 = vld [vmem:[%s3 + $0x18] sm:$0xff]
      %v1938 = vld [vmem:[%s3 + $0x20] sm:$0xff]
      %v1939 = vld [vmem:[%s3 + $0x28] sm:$0xff]
      %v1940 = vld [vmem:[%s3 + $0x30] sm:$0xff]
      %v1941 = vld [vmem:[%s3 + $0x38] sm:$0xff]
      %v1942 = vld [vmem:[%s3 + $0x40] sm:$0xff]
      %v1943 = vld [vmem:[%s3 + $0x48] sm:$0xff]
      %1945 = vset.pattern.permute.xlu0 0
      %1946 = vperm.xlu0 %1945, %v1934
      %v1947 = vpop.permute.xlu0 %1946
      %1950 = vset.pattern.permute.xlu0 0
      %1951 = vperm.xlu0 %1950, %v1935
      %v1952 = vpop.permute.xlu0 %1951
      %1955 = vset.pattern.permute.xlu0 0
      %1956 = vperm.xlu0 %1955, %v1936
      %v1957 = vpop.permute.xlu0 %1956
      %1960 = vset.pattern.permute.xlu0 0
      %1961 = vperm.xlu0 %1960, %v1937
      %v1962 = vpop.permute.xlu0 %1961
      %1965 = vset.pattern.permute.xlu0 0
      %1966 = vperm.xlu0 %1965, %v1938
      %v1967 = vpop.permute.xlu0 %1966
      %1970 = vset.pattern.permute.xlu0 0
      %1971 = vperm.xlu0 %1970, %v1939
      %v1972 = vpop.permute.xlu0 %1971
      %1975 = vset.pattern.permute.xlu0 0
      %1976 = vperm.xlu0 %1975, %v1940
      %v1977 = vpop.permute.xlu0 %1976
      %1980 = vset.pattern.permute.xlu0 0
      %1981 = vperm.xlu0 %1980, %v1941
      %v1982 = vpop.permute.xlu0 %1981
      %1985 = vset.pattern.permute.xlu0 0
      %1986 = vperm.xlu0 %1985, %v1942
      %v1987 = vpop.permute.xlu0 %1986
      %1990 = vset.pattern.permute.xlu0 0
      %1991 = vperm.xlu0 %1990, %v1943
      %v1992 = vpop.permute.xlu0 %1991
      %v1994 = vmul.f32 %v1914, %v1947
      %v1995 = vmul.f32 %v1915, %v1952
      %v1996 = vmul.f32 %v1916, %v1957
      %v1997 = vmul.f32 %v1917, %v1962
      %v1998 = vmul.f32 %v1918, %v1967
      %v1999 = vmul.f32 %v1919, %v1972
      %v2000 = vmul.f32 %v1920, %v1977
      %v2001 = vmul.f32 %v1921, %v1982
      %v2002 = vmul.f32 %v1922, %v1987
      %v2003 = vmul.f32 %v1923, %v1992
      %v2004 = vsel %vm293, %v1994, 0.0
      %v2005 = vsel %vm293, %v1995, 0.0
      %v2006 = vadd.f32 %v2004, %v2005
      %v2007 = vsel %vm293, %v1996, 0.0
      %v2008 = vadd.f32 %v2006, %v2007
      %v2009 = vsel %vm293, %v1997, 0.0
      %v2010 = vadd.f32 %v2008, %v2009
      %v2011 = vsel %vm293, %v1998, 0.0
      %v2012 = vadd.f32 %v2010, %v2011
      %v2013 = vsel %vm293, %v1999, 0.0
      %v2014 = vadd.f32 %v2012, %v2013
      %v2015 = vsel %vm293, %v2000, 0.0
      %v2016 = vadd.f32 %v2014, %v2015
      %v2017 = vsel %vm293, %v2001, 0.0
      %v2018 = vadd.f32 %v2016, %v2017
      %v2019 = vsel %vm293, %v2002, 0.0
      %v2020 = vadd.f32 %v2018, %v2019
      %v2021 = vsel %vm293, %v2003, 0.0
      %v2022 = vadd.f32 %v2020, %v2021
      %v2023 = vrot.slane %v2022, 4
      %v2024 = vadd.f32 %v2022, %v2023
      %v2025 = vrot.slane %v2024, 2
      %v2026 = vadd.f32 %v2024, %v2025
      %v2027 = vrot.slane %v2026, 1
      %v2028 = vadd.f32 %v2026, %v2027
      %v2029 = vmul.f32 %v1994, %v1994
      %v2030 = vmul.f32 %v1995, %v1995
      %v2031 = vmul.f32 %v1996, %v1996
      %v2032 = vmul.f32 %v1997, %v1997
      %v2033 = vmul.f32 %v1998, %v1998
      %v2034 = vmul.f32 %v1999, %v1999
      %v2035 = vmul.f32 %v2000, %v2000
      %v2036 = vmul.f32 %v2001, %v2001
      %v2037 = vmul.f32 %v2002, %v2002
      %v2038 = vmul.f32 %v2003, %v2003
      %v2039 = vsel %vm293, %v2029, 0.0
      %v2040 = vsel %vm293, %v2030, 0.0
      %v2041 = vadd.f32 %v2039, %v2040
      %v2042 = vsel %vm293, %v2031, 0.0
      %v2043 = vadd.f32 %v2041, %v2042
      %v2044 = vsel %vm293, %v2032, 0.0
      %v2045 = vadd.f32 %v2043, %v2044
      %v2046 = vsel %vm293, %v2033, 0.0
      %v2047 = vadd.f32 %v2045, %v2046
      %v2048 = vsel %vm293, %v2034, 0.0
      %v2049 = vadd.f32 %v2047, %v2048
      %v2050 = vsel %vm293, %v2035, 0.0
      %v2051 = vadd.f32 %v2049, %v2050
      %v2052 = vsel %vm293, %v2036, 0.0
      %v2053 = vadd.f32 %v2051, %v2052
      %v2054 = vsel %vm293, %v2037, 0.0
      %v2055 = vadd.f32 %v2053, %v2054
      %v2056 = vsel %vm293, %v2038, 0.0
      %v2057 = vadd.f32 %v2055, %v2056
      %v2058 = vrot.slane %v2057, 4
      %v2059 = vadd.f32 %v2057, %v2058
      %v2060 = vrot.slane %v2059, 2
      %v2061 = vadd.f32 %v2059, %v2060
      %v2062 = vrot.slane %v2061, 1
      %v2063 = vadd.f32 %v2061, %v2062
      %vm2064 = vcmask 1040384
      %v2065 = vsel %vm2064, %v2028, %v2063
      %s2066 = sadd.s32 %s22, %s23
      %p2067 = scmp.lt.s32.totalorder %s2066, 2
      // Predicated region
      $region45: #{cifar_basic_block_forward.4} parent=39 // pred_check
        %p2068 = pneg %p2067
      $region46: #{cifar_basic_block_forward.4} parent=39 // pred_check_branch
        %2070 = sbr.rel (%p2068) target = $region48
      $region47: #{cifar_basic_block_forward.4} parent=39 // pred_region
        %v2071 = vld [vmem:[%s286] sm:$0x3]
        %v2072 = vadd.f32 %v2071, %v2065
        %vm2073 = vcmask 58368
        %2074 = vst.msk [vmem:[%s286] sm:$0x3] %vm2073, %v2072
      $region48: #{cifar_basic_block_forward.4} parent=39 // pred_fallthru
        _
      %s2075 = sadd.s32 %s22, %s23
      %p2076 = scmp.lt.s32.totalorder %s2075, 1
      %s2077 = scalar_select %p2076, %s2075, 1
      %s2078 = smul.addr %s2077, 10
      %s2079 = smul.addr %s2078, 8
      %s2080 = scalar_lea.vmem %s5, %s2079
      %p2081 = scmp.lt.s32.totalorder %s22, 1
      %s2082 = scalar_select %p2081, %s22, 1
      %s2083 = smul.addr %s2082, 2
      %s2084 = scalar_lea.vmem %s6, %s2083
      // Predicated region
      $region49: #{cifar_basic_block_forward.4} parent=39 // pred_check
        %p2085 = pneg %p162
      $region50: #{cifar_basic_block_forward.4} parent=39 // pred_check_branch
        %2087 = sbr.rel (%p2085) target = $region52
      $region51: #{cifar_basic_block_forward.4} parent=39 // pred_region
        %s2088 = sadd.s32 %s22, %s23
      $region52: #{cifar_basic_block_forward.4} parent=39 // pred_fallthru
        _
      // Predicated region
      $region53: #{cifar_basic_block_forward.4} parent=39 // pred_check
        %p2089 = pneg %p188
      $region54: #{cifar_basic_block_forward.4} parent=39 // pred_check_branch
        %2091 = sbr.rel (%p2089) target = $region56
      $region55: #{cifar_basic_block_forward.4} parent=39 // pred_region
        _
      $region56: #{cifar_basic_block_forward.4} parent=39 // pred_fallthru
        _
    $region40: #{cifar_basic_block_forward.4} parent=5 // pred_fallthru
      _
    %p2092 = scmp.le.s32.totalorder 2, %s13
    // Predicated region
    $region57: #{cifar_basic_block_forward.4} parent=5 // pred_check
      %p2093 = pneg %p2092
    $region58: #{cifar_basic_block_forward.4} parent=5 // pred_check_branch
      %2095 = sbr.rel (%p2093) target = $region60
    $region59: #{cifar_basic_block_forward.4} parent=5 // pred_region
      %s2096 = ssub.s32 %s13, 2
      // Predicated region
      $region61: #{cifar_basic_block_forward.4} parent=59 // pred_check
        %p2097 = pneg %p168
      $region62: #{cifar_basic_block_forward.4} parent=59 // pred_check_branch
        %2099 = sbr.rel (%p2097) target = $region64
      $region63: #{cifar_basic_block_forward.4} parent=59 // pred_region
        %s2100 = sadd.s32 %s24, %s25
        %p2101 = scmp.lt.s32.totalorder %s2100, 1
        %s2102 = scalar_select %p2101, %s2100, 1
        %s2103 = smul.addr %s2102, 10
        %s2104 = smul.addr %s2103, 8
        %s2105 = scalar_lea.vmem %s5, %s2104
      $region64: #{cifar_basic_block_forward.4} parent=59 // pred_fallthru
        _
      // Predicated region
      $region65: #{cifar_basic_block_forward.4} parent=59 // pred_check
        %p2106 = pneg %p194
      $region66: #{cifar_basic_block_forward.4} parent=59 // pred_check_branch
        %2108 = sbr.rel (%p2106) target = $region68
      $region67: #{cifar_basic_block_forward.4} parent=59 // pred_region
        %p2109 = scmp.lt.s32.totalorder %s24, 1
        %s2110 = scalar_select %p2109, %s24, 1
        %s2111 = smul.addr %s2110, 2
        %s2112 = scalar_lea.vmem %s6, %s2111
      $region68: #{cifar_basic_block_forward.4} parent=59 // pred_fallthru
        _
    $region60: #{cifar_basic_block_forward.4} parent=5 // pred_fallthru
      _
  $region6: #{cifar_basic_block_forward.4} parent=0 // loop_footer
    %s17 = sadd.s32 1, %s13
  $region7: #{cifar_basic_block_forward.4} parent=0 // loop_footer_branch
    %12 = sbr.rel target = $region3
  $region8: #{cifar_basic_block_forward.4} parent=0 // loop_exit
    _

// kernel: cifar_basic_block_forward.3
$region0: #{cifar_basic_block_forward.3}
  #allocation0 [shape = 'u32[]', space=smem, size = 0x4, offset = 0x4, fixed_abs, tag = 'smem constant byte address 0x4 - core index']
  #allocation1 [shape = 'u32[144,128]{1,0:T(1,128)}', space=vmem, size = 0x12000, scoped, tag = 'internal scratch']
  %s0 = inlined_call_operand.vmem [shape: f32[2,328,4], index: 0, kind: input, shape index: {}]
  %s1 = inlined_call_operand.vmem [shape: f32[9,4,8], index: 1, kind: input, shape index: {}]
  %s2 = inlined_call_operand.vmem [shape: f32[288,1], index: 2, kind: input, shape index: {}]
  %s3 = inlined_call_operand.vmem [shape: f32[2,288,8], index: 3, kind: output, shape index: {0}]
  %s4 = inlined_call_operand.vmem [shape: f32[2,2,8], index: 4, kind: output, shape index: {1}]
  %5 = xla_tuple %s3, %s4
  %s6 = sld [smem:[#allocation0]]
  $region57: #{cifar_basic_block_forward.3} parent=0
    _
  %s8 = ssub.s32 1, %s6
  %s9 = scalar_select 0, %s8, %s6
  loop: start=0, step=1, limit=4
  $region2: #{cifar_basic_block_forward.3} parent=0 // loop_pre_header
    _
  $region3: #{cifar_basic_block_forward.3} parent=0 // loop_header
    %s11 = sphi 0, %s15
    %p12 = scmp.ge.s32.totalorder %s11, 4
    %s18 = sphi 0, %s30
    %s19 = sphi 0, %s26
    %s20 = sphi 0, %s18
    %s21 = sphi 0, %s19
    %s22 = sphi 0, %s20
    %s23 = sphi 0, %s21
    %s35 = sphi 0, %s37
    %s38 = sphi 0, %s35
    %s39 = sphi 0, %s38
    %s55 = sphi 0, %s39
    %s59 = sphi 0, %s59
    %s61 = sphi 0, %s59
    %s62 = sphi 0, %s61
    %s76 = sphi 0, %s62
    %s80 = sphi 0, %s80
    %s82 = sphi 0, %s80
    %s83 = sphi 0, %s82
    %s97 = sphi 0, %s83
    %s105 = sphi 0, %s107
    %s108 = sphi 0, %s105
    %s109 = sphi 0, %s108
    %s125 = sphi 0, %s109
    %s131 = sphi 0, %s133
    %s134 = sphi 0, %s131
    %s135 = sphi 0, %s134
    %s151 = sphi 0, %s135
  $region4: #{cifar_basic_block_forward.3} parent=0 // loop_header_branch
    %14 = sbr.rel (%p12) target = $region8
  $region5: #{cifar_basic_block_forward.3} parent=0 // loop_body
    %s16 = ssub.s32 %s11, 1
    %s17 = ssub.s32 %s11, 2
    %s24 = sadd.s32 1, %s19
    %p25 = scmp.ge.s32.totalorder %s24, 1
    %s26 = scalar_select %p25, 0, %s24
    %s27 = sadd.s32 1, %s18
    %s28 = scalar_select %p25, %s27, %s18
    %p29 = scmp.ge.s32.totalorder %s28, 2
    %s30 = scalar_select %p29, 0, %s28
    %s31 = sadd.s32 %s18, %s19
    %s32 = sadd.s32 %s30, %s26
    %s33 = ssub.s32 %s31, %s32
    %p34 = scmp.eq.s32.totalorder %s33, 0
    %s36 = sadd.s32 %s35, 1
    %s37 = scalar_select %p34, %s35, %s36
    %p40 = pneg %p34
    %p41 = scmp.eq.s32.totalorder %s11, 1
    %p42 = por %p40, %p41
    %p43 = scmp.ne.s32.totalorder %s35, %s38
    %p44 = scmp.eq.s32.totalorder %s11, 0
    %p45 = por %p43, %p44
    %p46 = scmp.ne.s32.totalorder %s35, %s38
    %p47 = scmp.eq.s32.totalorder %s16, 1
    %p48 = por %p46, %p47
    %p49 = scmp.ne.s32.totalorder %s38, %s39
    %p50 = scmp.eq.s32.totalorder %s16, 0
    %p51 = por %p49, %p50
    %p52 = scmp.ne.s32.totalorder %s38, %s39
    %p53 = scmp.eq.s32.totalorder %s17, 1
    %p54 = por %p52, %p53
    %p56 = scmp.ne.s32.totalorder %s39, %s55
    %p57 = scmp.eq.s32.totalorder %s17, 0
    %p58 = por %p56, %p57
    %s60 = sadd.s32 %s59, 1
    %p63 = scmp.eq.s32.totalorder %s11, 1
    %p64 = scmp.ne.s32.totalorder %s59, %s61
    %p65 = scmp.eq.s32.totalorder %s11, 0
    %p66 = por %p64, %p65
    %p67 = scmp.ne.s32.totalorder %s59, %s61
    %p68 = scmp.eq.s32.totalorder %s16, 1
    %p69 = por %p67, %p68
    %p70 = scmp.ne.s32.totalorder %s61, %s62
    %p71 = scmp.eq.s32.totalorder %s16, 0
    %p72 = por %p70, %p71
    %p73 = scmp.ne.s32.totalorder %s61, %s62
    %p74 = scmp.eq.s32.totalorder %s17, 1
    %p75 = por %p73, %p74
    %p77 = scmp.ne.s32.totalorder %s62, %s76
    %p78 = scmp.eq.s32.totalorder %s17, 0
    %p79 = por %p77, %p78
    %s81 = sadd.s32 %s80, 1
    %p84 = scmp.eq.s32.totalorder %s11, 1
    %p85 = scmp.ne.s32.totalorder %s80, %s82
    %p86 = scmp.eq.s32.totalorder %s11, 0
    %p87 = por %p85, %p86
    %p88 = scmp.ne.s32.totalorder %s80, %s82
    %p89 = scmp.eq.s32.totalorder %s16, 1
    %p90 = por %p88, %p89
    %p91 = scmp.ne.s32.totalorder %s82, %s83
    %p92 = scmp.eq.s32.totalorder %s16, 0
    %p93 = por %p91, %p92
    %p94 = scmp.ne.s32.totalorder %s82, %s83
    %p95 = scmp.eq.s32.totalorder %s17, 1
    %p96 = por %p94, %p95
    %p98 = scmp.ne.s32.totalorder %s83, %s97
    %p99 = scmp.eq.s32.totalorder %s17, 0
    %p100 = por %p98, %p99
    %s101 = sadd.s32 %s18, %s19
    %s102 = sadd.s32 %s30, %s26
    %s103 = ssub.s32 %s101, %s102
    %p104 = scmp.eq.s32.totalorder %s103, 0
    %s106 = sadd.s32 %s105, 1
    %s107 = scalar_select %p104, %s105, %s106
    %p110 = pneg %p104
    %p111 = scmp.eq.s32.totalorder %s11, 1
    %p112 = por %p110, %p111
    %p113 = scmp.ne.s32.totalorder %s105, %s108
    %p114 = scmp.eq.s32.totalorder %s11, 0
    %p115 = por %p113, %p114
    %p116 = scmp.ne.s32.totalorder %s105, %s108
    %p117 = scmp.eq.s32.totalorder %s16, 1
    %p118 = por %p116, %p117
    %p119 = scmp.ne.s32.totalorder %s108, %s109
    %p120 = scmp.eq.s32.totalorder %s16, 0
    %p121 = por %p119, %p120
    %p122 = scmp.ne.s32.totalorder %s108, %s109
    %p123 = scmp.eq.s32.totalorder %s17, 1
    %p124 = por %p122, %p123
    %p126 = scmp.ne.s32.totalorder %s109, %s125
    %p127 = scmp.eq.s32.totalorder %s17, 0
    %p128 = por %p126, %p127
    %s129 = ssub.s32 %s18, %s30
    %p130 = scmp.eq.s32.totalorder %s129, 0
    %s132 = sadd.s32 %s131, 1
    %s133 = scalar_select %p130, %s131, %s132
    %p136 = pneg %p130
    %p137 = scmp.eq.s32.totalorder %s11, 1
    %p138 = por %p136, %p137
    %p139 = scmp.ne.s32.totalorder %s131, %s134
    %p140 = scmp.eq.s32.totalorder %s11, 0
    %p141 = por %p139, %p140
    %p142 = scmp.ne.s32.totalorder %s131, %s134
    %p143 = scmp.eq.s32.totalorder %s16, 1
    %p144 = por %p142, %p143
    %p145 = scmp.ne.s32.totalorder %s134, %s135
    %p146 = scmp.eq.s32.totalorder %s16, 0
    %p147 = por %p145, %p146
    %p148 = scmp.ne.s32.totalorder %s134, %s135
    %p149 = scmp.eq.s32.totalorder %s17, 1
    %p150 = por %p148, %p149
    %p152 = scmp.ne.s32.totalorder %s135, %s151
    %p153 = scmp.eq.s32.totalorder %s17, 0
    %p154 = por %p152, %p153
    %p155 = scmp.le.s32.totalorder 1, %s11
    %p156 = scmp.lt.s32.totalorder %s11, 3
    %p157 = pnand %p155, %p156
    %p158 = pneg %p157
    // Predicated region
    $region9: #{cifar_basic_block_forward.3} parent=5 // pred_check
      _
    $region10: #{cifar_basic_block_forward.3} parent=5 // pred_check_branch
      %160 = sbr.rel (%p157) target = $region12
    $region11: #{cifar_basic_block_forward.3} parent=5 // pred_region
      %s161 = ssub.s32 %s11, 1
      // Predicated region
      $region13: #{cifar_basic_block_forward.3} parent=11 // pred_check
        %p162 = pneg %p72
      $region14: #{cifar_basic_block_forward.3} parent=11 // pred_check_branch
        %164 = sbr.rel (%p162) target = $region16
      $region15: #{cifar_basic_block_forward.3} parent=11 // pred_region
        _
      $region16: #{cifar_basic_block_forward.3} parent=11 // pred_fallthru
        _
      // Predicated region
      $region17: #{cifar_basic_block_forward.3} parent=11 // pred_check
        %p165 = pneg %p93
      $region18: #{cifar_basic_block_forward.3} parent=11 // pred_check_branch
        %167 = sbr.rel (%p165) target = $region20
      $region19: #{cifar_basic_block_forward.3} parent=11 // pred_region
        _
      $region20: #{cifar_basic_block_forward.3} parent=11 // pred_fallthru
        _
    $region12: #{cifar_basic_block_forward.3} parent=5 // pred_fallthru
      _
    %p168 = scmp.lt.s32.totalorder %s11, 2
    // Predicated region
    $region21: #{cifar_basic_block_forward.3} parent=5 // pred_check
      %p169 = pneg %p168
    $region22: #{cifar_basic_block_forward.3} parent=5 // pred_check_branch
      %171 = sbr.rel (%p169) target = $region24
    $region23: #{cifar_basic_block_forward.3} parent=5 // pred_region
      // Predicated region
      $region25: #{cifar_basic_block_forward.3} parent=23 // pred_check
        %p172 = pneg %p45
      $region26: #{cifar_basic_block_forward.3} parent=23 // pred_check_branch
        %174 = sbr.rel (%p172) target = $region28
      $region27: #{cifar_basic_block_forward.3} parent=23 // pred_region
        %s175 = sadd.s32 %s18, %s19
        %p176 = scmp.lt.s32.totalorder %s175, 1
        %s177 = scalar_select %p176, %s175, 1
        %s178 = smul.addr %s177, 41
        %s179 = smul.addr %s178, 8
        %s180 = scalar_lea.vmem %s0, %s179
        %s181 = sadd.s32 %s18, %s19
      $region28: #{cifar_basic_block_forward.3} parent=23 // pred_fallthru
        _
    $region24: #{cifar_basic_block_forward.3} parent=5 // pred_fallthru
      _
    %p182 = scmp.le.s32.totalorder 1, %s11
    %p183 = scmp.lt.s32.totalorder %s11, 3
    %p184 = pnand %p182, %p183
    %p185 = pneg %p184
    // Predicated region
    $region29: #{cifar_basic_block_forward.3} parent=5 // pred_check
      _
    $region30: #{cifar_basic_block_forward.3} parent=5 // pred_check_branch
      %187 = sbr.rel (%p184) target = $region32
    $region31: #{cifar_basic_block_forward.3} parent=5 // pred_region
      %s188 = ssub.s32 %s11, 1
      %s189 = sadd.s32 %s20, %s21
      %p190 = scmp.lt.s32.totalorder %s189, 1
      %s191 = scalar_select %p190, %s189, 1
      %s192 = smul.addr %s191, 41
      %s193 = smul.addr %s192, 8
      %s194 = scalar_lea.vmem %s0, %s193
      %p195 = pneg %p51
      %p196 = pneg %p48
      %p197 = pneg %p72
      %p198 = pneg %p69
      %p199 = pneg %p93
      %p200 = pneg %p90
      %p201 = pneg %p121
      %p202 = pneg %p118
      %s203 = sadd.s32 %s20, %s21
      %p204 = scmp.lt.s32.totalorder %s203, 1
      %s205 = scalar_select %p204, %s203, 1
      %s206 = smul.addr %s205, 36
      %s207 = smul.addr %s206, 8
      %s208 = scalar_lea.vmem %s3, %s207
      %p209 = pneg %p147
      %p210 = pneg %p144
      %p211 = scmp.lt.s32.totalorder %s20, 1
      %s212 = scalar_select %p211, %s20, 1
      %s213 = smul.addr %s212, 2
      %s214 = scalar_lea.vmem %s4, %s213
      %s215 = sadd.s32 %s20, %s21
      %p216 = scmp.lt.s32.totalorder %s215, 1
      %s217 = scalar_select %p216, %s215, 1
      %s218 = smul.addr %s217, 41
      %s219 = smul.addr %s218, 8
      %s220 = scalar_lea.vmem %s0, %s219
      %s221 = sadd.s32 %s20, %s21
      %s222 = sadd.s32 %s20, %s21
      %p223 = scmp.lt.s32.totalorder %s222, 1
      %s224 = scalar_select %p223, %s222, 1
      %s225 = smul.addr %s224, 36
      %s226 = smul.addr %s225, 8
      %s227 = scalar_lea.vmem %s3, %s226
      %s228 = sadd.s32 %s20, %s21
      %p229 = scmp.lt.s32.totalorder %s20, 1
      %s230 = scalar_select %p229, %s20, 1
      %s231 = smul.addr %s230, 2
      %s232 = scalar_lea.vmem %s4, %s231
      %p233 = scmp.eq.s32.totalorder %s21, 0
      // Predicated region
      $region33: #{cifar_basic_block_forward.3} parent=31 // pred_check
        %p234 = pneg %p233
      $region34: #{cifar_basic_block_forward.3} parent=31 // pred_check_branch
        %236 = sbr.rel (%p234) target = $region36
      $region35: #{cifar_basic_block_forward.3} parent=31 // pred_region
        %vm237 = vcmask 58368
        %238 = vst.msk [vmem:[%s232] sm:$0x3] %vm237, 0.0
      $region36: #{cifar_basic_block_forward.3} parent=31 // pred_fallthru
        _
      %v239 = vld [vmem:[%s220] sm:$0xff]
      %v240 = vld [vmem:[%s220 + $0x8] sm:$0xff]
      %v241 = vld [vmem:[%s220 + $0x10] sm:$0xff]
      %v242 = vld [vmem:[%s220 + $0x18] sm:$0xff]
      %v243 = vld [vmem:[%s220 + $0x20] sm:$0xff]
      %v244 = vld [vmem:[%s220 + $0x28] sm:$0xff]
      %v245 = vld [vmem:[%s220 + $0x30] sm:$0xff]
      %v246 = vld [vmem:[%s220 + $0x38] sm:$0xff]
      %v247 = vld [vmem:[%s220 + $0x40] sm:$0xff]
      %v248 = vld [vmem:[%s220 + $0x48] sm:$0xff]
      %v249 = vld [vmem:[%s220 + $0x50] sm:$0xff]
      %v250 = vld [vmem:[%s220 + $0x58] sm:$0xff]
      %v251 = vld [vmem:[%s220 + $0x60] sm:$0xff]
      %v252 = vld [vmem:[%s220 + $0x68] sm:$0xff]
      %v253 = vld [vmem:[%s220 + $0x70] sm:$0xff]
      %v254 = vld [vmem:[%s220 + $0x78] sm:$0xff]
      %v255 = vld [vmem:[%s220 + $0x80] sm:$0xff]
      %v256 = vld [vmem:[%s220 + $0x88] sm:$0xff]
      %v257 = vld [vmem:[%s220 + $0x90] sm:$0xff]
      %v258 = vld [vmem:[%s220 + $0x98] sm:$0xff]
      %v259 = vld [vmem:[%s220 + $0xa0] sm:$0xff]
      %v260 = vld [vmem:[%s220 + $0xa8] sm:$0xff]
      %v261 = vld [vmem:[%s220 + $0xb0] sm:$0xff]
      %v262 = vld [vmem:[%s220 + $0xb8] sm:$0xff]
      %v263 = vld [vmem:[%s220 + $0xc0] sm:$0xff]
      %v264 = vld [vmem:[%s220 + $0xc8] sm:$0xff]
      %v265 = vld [vmem:[%s220 + $0xd0] sm:$0xff]
      %v266 = vld [vmem:[%s220 + $0xd8] sm:$0xff]
      %v267 = vld [vmem:[%s220 + $0xe0] sm:$0xff]
      %v268 = vld [vmem:[%s220 + $0xe8] sm:$0xff]
      %v269 = vld [vmem:[%s220 + $0xf0] sm:$0xff]
      %v270 = vld [vmem:[%s220 + $0xf8] sm:$0xff]
      %v271 = vld [vmem:[%s220 + $0x100] sm:$0xff]
      %v272 = vld [vmem:[%s220 + $0x108] sm:$0xff]
      %v273 = vld [vmem:[%s220 + $0x110] sm:$0xff]
      %v274 = vld [vmem:[%s220 + $0x118] sm:$0xff]
      %v275 = vld [vmem:[%s1] sm:$0xf]
      %v276 = vld [vmem:[%s220 + $0x1] sm:$0xff]
      %v277 = vld [vmem:[%s220 + $0x9] sm:$0xff]
      %v278 = vld [vmem:[%s220 + $0x11] sm:$0xff]
      %v279 = vld [vmem:[%s220 + $0x19] sm:$0xff]
      %v280 = vld [vmem:[%s220 + $0x21] sm:$0xff]
      %v281 = vld [vmem:[%s220 + $0x29] sm:$0xff]
      %v282 = vld [vmem:[%s220 + $0x31] sm:$0xff]
      %v283 = vld [vmem:[%s220 + $0x39] sm:$0xff]
      %v284 = vld [vmem:[%s220 + $0x41] sm:$0xff]
      %v285 = vld [vmem:[%s220 + $0x49] sm:$0xff]
      %v286 = vld [vmem:[%s220 + $0x51] sm:$0xff]
      %v287 = vld [vmem:[%s220 + $0x59] sm:$0xff]
      %v288 = vld [vmem:[%s220 + $0x61] sm:$0xff]
      %v289 = vld [vmem:[%s220 + $0x69] sm:$0xff]
      %v290 = vld [vmem:[%s220 + $0x71] sm:$0xff]
      %v291 = vld [vmem:[%s220 + $0x79] sm:$0xff]
      %v292 = vld [vmem:[%s220 + $0x81] sm:$0xff]
      %v293 = vld [vmem:[%s220 + $0x89] sm:$0xff]
      %v294 = vld [vmem:[%s220 + $0x91] sm:$0xff]
      %v295 = vld [vmem:[%s220 + $0x99] sm:$0xff]
      %v296 = vld [vmem:[%s220 + $0xa1] sm:$0xff]
      %v297 = vld [vmem:[%s220 + $0xa9] sm:$0xff]
      %v298 = vld [vmem:[%s220 + $0xb1] sm:$0xff]
      %v299 = vld [vmem:[%s220 + $0xb9] sm:$0xff]
      %v300 = vld [vmem:[%s220 + $0xc1] sm:$0xff]
      %v301 = vld [vmem:[%s220 + $0xc9] sm:$0xff]
      %v302 = vld [vmem:[%s220 + $0xd1] sm:$0xff]
      %v303 = vld [vmem:[%s220 + $0xd9] sm:$0xff]
      %v304 = vld [vmem:[%s220 + $0xe1] sm:$0xff]
      %v305 = vld [vmem:[%s220 + $0xe9] sm:$0xff]
      %v306 = vld [vmem:[%s220 + $0xf1] sm:$0xff]
      %v307 = vld [vmem:[%s220 + $0xf9] sm:$0xff]
      %v308 = vld [vmem:[%s220 + $0x101] sm:$0xff]
      %v309 = vld [vmem:[%s220 + $0x109] sm:$0xff]
      %v310 = vld [vmem:[%s220 + $0x111] sm:$0xff]
      %v311 = vld [vmem:[%s220 + $0x119] sm:$0xff]
      %s312 = scalar_lea.vmem %s1, 4
      %v313 = vld [vmem:[%s312] sm:$0xf]
      %vm314 = vcmask 31744
      %v316 = vsel %vm314, %v276, 0
      %v319 = vsel %vm314, %v277, 0
      %v322 = vsel %vm314, %v278, 0
      %v325 = vsel %vm314, %v279, 0
      %v328 = vsel %vm314, %v280, 0
      %v331 = vsel %vm314, %v281, 0
      %v334 = vsel %vm314, %v282, 0
      %v337 = vsel %vm314, %v283, 0
      %v340 = vsel %vm314, %v284, 0
      %v343 = vsel %vm314, %v285, 0
      %v346 = vsel %vm314, %v286, 0
      %v349 = vsel %vm314, %v287, 0
      %v352 = vsel %vm314, %v288, 0
      %v355 = vsel %vm314, %v289, 0
      %v358 = vsel %vm314, %v290, 0
      %v361 = vsel %vm314, %v291, 0
      %v364 = vsel %vm314, %v292, 0
      %v367 = vsel %vm314, %v293, 0
      %v370 = vsel %vm314, %v294, 0
      %v373 = vsel %vm314, %v295, 0
      %v376 = vsel %vm314, %v296, 0
      %v379 = vsel %vm314, %v297, 0
      %v382 = vsel %vm314, %v298, 0
      %v385 = vsel %vm314, %v299, 0
      %v388 = vsel %vm314, %v300, 0
      %v391 = vsel %vm314, %v301, 0
      %v394 = vsel %vm314, %v302, 0
      %v397 = vsel %vm314, %v303, 0
      %v400 = vsel %vm314, %v304, 0
      %v403 = vsel %vm314, %v305, 0
      %v406 = vsel %vm314, %v306, 0
      %v409 = vsel %vm314, %v307, 0
      %v412 = vsel %vm314, %v308, 0
      %v415 = vsel %vm314, %v309, 0
      %v418 = vsel %vm314, %v310, 0
      %v421 = vsel %vm314, %v311, 0
      %vm423 = vcmask 1043456
      %v425 = vsel %vm423, %v313, 0
      %427 = vmatprep.subr.mxu0 0.0
      %428 = vmatpush1.msra.mxu0 %v425
      %429 = vmatprep.subr.mxu0 0.0
      %430 = vmatpush1.msra.mxu0 0.0
      %431 = vmatprep.subr.mxu0 0.0
      %432 = vmatpush1.msra.mxu0 0.0
      %433 = vmatprep.subr.mxu0 0.0
      %434 = vmatpush1.msra.mxu0 0.0
      %435 = vmatprep.subr.mxu0 0.0
      %436 = vmatpush1.msra.mxu0 0.0
      %437 = vmatprep.subr.mxu0 0.0
      %438 = vmatpush1.msra.mxu0 0.0
      %439 = vmatprep.subr.mxu0 0.0
      %440 = vmatpush1.msra.mxu0 0.0
      %441 = vmatprep.subr.mxu0 0.0
      %442 = vmatpush1.msra.mxu0 0.0
      %443 = vmatprep.subr.mxu0 0.0
      %444 = vmatpush1.msra.mxu0 0.0
      %445 = vmatprep.subr.mxu0 0.0
      %446 = vmatpush1.msra.mxu0 0.0
      %447 = vmatprep.subr.mxu0 0.0
      %448 = vmatpush1.msra.mxu0 0.0
      %449 = vmatprep.subr.mxu0 0.0
      %450 = vmatpush1.msra.mxu0 0.0
      %451 = vmatprep.subr.mxu0 0.0
      %452 = vmatpush1.msra.mxu0 0.0
      %453 = vmatprep.subr.mxu0 0.0
      %454 = vmatpush1.msra.mxu0 0.0
      %455 = vmatprep.subr.mxu0 0.0
      %456 = vmatpush1.msra.mxu0 0.0
      %457 = vmatprep.subr.mxu0 0.0
      %458 = vmatpush1.msra.mxu0 0.0
      %459 = vmatprep.subr.mxu0 0.0
      %460 = vmatpush1.msra.mxu0 0.0
      %461 = vmatprep.subr.mxu0 0.0
      %462 = vmatpush1.msra.mxu0 0.0
      %463 = vmatprep.subr.mxu0 0.0
      %464 = vmatpush1.msra.mxu0 0.0
      %465 = vmatprep.subr.mxu0 0.0
      %466 = vmatpush1.msra.mxu0 0.0
      %467 = vmatprep.subr.mxu0 0.0
      %468 = vmatpush1.msra.mxu0 0.0
      %469 = vmatprep.subr.mxu0 0.0
      %470 = vmatpush1.msra.mxu0 0.0
      %471 = vmatprep.subr.mxu0 0.0
      %472 = vmatpush1.msra.mxu0 0.0
      %473 = vmatprep.subr.mxu0 0.0
      %474 = vmatpush1.msra.mxu0 0.0
      %475 = vmatprep.subr.mxu0 0.0
      %476 = vmatpush1.msra.mxu0 0.0
      %477 = vmatprep.subr.mxu0 0.0
      %478 = vmatpush1.msra.mxu0 0.0
      %479 = vmatprep.subr.mxu0 0.0
      %480 = vmatpush1.msra.mxu0 0.0
      %481 = vmatprep.subr.mxu0 0.0
      %482 = vmatpush1.msra.mxu0 0.0
      %483 = vmatprep.subr.mxu0 0.0
      %484 = vmatpush1.msra.mxu0 0.0
      %485 = vmatprep.subr.mxu0 0.0
      %486 = vmatpush1.msra.mxu0 0.0
      %487 = vmatprep.subr.mxu0 0.0
      %488 = vmatpush1.msra.mxu0 0.0
      %489 = vmatprep.subr.mxu0 0.0
      %490 = vmatpush1.msra.mxu0 0.0
      %491 = vmatprep.mubr.f32.mxu0 0.0
      %492 = vmatmul.mubr.f32.gmra.mrb[0].mxu0 %v316
      %v493 = vpop.f32.mrb[0].mxu0
      %v494 = vadd.f32 0.0, %v493
      %v495 = vpop.f32.mrb[0].mxu0
      %496 = vmatprep.mubr.f32.mxu0 0.0
      %497 = vmatmul.mubr.f32.gmra.mrb[0].mxu0 %v319
      %v498 = vpop.f32.mrb[0].mxu0
      %v499 = vadd.f32 0.0, %v498
      %v500 = vpop.f32.mrb[0].mxu0
      %501 = vmatprep.mubr.f32.mxu0 0.0
      %502 = vmatmul.mubr.f32.gmra.mrb[0].mxu0 %v322
      %v503 = vpop.f32.mrb[0].mxu0
      %v504 = vadd.f32 0.0, %v503
      %v505 = vpop.f32.mrb[0].mxu0
      %506 = vmatprep.mubr.f32.mxu0 0.0
      %507 = vmatmul.mubr.f32.gmra.mrb[0].mxu0 %v325
      %v508 = vpop.f32.mrb[0].mxu0
      %v509 = vadd.f32 0.0, %v508
      %v510 = vpop.f32.mrb[0].mxu0
      %511 = vmatprep.mubr.f32.mxu0 0.0
      %512 = vmatmul.mubr.f32.gmra.mrb[0].mxu0 %v328
      %v513 = vpop.f32.mrb[0].mxu0
      %v514 = vadd.f32 0.0, %v513
      %v515 = vpop.f32.mrb[0].mxu0
      %516 = vmatprep.mubr.f32.mxu0 0.0
      %517 = vmatmul.mubr.f32.gmra.mrb[0].mxu0 %v331
      %v518 = vpop.f32.mrb[0].mxu0
      %v519 = vadd.f32 0.0, %v518
      %v520 = vpop.f32.mrb[0].mxu0
      %521 = vmatprep.mubr.f32.mxu0 0.0
      %522 = vmatmul.mubr.f32.gmra.mrb[0].mxu0 %v334
      %v523 = vpop.f32.mrb[0].mxu0
      %v524 = vadd.f32 0.0, %v523
      %v525 = vpop.f32.mrb[0].mxu0
      %526 = vmatprep.mubr.f32.mxu0 0.0
      %527 = vmatmul.mubr.f32.gmra.mrb[0].mxu0 %v337
      %v528 = vpop.f32.mrb[0].mxu0
      %v529 = vadd.f32 0.0, %v528
      %v530 = vpop.f32.mrb[0].mxu0
      %531 = vmatprep.mubr.f32.mxu0 0.0
      %532 = vmatmul.mubr.f32.gmra.mrb[0].mxu0 %v340
      %v533 = vpop.f32.mrb[0].mxu0
      %v534 = vadd.f32 0.0, %v533
      %v535 = vpop.f32.mrb[0].mxu0
      %536 = vmatprep.mubr.f32.mxu0 0.0
      %537 = vmatmul.mubr.f32.gmra.mrb[0].mxu0 %v343
      %v538 = vpop.f32.mrb[0].mxu0
      %v539 = vadd.f32 0.0, %v538
      %v540 = vpop.f32.mrb[0].mxu0
      %541 = vmatprep.mubr.f32.mxu0 0.0
      %542 = vmatmul.mubr.f32.gmra.mrb[0].mxu0 %v346
      %v543 = vpop.f32.mrb[0].mxu0
      %v544 = vadd.f32 0.0, %v543
      %v545 = vpop.f32.mrb[0].mxu0
      %546 = vmatprep.mubr.f32.mxu0 0.0
      %547 = vmatmul.mubr.f32.gmra.mrb[0].mxu0 %v349
      %v548 = vpop.f32.mrb[0].mxu0
      %v549 = vadd.f32 0.0, %v548
      %v550 = vpop.f32.mrb[0].mxu0
      %551 = vmatprep.mubr.f32.mxu0 0.0
      %552 = vmatmul.mubr.f32.gmra.mrb[0].mxu0 %v352
      %v553 = vpop.f32.mrb[0].mxu0
      %v554 = vadd.f32 0.0, %v553
      %v555 = vpop.f32.mrb[0].mxu0
      %556 = vmatprep.mubr.f32.mxu0 0.0
      %557 = vmatmul.mubr.f32.gmra.mrb[0].mxu0 %v355
      %v558 = vpop.f32.mrb[0].mxu0
      %v559 = vadd.f32 0.0, %v558
      %v560 = vpop.f32.mrb[0].mxu0
      %561 = vmatprep.mubr.f32.mxu0 0.0
      %562 = vmatmul.mubr.f32.gmra.mrb[0].mxu0 %v358
      %v563 = vpop.f32.mrb[0].mxu0
      %v564 = vadd.f32 0.0, %v563
      %v565 = vpop.f32.mrb[0].mxu0
      %566 = vmatprep.mubr.f32.mxu0 0.0
      %567 = vmatmul.mubr.f32.gmra.mrb[0].mxu0 %v361
      %v568 = vpop.f32.mrb[0].mxu0
      %v569 = vadd.f32 0.0, %v568
      %v570 = vpop.f32.mrb[0].mxu0
      %571 = vmatprep.mubr.f32.mxu0 0.0
      %572 = vmatmul.mubr.f32.gmra.mrb[0].mxu0 %v364
      %v573 = vpop.f32.mrb[0].mxu0
      %v574 = vadd.f32 0.0, %v573
      %v575 = vpop.f32.mrb[0].mxu0
      %576 = vmatprep.mubr.f32.mxu0 0.0
      %577 = vmatmul.mubr.f32.gmra.mrb[0].mxu0 %v367
      %v578 = vpop.f32.mrb[0].mxu0
      %v579 = vadd.f32 0.0, %v578
      %v580 = vpop.f32.mrb[0].mxu0
      %581 = vmatprep.mubr.f32.mxu0 0.0
      %582 = vmatmul.mubr.f32.gmra.mrb[0].mxu0 %v370
      %v583 = vpop.f32.mrb[0].mxu0
      %v584 = vadd.f32 0.0, %v583
      %v585 = vpop.f32.mrb[0].mxu0
      %586 = vmatprep.mubr.f32.mxu0 0.0
      %587 = vmatmul.mubr.f32.gmra.mrb[0].mxu0 %v373
      %v588 = vpop.f32.mrb[0].mxu0
      %v589 = vadd.f32 0.0, %v588
      %v590 = vpop.f32.mrb[0].mxu0
      %591 = vmatprep.mubr.f32.mxu0 0.0
      %592 = vmatmul.mubr.f32.gmra.mrb[0].mxu0 %v376
      %v593 = vpop.f32.mrb[0].mxu0
      %v594 = vadd.f32 0.0, %v593
      %v595 = vpop.f32.mrb[0].mxu0
      %596 = vmatprep.mubr.f32.mxu0 0.0
      %597 = vmatmul.mubr.f32.gmra.mrb[0].mxu0 %v379
      %v598 = vpop.f32.mrb[0].mxu0
      %v599 = vadd.f32 0.0, %v598
      %v600 = vpop.f32.mrb[0].mxu0
      %601 = vmatprep.mubr.f32.mxu0 0.0
      %602 = vmatmul.mubr.f32.gmra.mrb[0].mxu0 %v382
      %v603 = vpop.f32.mrb[0].mxu0
      %v604 = vadd.f32 0.0, %v603
      %v605 = vpop.f32.mrb[0].mxu0
      %606 = vmatprep.mubr.f32.mxu0 0.0
      %607 = vmatmul.mubr.f32.gmra.mrb[0].mxu0 %v385
      %v608 = vpop.f32.mrb[0].mxu0
      %v609 = vadd.f32 0.0, %v608
      %v610 = vpop.f32.mrb[0].mxu0
      %611 = vmatprep.mubr.f32.mxu0 0.0
      %612 = vmatmul.mubr.f32.gmra.mrb[0].mxu0 %v388
      %v613 = vpop.f32.mrb[0].mxu0
      %v614 = vadd.f32 0.0, %v613
      %v615 = vpop.f32.mrb[0].mxu0
      %616 = vmatprep.mubr.f32.mxu0 0.0
      %617 = vmatmul.mubr.f32.gmra.mrb[0].mxu0 %v391
      %v618 = vpop.f32.mrb[0].mxu0
      %v619 = vadd.f32 0.0, %v618
      %v620 = vpop.f32.mrb[0].mxu0
      %621 = vmatprep.mubr.f32.mxu0 0.0
      %622 = vmatmul.mubr.f32.gmra.mrb[0].mxu0 %v394
      %v623 = vpop.f32.mrb[0].mxu0
      %v624 = vadd.f32 0.0, %v623
      %v625 = vpop.f32.mrb[0].mxu0
      %626 = vmatprep.mubr.f32.mxu0 0.0
      %627 = vmatmul.mubr.f32.gmra.mrb[0].mxu0 %v397
      %v628 = vpop.f32.mrb[0].mxu0
      %v629 = vadd.f32 0.0, %v628
      %v630 = vpop.f32.mrb[0].mxu0
      %631 = vmatprep.mubr.f32.mxu0 0.0
      %632 = vmatmul.mubr.f32.gmra.mrb[0].mxu0 %v400
      %v633 = vpop.f32.mrb[0].mxu0
      %v634 = vadd.f32 0.0, %v633
      %v635 = vpop.f32.mrb[0].mxu0
      %636 = vmatprep.mubr.f32.mxu0 0.0
      %637 = vmatmul.mubr.f32.gmra.mrb[0].mxu0 %v403
      %v638 = vpop.f32.mrb[0].mxu0
      %v639 = vadd.f32 0.0, %v638
      %v640 = vpop.f32.mrb[0].mxu0
      %641 = vmatprep.mubr.f32.mxu0 0.0
      %642 = vmatmul.mubr.f32.gmra.mrb[0].mxu0 %v406
      %v643 = vpop.f32.mrb[0].mxu0
      %v644 = vadd.f32 0.0, %v643
      %v645 = vpop.f32.mrb[0].mxu0
      %646 = vmatprep.mubr.f32.mxu0 0.0
      %647 = vmatmul.mubr.f32.gmra.mrb[0].mxu0 %v409
      %v648 = vpop.f32.mrb[0].mxu0
      %v649 = vadd.f32 0.0, %v648
      %v650 = vpop.f32.mrb[0].mxu0
      %651 = vmatprep.mubr.f32.mxu0 0.0
      %652 = vmatmul.mubr.f32.gmra.mrb[0].mxu0 %v412
      %v653 = vpop.f32.mrb[0].mxu0
      %v654 = vadd.f32 0.0, %v653
      %v655 = vpop.f32.mrb[0].mxu0
      %656 = vmatprep.mubr.f32.mxu0 0.0
      %657 = vmatmul.mubr.f32.gmra.mrb[0].mxu0 %v415
      %v658 = vpop.f32.mrb[0].mxu0
      %v659 = vadd.f32 0.0, %v658
      %v660 = vpop.f32.mrb[0].mxu0
      %661 = vmatprep.mubr.f32.mxu0 0.0
      %662 = vmatmul.mubr.f32.gmra.mrb[0].mxu0 %v418
      %v663 = vpop.f32.mrb[0].mxu0
      %v664 = vadd.f32 0.0, %v663
      %v665 = vpop.f32.mrb[0].mxu0
      %666 = vmatprep.mubr.f32.mxu0 0.0
      %667 = vmatmul.mubr.f32.gmra.mrb[0].mxu0 %v421
      %v668 = vpop.f32.mrb[0].mxu0
      %v669 = vadd.f32 0.0, %v668
      %v670 = vpop.f32.mrb[0].mxu0
      %671 = vdwg.mxu0
      %v673 = vsel %vm314, %v239, 0
      %v676 = vsel %vm314, %v240, 0
      %v679 = vsel %vm314, %v241, 0
      %v682 = vsel %vm314, %v242, 0
      %v685 = vsel %vm314, %v243, 0
      %v688 = vsel %vm314, %v244, 0
      %v691 = vsel %vm314, %v245, 0
      %v694 = vsel %vm314, %v246, 0
      %v697 = vsel %vm314, %v247, 0
      %v700 = vsel %vm314, %v248, 0
      %v703 = vsel %vm314, %v249, 0
      %v706 = vsel %vm314, %v250, 0
      %v709 = vsel %vm314, %v251, 0
      %v712 = vsel %vm314, %v252, 0
      %v715 = vsel %vm314, %v253, 0
      %v718 = vsel %vm314, %v254, 0
      %v721 = vsel %vm314, %v255, 0
      %v724 = vsel %vm314, %v256, 0
      %v727 = vsel %vm314, %v257, 0
      %v730 = vsel %vm314, %v258, 0
      %v733 = vsel %vm314, %v259, 0
      %v736 = vsel %vm314, %v260, 0
      %v739 = vsel %vm314, %v261, 0
      %v742 = vsel %vm314, %v262, 0
      %v745 = vsel %vm314, %v263, 0
      %v748 = vsel %vm314, %v264, 0
      %v751 = vsel %vm314, %v265, 0
      %v754 = vsel %vm314, %v266, 0
      %v757 = vsel %vm314, %v267, 0
      %v760 = vsel %vm314, %v268, 0
      %v763 = vsel %vm314, %v269, 0
      %v766 = vsel %vm314, %v270, 0
      %v769 = vsel %vm314, %v271, 0
      %v772 = vsel %vm314, %v272, 0
      %v775 = vsel %vm314, %v273, 0
      %v778 = vsel %vm314, %v274, 0
      %v781 = vsel %vm423, %v275, 0
      %783 = vmatprep.subr.mxu0 0.0
      %784 = vmatpush1.msra.mxu0 %v781
      %785 = vmatprep.subr.mxu0 0.0
      %786 = vmatpush1.msra.mxu0 0.0
      %787 = vmatprep.subr.mxu0 0.0
      %788 = vmatpush1.msra.mxu0 0.0
      %789 = vmatprep.subr.mxu0 0.0
      %790 = vmatpush1.msra.mxu0 0.0
      %791 = vmatprep.subr.mxu0 0.0
      %792 = vmatpush1.msra.mxu0 0.0
      %793 = vmatprep.subr.mxu0 0.0
      %794 = vmatpush1.msra.mxu0 0.0
      %795 = vmatprep.subr.mxu0 0.0
      %796 = vmatpush1.msra.mxu0 0.0
      %797 = vmatprep.subr.mxu0 0.0
      %798 = vmatpush1.msra.mxu0 0.0
      %799 = vmatprep.subr.mxu0 0.0
      %800 = vmatpush1.msra.mxu0 0.0
      %801 = vmatprep.subr.mxu0 0.0
      %802 = vmatpush1.msra.mxu0 0.0
      %803 = vmatprep.subr.mxu0 0.0
      %804 = vmatpush1.msra.mxu0 0.0
      %805 = vmatprep.subr.mxu0 0.0
      %806 = vmatpush1.msra.mxu0 0.0
      %807 = vmatprep.subr.mxu0 0.0
      %808 = vmatpush1.msra.mxu0 0.0
      %809 = vmatprep.subr.mxu0 0.0
      %810 = vmatpush1.msra.mxu0 0.0
      %811 = vmatprep.subr.mxu0 0.0
      %812 = vmatpush1.msra.mxu0 0.0
      %813 = vmatprep.subr.mxu0 0.0
      %814 = vmatpush1.msra.mxu0 0.0
      %815 = vmatprep.subr.mxu0 0.0
      %816 = vmatpush1.msra.mxu0 0.0
      %817 = vmatprep.subr.mxu0 0.0
      %818 = vmatpush1.msra.mxu0 0.0
      %819 = vmatprep.subr.mxu0 0.0
      %820 = vmatpush1.msra.mxu0 0.0
      %821 = vmatprep.subr.mxu0 0.0
      %822 = vmatpush1.msra.mxu0 0.0
      %823 = vmatprep.subr.mxu0 0.0
      %824 = vmatpush1.msra.mxu0 0.0
      %825 = vmatprep.subr.mxu0 0.0
      %826 = vmatpush1.msra.mxu0 0.0
      %827 = vmatprep.subr.mxu0 0.0
      %828 = vmatpush1.msra.mxu0 0.0
      %829 = vmatprep.subr.mxu0 0.0
      %830 = vmatpush1.msra.mxu0 0.0
      %831 = vmatprep.subr.mxu0 0.0
      %832 = vmatpush1.msra.mxu0 0.0
      %833 = vmatprep.subr.mxu0 0.0
      %834 = vmatpush1.msra.mxu0 0.0
      %835 = vmatprep.subr.mxu0 0.0
      %836 = vmatpush1.msra.mxu0 0.0
      %837 = vmatprep.subr.mxu0 0.0
      %838 = vmatpush1.msra.mxu0 0.0
      %839 = vmatprep.subr.mxu0 0.0
      %840 = vmatpush1.msra.mxu0 0.0
      %841 = vmatprep.subr.mxu0 0.0
      %842 = vmatpush1.msra.mxu0 0.0
      %843 = vmatprep.subr.mxu0 0.0
      %844 = vmatpush1.msra.mxu0 0.0
      %845 = vmatprep.subr.mxu0 0.0
      %846 = vmatpush1.msra.mxu0 0.0
      %847 = vmatprep.mubr.f32.mxu0 0.0
      %848 = vmatmul.mubr.f32.gmra.mrb[0].mxu0 %v673
      %v849 = vpop.f32.mrb[0].mxu0
      %v850 = vadd.f32 %v494, %v849
      %v851 = vpop.f32.mrb[0].mxu0
      %852 = vmatprep.mubr.f32.mxu0 0.0
      %853 = vmatmul.mubr.f32.gmra.mrb[0].mxu0 %v676
      %v854 = vpop.f32.mrb[0].mxu0
      %v855 = vadd.f32 %v499, %v854
      %v856 = vpop.f32.mrb[0].mxu0
      %857 = vmatprep.mubr.f32.mxu0 0.0
      %858 = vmatmul.mubr.f32.gmra.mrb[0].mxu0 %v679
      %v859 = vpop.f32.mrb[0].mxu0
      %v860 = vadd.f32 %v504, %v859
      %v861 = vpop.f32.mrb[0].mxu0
      %862 = vmatprep.mubr.f32.mxu0 0.0
      %863 = vmatmul.mubr.f32.gmra.mrb[0].mxu0 %v682
      %v864 = vpop.f32.mrb[0].mxu0
      %v865 = vadd.f32 %v509, %v864
      %v866 = vpop.f32.mrb[0].mxu0
      %867 = vmatprep.mubr.f32.mxu0 0.0
      %868 = vmatmul.mubr.f32.gmra.mrb[0].mxu0 %v685
      %v869 = vpop.f32.mrb[0].mxu0
      %v870 = vadd.f32 %v514, %v869
      %v871 = vpop.f32.mrb[0].mxu0
      %872 = vmatprep.mubr.f32.mxu0 0.0
      %873 = vmatmul.mubr.f32.gmra.mrb[0].mxu0 %v688
      %v874 = vpop.f32.mrb[0].mxu0
      %v875 = vadd.f32 %v519, %v874
      %v876 = vpop.f32.mrb[0].mxu0
      %877 = vmatprep.mubr.f32.mxu0 0.0
      %878 = vmatmul.mubr.f32.gmra.mrb[0].mxu0 %v691
      %v879 = vpop.f32.mrb[0].mxu0
      %v880 = vadd.f32 %v524, %v879
      %v881 = vpop.f32.mrb[0].mxu0
      %882 = vmatprep.mubr.f32.mxu0 0.0
      %883 = vmatmul.mubr.f32.gmra.mrb[0].mxu0 %v694
      %v884 = vpop.f32.mrb[0].mxu0
      %v885 = vadd.f32 %v529, %v884
      %v886 = vpop.f32.mrb[0].mxu0
      %887 = vmatprep.mubr.f32.mxu0 0.0
      %888 = vmatmul.mubr.f32.gmra.mrb[0].mxu0 %v697
      %v889 = vpop.f32.mrb[0].mxu0
      %v890 = vadd.f32 %v534, %v889
      %v891 = vpop.f32.mrb[0].mxu0
      %892 = vmatprep.mubr.f32.mxu0 0.0
      %893 = vmatmul.mubr.f32.gmra.mrb[0].mxu0 %v700
      %v894 = vpop.f32.mrb[0].mxu0
      %v895 = vadd.f32 %v539, %v894
      %v896 = vpop.f32.mrb[0].mxu0
      %897 = vmatprep.mubr.f32.mxu0 0.0
      %898 = vmatmul.mubr.f32.gmra.mrb[0].mxu0 %v703
      %v899 = vpop.f32.mrb[0].mxu0
      %v900 = vadd.f32 %v544, %v899
      %v901 = vpop.f32.mrb[0].mxu0
      %902 = vmatprep.mubr.f32.mxu0 0.0
      %903 = vmatmul.mubr.f32.gmra.mrb[0].mxu0 %v706
      %v904 = vpop.f32.mrb[0].mxu0
      %v905 = vadd.f32 %v549, %v904
      %v906 = vpop.f32.mrb[0].mxu0
      %907 = vmatprep.mubr.f32.mxu0 0.0
      %908 = vmatmul.mubr.f32.gmra.mrb[0].mxu0 %v709
      %v909 = vpop.f32.mrb[0].mxu0
      %v910 = vadd.f32 %v554, %v909
      %v911 = vpop.f32.mrb[0].mxu0
      %912 = vmatprep.mubr.f32.mxu0 0.0
      %913 = vmatmul.mubr.f32.gmra.mrb[0].mxu0 %v712
      %v914 = vpop.f32.mrb[0].mxu0
      %v915 = vadd.f32 %v559, %v914
      %v916 = vpop.f32.mrb[0].mxu0
      %917 = vmatprep.mubr.f32.mxu0 0.0
      %918 = vmatmul.mubr.f32.gmra.mrb[0].mxu0 %v715
      %v919 = vpop.f32.mrb[0].mxu0
      %v920 = vadd.f32 %v564, %v919
      %v921 = vpop.f32.mrb[0].mxu0
      %922 = vmatprep.mubr.f32.mxu0 0.0
      %923 = vmatmul.mubr.f32.gmra.mrb[0].mxu0 %v718
      %v924 = vpop.f32.mrb[0].mxu0
      %v925 = vadd.f32 %v569, %v924
      %v926 = vpop.f32.mrb[0].mxu0
      %927 = vmatprep.mubr.f32.mxu0 0.0
      %928 = vmatmul.mubr.f32.gmra.mrb[0].mxu0 %v721
      %v929 = vpop.f32.mrb[0].mxu0
      %v930 = vadd.f32 %v574, %v929
      %v931 = vpop.f32.mrb[0].mxu0
      %932 = vmatprep.mubr.f32.mxu0 0.0
      %933 = vmatmul.mubr.f32.gmra.mrb[0].mxu0 %v724
      %v934 = vpop.f32.mrb[0].mxu0
      %v935 = vadd.f32 %v579, %v934
      %v936 = vpop.f32.mrb[0].mxu0
      %937 = vmatprep.mubr.f32.mxu0 0.0
      %938 = vmatmul.mubr.f32.gmra.mrb[0].mxu0 %v727
      %v939 = vpop.f32.mrb[0].mxu0
      %v940 = vadd.f32 %v584, %v939
      %v941 = vpop.f32.mrb[0].mxu0
      %942 = vmatprep.mubr.f32.mxu0 0.0
      %943 = vmatmul.mubr.f32.gmra.mrb[0].mxu0 %v730
      %v944 = vpop.f32.mrb[0].mxu0
      %v945 = vadd.f32 %v589, %v944
      %v946 = vpop.f32.mrb[0].mxu0
      %947 = vmatprep.mubr.f32.mxu0 0.0
      %948 = vmatmul.mubr.f32.gmra.mrb[0].mxu0 %v733
      %v949 = vpop.f32.mrb[0].mxu0
      %v950 = vadd.f32 %v594, %v949
      %v951 = vpop.f32.mrb[0].mxu0
      %952 = vmatprep.mubr.f32.mxu0 0.0
      %953 = vmatmul.mubr.f32.gmra.mrb[0].mxu0 %v736
      %v954 = vpop.f32.mrb[0].mxu0
      %v955 = vadd.f32 %v599, %v954
      %v956 = vpop.f32.mrb[0].mxu0
      %957 = vmatprep.mubr.f32.mxu0 0.0
      %958 = vmatmul.mubr.f32.gmra.mrb[0].mxu0 %v739
      %v959 = vpop.f32.mrb[0].mxu0
      %v960 = vadd.f32 %v604, %v959
      %v961 = vpop.f32.mrb[0].mxu0
      %962 = vmatprep.mubr.f32.mxu0 0.0
      %963 = vmatmul.mubr.f32.gmra.mrb[0].mxu0 %v742
      %v964 = vpop.f32.mrb[0].mxu0
      %v965 = vadd.f32 %v609, %v964
      %v966 = vpop.f32.mrb[0].mxu0
      %967 = vmatprep.mubr.f32.mxu0 0.0
      %968 = vmatmul.mubr.f32.gmra.mrb[0].mxu0 %v745
      %v969 = vpop.f32.mrb[0].mxu0
      %v970 = vadd.f32 %v614, %v969
      %v971 = vpop.f32.mrb[0].mxu0
      %972 = vmatprep.mubr.f32.mxu0 0.0
      %973 = vmatmul.mubr.f32.gmra.mrb[0].mxu0 %v748
      %v974 = vpop.f32.mrb[0].mxu0
      %v975 = vadd.f32 %v619, %v974
      %v976 = vpop.f32.mrb[0].mxu0
      %977 = vmatprep.mubr.f32.mxu0 0.0
      %978 = vmatmul.mubr.f32.gmra.mrb[0].mxu0 %v751
      %v979 = vpop.f32.mrb[0].mxu0
      %v980 = vadd.f32 %v624, %v979
      %v981 = vpop.f32.mrb[0].mxu0
      %982 = vmatprep.mubr.f32.mxu0 0.0
      %983 = vmatmul.mubr.f32.gmra.mrb[0].mxu0 %v754
      %v984 = vpop.f32.mrb[0].mxu0
      %v985 = vadd.f32 %v629, %v984
      %v986 = vpop.f32.mrb[0].mxu0
      %987 = vmatprep.mubr.f32.mxu0 0.0
      %988 = vmatmul.mubr.f32.gmra.mrb[0].mxu0 %v757
      %v989 = vpop.f32.mrb[0].mxu0
      %v990 = vadd.f32 %v634, %v989
      %v991 = vpop.f32.mrb[0].mxu0
      %992 = vmatprep.mubr.f32.mxu0 0.0
      %993 = vmatmul.mubr.f32.gmra.mrb[0].mxu0 %v760
      %v994 = vpop.f32.mrb[0].mxu0
      %v995 = vadd.f32 %v639, %v994
      %v996 = vpop.f32.mrb[0].mxu0
      %997 = vmatprep.mubr.f32.mxu0 0.0
      %998 = vmatmul.mubr.f32.gmra.mrb[0].mxu0 %v763
      %v999 = vpop.f32.mrb[0].mxu0
      %v1000 = vadd.f32 %v644, %v999
      %v1001 = vpop.f32.mrb[0].mxu0
      %1002 = vmatprep.mubr.f32.mxu0 0.0
      %1003 = vmatmul.mubr.f32.gmra.mrb[0].mxu0 %v766
      %v1004 = vpop.f32.mrb[0].mxu0
      %v1005 = vadd.f32 %v649, %v1004
      %v1006 = vpop.f32.mrb[0].mxu0
      %1007 = vmatprep.mubr.f32.mxu0 0.0
      %1008 = vmatmul.mubr.f32.gmra.mrb[0].mxu0 %v769
      %v1009 = vpop.f32.mrb[0].mxu0
      %v1010 = vadd.f32 %v654, %v1009
      %v1011 = vpop.f32.mrb[0].mxu0
      %1012 = vmatprep.mubr.f32.mxu0 0.0
      %1013 = vmatmul.mubr.f32.gmra.mrb[0].mxu0 %v772
      %v1014 = vpop.f32.mrb[0].mxu0
      %v1015 = vadd.f32 %v659, %v1014
      %v1016 = vpop.f32.mrb[0].mxu0
      %1017 = vmatprep.mubr.f32.mxu0 0.0
      %1018 = vmatmul.mubr.f32.gmra.mrb[0].mxu0 %v775
      %v1019 = vpop.f32.mrb[0].mxu0
      %v1020 = vadd.f32 %v664, %v1019
      %v1021 = vpop.f32.mrb[0].mxu0
      %1022 = vmatprep.mubr.f32.mxu0 0.0
      %1023 = vmatmul.mubr.f32.gmra.mrb[0].mxu0 %v778
      %v1024 = vpop.f32.mrb[0].mxu0
      %v1025 = vadd.f32 %v669, %v1024
      %v1026 = vpop.f32.mrb[0].mxu0
      %1027 = vdwg.mxu0
      %v1028 = vld [vmem:[%s220 + $0x2] sm:$0xff]
      %v1029 = vld [vmem:[%s220 + $0xa] sm:$0xff]
      %v1030 = vld [vmem:[%s220 + $0x12] sm:$0xff]
      %v1031 = vld [vmem:[%s220 + $0x1a] sm:$0xff]
      %v1032 = vld [vmem:[%s220 + $0x22] sm:$0xff]
      %v1033 = vld [vmem:[%s220 + $0x2a] sm:$0xff]
      %v1034 = vld [vmem:[%s220 + $0x32] sm:$0xff]
      %v1035 = vld [vmem:[%s220 + $0x3a] sm:$0xff]
      %v1036 = vld [vmem:[%s220 + $0x42] sm:$0xff]
      %v1037 = vld [vmem:[%s220 + $0x4a] sm:$0xff]
      %v1038 = vld [vmem:[%s220 + $0x52] sm:$0xff]
      %v1039 = vld [vmem:[%s220 + $0x5a] sm:$0xff]
      %v1040 = vld [vmem:[%s220 + $0x62] sm:$0xff]
      %v1041 = vld [vmem:[%s220 + $0x6a] sm:$0xff]
      %v1042 = vld [vmem:[%s220 + $0x72] sm:$0xff]
      %v1043 = vld [vmem:[%s220 + $0x7a] sm:$0xff]
      %v1044 = vld [vmem:[%s220 + $0x82] sm:$0xff]
      %v1045 = vld [vmem:[%s220 + $0x8a] sm:$0xff]
      %v1046 = vld [vmem:[%s220 + $0x92] sm:$0xff]
      %v1047 = vld [vmem:[%s220 + $0x9a] sm:$0xff]
      %v1048 = vld [vmem:[%s220 + $0xa2] sm:$0xff]
      %v1049 = vld [vmem:[%s220 + $0xaa] sm:$0xff]
      %v1050 = vld [vmem:[%s220 + $0xb2] sm:$0xff]
      %v1051 = vld [vmem:[%s220 + $0xba] sm:$0xff]
      %v1052 = vld [vmem:[%s220 + $0xc2] sm:$0xff]
      %v1053 = vld [vmem:[%s220 + $0xca] sm:$0xff]
      %v1054 = vld [vmem:[%s220 + $0xd2] sm:$0xff]
      %v1055 = vld [vmem:[%s220 + $0xda] sm:$0xff]
      %v1056 = vld [vmem:[%s220 + $0xe2] sm:$0xff]
      %v1057 = vld [vmem:[%s220 + $0xea] sm:$0xff]
      %v1058 = vld [vmem:[%s220 + $0xf2] sm:$0xff]
      %v1059 = vld [vmem:[%s220 + $0xfa] sm:$0xff]
      %v1060 = vld [vmem:[%s220 + $0x102] sm:$0xff]
      %v1061 = vld [vmem:[%s220 + $0x10a] sm:$0xff]
      %v1062 = vld [vmem:[%s220 + $0x112] sm:$0xff]
      %v1063 = vld [vmem:[%s220 + $0x11a] sm:$0xff]
      %s1064 = scalar_lea.vmem %s1, 8
      %v1065 = vld [vmem:[%s1064] sm:$0xf]
      %v1067 = vsel %vm314, %v1028, 0
      %v1070 = vsel %vm314, %v1029, 0
      %v1073 = vsel %vm314, %v1030, 0
      %v1076 = vsel %vm314, %v1031, 0
      %v1079 = vsel %vm314, %v1032, 0
      %v1082 = vsel %vm314, %v1033, 0
      %v1085 = vsel %vm314, %v1034, 0
      %v1088 = vsel %vm314, %v1035, 0
      %v1091 = vsel %vm314, %v1036, 0
      %v1094 = vsel %vm314, %v1037, 0
      %v1097 = vsel %vm314, %v1038, 0
      %v1100 = vsel %vm314, %v1039, 0
      %v1103 = vsel %vm314, %v1040, 0
      %v1106 = vsel %vm314, %v1041, 0
      %v1109 = vsel %vm314, %v1042, 0
      %v1112 = vsel %vm314, %v1043, 0
      %v1115 = vsel %vm314, %v1044, 0
      %v1118 = vsel %vm314, %v1045, 0
      %v1121 = vsel %vm314, %v1046, 0
      %v1124 = vsel %vm314, %v1047, 0
      %v1127 = vsel %vm314, %v1048, 0
      %v1130 = vsel %vm314, %v1049, 0
      %v1133 = vsel %vm314, %v1050, 0
      %v1136 = vsel %vm314, %v1051, 0
      %v1139 = vsel %vm314, %v1052, 0
      %v1142 = vsel %vm314, %v1053, 0
      %v1145 = vsel %vm314, %v1054, 0
      %v1148 = vsel %vm314, %v1055, 0
      %v1151 = vsel %vm314, %v1056, 0
      %v1154 = vsel %vm314, %v1057, 0
      %v1157 = vsel %vm314, %v1058, 0
      %v1160 = vsel %vm314, %v1059, 0
      %v1163 = vsel %vm314, %v1060, 0
      %v1166 = vsel %vm314, %v1061, 0
      %v1169 = vsel %vm314, %v1062, 0
      %v1172 = vsel %vm314, %v1063, 0
      %v1175 = vsel %vm423, %v1065, 0
      %1177 = vmatprep.subr.mxu0 0.0
      %1178 = vmatpush1.msra.mxu0 %v1175
      %1179 = vmatprep.subr.mxu0 0.0
      %1180 = vmatpush1.msra.mxu0 0.0
      %1181 = vmatprep.subr.mxu0 0.0
      %1182 = vmatpush1.msra.mxu0 0.0
      %1183 = vmatprep.subr.mxu0 0.0
      %1184 = vmatpush1.msra.mxu0 0.0
      %1185 = vmatprep.subr.mxu0 0.0
      %1186 = vmatpush1.msra.mxu0 0.0
      %1187 = vmatprep.subr.mxu0 0.0
      %1188 = vmatpush1.msra.mxu0 0.0
      %1189 = vmatprep.subr.mxu0 0.0
      %1190 = vmatpush1.msra.mxu0 0.0
      %1191 = vmatprep.subr.mxu0 0.0
      %1192 = vmatpush1.msra.mxu0 0.0
      %1193 = vmatprep.subr.mxu0 0.0
      %1194 = vmatpush1.msra.mxu0 0.0
      %1195 = vmatprep.subr.mxu0 0.0
      %1196 = vmatpush1.msra.mxu0 0.0
      %1197 = vmatprep.subr.mxu0 0.0
      %1198 = vmatpush1.msra.mxu0 0.0
      %1199 = vmatprep.subr.mxu0 0.0
      %1200 = vmatpush1.msra.mxu0 0.0
      %1201 = vmatprep.subr.mxu0 0.0
      %1202 = vmatpush1.msra.mxu0 0.0
      %1203 = vmatprep.subr.mxu0 0.0
      %1204 = vmatpush1.msra.mxu0 0.0
      %1205 = vmatprep.subr.mxu0 0.0
      %1206 = vmatpush1.msra.mxu0 0.0
      %1207 = vmatprep.subr.mxu0 0.0
      %1208 = vmatpush1.msra.mxu0 0.0
      %1209 = vmatprep.subr.mxu0 0.0
      %1210 = vmatpush1.msra.mxu0 0.0
      %1211 = vmatprep.subr.mxu0 0.0
      %1212 = vmatpush1.msra.mxu0 0.0
      %1213 = vmatprep.subr.mxu0 0.0
      %1214 = vmatpush1.msra.mxu0 0.0
      %1215 = vmatprep.subr.mxu0 0.0
      %1216 = vmatpush1.msra.mxu0 0.0
      %1217 = vmatprep.subr.mxu0 0.0
      %1218 = vmatpush1.msra.mxu0 0.0
      %1219 = vmatprep.subr.mxu0 0.0
      %1220 = vmatpush1.msra.mxu0 0.0
      %1221 = vmatprep.subr.mxu0 0.0
      %1222 = vmatpush1.msra.mxu0 0.0
      %1223 = vmatprep.subr.mxu0 0.0
      %1224 = vmatpush1.msra.mxu0 0.0
      %1225 = vmatprep.subr.mxu0 0.0
      %1226 = vmatpush1.msra.mxu0 0.0
      %1227 = vmatprep.subr.mxu0 0.0
      %1228 = vmatpush1.msra.mxu0 0.0
      %1229 = vmatprep.subr.mxu0 0.0
      %1230 = vmatpush1.msra.mxu0 0.0
      %1231 = vmatprep.subr.mxu0 0.0
      %1232 = vmatpush1.msra.mxu0 0.0
      %1233 = vmatprep.subr.mxu0 0.0
      %1234 = vmatpush1.msra.mxu0 0.0
      %1235 = vmatprep.subr.mxu0 0.0
      %1236 = vmatpush1.msra.mxu0 0.0
      %1237 = vmatprep.subr.mxu0 0.0
      %1238 = vmatpush1.msra.mxu0 0.0
      %1239 = vmatprep.subr.mxu0 0.0
      %1240 = vmatpush1.msra.mxu0 0.0
      %1241 = vmatprep.mubr.f32.mxu0 0.0
      %1242 = vmatmul.mubr.f32.gmra.mrb[0].mxu0 %v1067
      %v1243 = vpop.f32.mrb[0].mxu0
      %v1244 = vadd.f32 0.0, %v1243
      %v1245 = vpop.f32.mrb[0].mxu0
      %1246 = vmatprep.mubr.f32.mxu0 0.0
      %1247 = vmatmul.mubr.f32.gmra.mrb[0].mxu0 %v1070
      %v1248 = vpop.f32.mrb[0].mxu0
      %v1249 = vadd.f32 0.0, %v1248
      %v1250 = vpop.f32.mrb[0].mxu0
      %1251 = vmatprep.mubr.f32.mxu0 0.0
      %1252 = vmatmul.mubr.f32.gmra.mrb[0].mxu0 %v1073
      %v1253 = vpop.f32.mrb[0].mxu0
      %v1254 = vadd.f32 0.0, %v1253
      %v1255 = vpop.f32.mrb[0].mxu0
      %1256 = vmatprep.mubr.f32.mxu0 0.0
      %1257 = vmatmul.mubr.f32.gmra.mrb[0].mxu0 %v1076
      %v1258 = vpop.f32.mrb[0].mxu0
      %v1259 = vadd.f32 0.0, %v1258
      %v1260 = vpop.f32.mrb[0].mxu0
      %1261 = vmatprep.mubr.f32.mxu0 0.0
      %1262 = vmatmul.mubr.f32.gmra.mrb[0].mxu0 %v1079
      %v1263 = vpop.f32.mrb[0].mxu0
      %v1264 = vadd.f32 0.0, %v1263
      %v1265 = vpop.f32.mrb[0].mxu0
      %1266 = vmatprep.mubr.f32.mxu0 0.0
      %1267 = vmatmul.mubr.f32.gmra.mrb[0].mxu0 %v1082
      %v1268 = vpop.f32.mrb[0].mxu0
      %v1269 = vadd.f32 0.0, %v1268
      %v1270 = vpop.f32.mrb[0].mxu0
      %1271 = vmatprep.mubr.f32.mxu0 0.0
      %1272 = vmatmul.mubr.f32.gmra.mrb[0].mxu0 %v1085
      %v1273 = vpop.f32.mrb[0].mxu0
      %v1274 = vadd.f32 0.0, %v1273
      %v1275 = vpop.f32.mrb[0].mxu0
      %1276 = vmatprep.mubr.f32.mxu0 0.0
      %1277 = vmatmul.mubr.f32.gmra.mrb[0].mxu0 %v1088
      %v1278 = vpop.f32.mrb[0].mxu0
      %v1279 = vadd.f32 0.0, %v1278
      %v1280 = vpop.f32.mrb[0].mxu0
      %1281 = vmatprep.mubr.f32.mxu0 0.0
      %1282 = vmatmul.mubr.f32.gmra.mrb[0].mxu0 %v1091
      %v1283 = vpop.f32.mrb[0].mxu0
      %v1284 = vadd.f32 0.0, %v1283
      %v1285 = vpop.f32.mrb[0].mxu0
      %1286 = vmatprep.mubr.f32.mxu0 0.0
      %1287 = vmatmul.mubr.f32.gmra.mrb[0].mxu0 %v1094
      %v1288 = vpop.f32.mrb[0].mxu0
      %v1289 = vadd.f32 0.0, %v1288
      %v1290 = vpop.f32.mrb[0].mxu0
      %1291 = vmatprep.mubr.f32.mxu0 0.0
      %1292 = vmatmul.mubr.f32.gmra.mrb[0].mxu0 %v1097
      %v1293 = vpop.f32.mrb[0].mxu0
      %v1294 = vadd.f32 0.0, %v1293
      %v1295 = vpop.f32.mrb[0].mxu0
      %1296 = vmatprep.mubr.f32.mxu0 0.0
      %1297 = vmatmul.mubr.f32.gmra.mrb[0].mxu0 %v1100
      %v1298 = vpop.f32.mrb[0].mxu0
      %v1299 = vadd.f32 0.0, %v1298
      %v1300 = vpop.f32.mrb[0].mxu0
      %1301 = vmatprep.mubr.f32.mxu0 0.0
      %1302 = vmatmul.mubr.f32.gmra.mrb[0].mxu0 %v1103
      %v1303 = vpop.f32.mrb[0].mxu0
      %v1304 = vadd.f32 0.0, %v1303
      %v1305 = vpop.f32.mrb[0].mxu0
      %1306 = vmatprep.mubr.f32.mxu0 0.0
      %1307 = vmatmul.mubr.f32.gmra.mrb[0].mxu0 %v1106
      %v1308 = vpop.f32.mrb[0].mxu0
      %v1309 = vadd.f32 0.0, %v1308
      %v1310 = vpop.f32.mrb[0].mxu0
      %1311 = vmatprep.mubr.f32.mxu0 0.0
      %1312 = vmatmul.mubr.f32.gmra.mrb[0].mxu0 %v1109
      %v1313 = vpop.f32.mrb[0].mxu0
      %v1314 = vadd.f32 0.0, %v1313
      %v1315 = vpop.f32.mrb[0].mxu0
      %1316 = vmatprep.mubr.f32.mxu0 0.0
      %1317 = vmatmul.mubr.f32.gmra.mrb[0].mxu0 %v1112
      %v1318 = vpop.f32.mrb[0].mxu0
      %v1319 = vadd.f32 0.0, %v1318
      %v1320 = vpop.f32.mrb[0].mxu0
      %1321 = vmatprep.mubr.f32.mxu0 0.0
      %1322 = vmatmul.mubr.f32.gmra.mrb[0].mxu0 %v1115
      %v1323 = vpop.f32.mrb[0].mxu0
      %v1324 = vadd.f32 0.0, %v1323
      %v1325 = vpop.f32.mrb[0].mxu0
      %1326 = vmatprep.mubr.f32.mxu0 0.0
      %1327 = vmatmul.mubr.f32.gmra.mrb[0].mxu0 %v1118
      %v1328 = vpop.f32.mrb[0].mxu0
      %v1329 = vadd.f32 0.0, %v1328
      %v1330 = vpop.f32.mrb[0].mxu0
      %1331 = vmatprep.mubr.f32.mxu0 0.0
      %1332 = vmatmul.mubr.f32.gmra.mrb[0].mxu0 %v1121
      %v1333 = vpop.f32.mrb[0].mxu0
      %v1334 = vadd.f32 0.0, %v1333
      %v1335 = vpop.f32.mrb[0].mxu0
      %1336 = vmatprep.mubr.f32.mxu0 0.0
      %1337 = vmatmul.mubr.f32.gmra.mrb[0].mxu0 %v1124
      %v1338 = vpop.f32.mrb[0].mxu0
      %v1339 = vadd.f32 0.0, %v1338
      %v1340 = vpop.f32.mrb[0].mxu0
      %1341 = vmatprep.mubr.f32.mxu0 0.0
      %1342 = vmatmul.mubr.f32.gmra.mrb[0].mxu0 %v1127
      %v1343 = vpop.f32.mrb[0].mxu0
      %v1344 = vadd.f32 0.0, %v1343
      %v1345 = vpop.f32.mrb[0].mxu0
      %1346 = vmatprep.mubr.f32.mxu0 0.0
      %1347 = vmatmul.mubr.f32.gmra.mrb[0].mxu0 %v1130
      %v1348 = vpop.f32.mrb[0].mxu0
      %v1349 = vadd.f32 0.0, %v1348
      %v1350 = vpop.f32.mrb[0].mxu0
      %1351 = vmatprep.mubr.f32.mxu0 0.0
      %1352 = vmatmul.mubr.f32.gmra.mrb[0].mxu0 %v1133
      %v1353 = vpop.f32.mrb[0].mxu0
      %v1354 = vadd.f32 0.0, %v1353
      %v1355 = vpop.f32.mrb[0].mxu0
      %1356 = vmatprep.mubr.f32.mxu0 0.0
      %1357 = vmatmul.mubr.f32.gmra.mrb[0].mxu0 %v1136
      %v1358 = vpop.f32.mrb[0].mxu0
      %v1359 = vadd.f32 0.0, %v1358
      %v1360 = vpop.f32.mrb[0].mxu0
      %1361 = vmatprep.mubr.f32.mxu0 0.0
      %1362 = vmatmul.mubr.f32.gmra.mrb[0].mxu0 %v1139
      %v1363 = vpop.f32.mrb[0].mxu0
      %v1364 = vadd.f32 0.0, %v1363
      %v1365 = vpop.f32.mrb[0].mxu0
      %1366 = vmatprep.mubr.f32.mxu0 0.0
      %1367 = vmatmul.mubr.f32.gmra.mrb[0].mxu0 %v1142
      %v1368 = vpop.f32.mrb[0].mxu0
      %v1369 = vadd.f32 0.0, %v1368
      %v1370 = vpop.f32.mrb[0].mxu0
      %1371 = vmatprep.mubr.f32.mxu0 0.0
      %1372 = vmatmul.mubr.f32.gmra.mrb[0].mxu0 %v1145
      %v1373 = vpop.f32.mrb[0].mxu0
      %v1374 = vadd.f32 0.0, %v1373
      %v1375 = vpop.f32.mrb[0].mxu0
      %1376 = vmatprep.mubr.f32.mxu0 0.0
      %1377 = vmatmul.mubr.f32.gmra.mrb[0].mxu0 %v1148
      %v1378 = vpop.f32.mrb[0].mxu0
      %v1379 = vadd.f32 0.0, %v1378
      %v1380 = vpop.f32.mrb[0].mxu0
      %1381 = vmatprep.mubr.f32.mxu0 0.0
      %1382 = vmatmul.mubr.f32.gmra.mrb[0].mxu0 %v1151
      %v1383 = vpop.f32.mrb[0].mxu0
      %v1384 = vadd.f32 0.0, %v1383
      %v1385 = vpop.f32.mrb[0].mxu0
      %1386 = vmatprep.mubr.f32.mxu0 0.0
      %1387 = vmatmul.mubr.f32.gmra.mrb[0].mxu0 %v1154
      %v1388 = vpop.f32.mrb[0].mxu0
      %v1389 = vadd.f32 0.0, %v1388
      %v1390 = vpop.f32.mrb[0].mxu0
      %1391 = vmatprep.mubr.f32.mxu0 0.0
      %1392 = vmatmul.mubr.f32.gmra.mrb[0].mxu0 %v1157
      %v1393 = vpop.f32.mrb[0].mxu0
      %v1394 = vadd.f32 0.0, %v1393
      %v1395 = vpop.f32.mrb[0].mxu0
      %1396 = vmatprep.mubr.f32.mxu0 0.0
      %1397 = vmatmul.mubr.f32.gmra.mrb[0].mxu0 %v1160
      %v1398 = vpop.f32.mrb[0].mxu0
      %v1399 = vadd.f32 0.0, %v1398
      %v1400 = vpop.f32.mrb[0].mxu0
      %1401 = vmatprep.mubr.f32.mxu0 0.0
      %1402 = vmatmul.mubr.f32.gmra.mrb[0].mxu0 %v1163
      %v1403 = vpop.f32.mrb[0].mxu0
      %v1404 = vadd.f32 0.0, %v1403
      %v1405 = vpop.f32.mrb[0].mxu0
      %1406 = vmatprep.mubr.f32.mxu0 0.0
      %1407 = vmatmul.mubr.f32.gmra.mrb[0].mxu0 %v1166
      %v1408 = vpop.f32.mrb[0].mxu0
      %v1409 = vadd.f32 0.0, %v1408
      %v1410 = vpop.f32.mrb[0].mxu0
      %1411 = vmatprep.mubr.f32.mxu0 0.0
      %1412 = vmatmul.mubr.f32.gmra.mrb[0].mxu0 %v1169
      %v1413 = vpop.f32.mrb[0].mxu0
      %v1414 = vadd.f32 0.0, %v1413
      %v1415 = vpop.f32.mrb[0].mxu0
      %1416 = vmatprep.mubr.f32.mxu0 0.0
      %1417 = vmatmul.mubr.f32.gmra.mrb[0].mxu0 %v1172
      %v1418 = vpop.f32.mrb[0].mxu0
      %v1419 = vadd.f32 0.0, %v1418
      %v1420 = vpop.f32.mrb[0].mxu0
      %1421 = vdwg.mxu0
      %v1422 = vadd.f32 %v850, %v1244
      %v1423 = vadd.f32 %v855, %v1249
      %v1424 = vadd.f32 %v860, %v1254
      %v1425 = vadd.f32 %v865, %v1259
      %v1426 = vadd.f32 %v870, %v1264
      %v1427 = vadd.f32 %v875, %v1269
      %v1428 = vadd.f32 %v880, %v1274
      %v1429 = vadd.f32 %v885, %v1279
      %v1430 = vadd.f32 %v890, %v1284
      %v1431 = vadd.f32 %v895, %v1289
      %v1432 = vadd.f32 %v900, %v1294
      %v1433 = vadd.f32 %v905, %v1299
      %v1434 = vadd.f32 %v910, %v1304
      %v1435 = vadd.f32 %v915, %v1309
      %v1436 = vadd.f32 %v920, %v1314
      %v1437 = vadd.f32 %v925, %v1319
      %v1438 = vadd.f32 %v930, %v1324
      %v1439 = vadd.f32 %v935, %v1329
      %v1440 = vadd.f32 %v940, %v1334
      %v1441 = vadd.f32 %v945, %v1339
      %v1442 = vadd.f32 %v950, %v1344
      %v1443 = vadd.f32 %v955, %v1349
      %v1444 = vadd.f32 %v960, %v1354
      %v1445 = vadd.f32 %v965, %v1359
      %v1446 = vadd.f32 %v970, %v1364
      %v1447 = vadd.f32 %v975, %v1369
      %v1448 = vadd.f32 %v980, %v1374
      %v1449 = vadd.f32 %v985, %v1379
      %v1450 = vadd.f32 %v990, %v1384
      %v1451 = vadd.f32 %v995, %v1389
      %v1452 = vadd.f32 %v1000, %v1394
      %v1453 = vadd.f32 %v1005, %v1399
      %v1454 = vadd.f32 %v1010, %v1404
      %v1455 = vadd.f32 %v1015, %v1409
      %v1456 = vadd.f32 %v1020, %v1414
      %v1457 = vadd.f32 %v1025, %v1419
      %v1458 = vld [vmem:[%s220 + $0x12] sm:$0xff]
      %v1459 = vld [vmem:[%s220 + $0x1a] sm:$0xff]
      %v1460 = vld [vmem:[%s220 + $0x22] sm:$0xff]
      %v1461 = vld [vmem:[%s220 + $0x2a] sm:$0xff]
      %v1462 = vld [vmem:[%s220 + $0x32] sm:$0xff]
      %v1463 = vld [vmem:[%s220 + $0x3a] sm:$0xff]
      %v1464 = vld [vmem:[%s220 + $0x42] sm:$0xff]
      %v1465 = vld [vmem:[%s220 + $0x4a] sm:$0xff]
      %v1466 = vld [vmem:[%s220 + $0x52] sm:$0xff]
      %v1467 = vld [vmem:[%s220 + $0x5a] sm:$0xff]
      %v1468 = vld [vmem:[%s220 + $0x62] sm:$0xff]
      %v1469 = vld [vmem:[%s220 + $0x6a] sm:$0xff]
      %v1470 = vld [vmem:[%s220 + $0x72] sm:$0xff]
      %v1471 = vld [vmem:[%s220 + $0x7a] sm:$0xff]
      %v1472 = vld [vmem:[%s220 + $0x82] sm:$0xff]
      %v1473 = vld [vmem:[%s220 + $0x8a] sm:$0xff]
      %v1474 = vld [vmem:[%s220 + $0x92] sm:$0xff]
      %v1475 = vld [vmem:[%s220 + $0x9a] sm:$0xff]
      %v1476 = vld [vmem:[%s220 + $0xa2] sm:$0xff]
      %v1477 = vld [vmem:[%s220 + $0xaa] sm:$0xff]
      %v1478 = vld [vmem:[%s220 + $0xb2] sm:$0xff]
      %v1479 = vld [vmem:[%s220 + $0xba] sm:$0xff]
      %v1480 = vld [vmem:[%s220 + $0xc2] sm:$0xff]
      %v1481 = vld [vmem:[%s220 + $0xca] sm:$0xff]
      %v1482 = vld [vmem:[%s220 + $0xd2] sm:$0xff]
      %v1483 = vld [vmem:[%s220 + $0xda] sm:$0xff]
      %v1484 = vld [vmem:[%s220 + $0xe2] sm:$0xff]
      %v1485 = vld [vmem:[%s220 + $0xea] sm:$0xff]
      %v1486 = vld [vmem:[%s220 + $0xf2] sm:$0xff]
      %v1487 = vld [vmem:[%s220 + $0xfa] sm:$0xff]
      %v1488 = vld [vmem:[%s220 + $0x102] sm:$0xff]
      %v1489 = vld [vmem:[%s220 + $0x10a] sm:$0xff]
      %v1490 = vld [vmem:[%s220 + $0x112] sm:$0xff]
      %v1491 = vld [vmem:[%s220 + $0x11a] sm:$0xff]
      %v1492 = vld [vmem:[%s220 + $0x122] sm:$0xff]
      %v1493 = vld [vmem:[%s220 + $0x12a] sm:$0xff]
      %s1494 = scalar_lea.vmem %s1, 12
      %v1495 = vld [vmem:[%s1494] sm:$0xf]
      %v1497 = vsel %vm314, %v1458, 0
      %v1500 = vsel %vm314, %v1459, 0
      %v1503 = vsel %vm314, %v1460, 0
      %v1506 = vsel %vm314, %v1461, 0
      %v1509 = vsel %vm314, %v1462, 0
      %v1512 = vsel %vm314, %v1463, 0
      %v1515 = vsel %vm314, %v1464, 0
      %v1518 = vsel %vm314, %v1465, 0
      %v1521 = vsel %vm314, %v1466, 0
      %v1524 = vsel %vm314, %v1467, 0
      %v1527 = vsel %vm314, %v1468, 0
      %v1530 = vsel %vm314, %v1469, 0
      %v1533 = vsel %vm314, %v1470, 0
      %v1536 = vsel %vm314, %v1471, 0
      %v1539 = vsel %vm314, %v1472, 0
      %v1542 = vsel %vm314, %v1473, 0
      %v1545 = vsel %vm314, %v1474, 0
      %v1548 = vsel %vm314, %v1475, 0
      %v1551 = vsel %vm314, %v1476, 0
      %v1554 = vsel %vm314, %v1477, 0
      %v1557 = vsel %vm314, %v1478, 0
      %v1560 = vsel %vm314, %v1479, 0
      %v1563 = vsel %vm314, %v1480, 0
      %v1566 = vsel %vm314, %v1481, 0
      %v1569 = vsel %vm314, %v1482, 0
      %v1572 = vsel %vm314, %v1483, 0
      %v1575 = vsel %vm314, %v1484, 0
      %v1578 = vsel %vm314, %v1485, 0
      %v1581 = vsel %vm314, %v1486, 0
      %v1584 = vsel %vm314, %v1487, 0
      %v1587 = vsel %vm314, %v1488, 0
      %v1590 = vsel %vm314, %v1489, 0
      %v1593 = vsel %vm314, %v1490, 0
      %v1596 = vsel %vm314, %v1491, 0
      %v1599 = vsel %vm314, %v1492, 0
      %v1602 = vsel %vm314, %v1493, 0
      %v1605 = vsel %vm423, %v1495, 0
      %1607 = vmatprep.subr.mxu0 0.0
      %1608 = vmatpush1.msra.mxu0 %v1605
      %1609 = vmatprep.subr.mxu0 0.0
      %1610 = vmatpush1.msra.mxu0 0.0
      %1611 = vmatprep.subr.mxu0 0.0
      %1612 = vmatpush1.msra.mxu0 0.0
      %1613 = vmatprep.subr.mxu0 0.0
      %1614 = vmatpush1.msra.mxu0 0.0
      %1615 = vmatprep.subr.mxu0 0.0
      %1616 = vmatpush1.msra.mxu0 0.0
      %1617 = vmatprep.subr.mxu0 0.0
      %1618 = vmatpush1.msra.mxu0 0.0
      %1619 = vmatprep.subr.mxu0 0.0
      %1620 = vmatpush1.msra.mxu0 0.0
      %1621 = vmatprep.subr.mxu0 0.0
      %1622 = vmatpush1.msra.mxu0 0.0
      %1623 = vmatprep.subr.mxu0 0.0
      %1624 = vmatpush1.msra.mxu0 0.0
      %1625 = vmatprep.subr.mxu0 0.0
      %1626 = vmatpush1.msra.mxu0 0.0
      %1627 = vmatprep.subr.mxu0 0.0
      %1628 = vmatpush1.msra.mxu0 0.0
      %1629 = vmatprep.subr.mxu0 0.0
      %1630 = vmatpush1.msra.mxu0 0.0
      %1631 = vmatprep.subr.mxu0 0.0
      %1632 = vmatpush1.msra.mxu0 0.0
      %1633 = vmatprep.subr.mxu0 0.0
      %1634 = vmatpush1.msra.mxu0 0.0
      %1635 = vmatprep.subr.mxu0 0.0
      %1636 = vmatpush1.msra.mxu0 0.0
      %1637 = vmatprep.subr.mxu0 0.0
      %1638 = vmatpush1.msra.mxu0 0.0
      %1639 = vmatprep.subr.mxu0 0.0
      %1640 = vmatpush1.msra.mxu0 0.0
      %1641 = vmatprep.subr.mxu0 0.0
      %1642 = vmatpush1.msra.mxu0 0.0
      %1643 = vmatprep.subr.mxu0 0.0
      %1644 = vmatpush1.msra.mxu0 0.0
      %1645 = vmatprep.subr.mxu0 0.0
      %1646 = vmatpush1.msra.mxu0 0.0
      %1647 = vmatprep.subr.mxu0 0.0
      %1648 = vmatpush1.msra.mxu0 0.0
      %1649 = vmatprep.subr.mxu0 0.0
      %1650 = vmatpush1.msra.mxu0 0.0
      %1651 = vmatprep.subr.mxu0 0.0
      %1652 = vmatpush1.msra.mxu0 0.0
      %1653 = vmatprep.subr.mxu0 0.0
      %1654 = vmatpush1.msra.mxu0 0.0
      %1655 = vmatprep.subr.mxu0 0.0
      %1656 = vmatpush1.msra.mxu0 0.0
      %1657 = vmatprep.subr.mxu0 0.0
      %1658 = vmatpush1.msra.mxu0 0.0
      %1659 = vmatprep.subr.mxu0 0.0
      %1660 = vmatpush1.msra.mxu0 0.0
      %1661 = vmatprep.subr.mxu0 0.0
      %1662 = vmatpush1.msra.mxu0 0.0
      %1663 = vmatprep.subr.mxu0 0.0
      %1664 = vmatpush1.msra.mxu0 0.0
      %1665 = vmatprep.subr.mxu0 0.0
      %1666 = vmatpush1.msra.mxu0 0.0
      %1667 = vmatprep.subr.mxu0 0.0
      %1668 = vmatpush1.msra.mxu0 0.0
      %1669 = vmatprep.subr.mxu0 0.0
      %1670 = vmatpush1.msra.mxu0 0.0
      %1671 = vmatprep.mubr.f32.mxu0 0.0
      %1672 = vmatmul.mubr.f32.gmra.mrb[0].mxu0 %v1497
      %v1673 = vpop.f32.mrb[0].mxu0
      %v1674 = vadd.f32 0.0, %v1673
      %v1675 = vpop.f32.mrb[0].mxu0
      %1676 = vmatprep.mubr.f32.mxu0 0.0
      %1677 = vmatmul.mubr.f32.gmra.mrb[0].mxu0 %v1500
      %v1678 = vpop.f32.mrb[0].mxu0
      %v1679 = vadd.f32 0.0, %v1678
      %v1680 = vpop.f32.mrb[0].mxu0
      %1681 = vmatprep.mubr.f32.mxu0 0.0
      %1682 = vmatmul.mubr.f32.gmra.mrb[0].mxu0 %v1503
      %v1683 = vpop.f32.mrb[0].mxu0
      %v1684 = vadd.f32 0.0, %v1683
      %v1685 = vpop.f32.mrb[0].mxu0
      %1686 = vmatprep.mubr.f32.mxu0 0.0
      %1687 = vmatmul.mubr.f32.gmra.mrb[0].mxu0 %v1506
      %v1688 = vpop.f32.mrb[0].mxu0
      %v1689 = vadd.f32 0.0, %v1688
      %v1690 = vpop.f32.mrb[0].mxu0
      %1691 = vmatprep.mubr.f32.mxu0 0.0
      %1692 = vmatmul.mubr.f32.gmra.mrb[0].mxu0 %v1509
      %v1693 = vpop.f32.mrb[0].mxu0
      %v1694 = vadd.f32 0.0, %v1693
      %v1695 = vpop.f32.mrb[0].mxu0
      %1696 = vmatprep.mubr.f32.mxu0 0.0
      %1697 = vmatmul.mubr.f32.gmra.mrb[0].mxu0 %v1512
      %v1698 = vpop.f32.mrb[0].mxu0
      %v1699 = vadd.f32 0.0, %v1698
      %v1700 = vpop.f32.mrb[0].mxu0
      %1701 = vmatprep.mubr.f32.mxu0 0.0
      %1702 = vmatmul.mubr.f32.gmra.mrb[0].mxu0 %v1515
      %v1703 = vpop.f32.mrb[0].mxu0
      %v1704 = vadd.f32 0.0, %v1703
      %v1705 = vpop.f32.mrb[0].mxu0
      %1706 = vmatprep.mubr.f32.mxu0 0.0
      %1707 = vmatmul.mubr.f32.gmra.mrb[0].mxu0 %v1518
      %v1708 = vpop.f32.mrb[0].mxu0
      %v1709 = vadd.f32 0.0, %v1708
      %v1710 = vpop.f32.mrb[0].mxu0
      %1711 = vmatprep.mubr.f32.mxu0 0.0
      %1712 = vmatmul.mubr.f32.gmra.mrb[0].mxu0 %v1521
      %v1713 = vpop.f32.mrb[0].mxu0
      %v1714 = vadd.f32 0.0, %v1713
      %v1715 = vpop.f32.mrb[0].mxu0
      %1716 = vmatprep.mubr.f32.mxu0 0.0
      %1717 = vmatmul.mubr.f32.gmra.mrb[0].mxu0 %v1524
      %v1718 = vpop.f32.mrb[0].mxu0
      %v1719 = vadd.f32 0.0, %v1718
      %v1720 = vpop.f32.mrb[0].mxu0
      %1721 = vmatprep.mubr.f32.mxu0 0.0
      %1722 = vmatmul.mubr.f32.gmra.mrb[0].mxu0 %v1527
      %v1723 = vpop.f32.mrb[0].mxu0
      %v1724 = vadd.f32 0.0, %v1723
      %v1725 = vpop.f32.mrb[0].mxu0
      %1726 = vmatprep.mubr.f32.mxu0 0.0
      %1727 = vmatmul.mubr.f32.gmra.mrb[0].mxu0 %v1530
      %v1728 = vpop.f32.mrb[0].mxu0
      %v1729 = vadd.f32 0.0, %v1728
      %v1730 = vpop.f32.mrb[0].mxu0
      %1731 = vmatprep.mubr.f32.mxu0 0.0
      %1732 = vmatmul.mubr.f32.gmra.mrb[0].mxu0 %v1533
      %v1733 = vpop.f32.mrb[0].mxu0
      %v1734 = vadd.f32 0.0, %v1733
      %v1735 = vpop.f32.mrb[0].mxu0
      %1736 = vmatprep.mubr.f32.mxu0 0.0
      %1737 = vmatmul.mubr.f32.gmra.mrb[0].mxu0 %v1536
      %v1738 = vpop.f32.mrb[0].mxu0
      %v1739 = vadd.f32 0.0, %v1738
      %v1740 = vpop.f32.mrb[0].mxu0
      %1741 = vmatprep.mubr.f32.mxu0 0.0
      %1742 = vmatmul.mubr.f32.gmra.mrb[0].mxu0 %v1539
      %v1743 = vpop.f32.mrb[0].mxu0
      %v1744 = vadd.f32 0.0, %v1743
      %v1745 = vpop.f32.mrb[0].mxu0
      %1746 = vmatprep.mubr.f32.mxu0 0.0
      %1747 = vmatmul.mubr.f32.gmra.mrb[0].mxu0 %v1542
      %v1748 = vpop.f32.mrb[0].mxu0
      %v1749 = vadd.f32 0.0, %v1748
      %v1750 = vpop.f32.mrb[0].mxu0
      %1751 = vmatprep.mubr.f32.mxu0 0.0
      %1752 = vmatmul.mubr.f32.gmra.mrb[0].mxu0 %v1545
      %v1753 = vpop.f32.mrb[0].mxu0
      %v1754 = vadd.f32 0.0, %v1753
      %v1755 = vpop.f32.mrb[0].mxu0
      %1756 = vmatprep.mubr.f32.mxu0 0.0
      %1757 = vmatmul.mubr.f32.gmra.mrb[0].mxu0 %v1548
      %v1758 = vpop.f32.mrb[0].mxu0
      %v1759 = vadd.f32 0.0, %v1758
      %v1760 = vpop.f32.mrb[0].mxu0
      %1761 = vmatprep.mubr.f32.mxu0 0.0
      %1762 = vmatmul.mubr.f32.gmra.mrb[0].mxu0 %v1551
      %v1763 = vpop.f32.mrb[0].mxu0
      %v1764 = vadd.f32 0.0, %v1763
      %v1765 = vpop.f32.mrb[0].mxu0
      %1766 = vmatprep.mubr.f32.mxu0 0.0
      %1767 = vmatmul.mubr.f32.gmra.mrb[0].mxu0 %v1554
      %v1768 = vpop.f32.mrb[0].mxu0
      %v1769 = vadd.f32 0.0, %v1768
      %v1770 = vpop.f32.mrb[0].mxu0
      %1771 = vmatprep.mubr.f32.mxu0 0.0
      %1772 = vmatmul.mubr.f32.gmra.mrb[0].mxu0 %v1557
      %v1773 = vpop.f32.mrb[0].mxu0
      %v1774 = vadd.f32 0.0, %v1773
      %v1775 = vpop.f32.mrb[0].mxu0
      %1776 = vmatprep.mubr.f32.mxu0 0.0
      %1777 = vmatmul.mubr.f32.gmra.mrb[0].mxu0 %v1560
      %v1778 = vpop.f32.mrb[0].mxu0
      %v1779 = vadd.f32 0.0, %v1778
      %v1780 = vpop.f32.mrb[0].mxu0
      %1781 = vmatprep.mubr.f32.mxu0 0.0
      %1782 = vmatmul.mubr.f32.gmra.mrb[0].mxu0 %v1563
      %v1783 = vpop.f32.mrb[0].mxu0
      %v1784 = vadd.f32 0.0, %v1783
      %v1785 = vpop.f32.mrb[0].mxu0
      %1786 = vmatprep.mubr.f32.mxu0 0.0
      %1787 = vmatmul.mubr.f32.gmra.mrb[0].mxu0 %v1566
      %v1788 = vpop.f32.mrb[0].mxu0
      %v1789 = vadd.f32 0.0, %v1788
      %v1790 = vpop.f32.mrb[0].mxu0
      %1791 = vmatprep.mubr.f32.mxu0 0.0
      %1792 = vmatmul.mubr.f32.gmra.mrb[0].mxu0 %v1569
      %v1793 = vpop.f32.mrb[0].mxu0
      %v1794 = vadd.f32 0.0, %v1793
      %v1795 = vpop.f32.mrb[0].mxu0
      %1796 = vmatprep.mubr.f32.mxu0 0.0
      %1797 = vmatmul.mubr.f32.gmra.mrb[0].mxu0 %v1572
      %v1798 = vpop.f32.mrb[0].mxu0
      %v1799 = vadd.f32 0.0, %v1798
      %v1800 = vpop.f32.mrb[0].mxu0
      %1801 = vmatprep.mubr.f32.mxu0 0.0
      %1802 = vmatmul.mubr.f32.gmra.mrb[0].mxu0 %v1575
      %v1803 = vpop.f32.mrb[0].mxu0
      %v1804 = vadd.f32 0.0, %v1803
      %v1805 = vpop.f32.mrb[0].mxu0
      %1806 = vmatprep.mubr.f32.mxu0 0.0
      %1807 = vmatmul.mubr.f32.gmra.mrb[0].mxu0 %v1578
      %v1808 = vpop.f32.mrb[0].mxu0
      %v1809 = vadd.f32 0.0, %v1808
      %v1810 = vpop.f32.mrb[0].mxu0
      %1811 = vmatprep.mubr.f32.mxu0 0.0
      %1812 = vmatmul.mubr.f32.gmra.mrb[0].mxu0 %v1581
      %v1813 = vpop.f32.mrb[0].mxu0
      %v1814 = vadd.f32 0.0, %v1813
      %v1815 = vpop.f32.mrb[0].mxu0
      %1816 = vmatprep.mubr.f32.mxu0 0.0
      %1817 = vmatmul.mubr.f32.gmra.mrb[0].mxu0 %v1584
      %v1818 = vpop.f32.mrb[0].mxu0
      %v1819 = vadd.f32 0.0, %v1818
      %v1820 = vpop.f32.mrb[0].mxu0
      %1821 = vmatprep.mubr.f32.mxu0 0.0
      %1822 = vmatmul.mubr.f32.gmra.mrb[0].mxu0 %v1587
      %v1823 = vpop.f32.mrb[0].mxu0
      %v1824 = vadd.f32 0.0, %v1823
      %v1825 = vpop.f32.mrb[0].mxu0
      %1826 = vmatprep.mubr.f32.mxu0 0.0
      %1827 = vmatmul.mubr.f32.gmra.mrb[0].mxu0 %v1590
      %v1828 = vpop.f32.mrb[0].mxu0
      %v1829 = vadd.f32 0.0, %v1828
      %v1830 = vpop.f32.mrb[0].mxu0
      %1831 = vmatprep.mubr.f32.mxu0 0.0
      %1832 = vmatmul.mubr.f32.gmra.mrb[0].mxu0 %v1593
      %v1833 = vpop.f32.mrb[0].mxu0
      %v1834 = vadd.f32 0.0, %v1833
      %v1835 = vpop.f32.mrb[0].mxu0
      %1836 = vmatprep.mubr.f32.mxu0 0.0
      %1837 = vmatmul.mubr.f32.gmra.mrb[0].mxu0 %v1596
      %v1838 = vpop.f32.mrb[0].mxu0
      %v1839 = vadd.f32 0.0, %v1838
      %v1840 = vpop.f32.mrb[0].mxu0
      %1841 = vmatprep.mubr.f32.mxu0 0.0
      %1842 = vmatmul.mubr.f32.gmra.mrb[0].mxu0 %v1599
      %v1843 = vpop.f32.mrb[0].mxu0
      %v1844 = vadd.f32 0.0, %v1843
      %v1845 = vpop.f32.mrb[0].mxu0
      %1846 = vmatprep.mubr.f32.mxu0 0.0
      %1847 = vmatmul.mubr.f32.gmra.mrb[0].mxu0 %v1602
      %v1848 = vpop.f32.mrb[0].mxu0
      %v1849 = vadd.f32 0.0, %v1848
      %v1850 = vpop.f32.mrb[0].mxu0
      %1851 = vdwg.mxu0
      %v1852 = vadd.f32 %v1422, %v1674
      %v1853 = vadd.f32 %v1423, %v1679
      %v1854 = vadd.f32 %v1424, %v1684
      %v1855 = vadd.f32 %v1425, %v1689
      %v1856 = vadd.f32 %v1426, %v1694
      %v1857 = vadd.f32 %v1427, %v1699
      %v1858 = vadd.f32 %v1428, %v1704
      %v1859 = vadd.f32 %v1429, %v1709
      %v1860 = vadd.f32 %v1430, %v1714
      %v1861 = vadd.f32 %v1431, %v1719
      %v1862 = vadd.f32 %v1432, %v1724
      %v1863 = vadd.f32 %v1433, %v1729
      %v1864 = vadd.f32 %v1434, %v1734
      %v1865 = vadd.f32 %v1435, %v1739
      %v1866 = vadd.f32 %v1436, %v1744
      %v1867 = vadd.f32 %v1437, %v1749
      %v1868 = vadd.f32 %v1438, %v1754
      %v1869 = vadd.f32 %v1439, %v1759
      %v1870 = vadd.f32 %v1440, %v1764
      %v1871 = vadd.f32 %v1441, %v1769
      %v1872 = vadd.f32 %v1442, %v1774
      %v1873 = vadd.f32 %v1443, %v1779
      %v1874 = vadd.f32 %v1444, %v1784
      %v1875 = vadd.f32 %v1445, %v1789
      %v1876 = vadd.f32 %v1446, %v1794
      %v1877 = vadd.f32 %v1447, %v1799
      %v1878 = vadd.f32 %v1448, %v1804
      %v1879 = vadd.f32 %v1449, %v1809
      %v1880 = vadd.f32 %v1450, %v1814
      %v1881 = vadd.f32 %v1451, %v1819
      %v1882 = vadd.f32 %v1452, %v1824
      %v1883 = vadd.f32 %v1453, %v1829
      %v1884 = vadd.f32 %v1454, %v1834
      %v1885 = vadd.f32 %v1455, %v1839
      %v1886 = vadd.f32 %v1456, %v1844
      %v1887 = vadd.f32 %v1457, %v1849
      %v1888 = vld [vmem:[%s220 + $0x13] sm:$0xff]
      %v1889 = vld [vmem:[%s220 + $0x1b] sm:$0xff]
      %v1890 = vld [vmem:[%s220 + $0x23] sm:$0xff]
      %v1891 = vld [vmem:[%s220 + $0x2b] sm:$0xff]
      %v1892 = vld [vmem:[%s220 + $0x33] sm:$0xff]
      %v1893 = vld [vmem:[%s220 + $0x3b] sm:$0xff]
      %v1894 = vld [vmem:[%s220 + $0x43] sm:$0xff]
      %v1895 = vld [vmem:[%s220 + $0x4b] sm:$0xff]
      %v1896 = vld [vmem:[%s220 + $0x53] sm:$0xff]
      %v1897 = vld [vmem:[%s220 + $0x5b] sm:$0xff]
      %v1898 = vld [vmem:[%s220 + $0x63] sm:$0xff]
      %v1899 = vld [vmem:[%s220 + $0x6b] sm:$0xff]
      %v1900 = vld [vmem:[%s220 + $0x73] sm:$0xff]
      %v1901 = vld [vmem:[%s220 + $0x7b] sm:$0xff]
      %v1902 = vld [vmem:[%s220 + $0x83] sm:$0xff]
      %v1903 = vld [vmem:[%s220 + $0x8b] sm:$0xff]
      %v1904 = vld [vmem:[%s220 + $0x93] sm:$0xff]
      %v1905 = vld [vmem:[%s220 + $0x9b] sm:$0xff]
      %v1906 = vld [vmem:[%s220 + $0xa3] sm:$0xff]
      %v1907 = vld [vmem:[%s220 + $0xab] sm:$0xff]
      %v1908 = vld [vmem:[%s220 + $0xb3] sm:$0xff]
      %v1909 = vld [vmem:[%s220 + $0xbb] sm:$0xff]
      %v1910 = vld [vmem:[%s220 + $0xc3] sm:$0xff]
      %v1911 = vld [vmem:[%s220 + $0xcb] sm:$0xff]
      %v1912 = vld [vmem:[%s220 + $0xd3] sm:$0xff]
      %v1913 = vld [vmem:[%s220 + $0xdb] sm:$0xff]
      %v1914 = vld [vmem:[%s220 + $0xe3] sm:$0xff]
      %v1915 = vld [vmem:[%s220 + $0xeb] sm:$0xff]
      %v1916 = vld [vmem:[%s220 + $0xf3] sm:$0xff]
      %v1917 = vld [vmem:[%s220 + $0xfb] sm:$0xff]
      %v1918 = vld [vmem:[%s220 + $0x103] sm:$0xff]
      %v1919 = vld [vmem:[%s220 + $0x10b] sm:$0xff]
      %v1920 = vld [vmem:[%s220 + $0x113] sm:$0xff]
      %v1921 = vld [vmem:[%s220 + $0x11b] sm:$0xff]
      %v1922 = vld [vmem:[%s220 + $0x123] sm:$0xff]
      %v1923 = vld [vmem:[%s220 + $0x12b] sm:$0xff]
      %s1924 = scalar_lea.vmem %s1, 16
      %v1925 = vld [vmem:[%s1924] sm:$0xf]
      %v1927 = vsel %vm314, %v1888, 0
      %v1930 = vsel %vm314, %v1889, 0
      %v1933 = vsel %vm314, %v1890, 0
      %v1936 = vsel %vm314, %v1891, 0
      %v1939 = vsel %vm314, %v1892, 0
      %v1942 = vsel %vm314, %v1893, 0
      %v1945 = vsel %vm314, %v1894, 0
      %v1948 = vsel %vm314, %v1895, 0
      %v1951 = vsel %vm314, %v1896, 0
      %v1954 = vsel %vm314, %v1897, 0
      %v1957 = vsel %vm314, %v1898, 0
      %v1960 = vsel %vm314, %v1899, 0
      %v1963 = vsel %vm314, %v1900, 0
      %v1966 = vsel %vm314, %v1901, 0
      %v1969 = vsel %vm314, %v1902, 0
      %v1972 = vsel %vm314, %v1903, 0
      %v1975 = vsel %vm314, %v1904, 0
      %v1978 = vsel %vm314, %v1905, 0
      %v1981 = vsel %vm314, %v1906, 0
      %v1984 = vsel %vm314, %v1907, 0
      %v1987 = vsel %vm314, %v1908, 0
      %v1990 = vsel %vm314, %v1909, 0
      %v1993 = vsel %vm314, %v1910, 0
      %v1996 = vsel %vm314, %v1911, 0
      %v1999 = vsel %vm314, %v1912, 0
      %v2002 = vsel %vm314, %v1913, 0
      %v2005 = vsel %vm314, %v1914, 0
      %v2008 = vsel %vm314, %v1915, 0
      %v2011 = vsel %vm314, %v1916, 0
      %v2014 = vsel %vm314, %v1917, 0
      %v2017 = vsel %vm314, %v1918, 0
      %v2020 = vsel %vm314, %v1919, 0
      %v2023 = vsel %vm314, %v1920, 0
      %v2026 = vsel %vm314, %v1921, 0
      %v2029 = vsel %vm314, %v1922, 0
      %v2032 = vsel %vm314, %v1923, 0
      %v2035 = vsel %vm423, %v1925, 0
      %2037 = vmatprep.subr.mxu0 0.0
      %2038 = vmatpush1.msra.mxu0 %v2035
      %2039 = vmatprep.subr.mxu0 0.0
      %2040 = vmatpush1.msra.mxu0 0.0
      %2041 = vmatprep.subr.mxu0 0.0
      %2042 = vmatpush1.msra.mxu0 0.0
      %2043 = vmatprep.subr.mxu0 0.0
      %2044 = vmatpush1.msra.mxu0 0.0
      %2045 = vmatprep.subr.mxu0 0.0
      %2046 = vmatpush1.msra.mxu0 0.0
      %2047 = vmatprep.subr.mxu0 0.0
      %2048 = vmatpush1.msra.mxu0 0.0
      %2049 = vmatprep.subr.mxu0 0.0
      %2050 = vmatpush1.msra.mxu0 0.0
      %2051 = vmatprep.subr.mxu0 0.0
      %2052 = vmatpush1.msra.mxu0 0.0
      %2053 = vmatprep.subr.mxu0 0.0
      %2054 = vmatpush1.msra.mxu0 0.0
      %2055 = vmatprep.subr.mxu0 0.0
      %2056 = vmatpush1.msra.mxu0 0.0
      %2057 = vmatprep.subr.mxu0 0.0
      %2058 = vmatpush1.msra.mxu0 0.0
      %2059 = vmatprep.subr.mxu0 0.0
      %2060 = vmatpush1.msra.mxu0 0.0
      %2061 = vmatprep.subr.mxu0 0.0
      %2062 = vmatpush1.msra.mxu0 0.0
      %2063 = vmatprep.subr.mxu0 0.0
      %2064 = vmatpush1.msra.mxu0 0.0
      %2065 = vmatprep.subr.mxu0 0.0
      %2066 = vmatpush1.msra.mxu0 0.0
      %2067 = vmatprep.subr.mxu0 0.0
      %2068 = vmatpush1.msra.mxu0 0.0
      %2069 = vmatprep.subr.mxu0 0.0
      %2070 = vmatpush1.msra.mxu0 0.0
      %2071 = vmatprep.subr.mxu0 0.0
      %2072 = vmatpush1.msra.mxu0 0.0
      %2073 = vmatprep.subr.mxu0 0.0
      %2074 = vmatpush1.msra.mxu0 0.0
      %2075 = vmatprep.subr.mxu0 0.0
      %2076 = vmatpush1.msra.mxu0 0.0
      %2077 = vmatprep.subr.mxu0 0.0
      %2078 = vmatpush1.msra.mxu0 0.0
      %2079 = vmatprep.subr.mxu0 0.0
      %2080 = vmatpush1.msra.mxu0 0.0
      %2081 = vmatprep.subr.mxu0 0.0
      %2082 = vmatpush1.msra.mxu0 0.0
      %2083 = vmatprep.subr.mxu0 0.0
      %2084 = vmatpush1.msra.mxu0 0.0
      %2085 = vmatprep.subr.mxu0 0.0
      %2086 = vmatpush1.msra.mxu0 0.0
      %2087 = vmatprep.subr.mxu0 0.0
      %2088 = vmatpush1.msra.mxu0 0.0
      %2089 = vmatprep.subr.mxu0 0.0
      %2090 = vmatpush1.msra.mxu0 0.0
      %2091 = vmatprep.subr.mxu0 0.0
      %2092 = vmatpush1.msra.mxu0 0.0
      %2093 = vmatprep.subr.mxu0 0.0
      %2094 = vmatpush1.msra.mxu0 0.0
      %2095 = vmatprep.subr.mxu0 0.0
      %2096 = vmatpush1.msra.mxu0 0.0
      %2097 = vmatprep.subr.mxu0 0.0
      %2098 = vmatpush1.msra.mxu0 0.0
      %2099 = vmatprep.subr.mxu0 0.0
      %2100 = vmatpush1.msra.mxu0 0.0
      %2101 = vmatprep.mubr.f32.mxu0 0.0
      %2102 = vmatmul.mubr.f32.gmra.mrb[0].mxu0 %v1927
      %v2103 = vpop.f32.mrb[0].mxu0
      %v2104 = vadd.f32 0.0, %v2103
      %v2105 = vpop.f32.mrb[0].mxu0
      %2106 = vmatprep.mubr.f32.mxu0 0.0
      %2107 = vmatmul.mubr.f32.gmra.mrb[0].mxu0 %v1930
      %v2108 = vpop.f32.mrb[0].mxu0
      %v2109 = vadd.f32 0.0, %v2108
      %v2110 = vpop.f32.mrb[0].mxu0
      %2111 = vmatprep.mubr.f32.mxu0 0.0
      %2112 = vmatmul.mubr.f32.gmra.mrb[0].mxu0 %v1933
      %v2113 = vpop.f32.mrb[0].mxu0
      %v2114 = vadd.f32 0.0, %v2113
      %v2115 = vpop.f32.mrb[0].mxu0
      %2116 = vmatprep.mubr.f32.mxu0 0.0
      %2117 = vmatmul.mubr.f32.gmra.mrb[0].mxu0 %v1936
      %v2118 = vpop.f32.mrb[0].mxu0
      %v2119 = vadd.f32 0.0, %v2118
      %v2120 = vpop.f32.mrb[0].mxu0
      %2121 = vmatprep.mubr.f32.mxu0 0.0
      %2122 = vmatmul.mubr.f32.gmra.mrb[0].mxu0 %v1939
      %v2123 = vpop.f32.mrb[0].mxu0
      %v2124 = vadd.f32 0.0, %v2123
      %v2125 = vpop.f32.mrb[0].mxu0
      %2126 = vmatprep.mubr.f32.mxu0 0.0
      %2127 = vmatmul.mubr.f32.gmra.mrb[0].mxu0 %v1942
      %v2128 = vpop.f32.mrb[0].mxu0
      %v2129 = vadd.f32 0.0, %v2128
      %v2130 = vpop.f32.mrb[0].mxu0
      %2131 = vmatprep.mubr.f32.mxu0 0.0
      %2132 = vmatmul.mubr.f32.gmra.mrb[0].mxu0 %v1945
      %v2133 = vpop.f32.mrb[0].mxu0
      %v2134 = vadd.f32 0.0, %v2133
      %v2135 = vpop.f32.mrb[0].mxu0
      %2136 = vmatprep.mubr.f32.mxu0 0.0
      %2137 = vmatmul.mubr.f32.gmra.mrb[0].mxu0 %v1948
      %v2138 = vpop.f32.mrb[0].mxu0
      %v2139 = vadd.f32 0.0, %v2138
      %v2140 = vpop.f32.mrb[0].mxu0
      %2141 = vmatprep.mubr.f32.mxu0 0.0
      %2142 = vmatmul.mubr.f32.gmra.mrb[0].mxu0 %v1951
      %v2143 = vpop.f32.mrb[0].mxu0
      %v2144 = vadd.f32 0.0, %v2143
      %v2145 = vpop.f32.mrb[0].mxu0
      %2146 = vmatprep.mubr.f32.mxu0 0.0
      %2147 = vmatmul.mubr.f32.gmra.mrb[0].mxu0 %v1954
      %v2148 = vpop.f32.mrb[0].mxu0
      %v2149 = vadd.f32 0.0, %v2148
      %v2150 = vpop.f32.mrb[0].mxu0
      %2151 = vmatprep.mubr.f32.mxu0 0.0
      %2152 = vmatmul.mubr.f32.gmra.mrb[0].mxu0 %v1957
      %v2153 = vpop.f32.mrb[0].mxu0
      %v2154 = vadd.f32 0.0, %v2153
      %v2155 = vpop.f32.mrb[0].mxu0
      %2156 = vmatprep.mubr.f32.mxu0 0.0
      %2157 = vmatmul.mubr.f32.gmra.mrb[0].mxu0 %v1960
      %v2158 = vpop.f32.mrb[0].mxu0
      %v2159 = vadd.f32 0.0, %v2158
      %v2160 = vpop.f32.mrb[0].mxu0
      %2161 = vmatprep.mubr.f32.mxu0 0.0
      %2162 = vmatmul.mubr.f32.gmra.mrb[0].mxu0 %v1963
      %v2163 = vpop.f32.mrb[0].mxu0
      %v2164 = vadd.f32 0.0, %v2163
      %v2165 = vpop.f32.mrb[0].mxu0
      %2166 = vmatprep.mubr.f32.mxu0 0.0
      %2167 = vmatmul.mubr.f32.gmra.mrb[0].mxu0 %v1966
      %v2168 = vpop.f32.mrb[0].mxu0
      %v2169 = vadd.f32 0.0, %v2168
      %v2170 = vpop.f32.mrb[0].mxu0
      %2171 = vmatprep.mubr.f32.mxu0 0.0
      %2172 = vmatmul.mubr.f32.gmra.mrb[0].mxu0 %v1969
      %v2173 = vpop.f32.mrb[0].mxu0
      %v2174 = vadd.f32 0.0, %v2173
      %v2175 = vpop.f32.mrb[0].mxu0
      %2176 = vmatprep.mubr.f32.mxu0 0.0
      %2177 = vmatmul.mubr.f32.gmra.mrb[0].mxu0 %v1972
      %v2178 = vpop.f32.mrb[0].mxu0
      %v2179 = vadd.f32 0.0, %v2178
      %v2180 = vpop.f32.mrb[0].mxu0
      %2181 = vmatprep.mubr.f32.mxu0 0.0
      %2182 = vmatmul.mubr.f32.gmra.mrb[0].mxu0 %v1975
      %v2183 = vpop.f32.mrb[0].mxu0
      %v2184 = vadd.f32 0.0, %v2183
      %v2185 = vpop.f32.mrb[0].mxu0
      %2186 = vmatprep.mubr.f32.mxu0 0.0
      %2187 = vmatmul.mubr.f32.gmra.mrb[0].mxu0 %v1978
      %v2188 = vpop.f32.mrb[0].mxu0
      %v2189 = vadd.f32 0.0, %v2188
      %v2190 = vpop.f32.mrb[0].mxu0
      %2191 = vmatprep.mubr.f32.mxu0 0.0
      %2192 = vmatmul.mubr.f32.gmra.mrb[0].mxu0 %v1981
      %v2193 = vpop.f32.mrb[0].mxu0
      %v2194 = vadd.f32 0.0, %v2193
      %v2195 = vpop.f32.mrb[0].mxu0
      %2196 = vmatprep.mubr.f32.mxu0 0.0
      %2197 = vmatmul.mubr.f32.gmra.mrb[0].mxu0 %v1984
      %v2198 = vpop.f32.mrb[0].mxu0
      %v2199 = vadd.f32 0.0, %v2198
      %v2200 = vpop.f32.mrb[0].mxu0
      %2201 = vmatprep.mubr.f32.mxu0 0.0
      %2202 = vmatmul.mubr.f32.gmra.mrb[0].mxu0 %v1987
      %v2203 = vpop.f32.mrb[0].mxu0
      %v2204 = vadd.f32 0.0, %v2203
      %v2205 = vpop.f32.mrb[0].mxu0
      %2206 = vmatprep.mubr.f32.mxu0 0.0
      %2207 = vmatmul.mubr.f32.gmra.mrb[0].mxu0 %v1990
      %v2208 = vpop.f32.mrb[0].mxu0
      %v2209 = vadd.f32 0.0, %v2208
      %v2210 = vpop.f32.mrb[0].mxu0
      %2211 = vmatprep.mubr.f32.mxu0 0.0
      %2212 = vmatmul.mubr.f32.gmra.mrb[0].mxu0 %v1993
      %v2213 = vpop.f32.mrb[0].mxu0
      %v2214 = vadd.f32 0.0, %v2213
      %v2215 = vpop.f32.mrb[0].mxu0
      %2216 = vmatprep.mubr.f32.mxu0 0.0
      %2217 = vmatmul.mubr.f32.gmra.mrb[0].mxu0 %v1996
      %v2218 = vpop.f32.mrb[0].mxu0
      %v2219 = vadd.f32 0.0, %v2218
      %v2220 = vpop.f32.mrb[0].mxu0
      %2221 = vmatprep.mubr.f32.mxu0 0.0
      %2222 = vmatmul.mubr.f32.gmra.mrb[0].mxu0 %v1999
      %v2223 = vpop.f32.mrb[0].mxu0
      %v2224 = vadd.f32 0.0, %v2223
      %v2225 = vpop.f32.mrb[0].mxu0
      %2226 = vmatprep.mubr.f32.mxu0 0.0
      %2227 = vmatmul.mubr.f32.gmra.mrb[0].mxu0 %v2002
      %v2228 = vpop.f32.mrb[0].mxu0
      %v2229 = vadd.f32 0.0, %v2228
      %v2230 = vpop.f32.mrb[0].mxu0
      %2231 = vmatprep.mubr.f32.mxu0 0.0
      %2232 = vmatmul.mubr.f32.gmra.mrb[0].mxu0 %v2005
      %v2233 = vpop.f32.mrb[0].mxu0
      %v2234 = vadd.f32 0.0, %v2233
      %v2235 = vpop.f32.mrb[0].mxu0
      %2236 = vmatprep.mubr.f32.mxu0 0.0
      %2237 = vmatmul.mubr.f32.gmra.mrb[0].mxu0 %v2008
      %v2238 = vpop.f32.mrb[0].mxu0
      %v2239 = vadd.f32 0.0, %v2238
      %v2240 = vpop.f32.mrb[0].mxu0
      %2241 = vmatprep.mubr.f32.mxu0 0.0
      %2242 = vmatmul.mubr.f32.gmra.mrb[0].mxu0 %v2011
      %v2243 = vpop.f32.mrb[0].mxu0
      %v2244 = vadd.f32 0.0, %v2243
      %v2245 = vpop.f32.mrb[0].mxu0
      %2246 = vmatprep.mubr.f32.mxu0 0.0
      %2247 = vmatmul.mubr.f32.gmra.mrb[0].mxu0 %v2014
      %v2248 = vpop.f32.mrb[0].mxu0
      %v2249 = vadd.f32 0.0, %v2248
      %v2250 = vpop.f32.mrb[0].mxu0
      %2251 = vmatprep.mubr.f32.mxu0 0.0
      %2252 = vmatmul.mubr.f32.gmra.mrb[0].mxu0 %v2017
      %v2253 = vpop.f32.mrb[0].mxu0
      %v2254 = vadd.f32 0.0, %v2253
      %v2255 = vpop.f32.mrb[0].mxu0
      %2256 = vmatprep.mubr.f32.mxu0 0.0
      %2257 = vmatmul.mubr.f32.gmra.mrb[0].mxu0 %v2020
      %v2258 = vpop.f32.mrb[0].mxu0
      %v2259 = vadd.f32 0.0, %v2258
      %v2260 = vpop.f32.mrb[0].mxu0
      %2261 = vmatprep.mubr.f32.mxu0 0.0
      %2262 = vmatmul.mubr.f32.gmra.mrb[0].mxu0 %v2023
      %v2263 = vpop.f32.mrb[0].mxu0
      %v2264 = vadd.f32 0.0, %v2263
      %v2265 = vpop.f32.mrb[0].mxu0
      %2266 = vmatprep.mubr.f32.mxu0 0.0
      %2267 = vmatmul.mubr.f32.gmra.mrb[0].mxu0 %v2026
      %v2268 = vpop.f32.mrb[0].mxu0
      %v2269 = vadd.f32 0.0, %v2268
      %v2270 = vpop.f32.mrb[0].mxu0
      %2271 = vmatprep.mubr.f32.mxu0 0.0
      %2272 = vmatmul.mubr.f32.gmra.mrb[0].mxu0 %v2029
      %v2273 = vpop.f32.mrb[0].mxu0
      %v2274 = vadd.f32 0.0, %v2273
      %v2275 = vpop.f32.mrb[0].mxu0
      %2276 = vmatprep.mubr.f32.mxu0 0.0
      %2277 = vmatmul.mubr.f32.gmra.mrb[0].mxu0 %v2032
      %v2278 = vpop.f32.mrb[0].mxu0
      %v2279 = vadd.f32 0.0, %v2278
      %v2280 = vpop.f32.mrb[0].mxu0
      %2281 = vdwg.mxu0
      %v2282 = vadd.f32 %v1852, %v2104
      %v2283 = vadd.f32 %v1853, %v2109
      %v2284 = vadd.f32 %v1854, %v2114
      %v2285 = vadd.f32 %v1855, %v2119
      %v2286 = vadd.f32 %v1856, %v2124
      %v2287 = vadd.f32 %v1857, %v2129
      %v2288 = vadd.f32 %v1858, %v2134
      %v2289 = vadd.f32 %v1859, %v2139
      %v2290 = vadd.f32 %v1860, %v2144
      %v2291 = vadd.f32 %v1861, %v2149
      %v2292 = vadd.f32 %v1862, %v2154
      %v2293 = vadd.f32 %v1863, %v2159
      %v2294 = vadd.f32 %v1864, %v2164
      %v2295 = vadd.f32 %v1865, %v2169
      %v2296 = vadd.f32 %v1866, %v2174
      %v2297 = vadd.f32 %v1867, %v2179
      %v2298 = vadd.f32 %v1868, %v2184
      %v2299 = vadd.f32 %v1869, %v2189
      %v2300 = vadd.f32 %v1870, %v2194
      %v2301 = vadd.f32 %v1871, %v2199
      %v2302 = vadd.f32 %v1872, %v2204
      %v2303 = vadd.f32 %v1873, %v2209
      %v2304 = vadd.f32 %v1874, %v2214
      %v2305 = vadd.f32 %v1875, %v2219
      %v2306 = vadd.f32 %v1876, %v2224
      %v2307 = vadd.f32 %v1877, %v2229
      %v2308 = vadd.f32 %v1878, %v2234
      %v2309 = vadd.f32 %v1879, %v2239
      %v2310 = vadd.f32 %v1880, %v2244
      %v2311 = vadd.f32 %v1881, %v2249
      %v2312 = vadd.f32 %v1882, %v2254
      %v2313 = vadd.f32 %v1883, %v2259
      %v2314 = vadd.f32 %v1884, %v2264
      %v2315 = vadd.f32 %v1885, %v2269
      %v2316 = vadd.f32 %v1886, %v2274
      %v2317 = vadd.f32 %v1887, %v2279
      %v2318 = vld [vmem:[%s220 + $0x14] sm:$0xff]
      %v2319 = vld [vmem:[%s220 + $0x1c] sm:$0xff]
      %v2320 = vld [vmem:[%s220 + $0x24] sm:$0xff]
      %v2321 = vld [vmem:[%s220 + $0x2c] sm:$0xff]
      %v2322 = vld [vmem:[%s220 + $0x34] sm:$0xff]
      %v2323 = vld [vmem:[%s220 + $0x3c] sm:$0xff]
      %v2324 = vld [vmem:[%s220 + $0x44] sm:$0xff]
      %v2325 = vld [vmem:[%s220 + $0x4c] sm:$0xff]
      %v2326 = vld [vmem:[%s220 + $0x54] sm:$0xff]
      %v2327 = vld [vmem:[%s220 + $0x5c] sm:$0xff]
      %v2328 = vld [vmem:[%s220 + $0x64] sm:$0xff]
      %v2329 = vld [vmem:[%s220 + $0x6c] sm:$0xff]
      %v2330 = vld [vmem:[%s220 + $0x74] sm:$0xff]
      %v2331 = vld [vmem:[%s220 + $0x7c] sm:$0xff]
      %v2332 = vld [vmem:[%s220 + $0x84] sm:$0xff]
      %v2333 = vld [vmem:[%s220 + $0x8c] sm:$0xff]
      %v2334 = vld [vmem:[%s220 + $0x94] sm:$0xff]
      %v2335 = vld [vmem:[%s220 + $0x9c] sm:$0xff]
      %v2336 = vld [vmem:[%s220 + $0xa4] sm:$0xff]
      %v2337 = vld [vmem:[%s220 + $0xac] sm:$0xff]
      %v2338 = vld [vmem:[%s220 + $0xb4] sm:$0xff]
      %v2339 = vld [vmem:[%s220 + $0xbc] sm:$0xff]
      %v2340 = vld [vmem:[%s220 + $0xc4] sm:$0xff]
      %v2341 = vld [vmem:[%s220 + $0xcc] sm:$0xff]
      %v2342 = vld [vmem:[%s220 + $0xd4] sm:$0xff]
      %v2343 = vld [vmem:[%s220 + $0xdc] sm:$0xff]
      %v2344 = vld [vmem:[%s220 + $0xe4] sm:$0xff]
      %v2345 = vld [vmem:[%s220 + $0xec] sm:$0xff]
      %v2346 = vld [vmem:[%s220 + $0xf4] sm:$0xff]
      %v2347 = vld [vmem:[%s220 + $0xfc] sm:$0xff]
      %v2348 = vld [vmem:[%s220 + $0x104] sm:$0xff]
      %v2349 = vld [vmem:[%s220 + $0x10c] sm:$0xff]
      %v2350 = vld [vmem:[%s220 + $0x114] sm:$0xff]
      %v2351 = vld [vmem:[%s220 + $0x11c] sm:$0xff]
      %v2352 = vld [vmem:[%s220 + $0x124] sm:$0xff]
      %v2353 = vld [vmem:[%s220 + $0x12c] sm:$0xff]
      %s2354 = scalar_lea.vmem %s1, 20
      %v2355 = vld [vmem:[%s2354] sm:$0xf]
      %v2357 = vsel %vm314, %v2318, 0
      %v2360 = vsel %vm314, %v2319, 0
      %v2363 = vsel %vm314, %v2320, 0
      %v2366 = vsel %vm314, %v2321, 0
      %v2369 = vsel %vm314, %v2322, 0
      %v2372 = vsel %vm314, %v2323, 0
      %v2375 = vsel %vm314, %v2324, 0
      %v2378 = vsel %vm314, %v2325, 0
      %v2381 = vsel %vm314, %v2326, 0
      %v2384 = vsel %vm314, %v2327, 0
      %v2387 = vsel %vm314, %v2328, 0
      %v2390 = vsel %vm314, %v2329, 0
      %v2393 = vsel %vm314, %v2330, 0
      %v2396 = vsel %vm314, %v2331, 0
      %v2399 = vsel %vm314, %v2332, 0
      %v2402 = vsel %vm314, %v2333, 0
      %v2405 = vsel %vm314, %v2334, 0
      %v2408 = vsel %vm314, %v2335, 0
      %v2411 = vsel %vm314, %v2336, 0
      %v2414 = vsel %vm314, %v2337, 0
      %v2417 = vsel %vm314, %v2338, 0
      %v2420 = vsel %vm314, %v2339, 0
      %v2423 = vsel %vm314, %v2340, 0
      %v2426 = vsel %vm314, %v2341, 0
      %v2429 = vsel %vm314, %v2342, 0
      %v2432 = vsel %vm314, %v2343, 0
      %v2435 = vsel %vm314, %v2344, 0
      %v2438 = vsel %vm314, %v2345, 0
      %v2441 = vsel %vm314, %v2346, 0
      %v2444 = vsel %vm314, %v2347, 0
      %v2447 = vsel %vm314, %v2348, 0
      %v2450 = vsel %vm314, %v2349, 0
      %v2453 = vsel %vm314, %v2350, 0
      %v2456 = vsel %vm314, %v2351, 0
      %v2459 = vsel %vm314, %v2352, 0
      %v2462 = vsel %vm314, %v2353, 0
      %v2465 = vsel %vm423, %v2355, 0
      %2467 = vmatprep.subr.mxu0 0.0
      %2468 = vmatpush1.msra.mxu0 %v2465
      %2469 = vmatprep.subr.mxu0 0.0
      %2470 = vmatpush1.msra.mxu0 0.0
      %2471 = vmatprep.subr.mxu0 0.0
      %2472 = vmatpush1.msra.mxu0 0.0
      %2473 = vmatprep.subr.mxu0 0.0
      %2474 = vmatpush1.msra.mxu0 0.0
      %2475 = vmatprep.subr.mxu0 0.0
      %2476 = vmatpush1.msra.mxu0 0.0
      %2477 = vmatprep.subr.mxu0 0.0
      %2478 = vmatpush1.msra.mxu0 0.0
      %2479 = vmatprep.subr.mxu0 0.0
      %2480 = vmatpush1.msra.mxu0 0.0
      %2481 = vmatprep.subr.mxu0 0.0
      %2482 = vmatpush1.msra.mxu0 0.0
      %2483 = vmatprep.subr.mxu0 0.0
      %2484 = vmatpush1.msra.mxu0 0.0
      %2485 = vmatprep.subr.mxu0 0.0
      %2486 = vmatpush1.msra.mxu0 0.0
      %2487 = vmatprep.subr.mxu0 0.0
      %2488 = vmatpush1.msra.mxu0 0.0
      %2489 = vmatprep.subr.mxu0 0.0
      %2490 = vmatpush1.msra.mxu0 0.0
      %2491 = vmatprep.subr.mxu0 0.0
      %2492 = vmatpush1.msra.mxu0 0.0
      %2493 = vmatprep.subr.mxu0 0.0
      %2494 = vmatpush1.msra.mxu0 0.0
      %2495 = vmatprep.subr.mxu0 0.0
      %2496 = vmatpush1.msra.mxu0 0.0
      %2497 = vmatprep.subr.mxu0 0.0
      %2498 = vmatpush1.msra.mxu0 0.0
      %2499 = vmatprep.subr.mxu0 0.0
      %2500 = vmatpush1.msra.mxu0 0.0
      %2501 = vmatprep.subr.mxu0 0.0
      %2502 = vmatpush1.msra.mxu0 0.0
      %2503 = vmatprep.subr.mxu0 0.0
      %2504 = vmatpush1.msra.mxu0 0.0
      %2505 = vmatprep.subr.mxu0 0.0
      %2506 = vmatpush1.msra.mxu0 0.0
      %2507 = vmatprep.subr.mxu0 0.0
      %2508 = vmatpush1.msra.mxu0 0.0
      %2509 = vmatprep.subr.mxu0 0.0
      %2510 = vmatpush1.msra.mxu0 0.0
      %2511 = vmatprep.subr.mxu0 0.0
      %2512 = vmatpush1.msra.mxu0 0.0
      %2513 = vmatprep.subr.mxu0 0.0
      %2514 = vmatpush1.msra.mxu0 0.0
      %2515 = vmatprep.subr.mxu0 0.0
      %2516 = vmatpush1.msra.mxu0 0.0
      %2517 = vmatprep.subr.mxu0 0.0
      %2518 = vmatpush1.msra.mxu0 0.0
      %2519 = vmatprep.subr.mxu0 0.0
      %2520 = vmatpush1.msra.mxu0 0.0
      %2521 = vmatprep.subr.mxu0 0.0
      %2522 = vmatpush1.msra.mxu0 0.0
      %2523 = vmatprep.subr.mxu0 0.0
      %2524 = vmatpush1.msra.mxu0 0.0
      %2525 = vmatprep.subr.mxu0 0.0
      %2526 = vmatpush1.msra.mxu0 0.0
      %2527 = vmatprep.subr.mxu0 0.0
      %2528 = vmatpush1.msra.mxu0 0.0
      %2529 = vmatprep.subr.mxu0 0.0
      %2530 = vmatpush1.msra.mxu0 0.0
      %2531 = vmatprep.mubr.f32.mxu0 0.0
      %2532 = vmatmul.mubr.f32.gmra.mrb[0].mxu0 %v2357
      %v2533 = vpop.f32.mrb[0].mxu0
      %v2534 = vadd.f32 0.0, %v2533
      %v2535 = vpop.f32.mrb[0].mxu0
      %2536 = vmatprep.mubr.f32.mxu0 0.0
      %2537 = vmatmul.mubr.f32.gmra.mrb[0].mxu0 %v2360
      %v2538 = vpop.f32.mrb[0].mxu0
      %v2539 = vadd.f32 0.0, %v2538
      %v2540 = vpop.f32.mrb[0].mxu0
      %2541 = vmatprep.mubr.f32.mxu0 0.0
      %2542 = vmatmul.mubr.f32.gmra.mrb[0].mxu0 %v2363
      %v2543 = vpop.f32.mrb[0].mxu0
      %v2544 = vadd.f32 0.0, %v2543
      %v2545 = vpop.f32.mrb[0].mxu0
      %2546 = vmatprep.mubr.f32.mxu0 0.0
      %2547 = vmatmul.mubr.f32.gmra.mrb[0].mxu0 %v2366
      %v2548 = vpop.f32.mrb[0].mxu0
      %v2549 = vadd.f32 0.0, %v2548
      %v2550 = vpop.f32.mrb[0].mxu0
      %2551 = vmatprep.mubr.f32.mxu0 0.0
      %2552 = vmatmul.mubr.f32.gmra.mrb[0].mxu0 %v2369
      %v2553 = vpop.f32.mrb[0].mxu0
      %v2554 = vadd.f32 0.0, %v2553
      %v2555 = vpop.f32.mrb[0].mxu0
      %2556 = vmatprep.mubr.f32.mxu0 0.0
      %2557 = vmatmul.mubr.f32.gmra.mrb[0].mxu0 %v2372
      %v2558 = vpop.f32.mrb[0].mxu0
      %v2559 = vadd.f32 0.0, %v2558
      %v2560 = vpop.f32.mrb[0].mxu0
      %2561 = vmatprep.mubr.f32.mxu0 0.0
      %2562 = vmatmul.mubr.f32.gmra.mrb[0].mxu0 %v2375
      %v2563 = vpop.f32.mrb[0].mxu0
      %v2564 = vadd.f32 0.0, %v2563
      %v2565 = vpop.f32.mrb[0].mxu0
      %2566 = vmatprep.mubr.f32.mxu0 0.0
      %2567 = vmatmul.mubr.f32.gmra.mrb[0].mxu0 %v2378
      %v2568 = vpop.f32.mrb[0].mxu0
      %v2569 = vadd.f32 0.0, %v2568
      %v2570 = vpop.f32.mrb[0].mxu0
      %2571 = vmatprep.mubr.f32.mxu0 0.0
      %2572 = vmatmul.mubr.f32.gmra.mrb[0].mxu0 %v2381
      %v2573 = vpop.f32.mrb[0].mxu0
      %v2574 = vadd.f32 0.0, %v2573
      %v2575 = vpop.f32.mrb[0].mxu0
      %2576 = vmatprep.mubr.f32.mxu0 0.0
      %2577 = vmatmul.mubr.f32.gmra.mrb[0].mxu0 %v2384
      %v2578 = vpop.f32.mrb[0].mxu0
      %v2579 = vadd.f32 0.0, %v2578
      %v2580 = vpop.f32.mrb[0].mxu0
      %2581 = vmatprep.mubr.f32.mxu0 0.0
      %2582 = vmatmul.mubr.f32.gmra.mrb[0].mxu0 %v2387
      %v2583 = vpop.f32.mrb[0].mxu0
      %v2584 = vadd.f32 0.0, %v2583
      %v2585 = vpop.f32.mrb[0].mxu0
      %2586 = vmatprep.mubr.f32.mxu0 0.0
      %2587 = vmatmul.mubr.f32.gmra.mrb[0].mxu0 %v2390
      %v2588 = vpop.f32.mrb[0].mxu0
      %v2589 = vadd.f32 0.0, %v2588
      %v2590 = vpop.f32.mrb[0].mxu0
      %2591 = vmatprep.mubr.f32.mxu0 0.0
      %2592 = vmatmul.mubr.f32.gmra.mrb[0].mxu0 %v2393
      %v2593 = vpop.f32.mrb[0].mxu0
      %v2594 = vadd.f32 0.0, %v2593
      %v2595 = vpop.f32.mrb[0].mxu0
      %2596 = vmatprep.mubr.f32.mxu0 0.0
      %2597 = vmatmul.mubr.f32.gmra.mrb[0].mxu0 %v2396
      %v2598 = vpop.f32.mrb[0].mxu0
      %v2599 = vadd.f32 0.0, %v2598
      %v2600 = vpop.f32.mrb[0].mxu0
      %2601 = vmatprep.mubr.f32.mxu0 0.0
      %2602 = vmatmul.mubr.f32.gmra.mrb[0].mxu0 %v2399
      %v2603 = vpop.f32.mrb[0].mxu0
      %v2604 = vadd.f32 0.0, %v2603
      %v2605 = vpop.f32.mrb[0].mxu0
      %2606 = vmatprep.mubr.f32.mxu0 0.0
      %2607 = vmatmul.mubr.f32.gmra.mrb[0].mxu0 %v2402
      %v2608 = vpop.f32.mrb[0].mxu0
      %v2609 = vadd.f32 0.0, %v2608
      %v2610 = vpop.f32.mrb[0].mxu0
      %2611 = vmatprep.mubr.f32.mxu0 0.0
      %2612 = vmatmul.mubr.f32.gmra.mrb[0].mxu0 %v2405
      %v2613 = vpop.f32.mrb[0].mxu0
      %v2614 = vadd.f32 0.0, %v2613
      %v2615 = vpop.f32.mrb[0].mxu0
      %2616 = vmatprep.mubr.f32.mxu0 0.0
      %2617 = vmatmul.mubr.f32.gmra.mrb[0].mxu0 %v2408
      %v2618 = vpop.f32.mrb[0].mxu0
      %v2619 = vadd.f32 0.0, %v2618
      %v2620 = vpop.f32.mrb[0].mxu0
      %2621 = vmatprep.mubr.f32.mxu0 0.0
      %2622 = vmatmul.mubr.f32.gmra.mrb[0].mxu0 %v2411
      %v2623 = vpop.f32.mrb[0].mxu0
      %v2624 = vadd.f32 0.0, %v2623
      %v2625 = vpop.f32.mrb[0].mxu0
      %2626 = vmatprep.mubr.f32.mxu0 0.0
      %2627 = vmatmul.mubr.f32.gmra.mrb[0].mxu0 %v2414
      %v2628 = vpop.f32.mrb[0].mxu0
      %v2629 = vadd.f32 0.0, %v2628
      %v2630 = vpop.f32.mrb[0].mxu0
      %2631 = vmatprep.mubr.f32.mxu0 0.0
      %2632 = vmatmul.mubr.f32.gmra.mrb[0].mxu0 %v2417
      %v2633 = vpop.f32.mrb[0].mxu0
      %v2634 = vadd.f32 0.0, %v2633
      %v2635 = vpop.f32.mrb[0].mxu0
      %2636 = vmatprep.mubr.f32.mxu0 0.0
      %2637 = vmatmul.mubr.f32.gmra.mrb[0].mxu0 %v2420
      %v2638 = vpop.f32.mrb[0].mxu0
      %v2639 = vadd.f32 0.0, %v2638
      %v2640 = vpop.f32.mrb[0].mxu0
      %2641 = vmatprep.mubr.f32.mxu0 0.0
      %2642 = vmatmul.mubr.f32.gmra.mrb[0].mxu0 %v2423
      %v2643 = vpop.f32.mrb[0].mxu0
      %v2644 = vadd.f32 0.0, %v2643
      %v2645 = vpop.f32.mrb[0].mxu0
      %2646 = vmatprep.mubr.f32.mxu0 0.0
      %2647 = vmatmul.mubr.f32.gmra.mrb[0].mxu0 %v2426
      %v2648 = vpop.f32.mrb[0].mxu0
      %v2649 = vadd.f32 0.0, %v2648
      %v2650 = vpop.f32.mrb[0].mxu0
      %2651 = vmatprep.mubr.f32.mxu0 0.0
      %2652 = vmatmul.mubr.f32.gmra.mrb[0].mxu0 %v2429
      %v2653 = vpop.f32.mrb[0].mxu0
      %v2654 = vadd.f32 0.0, %v2653
      %v2655 = vpop.f32.mrb[0].mxu0
      %2656 = vmatprep.mubr.f32.mxu0 0.0
      %2657 = vmatmul.mubr.f32.gmra.mrb[0].mxu0 %v2432
      %v2658 = vpop.f32.mrb[0].mxu0
      %v2659 = vadd.f32 0.0, %v2658
      %v2660 = vpop.f32.mrb[0].mxu0
      %2661 = vmatprep.mubr.f32.mxu0 0.0
      %2662 = vmatmul.mubr.f32.gmra.mrb[0].mxu0 %v2435
      %v2663 = vpop.f32.mrb[0].mxu0
      %v2664 = vadd.f32 0.0, %v2663
      %v2665 = vpop.f32.mrb[0].mxu0
      %2666 = vmatprep.mubr.f32.mxu0 0.0
      %2667 = vmatmul.mubr.f32.gmra.mrb[0].mxu0 %v2438
      %v2668 = vpop.f32.mrb[0].mxu0
      %v2669 = vadd.f32 0.0, %v2668
      %v2670 = vpop.f32.mrb[0].mxu0
      %2671 = vmatprep.mubr.f32.mxu0 0.0
      %2672 = vmatmul.mubr.f32.gmra.mrb[0].mxu0 %v2441
      %v2673 = vpop.f32.mrb[0].mxu0
      %v2674 = vadd.f32 0.0, %v2673
      %v2675 = vpop.f32.mrb[0].mxu0
      %2676 = vmatprep.mubr.f32.mxu0 0.0
      %2677 = vmatmul.mubr.f32.gmra.mrb[0].mxu0 %v2444
      %v2678 = vpop.f32.mrb[0].mxu0
      %v2679 = vadd.f32 0.0, %v2678
      %v2680 = vpop.f32.mrb[0].mxu0
      %2681 = vmatprep.mubr.f32.mxu0 0.0
      %2682 = vmatmul.mubr.f32.gmra.mrb[0].mxu0 %v2447
      %v2683 = vpop.f32.mrb[0].mxu0
      %v2684 = vadd.f32 0.0, %v2683
      %v2685 = vpop.f32.mrb[0].mxu0
      %2686 = vmatprep.mubr.f32.mxu0 0.0
      %2687 = vmatmul.mubr.f32.gmra.mrb[0].mxu0 %v2450
      %v2688 = vpop.f32.mrb[0].mxu0
      %v2689 = vadd.f32 0.0, %v2688
      %v2690 = vpop.f32.mrb[0].mxu0
      %2691 = vmatprep.mubr.f32.mxu0 0.0
      %2692 = vmatmul.mubr.f32.gmra.mrb[0].mxu0 %v2453
      %v2693 = vpop.f32.mrb[0].mxu0
      %v2694 = vadd.f32 0.0, %v2693
      %v2695 = vpop.f32.mrb[0].mxu0
      %2696 = vmatprep.mubr.f32.mxu0 0.0
      %2697 = vmatmul.mubr.f32.gmra.mrb[0].mxu0 %v2456
      %v2698 = vpop.f32.mrb[0].mxu0
      %v2699 = vadd.f32 0.0, %v2698
      %v2700 = vpop.f32.mrb[0].mxu0
      %2701 = vmatprep.mubr.f32.mxu0 0.0
      %2702 = vmatmul.mubr.f32.gmra.mrb[0].mxu0 %v2459
      %v2703 = vpop.f32.mrb[0].mxu0
      %v2704 = vadd.f32 0.0, %v2703
      %v2705 = vpop.f32.mrb[0].mxu0
      %2706 = vmatprep.mubr.f32.mxu0 0.0
      %2707 = vmatmul.mubr.f32.gmra.mrb[0].mxu0 %v2462
      %v2708 = vpop.f32.mrb[0].mxu0
      %v2709 = vadd.f32 0.0, %v2708
      %v2710 = vpop.f32.mrb[0].mxu0
      %2711 = vdwg.mxu0
      %v2712 = vadd.f32 %v2282, %v2534
      %v2713 = vadd.f32 %v2283, %v2539
      %v2714 = vadd.f32 %v2284, %v2544
      %v2715 = vadd.f32 %v2285, %v2549
      %v2716 = vadd.f32 %v2286, %v2554
      %v2717 = vadd.f32 %v2287, %v2559
      %v2718 = vadd.f32 %v2288, %v2564
      %v2719 = vadd.f32 %v2289, %v2569
      %v2720 = vadd.f32 %v2290, %v2574
      %v2721 = vadd.f32 %v2291, %v2579
      %v2722 = vadd.f32 %v2292, %v2584
      %v2723 = vadd.f32 %v2293, %v2589
      %v2724 = vadd.f32 %v2294, %v2594
      %v2725 = vadd.f32 %v2295, %v2599
      %v2726 = vadd.f32 %v2296, %v2604
      %v2727 = vadd.f32 %v2297, %v2609
      %v2728 = vadd.f32 %v2298, %v2614
      %v2729 = vadd.f32 %v2299, %v2619
      %v2730 = vadd.f32 %v2300, %v2624
      %v2731 = vadd.f32 %v2301, %v2629
      %v2732 = vadd.f32 %v2302, %v2634
      %v2733 = vadd.f32 %v2303, %v2639
      %v2734 = vadd.f32 %v2304, %v2644
      %v2735 = vadd.f32 %v2305, %v2649
      %v2736 = vadd.f32 %v2306, %v2654
      %v2737 = vadd.f32 %v2307, %v2659
      %v2738 = vadd.f32 %v2308, %v2664
      %v2739 = vadd.f32 %v2309, %v2669
      %v2740 = vadd.f32 %v2310, %v2674
      %v2741 = vadd.f32 %v2311, %v2679
      %v2742 = vadd.f32 %v2312, %v2684
      %v2743 = vadd.f32 %v2313, %v2689
      %v2744 = vadd.f32 %v2314, %v2694
      %v2745 = vadd.f32 %v2315, %v2699
      %v2746 = vadd.f32 %v2316, %v2704
      %v2747 = vadd.f32 %v2317, %v2709
      %v2748 = vld [vmem:[%s220 + $0x24] sm:$0xff]
      %v2749 = vld [vmem:[%s220 + $0x2c] sm:$0xff]
      %v2750 = vld [vmem:[%s220 + $0x34] sm:$0xff]
      %v2751 = vld [vmem:[%s220 + $0x3c] sm:$0xff]
      %v2752 = vld [vmem:[%s220 + $0x44] sm:$0xff]
      %v2753 = vld [vmem:[%s220 + $0x4c] sm:$0xff]
      %v2754 = vld [vmem:[%s220 + $0x54] sm:$0xff]
      %v2755 = vld [vmem:[%s220 + $0x5c] sm:$0xff]
      %v2756 = vld [vmem:[%s220 + $0x64] sm:$0xff]
      %v2757 = vld [vmem:[%s220 + $0x6c] sm:$0xff]
      %v2758 = vld [vmem:[%s220 + $0x74] sm:$0xff]
      %v2759 = vld [vmem:[%s220 + $0x7c] sm:$0xff]
      %v2760 = vld [vmem:[%s220 + $0x84] sm:$0xff]
      %v2761 = vld [vmem:[%s220 + $0x8c] sm:$0xff]
      %v2762 = vld [vmem:[%s220 + $0x94] sm:$0xff]
      %v2763 = vld [vmem:[%s220 + $0x9c] sm:$0xff]
      %v2764 = vld [vmem:[%s220 + $0xa4] sm:$0xff]
      %v2765 = vld [vmem:[%s220 + $0xac] sm:$0xff]
      %v2766 = vld [vmem:[%s220 + $0xb4] sm:$0xff]
      %v2767 = vld [vmem:[%s220 + $0xbc] sm:$0xff]
      %v2768 = vld [vmem:[%s220 + $0xc4] sm:$0xff]
      %v2769 = vld [vmem:[%s220 + $0xcc] sm:$0xff]
      %v2770 = vld [vmem:[%s220 + $0xd4] sm:$0xff]
      %v2771 = vld [vmem:[%s220 + $0xdc] sm:$0xff]
      %v2772 = vld [vmem:[%s220 + $0xe4] sm:$0xff]
      %v2773 = vld [vmem:[%s220 + $0xec] sm:$0xff]
      %v2774 = vld [vmem:[%s220 + $0xf4] sm:$0xff]
      %v2775 = vld [vmem:[%s220 + $0xfc] sm:$0xff]
      %v2776 = vld [vmem:[%s220 + $0x104] sm:$0xff]
      %v2777 = vld [vmem:[%s220 + $0x10c] sm:$0xff]
      %v2778 = vld [vmem:[%s220 + $0x114] sm:$0xff]
      %v2779 = vld [vmem:[%s220 + $0x11c] sm:$0xff]
      %v2780 = vld [vmem:[%s220 + $0x124] sm:$0xff]
      %v2781 = vld [vmem:[%s220 + $0x12c] sm:$0xff]
      %v2782 = vld [vmem:[%s220 + $0x134] sm:$0xff]
      %v2783 = vld [vmem:[%s220 + $0x13c] sm:$0xff]
      %s2784 = scalar_lea.vmem %s1, 24
      %v2785 = vld [vmem:[%s2784] sm:$0xf]
      %v2787 = vsel %vm314, %v2748, 0
      %v2790 = vsel %vm314, %v2749, 0
      %v2793 = vsel %vm314, %v2750, 0
      %v2796 = vsel %vm314, %v2751, 0
      %v2799 = vsel %vm314, %v2752, 0
      %v2802 = vsel %vm314, %v2753, 0
      %v2805 = vsel %vm314, %v2754, 0
      %v2808 = vsel %vm314, %v2755, 0
      %v2811 = vsel %vm314, %v2756, 0
      %v2814 = vsel %vm314, %v2757, 0
      %v2817 = vsel %vm314, %v2758, 0
      %v2820 = vsel %vm314, %v2759, 0
      %v2823 = vsel %vm314, %v2760, 0
      %v2826 = vsel %vm314, %v2761, 0
      %v2829 = vsel %vm314, %v2762, 0
      %v2832 = vsel %vm314, %v2763, 0
      %v2835 = vsel %vm314, %v2764, 0
      %v2838 = vsel %vm314, %v2765, 0
      %v2841 = vsel %vm314, %v2766, 0
      %v2844 = vsel %vm314, %v2767, 0
      %v2847 = vsel %vm314, %v2768, 0
      %v2850 = vsel %vm314, %v2769, 0
      %v2853 = vsel %vm314, %v2770, 0
      %v2856 = vsel %vm314, %v2771, 0
      %v2859 = vsel %vm314, %v2772, 0
      %v2862 = vsel %vm314, %v2773, 0
      %v2865 = vsel %vm314, %v2774, 0
      %v2868 = vsel %vm314, %v2775, 0
      %v2871 = vsel %vm314, %v2776, 0
      %v2874 = vsel %vm314, %v2777, 0
      %v2877 = vsel %vm314, %v2778, 0
      %v2880 = vsel %vm314, %v2779, 0
      %v2883 = vsel %vm314, %v2780, 0
      %v2886 = vsel %vm314, %v2781, 0
      %v2889 = vsel %vm314, %v2782, 0
      %v2892 = vsel %vm314, %v2783, 0
      %v2895 = vsel %vm423, %v2785, 0
      %2897 = vmatprep.subr.mxu0 0.0
      %2898 = vmatpush1.msra.mxu0 %v2895
      %2899 = vmatprep.subr.mxu0 0.0
      %2900 = vmatpush1.msra.mxu0 0.0
      %2901 = vmatprep.subr.mxu0 0.0
      %2902 = vmatpush1.msra.mxu0 0.0
      %2903 = vmatprep.subr.mxu0 0.0
      %2904 = vmatpush1.msra.mxu0 0.0
      %2905 = vmatprep.subr.mxu0 0.0
      %2906 = vmatpush1.msra.mxu0 0.0
      %2907 = vmatprep.subr.mxu0 0.0
      %2908 = vmatpush1.msra.mxu0 0.0
      %2909 = vmatprep.subr.mxu0 0.0
      %2910 = vmatpush1.msra.mxu0 0.0
      %2911 = vmatprep.subr.mxu0 0.0
      %2912 = vmatpush1.msra.mxu0 0.0
      %2913 = vmatprep.subr.mxu0 0.0
      %2914 = vmatpush1.msra.mxu0 0.0
      %2915 = vmatprep.subr.mxu0 0.0
      %2916 = vmatpush1.msra.mxu0 0.0
      %2917 = vmatprep.subr.mxu0 0.0
      %2918 = vmatpush1.msra.mxu0 0.0
      %2919 = vmatprep.subr.mxu0 0.0
      %2920 = vmatpush1.msra.mxu0 0.0
      %2921 = vmatprep.subr.mxu0 0.0
      %2922 = vmatpush1.msra.mxu0 0.0
      %2923 = vmatprep.subr.mxu0 0.0
      %2924 = vmatpush1.msra.mxu0 0.0
      %2925 = vmatprep.subr.mxu0 0.0
      %2926 = vmatpush1.msra.mxu0 0.0
      %2927 = vmatprep.subr.mxu0 0.0
      %2928 = vmatpush1.msra.mxu0 0.0
      %2929 = vmatprep.subr.mxu0 0.0
      %2930 = vmatpush1.msra.mxu0 0.0
      %2931 = vmatprep.subr.mxu0 0.0
      %2932 = vmatpush1.msra.mxu0 0.0
      %2933 = vmatprep.subr.mxu0 0.0
      %2934 = vmatpush1.msra.mxu0 0.0
      %2935 = vmatprep.subr.mxu0 0.0
      %2936 = vmatpush1.msra.mxu0 0.0
      %2937 = vmatprep.subr.mxu0 0.0
      %2938 = vmatpush1.msra.mxu0 0.0
      %2939 = vmatprep.subr.mxu0 0.0
      %2940 = vmatpush1.msra.mxu0 0.0
      %2941 = vmatprep.subr.mxu0 0.0
      %2942 = vmatpush1.msra.mxu0 0.0
      %2943 = vmatprep.subr.mxu0 0.0
      %2944 = vmatpush1.msra.mxu0 0.0
      %2945 = vmatprep.subr.mxu0 0.0
      %2946 = vmatpush1.msra.mxu0 0.0
      %2947 = vmatprep.subr.mxu0 0.0
      %2948 = vmatpush1.msra.mxu0 0.0
      %2949 = vmatprep.subr.mxu0 0.0
      %2950 = vmatpush1.msra.mxu0 0.0
      %2951 = vmatprep.subr.mxu0 0.0
      %2952 = vmatpush1.msra.mxu0 0.0
      %2953 = vmatprep.subr.mxu0 0.0
      %2954 = vmatpush1.msra.mxu0 0.0
      %2955 = vmatprep.subr.mxu0 0.0
      %2956 = vmatpush1.msra.mxu0 0.0
      %2957 = vmatprep.subr.mxu0 0.0
      %2958 = vmatpush1.msra.mxu0 0.0
      %2959 = vmatprep.subr.mxu0 0.0
      %2960 = vmatpush1.msra.mxu0 0.0
      %2961 = vmatprep.mubr.f32.mxu0 0.0
      %2962 = vmatmul.mubr.f32.gmra.mrb[0].mxu0 %v2787
      %v2963 = vpop.f32.mrb[0].mxu0
      %v2964 = vadd.f32 0.0, %v2963
      %v2965 = vpop.f32.mrb[0].mxu0
      %2966 = vmatprep.mubr.f32.mxu0 0.0
      %2967 = vmatmul.mubr.f32.gmra.mrb[0].mxu0 %v2790
      %v2968 = vpop.f32.mrb[0].mxu0
      %v2969 = vadd.f32 0.0, %v2968
      %v2970 = vpop.f32.mrb[0].mxu0
      %2971 = vmatprep.mubr.f32.mxu0 0.0
      %2972 = vmatmul.mubr.f32.gmra.mrb[0].mxu0 %v2793
      %v2973 = vpop.f32.mrb[0].mxu0
      %v2974 = vadd.f32 0.0, %v2973
      %v2975 = vpop.f32.mrb[0].mxu0
      %2976 = vmatprep.mubr.f32.mxu0 0.0
      %2977 = vmatmul.mubr.f32.gmra.mrb[0].mxu0 %v2796
      %v2978 = vpop.f32.mrb[0].mxu0
      %v2979 = vadd.f32 0.0, %v2978
      %v2980 = vpop.f32.mrb[0].mxu0
      %2981 = vmatprep.mubr.f32.mxu0 0.0
      %2982 = vmatmul.mubr.f32.gmra.mrb[0].mxu0 %v2799
      %v2983 = vpop.f32.mrb[0].mxu0
      %v2984 = vadd.f32 0.0, %v2983
      %v2985 = vpop.f32.mrb[0].mxu0
      %2986 = vmatprep.mubr.f32.mxu0 0.0
      %2987 = vmatmul.mubr.f32.gmra.mrb[0].mxu0 %v2802
      %v2988 = vpop.f32.mrb[0].mxu0
      %v2989 = vadd.f32 0.0, %v2988
      %v2990 = vpop.f32.mrb[0].mxu0
      %2991 = vmatprep.mubr.f32.mxu0 0.0
      %2992 = vmatmul.mubr.f32.gmra.mrb[0].mxu0 %v2805
      %v2993 = vpop.f32.mrb[0].mxu0
      %v2994 = vadd.f32 0.0, %v2993
      %v2995 = vpop.f32.mrb[0].mxu0
      %2996 = vmatprep.mubr.f32.mxu0 0.0
      %2997 = vmatmul.mubr.f32.gmra.mrb[0].mxu0 %v2808
      %v2998 = vpop.f32.mrb[0].mxu0
      %v2999 = vadd.f32 0.0, %v2998
      %v3000 = vpop.f32.mrb[0].mxu0
      %3001 = vmatprep.mubr.f32.mxu0 0.0
      %3002 = vmatmul.mubr.f32.gmra.mrb[0].mxu0 %v2811
      %v3003 = vpop.f32.mrb[0].mxu0
      %v3004 = vadd.f32 0.0, %v3003
      %v3005 = vpop.f32.mrb[0].mxu0
      %3006 = vmatprep.mubr.f32.mxu0 0.0
      %3007 = vmatmul.mubr.f32.gmra.mrb[0].mxu0 %v2814
      %v3008 = vpop.f32.mrb[0].mxu0
      %v3009 = vadd.f32 0.0, %v3008
      %v3010 = vpop.f32.mrb[0].mxu0
      %3011 = vmatprep.mubr.f32.mxu0 0.0
      %3012 = vmatmul.mubr.f32.gmra.mrb[0].mxu0 %v2817
      %v3013 = vpop.f32.mrb[0].mxu0
      %v3014 = vadd.f32 0.0, %v3013
      %v3015 = vpop.f32.mrb[0].mxu0
      %3016 = vmatprep.mubr.f32.mxu0 0.0
      %3017 = vmatmul.mubr.f32.gmra.mrb[0].mxu0 %v2820
      %v3018 = vpop.f32.mrb[0].mxu0
      %v3019 = vadd.f32 0.0, %v3018
      %v3020 = vpop.f32.mrb[0].mxu0
      %3021 = vmatprep.mubr.f32.mxu0 0.0
      %3022 = vmatmul.mubr.f32.gmra.mrb[0].mxu0 %v2823
      %v3023 = vpop.f32.mrb[0].mxu0
      %v3024 = vadd.f32 0.0, %v3023
      %v3025 = vpop.f32.mrb[0].mxu0
      %3026 = vmatprep.mubr.f32.mxu0 0.0
      %3027 = vmatmul.mubr.f32.gmra.mrb[0].mxu0 %v2826
      %v3028 = vpop.f32.mrb[0].mxu0
      %v3029 = vadd.f32 0.0, %v3028
      %v3030 = vpop.f32.mrb[0].mxu0
      %3031 = vmatprep.mubr.f32.mxu0 0.0
      %3032 = vmatmul.mubr.f32.gmra.mrb[0].mxu0 %v2829
      %v3033 = vpop.f32.mrb[0].mxu0
      %v3034 = vadd.f32 0.0, %v3033
      %v3035 = vpop.f32.mrb[0].mxu0
      %3036 = vmatprep.mubr.f32.mxu0 0.0
      %3037 = vmatmul.mubr.f32.gmra.mrb[0].mxu0 %v2832
      %v3038 = vpop.f32.mrb[0].mxu0
      %v3039 = vadd.f32 0.0, %v3038
      %v3040 = vpop.f32.mrb[0].mxu0
      %3041 = vmatprep.mubr.f32.mxu0 0.0
      %3042 = vmatmul.mubr.f32.gmra.mrb[0].mxu0 %v2835
      %v3043 = vpop.f32.mrb[0].mxu0
      %v3044 = vadd.f32 0.0, %v3043
      %v3045 = vpop.f32.mrb[0].mxu0
      %3046 = vmatprep.mubr.f32.mxu0 0.0
      %3047 = vmatmul.mubr.f32.gmra.mrb[0].mxu0 %v2838
      %v3048 = vpop.f32.mrb[0].mxu0
      %v3049 = vadd.f32 0.0, %v3048
      %v3050 = vpop.f32.mrb[0].mxu0
      %3051 = vmatprep.mubr.f32.mxu0 0.0
      %3052 = vmatmul.mubr.f32.gmra.mrb[0].mxu0 %v2841
      %v3053 = vpop.f32.mrb[0].mxu0
      %v3054 = vadd.f32 0.0, %v3053
      %v3055 = vpop.f32.mrb[0].mxu0
      %3056 = vmatprep.mubr.f32.mxu0 0.0
      %3057 = vmatmul.mubr.f32.gmra.mrb[0].mxu0 %v2844
      %v3058 = vpop.f32.mrb[0].mxu0
      %v3059 = vadd.f32 0.0, %v3058
      %v3060 = vpop.f32.mrb[0].mxu0
      %3061 = vmatprep.mubr.f32.mxu0 0.0
      %3062 = vmatmul.mubr.f32.gmra.mrb[0].mxu0 %v2847
      %v3063 = vpop.f32.mrb[0].mxu0
      %v3064 = vadd.f32 0.0, %v3063
      %v3065 = vpop.f32.mrb[0].mxu0
      %3066 = vmatprep.mubr.f32.mxu0 0.0
      %3067 = vmatmul.mubr.f32.gmra.mrb[0].mxu0 %v2850
      %v3068 = vpop.f32.mrb[0].mxu0
      %v3069 = vadd.f32 0.0, %v3068
      %v3070 = vpop.f32.mrb[0].mxu0
      %3071 = vmatprep.mubr.f32.mxu0 0.0
      %3072 = vmatmul.mubr.f32.gmra.mrb[0].mxu0 %v2853
      %v3073 = vpop.f32.mrb[0].mxu0
      %v3074 = vadd.f32 0.0, %v3073
      %v3075 = vpop.f32.mrb[0].mxu0
      %3076 = vmatprep.mubr.f32.mxu0 0.0
      %3077 = vmatmul.mubr.f32.gmra.mrb[0].mxu0 %v2856
      %v3078 = vpop.f32.mrb[0].mxu0
      %v3079 = vadd.f32 0.0, %v3078
      %v3080 = vpop.f32.mrb[0].mxu0
      %3081 = vmatprep.mubr.f32.mxu0 0.0
      %3082 = vmatmul.mubr.f32.gmra.mrb[0].mxu0 %v2859
      %v3083 = vpop.f32.mrb[0].mxu0
      %v3084 = vadd.f32 0.0, %v3083
      %v3085 = vpop.f32.mrb[0].mxu0
      %3086 = vmatprep.mubr.f32.mxu0 0.0
      %3087 = vmatmul.mubr.f32.gmra.mrb[0].mxu0 %v2862
      %v3088 = vpop.f32.mrb[0].mxu0
      %v3089 = vadd.f32 0.0, %v3088
      %v3090 = vpop.f32.mrb[0].mxu0
      %3091 = vmatprep.mubr.f32.mxu0 0.0
      %3092 = vmatmul.mubr.f32.gmra.mrb[0].mxu0 %v2865
      %v3093 = vpop.f32.mrb[0].mxu0
      %v3094 = vadd.f32 0.0, %v3093
      %v3095 = vpop.f32.mrb[0].mxu0
      %3096 = vmatprep.mubr.f32.mxu0 0.0
      %3097 = vmatmul.mubr.f32.gmra.mrb[0].mxu0 %v2868
      %v3098 = vpop.f32.mrb[0].mxu0
      %v3099 = vadd.f32 0.0, %v3098
      %v3100 = vpop.f32.mrb[0].mxu0
      %3101 = vmatprep.mubr.f32.mxu0 0.0
      %3102 = vmatmul.mubr.f32.gmra.mrb[0].mxu0 %v2871
      %v3103 = vpop.f32.mrb[0].mxu0
      %v3104 = vadd.f32 0.0, %v3103
      %v3105 = vpop.f32.mrb[0].mxu0
      %3106 = vmatprep.mubr.f32.mxu0 0.0
      %3107 = vmatmul.mubr.f32.gmra.mrb[0].mxu0 %v2874
      %v3108 = vpop.f32.mrb[0].mxu0
      %v3109 = vadd.f32 0.0, %v3108
      %v3110 = vpop.f32.mrb[0].mxu0
      %3111 = vmatprep.mubr.f32.mxu0 0.0
      %3112 = vmatmul.mubr.f32.gmra.mrb[0].mxu0 %v2877
      %v3113 = vpop.f32.mrb[0].mxu0
      %v3114 = vadd.f32 0.0, %v3113
      %v3115 = vpop.f32.mrb[0].mxu0
      %3116 = vmatprep.mubr.f32.mxu0 0.0
      %3117 = vmatmul.mubr.f32.gmra.mrb[0].mxu0 %v2880
      %v3118 = vpop.f32.mrb[0].mxu0
      %v3119 = vadd.f32 0.0, %v3118
      %v3120 = vpop.f32.mrb[0].mxu0
      %3121 = vmatprep.mubr.f32.mxu0 0.0
      %3122 = vmatmul.mubr.f32.gmra.mrb[0].mxu0 %v2883
      %v3123 = vpop.f32.mrb[0].mxu0
      %v3124 = vadd.f32 0.0, %v3123
      %v3125 = vpop.f32.mrb[0].mxu0
      %3126 = vmatprep.mubr.f32.mxu0 0.0
      %3127 = vmatmul.mubr.f32.gmra.mrb[0].mxu0 %v2886
      %v3128 = vpop.f32.mrb[0].mxu0
      %v3129 = vadd.f32 0.0, %v3128
      %v3130 = vpop.f32.mrb[0].mxu0
      %3131 = vmatprep.mubr.f32.mxu0 0.0
      %3132 = vmatmul.mubr.f32.gmra.mrb[0].mxu0 %v2889
      %v3133 = vpop.f32.mrb[0].mxu0
      %v3134 = vadd.f32 0.0, %v3133
      %v3135 = vpop.f32.mrb[0].mxu0
      %3136 = vmatprep.mubr.f32.mxu0 0.0
      %3137 = vmatmul.mubr.f32.gmra.mrb[0].mxu0 %v2892
      %v3138 = vpop.f32.mrb[0].mxu0
      %v3139 = vadd.f32 0.0, %v3138
      %v3140 = vpop.f32.mrb[0].mxu0
      %3141 = vdwg.mxu0
      %v3142 = vadd.f32 %v2712, %v2964
      %v3143 = vadd.f32 %v2713, %v2969
      %v3144 = vadd.f32 %v2714, %v2974
      %v3145 = vadd.f32 %v2715, %v2979
      %v3146 = vadd.f32 %v2716, %v2984
      %v3147 = vadd.f32 %v2717, %v2989
      %v3148 = vadd.f32 %v2718, %v2994
      %v3149 = vadd.f32 %v2719, %v2999
      %v3150 = vadd.f32 %v2720, %v3004
      %v3151 = vadd.f32 %v2721, %v3009
      %v3152 = vadd.f32 %v2722, %v3014
      %v3153 = vadd.f32 %v2723, %v3019
      %v3154 = vadd.f32 %v2724, %v3024
      %v3155 = vadd.f32 %v2725, %v3029
      %v3156 = vadd.f32 %v2726, %v3034
      %v3157 = vadd.f32 %v2727, %v3039
      %v3158 = vadd.f32 %v2728, %v3044
      %v3159 = vadd.f32 %v2729, %v3049
      %v3160 = vadd.f32 %v2730, %v3054
      %v3161 = vadd.f32 %v2731, %v3059
      %v3162 = vadd.f32 %v2732, %v3064
      %v3163 = vadd.f32 %v2733, %v3069
      %v3164 = vadd.f32 %v2734, %v3074
      %v3165 = vadd.f32 %v2735, %v3079
      %v3166 = vadd.f32 %v2736, %v3084
      %v3167 = vadd.f32 %v2737, %v3089
      %v3168 = vadd.f32 %v2738, %v3094
      %v3169 = vadd.f32 %v2739, %v3099
      %v3170 = vadd.f32 %v2740, %v3104
      %v3171 = vadd.f32 %v2741, %v3109
      %v3172 = vadd.f32 %v2742, %v3114
      %v3173 = vadd.f32 %v2743, %v3119
      %v3174 = vadd.f32 %v2744, %v3124
      %v3175 = vadd.f32 %v2745, %v3129
      %v3176 = vadd.f32 %v2746, %v3134
      %v3177 = vadd.f32 %v2747, %v3139
      %v3178 = vld [vmem:[%s220 + $0x25] sm:$0xff]
      %v3179 = vld [vmem:[%s220 + $0x2d] sm:$0xff]
      %v3180 = vld [vmem:[%s220 + $0x35] sm:$0xff]
      %v3181 = vld [vmem:[%s220 + $0x3d] sm:$0xff]
      %v3182 = vld [vmem:[%s220 + $0x45] sm:$0xff]
      %v3183 = vld [vmem:[%s220 + $0x4d] sm:$0xff]
      %v3184 = vld [vmem:[%s220 + $0x55] sm:$0xff]
      %v3185 = vld [vmem:[%s220 + $0x5d] sm:$0xff]
      %v3186 = vld [vmem:[%s220 + $0x65] sm:$0xff]
      %v3187 = vld [vmem:[%s220 + $0x6d] sm:$0xff]
      %v3188 = vld [vmem:[%s220 + $0x75] sm:$0xff]
      %v3189 = vld [vmem:[%s220 + $0x7d] sm:$0xff]
      %v3190 = vld [vmem:[%s220 + $0x85] sm:$0xff]
      %v3191 = vld [vmem:[%s220 + $0x8d] sm:$0xff]
      %v3192 = vld [vmem:[%s220 + $0x95] sm:$0xff]
      %v3193 = vld [vmem:[%s220 + $0x9d] sm:$0xff]
      %v3194 = vld [vmem:[%s220 + $0xa5] sm:$0xff]
      %v3195 = vld [vmem:[%s220 + $0xad] sm:$0xff]
      %v3196 = vld [vmem:[%s220 + $0xb5] sm:$0xff]
      %v3197 = vld [vmem:[%s220 + $0xbd] sm:$0xff]
      %v3198 = vld [vmem:[%s220 + $0xc5] sm:$0xff]
      %v3199 = vld [vmem:[%s220 + $0xcd] sm:$0xff]
      %v3200 = vld [vmem:[%s220 + $0xd5] sm:$0xff]
      %v3201 = vld [vmem:[%s220 + $0xdd] sm:$0xff]
      %v3202 = vld [vmem:[%s220 + $0xe5] sm:$0xff]
      %v3203 = vld [vmem:[%s220 + $0xed] sm:$0xff]
      %v3204 = vld [vmem:[%s220 + $0xf5] sm:$0xff]
      %v3205 = vld [vmem:[%s220 + $0xfd] sm:$0xff]
      %v3206 = vld [vmem:[%s220 + $0x105] sm:$0xff]
      %v3207 = vld [vmem:[%s220 + $0x10d] sm:$0xff]
      %v3208 = vld [vmem:[%s220 + $0x115] sm:$0xff]
      %v3209 = vld [vmem:[%s220 + $0x11d] sm:$0xff]
      %v3210 = vld [vmem:[%s220 + $0x125] sm:$0xff]
      %v3211 = vld [vmem:[%s220 + $0x12d] sm:$0xff]
      %v3212 = vld [vmem:[%s220 + $0x135] sm:$0xff]
      %v3213 = vld [vmem:[%s220 + $0x13d] sm:$0xff]
      %s3214 = scalar_lea.vmem %s1, 28
      %v3215 = vld [vmem:[%s3214] sm:$0xf]
      %v3217 = vsel %vm314, %v3178, 0
      %v3220 = vsel %vm314, %v3179, 0
      %v3223 = vsel %vm314, %v3180, 0
      %v3226 = vsel %vm314, %v3181, 0
      %v3229 = vsel %vm314, %v3182, 0
      %v3232 = vsel %vm314, %v3183, 0
      %v3235 = vsel %vm314, %v3184, 0
      %v3238 = vsel %vm314, %v3185, 0
      %v3241 = vsel %vm314, %v3186, 0
      %v3244 = vsel %vm314, %v3187, 0
      %v3247 = vsel %vm314, %v3188, 0
      %v3250 = vsel %vm314, %v3189, 0
      %v3253 = vsel %vm314, %v3190, 0
      %v3256 = vsel %vm314, %v3191, 0
      %v3259 = vsel %vm314, %v3192, 0
      %v3262 = vsel %vm314, %v3193, 0
      %v3265 = vsel %vm314, %v3194, 0
      %v3268 = vsel %vm314, %v3195, 0
      %v3271 = vsel %vm314, %v3196, 0
      %v3274 = vsel %vm314, %v3197, 0
      %v3277 = vsel %vm314, %v3198, 0
      %v3280 = vsel %vm314, %v3199, 0
      %v3283 = vsel %vm314, %v3200, 0
      %v3286 = vsel %vm314, %v3201, 0
      %v3289 = vsel %vm314, %v3202, 0
      %v3292 = vsel %vm314, %v3203, 0
      %v3295 = vsel %vm314, %v3204, 0
      %v3298 = vsel %vm314, %v3205, 0
      %v3301 = vsel %vm314, %v3206, 0
      %v3304 = vsel %vm314, %v3207, 0
      %v3307 = vsel %vm314, %v3208, 0
      %v3310 = vsel %vm314, %v3209, 0
      %v3313 = vsel %vm314, %v3210, 0
      %v3316 = vsel %vm314, %v3211, 0
      %v3319 = vsel %vm314, %v3212, 0
      %v3322 = vsel %vm314, %v3213, 0
      %v3325 = vsel %vm423, %v3215, 0
      %3327 = vmatprep.subr.mxu0 0.0
      %3328 = vmatpush1.msra.mxu0 %v3325
      %3329 = vmatprep.subr.mxu0 0.0
      %3330 = vmatpush1.msra.mxu0 0.0
      %3331 = vmatprep.subr.mxu0 0.0
      %3332 = vmatpush1.msra.mxu0 0.0
      %3333 = vmatprep.subr.mxu0 0.0
      %3334 = vmatpush1.msra.mxu0 0.0
      %3335 = vmatprep.subr.mxu0 0.0
      %3336 = vmatpush1.msra.mxu0 0.0
      %3337 = vmatprep.subr.mxu0 0.0
      %3338 = vmatpush1.msra.mxu0 0.0
      %3339 = vmatprep.subr.mxu0 0.0
      %3340 = vmatpush1.msra.mxu0 0.0
      %3341 = vmatprep.subr.mxu0 0.0
      %3342 = vmatpush1.msra.mxu0 0.0
      %3343 = vmatprep.subr.mxu0 0.0
      %3344 = vmatpush1.msra.mxu0 0.0
      %3345 = vmatprep.subr.mxu0 0.0
      %3346 = vmatpush1.msra.mxu0 0.0
      %3347 = vmatprep.subr.mxu0 0.0
      %3348 = vmatpush1.msra.mxu0 0.0
      %3349 = vmatprep.subr.mxu0 0.0
      %3350 = vmatpush1.msra.mxu0 0.0
      %3351 = vmatprep.subr.mxu0 0.0
      %3352 = vmatpush1.msra.mxu0 0.0
      %3353 = vmatprep.subr.mxu0 0.0
      %3354 = vmatpush1.msra.mxu0 0.0
      %3355 = vmatprep.subr.mxu0 0.0
      %3356 = vmatpush1.msra.mxu0 0.0
      %3357 = vmatprep.subr.mxu0 0.0
      %3358 = vmatpush1.msra.mxu0 0.0
      %3359 = vmatprep.subr.mxu0 0.0
      %3360 = vmatpush1.msra.mxu0 0.0
      %3361 = vmatprep.subr.mxu0 0.0
      %3362 = vmatpush1.msra.mxu0 0.0
      %3363 = vmatprep.subr.mxu0 0.0
      %3364 = vmatpush1.msra.mxu0 0.0
      %3365 = vmatprep.subr.mxu0 0.0
      %3366 = vmatpush1.msra.mxu0 0.0
      %3367 = vmatprep.subr.mxu0 0.0
      %3368 = vmatpush1.msra.mxu0 0.0
      %3369 = vmatprep.subr.mxu0 0.0
      %3370 = vmatpush1.msra.mxu0 0.0
      %3371 = vmatprep.subr.mxu0 0.0
      %3372 = vmatpush1.msra.mxu0 0.0
      %3373 = vmatprep.subr.mxu0 0.0
      %3374 = vmatpush1.msra.mxu0 0.0
      %3375 = vmatprep.subr.mxu0 0.0
      %3376 = vmatpush1.msra.mxu0 0.0
      %3377 = vmatprep.subr.mxu0 0.0
      %3378 = vmatpush1.msra.mxu0 0.0
      %3379 = vmatprep.subr.mxu0 0.0
      %3380 = vmatpush1.msra.mxu0 0.0
      %3381 = vmatprep.subr.mxu0 0.0
      %3382 = vmatpush1.msra.mxu0 0.0
      %3383 = vmatprep.subr.mxu0 0.0
      %3384 = vmatpush1.msra.mxu0 0.0
      %3385 = vmatprep.subr.mxu0 0.0
      %3386 = vmatpush1.msra.mxu0 0.0
      %3387 = vmatprep.subr.mxu0 0.0
      %3388 = vmatpush1.msra.mxu0 0.0
      %3389 = vmatprep.subr.mxu0 0.0
      %3390 = vmatpush1.msra.mxu0 0.0
      %3391 = vmatprep.mubr.f32.mxu0 0.0
      %3392 = vmatmul.mubr.f32.gmra.mrb[0].mxu0 %v3217
      %v3393 = vpop.f32.mrb[0].mxu0
      %v3394 = vadd.f32 0.0, %v3393
      %v3395 = vpop.f32.mrb[0].mxu0
      %3396 = vmatprep.mubr.f32.mxu0 0.0
      %3397 = vmatmul.mubr.f32.gmra.mrb[0].mxu0 %v3220
      %v3398 = vpop.f32.mrb[0].mxu0
      %v3399 = vadd.f32 0.0, %v3398
      %v3400 = vpop.f32.mrb[0].mxu0
      %3401 = vmatprep.mubr.f32.mxu0 0.0
      %3402 = vmatmul.mubr.f32.gmra.mrb[0].mxu0 %v3223
      %v3403 = vpop.f32.mrb[0].mxu0
      %v3404 = vadd.f32 0.0, %v3403
      %v3405 = vpop.f32.mrb[0].mxu0
      %3406 = vmatprep.mubr.f32.mxu0 0.0
      %3407 = vmatmul.mubr.f32.gmra.mrb[0].mxu0 %v3226
      %v3408 = vpop.f32.mrb[0].mxu0
      %v3409 = vadd.f32 0.0, %v3408
      %v3410 = vpop.f32.mrb[0].mxu0
      %3411 = vmatprep.mubr.f32.mxu0 0.0
      %3412 = vmatmul.mubr.f32.gmra.mrb[0].mxu0 %v3229
      %v3413 = vpop.f32.mrb[0].mxu0
      %v3414 = vadd.f32 0.0, %v3413
      %v3415 = vpop.f32.mrb[0].mxu0
      %3416 = vmatprep.mubr.f32.mxu0 0.0
      %3417 = vmatmul.mubr.f32.gmra.mrb[0].mxu0 %v3232
      %v3418 = vpop.f32.mrb[0].mxu0
      %v3419 = vadd.f32 0.0, %v3418
      %v3420 = vpop.f32.mrb[0].mxu0
      %3421 = vmatprep.mubr.f32.mxu0 0.0
      %3422 = vmatmul.mubr.f32.gmra.mrb[0].mxu0 %v3235
      %v3423 = vpop.f32.mrb[0].mxu0
      %v3424 = vadd.f32 0.0, %v3423
      %v3425 = vpop.f32.mrb[0].mxu0
      %3426 = vmatprep.mubr.f32.mxu0 0.0
      %3427 = vmatmul.mubr.f32.gmra.mrb[0].mxu0 %v3238
      %v3428 = vpop.f32.mrb[0].mxu0
      %v3429 = vadd.f32 0.0, %v3428
      %v3430 = vpop.f32.mrb[0].mxu0
      %3431 = vmatprep.mubr.f32.mxu0 0.0
      %3432 = vmatmul.mubr.f32.gmra.mrb[0].mxu0 %v3241
      %v3433 = vpop.f32.mrb[0].mxu0
      %v3434 = vadd.f32 0.0, %v3433
      %v3435 = vpop.f32.mrb[0].mxu0
      %3436 = vmatprep.mubr.f32.mxu0 0.0
      %3437 = vmatmul.mubr.f32.gmra.mrb[0].mxu0 %v3244
      %v3438 = vpop.f32.mrb[0].mxu0
      %v3439 = vadd.f32 0.0, %v3438
      %v3440 = vpop.f32.mrb[0].mxu0
      %3441 = vmatprep.mubr.f32.mxu0 0.0
      %3442 = vmatmul.mubr.f32.gmra.mrb[0].mxu0 %v3247
      %v3443 = vpop.f32.mrb[0].mxu0
      %v3444 = vadd.f32 0.0, %v3443
      %v3445 = vpop.f32.mrb[0].mxu0
      %3446 = vmatprep.mubr.f32.mxu0 0.0
      %3447 = vmatmul.mubr.f32.gmra.mrb[0].mxu0 %v3250
      %v3448 = vpop.f32.mrb[0].mxu0
      %v3449 = vadd.f32 0.0, %v3448
      %v3450 = vpop.f32.mrb[0].mxu0
      %3451 = vmatprep.mubr.f32.mxu0 0.0
      %3452 = vmatmul.mubr.f32.gmra.mrb[0].mxu0 %v3253
      %v3453 = vpop.f32.mrb[0].mxu0
      %v3454 = vadd.f32 0.0, %v3453
      %v3455 = vpop.f32.mrb[0].mxu0
      %3456 = vmatprep.mubr.f32.mxu0 0.0
      %3457 = vmatmul.mubr.f32.gmra.mrb[0].mxu0 %v3256
      %v3458 = vpop.f32.mrb[0].mxu0
      %v3459 = vadd.f32 0.0, %v3458
      %v3460 = vpop.f32.mrb[0].mxu0
      %3461 = vmatprep.mubr.f32.mxu0 0.0
      %3462 = vmatmul.mubr.f32.gmra.mrb[0].mxu0 %v3259
      %v3463 = vpop.f32.mrb[0].mxu0
      %v3464 = vadd.f32 0.0, %v3463
      %v3465 = vpop.f32.mrb[0].mxu0
      %3466 = vmatprep.mubr.f32.mxu0 0.0
      %3467 = vmatmul.mubr.f32.gmra.mrb[0].mxu0 %v3262
      %v3468 = vpop.f32.mrb[0].mxu0
      %v3469 = vadd.f32 0.0, %v3468
      %v3470 = vpop.f32.mrb[0].mxu0
      %3471 = vmatprep.mubr.f32.mxu0 0.0
      %3472 = vmatmul.mubr.f32.gmra.mrb[0].mxu0 %v3265
      %v3473 = vpop.f32.mrb[0].mxu0
      %v3474 = vadd.f32 0.0, %v3473
      %v3475 = vpop.f32.mrb[0].mxu0
      %3476 = vmatprep.mubr.f32.mxu0 0.0
      %3477 = vmatmul.mubr.f32.gmra.mrb[0].mxu0 %v3268
      %v3478 = vpop.f32.mrb[0].mxu0
      %v3479 = vadd.f32 0.0, %v3478
      %v3480 = vpop.f32.mrb[0].mxu0
      %3481 = vmatprep.mubr.f32.mxu0 0.0
      %3482 = vmatmul.mubr.f32.gmra.mrb[0].mxu0 %v3271
      %v3483 = vpop.f32.mrb[0].mxu0
      %v3484 = vadd.f32 0.0, %v3483
      %v3485 = vpop.f32.mrb[0].mxu0
      %3486 = vmatprep.mubr.f32.mxu0 0.0
      %3487 = vmatmul.mubr.f32.gmra.mrb[0].mxu0 %v3274
      %v3488 = vpop.f32.mrb[0].mxu0
      %v3489 = vadd.f32 0.0, %v3488
      %v3490 = vpop.f32.mrb[0].mxu0
      %3491 = vmatprep.mubr.f32.mxu0 0.0
      %3492 = vmatmul.mubr.f32.gmra.mrb[0].mxu0 %v3277
      %v3493 = vpop.f32.mrb[0].mxu0
      %v3494 = vadd.f32 0.0, %v3493
      %v3495 = vpop.f32.mrb[0].mxu0
      %3496 = vmatprep.mubr.f32.mxu0 0.0
      %3497 = vmatmul.mubr.f32.gmra.mrb[0].mxu0 %v3280
      %v3498 = vpop.f32.mrb[0].mxu0
      %v3499 = vadd.f32 0.0, %v3498
      %v3500 = vpop.f32.mrb[0].mxu0
      %3501 = vmatprep.mubr.f32.mxu0 0.0
      %3502 = vmatmul.mubr.f32.gmra.mrb[0].mxu0 %v3283
      %v3503 = vpop.f32.mrb[0].mxu0
      %v3504 = vadd.f32 0.0, %v3503
      %v3505 = vpop.f32.mrb[0].mxu0
      %3506 = vmatprep.mubr.f32.mxu0 0.0
      %3507 = vmatmul.mubr.f32.gmra.mrb[0].mxu0 %v3286
      %v3508 = vpop.f32.mrb[0].mxu0
      %v3509 = vadd.f32 0.0, %v3508
      %v3510 = vpop.f32.mrb[0].mxu0
      %3511 = vmatprep.mubr.f32.mxu0 0.0
      %3512 = vmatmul.mubr.f32.gmra.mrb[0].mxu0 %v3289
      %v3513 = vpop.f32.mrb[0].mxu0
      %v3514 = vadd.f32 0.0, %v3513
      %v3515 = vpop.f32.mrb[0].mxu0
      %3516 = vmatprep.mubr.f32.mxu0 0.0
      %3517 = vmatmul.mubr.f32.gmra.mrb[0].mxu0 %v3292
      %v3518 = vpop.f32.mrb[0].mxu0
      %v3519 = vadd.f32 0.0, %v3518
      %v3520 = vpop.f32.mrb[0].mxu0
      %3521 = vmatprep.mubr.f32.mxu0 0.0
      %3522 = vmatmul.mubr.f32.gmra.mrb[0].mxu0 %v3295
      %v3523 = vpop.f32.mrb[0].mxu0
      %v3524 = vadd.f32 0.0, %v3523
      %v3525 = vpop.f32.mrb[0].mxu0
      %3526 = vmatprep.mubr.f32.mxu0 0.0
      %3527 = vmatmul.mubr.f32.gmra.mrb[0].mxu0 %v3298
      %v3528 = vpop.f32.mrb[0].mxu0
      %v3529 = vadd.f32 0.0, %v3528
      %v3530 = vpop.f32.mrb[0].mxu0
      %3531 = vmatprep.mubr.f32.mxu0 0.0
      %3532 = vmatmul.mubr.f32.gmra.mrb[0].mxu0 %v3301
      %v3533 = vpop.f32.mrb[0].mxu0
      %v3534 = vadd.f32 0.0, %v3533
      %v3535 = vpop.f32.mrb[0].mxu0
      %3536 = vmatprep.mubr.f32.mxu0 0.0
      %3537 = vmatmul.mubr.f32.gmra.mrb[0].mxu0 %v3304
      %v3538 = vpop.f32.mrb[0].mxu0
      %v3539 = vadd.f32 0.0, %v3538
      %v3540 = vpop.f32.mrb[0].mxu0
      %3541 = vmatprep.mubr.f32.mxu0 0.0
      %3542 = vmatmul.mubr.f32.gmra.mrb[0].mxu0 %v3307
      %v3543 = vpop.f32.mrb[0].mxu0
      %v3544 = vadd.f32 0.0, %v3543
      %v3545 = vpop.f32.mrb[0].mxu0
      %3546 = vmatprep.mubr.f32.mxu0 0.0
      %3547 = vmatmul.mubr.f32.gmra.mrb[0].mxu0 %v3310
      %v3548 = vpop.f32.mrb[0].mxu0
      %v3549 = vadd.f32 0.0, %v3548
      %v3550 = vpop.f32.mrb[0].mxu0
      %3551 = vmatprep.mubr.f32.mxu0 0.0
      %3552 = vmatmul.mubr.f32.gmra.mrb[0].mxu0 %v3313
      %v3553 = vpop.f32.mrb[0].mxu0
      %v3554 = vadd.f32 0.0, %v3553
      %v3555 = vpop.f32.mrb[0].mxu0
      %3556 = vmatprep.mubr.f32.mxu0 0.0
      %3557 = vmatmul.mubr.f32.gmra.mrb[0].mxu0 %v3316
      %v3558 = vpop.f32.mrb[0].mxu0
      %v3559 = vadd.f32 0.0, %v3558
      %v3560 = vpop.f32.mrb[0].mxu0
      %3561 = vmatprep.mubr.f32.mxu0 0.0
      %3562 = vmatmul.mubr.f32.gmra.mrb[0].mxu0 %v3319
      %v3563 = vpop.f32.mrb[0].mxu0
      %v3564 = vadd.f32 0.0, %v3563
      %v3565 = vpop.f32.mrb[0].mxu0
      %3566 = vmatprep.mubr.f32.mxu0 0.0
      %3567 = vmatmul.mubr.f32.gmra.mrb[0].mxu0 %v3322
      %v3568 = vpop.f32.mrb[0].mxu0
      %v3569 = vadd.f32 0.0, %v3568
      %v3570 = vpop.f32.mrb[0].mxu0
      %3571 = vdwg.mxu0
      %v3572 = vadd.f32 %v3142, %v3394
      %v3573 = vadd.f32 %v3143, %v3399
      %v3574 = vadd.f32 %v3144, %v3404
      %v3575 = vadd.f32 %v3145, %v3409
      %v3576 = vadd.f32 %v3146, %v3414
      %v3577 = vadd.f32 %v3147, %v3419
      %v3578 = vadd.f32 %v3148, %v3424
      %v3579 = vadd.f32 %v3149, %v3429
      %v3580 = vadd.f32 %v3150, %v3434
      %v3581 = vadd.f32 %v3151, %v3439
      %v3582 = vadd.f32 %v3152, %v3444
      %v3583 = vadd.f32 %v3153, %v3449
      %v3584 = vadd.f32 %v3154, %v3454
      %v3585 = vadd.f32 %v3155, %v3459
      %v3586 = vadd.f32 %v3156, %v3464
      %v3587 = vadd.f32 %v3157, %v3469
      %v3588 = vadd.f32 %v3158, %v3474
      %v3589 = vadd.f32 %v3159, %v3479
      %v3590 = vadd.f32 %v3160, %v3484
      %v3591 = vadd.f32 %v3161, %v3489
      %v3592 = vadd.f32 %v3162, %v3494
      %v3593 = vadd.f32 %v3163, %v3499
      %v3594 = vadd.f32 %v3164, %v3504
      %v3595 = vadd.f32 %v3165, %v3509
      %v3596 = vadd.f32 %v3166, %v3514
      %v3597 = vadd.f32 %v3167, %v3519
      %v3598 = vadd.f32 %v3168, %v3524
      %v3599 = vadd.f32 %v3169, %v3529
      %v3600 = vadd.f32 %v3170, %v3534
      %v3601 = vadd.f32 %v3171, %v3539
      %v3602 = vadd.f32 %v3172, %v3544
      %v3603 = vadd.f32 %v3173, %v3549
      %v3604 = vadd.f32 %v3174, %v3554
      %v3605 = vadd.f32 %v3175, %v3559
      %v3606 = vadd.f32 %v3176, %v3564
      %v3607 = vadd.f32 %v3177, %v3569
      %v3608 = vld [vmem:[%s220 + $0x26] sm:$0xff]
      %v3609 = vld [vmem:[%s220 + $0x2e] sm:$0xff]
      %v3610 = vld [vmem:[%s220 + $0x36] sm:$0xff]
      %v3611 = vld [vmem:[%s220 + $0x3e] sm:$0xff]
      %v3612 = vld [vmem:[%s220 + $0x46] sm:$0xff]
      %v3613 = vld [vmem:[%s220 + $0x4e] sm:$0xff]
      %v3614 = vld [vmem:[%s220 + $0x56] sm:$0xff]
      %v3615 = vld [vmem:[%s220 + $0x5e] sm:$0xff]
      %v3616 = vld [vmem:[%s220 + $0x66] sm:$0xff]
      %v3617 = vld [vmem:[%s220 + $0x6e] sm:$0xff]
      %v3618 = vld [vmem:[%s220 + $0x76] sm:$0xff]
      %v3619 = vld [vmem:[%s220 + $0x7e] sm:$0xff]
      %v3620 = vld [vmem:[%s220 + $0x86] sm:$0xff]
      %v3621 = vld [vmem:[%s220 + $0x8e] sm:$0xff]
      %v3622 = vld [vmem:[%s220 + $0x96] sm:$0xff]
      %v3623 = vld [vmem:[%s220 + $0x9e] sm:$0xff]
      %v3624 = vld [vmem:[%s220 + $0xa6] sm:$0xff]
      %v3625 = vld [vmem:[%s220 + $0xae] sm:$0xff]
      %v3626 = vld [vmem:[%s220 + $0xb6] sm:$0xff]
      %v3627 = vld [vmem:[%s220 + $0xbe] sm:$0xff]
      %v3628 = vld [vmem:[%s220 + $0xc6] sm:$0xff]
      %v3629 = vld [vmem:[%s220 + $0xce] sm:$0xff]
      %v3630 = vld [vmem:[%s220 + $0xd6] sm:$0xff]
      %v3631 = vld [vmem:[%s220 + $0xde] sm:$0xff]
      %v3632 = vld [vmem:[%s220 + $0xe6] sm:$0xff]
      %v3633 = vld [vmem:[%s220 + $0xee] sm:$0xff]
      %v3634 = vld [vmem:[%s220 + $0xf6] sm:$0xff]
      %v3635 = vld [vmem:[%s220 + $0xfe] sm:$0xff]
      %v3636 = vld [vmem:[%s220 + $0x106] sm:$0xff]
      %v3637 = vld [vmem:[%s220 + $0x10e] sm:$0xff]
      %v3638 = vld [vmem:[%s220 + $0x116] sm:$0xff]
      %v3639 = vld [vmem:[%s220 + $0x11e] sm:$0xff]
      %v3640 = vld [vmem:[%s220 + $0x126] sm:$0xff]
      %v3641 = vld [vmem:[%s220 + $0x12e] sm:$0xff]
      %v3642 = vld [vmem:[%s220 + $0x136] sm:$0xff]
      %v3643 = vld [vmem:[%s220 + $0x13e] sm:$0xff]
      %s3644 = scalar_lea.vmem %s1, 32
      %v3645 = vld [vmem:[%s3644] sm:$0xf]
      %v3647 = vsel %vm314, %v3608, 0
      %v3650 = vsel %vm314, %v3609, 0
      %v3653 = vsel %vm314, %v3610, 0
      %v3656 = vsel %vm314, %v3611, 0
      %v3659 = vsel %vm314, %v3612, 0
      %v3662 = vsel %vm314, %v3613, 0
      %v3665 = vsel %vm314, %v3614, 0
      %v3668 = vsel %vm314, %v3615, 0
      %v3671 = vsel %vm314, %v3616, 0
      %v3674 = vsel %vm314, %v3617, 0
      %v3677 = vsel %vm314, %v3618, 0
      %v3680 = vsel %vm314, %v3619, 0
      %v3683 = vsel %vm314, %v3620, 0
      %v3686 = vsel %vm314, %v3621, 0
      %v3689 = vsel %vm314, %v3622, 0
      %v3692 = vsel %vm314, %v3623, 0
      %v3695 = vsel %vm314, %v3624, 0
      %v3698 = vsel %vm314, %v3625, 0
      %v3701 = vsel %vm314, %v3626, 0
      %v3704 = vsel %vm314, %v3627, 0
      %v3707 = vsel %vm314, %v3628, 0
      %v3710 = vsel %vm314, %v3629, 0
      %v3713 = vsel %vm314, %v3630, 0
      %v3716 = vsel %vm314, %v3631, 0
      %v3719 = vsel %vm314, %v3632, 0
      %v3722 = vsel %vm314, %v3633, 0
      %v3725 = vsel %vm314, %v3634, 0
      %v3728 = vsel %vm314, %v3635, 0
      %v3731 = vsel %vm314, %v3636, 0
      %v3734 = vsel %vm314, %v3637, 0
      %v3737 = vsel %vm314, %v3638, 0
      %v3740 = vsel %vm314, %v3639, 0
      %v3743 = vsel %vm314, %v3640, 0
      %v3746 = vsel %vm314, %v3641, 0
      %v3749 = vsel %vm314, %v3642, 0
      %v3752 = vsel %vm314, %v3643, 0
      %v3755 = vsel %vm423, %v3645, 0
      %3757 = vmatprep.subr.mxu0 0.0
      %3758 = vmatpush1.msra.mxu0 %v3755
      %3759 = vmatprep.subr.mxu0 0.0
      %3760 = vmatpush1.msra.mxu0 0.0
      %3761 = vmatprep.subr.mxu0 0.0
      %3762 = vmatpush1.msra.mxu0 0.0
      %3763 = vmatprep.subr.mxu0 0.0
      %3764 = vmatpush1.msra.mxu0 0.0
      %3765 = vmatprep.subr.mxu0 0.0
      %3766 = vmatpush1.msra.mxu0 0.0
      %3767 = vmatprep.subr.mxu0 0.0
      %3768 = vmatpush1.msra.mxu0 0.0
      %3769 = vmatprep.subr.mxu0 0.0
      %3770 = vmatpush1.msra.mxu0 0.0
      %3771 = vmatprep.subr.mxu0 0.0
      %3772 = vmatpush1.msra.mxu0 0.0
      %3773 = vmatprep.subr.mxu0 0.0
      %3774 = vmatpush1.msra.mxu0 0.0
      %3775 = vmatprep.subr.mxu0 0.0
      %3776 = vmatpush1.msra.mxu0 0.0
      %3777 = vmatprep.subr.mxu0 0.0
      %3778 = vmatpush1.msra.mxu0 0.0
      %3779 = vmatprep.subr.mxu0 0.0
      %3780 = vmatpush1.msra.mxu0 0.0
      %3781 = vmatprep.subr.mxu0 0.0
      %3782 = vmatpush1.msra.mxu0 0.0
      %3783 = vmatprep.subr.mxu0 0.0
      %3784 = vmatpush1.msra.mxu0 0.0
      %3785 = vmatprep.subr.mxu0 0.0
      %3786 = vmatpush1.msra.mxu0 0.0
      %3787 = vmatprep.subr.mxu0 0.0
      %3788 = vmatpush1.msra.mxu0 0.0
      %3789 = vmatprep.subr.mxu0 0.0
      %3790 = vmatpush1.msra.mxu0 0.0
      %3791 = vmatprep.subr.mxu0 0.0
      %3792 = vmatpush1.msra.mxu0 0.0
      %3793 = vmatprep.subr.mxu0 0.0
      %3794 = vmatpush1.msra.mxu0 0.0
      %3795 = vmatprep.subr.mxu0 0.0
      %3796 = vmatpush1.msra.mxu0 0.0
      %3797 = vmatprep.subr.mxu0 0.0
      %3798 = vmatpush1.msra.mxu0 0.0
      %3799 = vmatprep.subr.mxu0 0.0
      %3800 = vmatpush1.msra.mxu0 0.0
      %3801 = vmatprep.subr.mxu0 0.0
      %3802 = vmatpush1.msra.mxu0 0.0
      %3803 = vmatprep.subr.mxu0 0.0
      %3804 = vmatpush1.msra.mxu0 0.0
      %3805 = vmatprep.subr.mxu0 0.0
      %3806 = vmatpush1.msra.mxu0 0.0
      %3807 = vmatprep.subr.mxu0 0.0
      %3808 = vmatpush1.msra.mxu0 0.0
      %3809 = vmatprep.subr.mxu0 0.0
      %3810 = vmatpush1.msra.mxu0 0.0
      %3811 = vmatprep.subr.mxu0 0.0
      %3812 = vmatpush1.msra.mxu0 0.0
      %3813 = vmatprep.subr.mxu0 0.0
      %3814 = vmatpush1.msra.mxu0 0.0
      %3815 = vmatprep.subr.mxu0 0.0
      %3816 = vmatpush1.msra.mxu0 0.0
      %3817 = vmatprep.subr.mxu0 0.0
      %3818 = vmatpush1.msra.mxu0 0.0
      %3819 = vmatprep.subr.mxu0 0.0
      %3820 = vmatpush1.msra.mxu0 0.0
      %3821 = vmatprep.mubr.f32.mxu0 0.0
      %3822 = vmatmul.mubr.f32.gmra.mrb[0].mxu0 %v3647
      %v3823 = vpop.f32.mrb[0].mxu0
      %v3824 = vadd.f32 0.0, %v3823
      %v3825 = vpop.f32.mrb[0].mxu0
      %3826 = vmatprep.mubr.f32.mxu0 0.0
      %3827 = vmatmul.mubr.f32.gmra.mrb[0].mxu0 %v3650
      %v3828 = vpop.f32.mrb[0].mxu0
      %v3829 = vadd.f32 0.0, %v3828
      %v3830 = vpop.f32.mrb[0].mxu0
      %3831 = vmatprep.mubr.f32.mxu0 0.0
      %3832 = vmatmul.mubr.f32.gmra.mrb[0].mxu0 %v3653
      %v3833 = vpop.f32.mrb[0].mxu0
      %v3834 = vadd.f32 0.0, %v3833
      %v3835 = vpop.f32.mrb[0].mxu0
      %3836 = vmatprep.mubr.f32.mxu0 0.0
      %3837 = vmatmul.mubr.f32.gmra.mrb[0].mxu0 %v3656
      %v3838 = vpop.f32.mrb[0].mxu0
      %v3839 = vadd.f32 0.0, %v3838
      %v3840 = vpop.f32.mrb[0].mxu0
      %3841 = vmatprep.mubr.f32.mxu0 0.0
      %3842 = vmatmul.mubr.f32.gmra.mrb[0].mxu0 %v3659
      %v3843 = vpop.f32.mrb[0].mxu0
      %v3844 = vadd.f32 0.0, %v3843
      %v3845 = vpop.f32.mrb[0].mxu0
      %3846 = vmatprep.mubr.f32.mxu0 0.0
      %3847 = vmatmul.mubr.f32.gmra.mrb[0].mxu0 %v3662
      %v3848 = vpop.f32.mrb[0].mxu0
      %v3849 = vadd.f32 0.0, %v3848
      %v3850 = vpop.f32.mrb[0].mxu0
      %3851 = vmatprep.mubr.f32.mxu0 0.0
      %3852 = vmatmul.mubr.f32.gmra.mrb[0].mxu0 %v3665
      %v3853 = vpop.f32.mrb[0].mxu0
      %v3854 = vadd.f32 0.0, %v3853
      %v3855 = vpop.f32.mrb[0].mxu0
      %3856 = vmatprep.mubr.f32.mxu0 0.0
      %3857 = vmatmul.mubr.f32.gmra.mrb[0].mxu0 %v3668
      %v3858 = vpop.f32.mrb[0].mxu0
      %v3859 = vadd.f32 0.0, %v3858
      %v3860 = vpop.f32.mrb[0].mxu0
      %3861 = vmatprep.mubr.f32.mxu0 0.0
      %3862 = vmatmul.mubr.f32.gmra.mrb[0].mxu0 %v3671
      %v3863 = vpop.f32.mrb[0].mxu0
      %v3864 = vadd.f32 0.0, %v3863
      %v3865 = vpop.f32.mrb[0].mxu0
      %3866 = vmatprep.mubr.f32.mxu0 0.0
      %3867 = vmatmul.mubr.f32.gmra.mrb[0].mxu0 %v3674
      %v3868 = vpop.f32.mrb[0].mxu0
      %v3869 = vadd.f32 0.0, %v3868
      %v3870 = vpop.f32.mrb[0].mxu0
      %3871 = vmatprep.mubr.f32.mxu0 0.0
      %3872 = vmatmul.mubr.f32.gmra.mrb[0].mxu0 %v3677
      %v3873 = vpop.f32.mrb[0].mxu0
      %v3874 = vadd.f32 0.0, %v3873
      %v3875 = vpop.f32.mrb[0].mxu0
      %3876 = vmatprep.mubr.f32.mxu0 0.0
      %3877 = vmatmul.mubr.f32.gmra.mrb[0].mxu0 %v3680
      %v3878 = vpop.f32.mrb[0].mxu0
      %v3879 = vadd.f32 0.0, %v3878
      %v3880 = vpop.f32.mrb[0].mxu0
      %3881 = vmatprep.mubr.f32.mxu0 0.0
      %3882 = vmatmul.mubr.f32.gmra.mrb[0].mxu0 %v3683
      %v3883 = vpop.f32.mrb[0].mxu0
      %v3884 = vadd.f32 0.0, %v3883
      %v3885 = vpop.f32.mrb[0].mxu0
      %3886 = vmatprep.mubr.f32.mxu0 0.0
      %3887 = vmatmul.mubr.f32.gmra.mrb[0].mxu0 %v3686
      %v3888 = vpop.f32.mrb[0].mxu0
      %v3889 = vadd.f32 0.0, %v3888
      %v3890 = vpop.f32.mrb[0].mxu0
      %3891 = vmatprep.mubr.f32.mxu0 0.0
      %3892 = vmatmul.mubr.f32.gmra.mrb[0].mxu0 %v3689
      %v3893 = vpop.f32.mrb[0].mxu0
      %v3894 = vadd.f32 0.0, %v3893
      %v3895 = vpop.f32.mrb[0].mxu0
      %3896 = vmatprep.mubr.f32.mxu0 0.0
      %3897 = vmatmul.mubr.f32.gmra.mrb[0].mxu0 %v3692
      %v3898 = vpop.f32.mrb[0].mxu0
      %v3899 = vadd.f32 0.0, %v3898
      %v3900 = vpop.f32.mrb[0].mxu0
      %3901 = vmatprep.mubr.f32.mxu0 0.0
      %3902 = vmatmul.mubr.f32.gmra.mrb[0].mxu0 %v3695
      %v3903 = vpop.f32.mrb[0].mxu0
      %v3904 = vadd.f32 0.0, %v3903
      %v3905 = vpop.f32.mrb[0].mxu0
      %3906 = vmatprep.mubr.f32.mxu0 0.0
      %3907 = vmatmul.mubr.f32.gmra.mrb[0].mxu0 %v3698
      %v3908 = vpop.f32.mrb[0].mxu0
      %v3909 = vadd.f32 0.0, %v3908
      %v3910 = vpop.f32.mrb[0].mxu0
      %3911 = vmatprep.mubr.f32.mxu0 0.0
      %3912 = vmatmul.mubr.f32.gmra.mrb[0].mxu0 %v3701
      %v3913 = vpop.f32.mrb[0].mxu0
      %v3914 = vadd.f32 0.0, %v3913
      %v3915 = vpop.f32.mrb[0].mxu0
      %3916 = vmatprep.mubr.f32.mxu0 0.0
      %3917 = vmatmul.mubr.f32.gmra.mrb[0].mxu0 %v3704
      %v3918 = vpop.f32.mrb[0].mxu0
      %v3919 = vadd.f32 0.0, %v3918
      %v3920 = vpop.f32.mrb[0].mxu0
      %3921 = vmatprep.mubr.f32.mxu0 0.0
      %3922 = vmatmul.mubr.f32.gmra.mrb[0].mxu0 %v3707
      %v3923 = vpop.f32.mrb[0].mxu0
      %v3924 = vadd.f32 0.0, %v3923
      %v3925 = vpop.f32.mrb[0].mxu0
      %3926 = vmatprep.mubr.f32.mxu0 0.0
      %3927 = vmatmul.mubr.f32.gmra.mrb[0].mxu0 %v3710
      %v3928 = vpop.f32.mrb[0].mxu0
      %v3929 = vadd.f32 0.0, %v3928
      %v3930 = vpop.f32.mrb[0].mxu0
      %3931 = vmatprep.mubr.f32.mxu0 0.0
      %3932 = vmatmul.mubr.f32.gmra.mrb[0].mxu0 %v3713
      %v3933 = vpop.f32.mrb[0].mxu0
      %v3934 = vadd.f32 0.0, %v3933
      %v3935 = vpop.f32.mrb[0].mxu0
      %3936 = vmatprep.mubr.f32.mxu0 0.0
      %3937 = vmatmul.mubr.f32.gmra.mrb[0].mxu0 %v3716
      %v3938 = vpop.f32.mrb[0].mxu0
      %v3939 = vadd.f32 0.0, %v3938
      %v3940 = vpop.f32.mrb[0].mxu0
      %3941 = vmatprep.mubr.f32.mxu0 0.0
      %3942 = vmatmul.mubr.f32.gmra.mrb[0].mxu0 %v3719
      %v3943 = vpop.f32.mrb[0].mxu0
      %v3944 = vadd.f32 0.0, %v3943
      %v3945 = vpop.f32.mrb[0].mxu0
      %3946 = vmatprep.mubr.f32.mxu0 0.0
      %3947 = vmatmul.mubr.f32.gmra.mrb[0].mxu0 %v3722
      %v3948 = vpop.f32.mrb[0].mxu0
      %v3949 = vadd.f32 0.0, %v3948
      %v3950 = vpop.f32.mrb[0].mxu0
      %3951 = vmatprep.mubr.f32.mxu0 0.0
      %3952 = vmatmul.mubr.f32.gmra.mrb[0].mxu0 %v3725
      %v3953 = vpop.f32.mrb[0].mxu0
      %v3954 = vadd.f32 0.0, %v3953
      %v3955 = vpop.f32.mrb[0].mxu0
      %3956 = vmatprep.mubr.f32.mxu0 0.0
      %3957 = vmatmul.mubr.f32.gmra.mrb[0].mxu0 %v3728
      %v3958 = vpop.f32.mrb[0].mxu0
      %v3959 = vadd.f32 0.0, %v3958
      %v3960 = vpop.f32.mrb[0].mxu0
      %3961 = vmatprep.mubr.f32.mxu0 0.0
      %3962 = vmatmul.mubr.f32.gmra.mrb[0].mxu0 %v3731
      %v3963 = vpop.f32.mrb[0].mxu0
      %v3964 = vadd.f32 0.0, %v3963
      %v3965 = vpop.f32.mrb[0].mxu0
      %3966 = vmatprep.mubr.f32.mxu0 0.0
      %3967 = vmatmul.mubr.f32.gmra.mrb[0].mxu0 %v3734
      %v3968 = vpop.f32.mrb[0].mxu0
      %v3969 = vadd.f32 0.0, %v3968
      %v3970 = vpop.f32.mrb[0].mxu0
      %3971 = vmatprep.mubr.f32.mxu0 0.0
      %3972 = vmatmul.mubr.f32.gmra.mrb[0].mxu0 %v3737
      %v3973 = vpop.f32.mrb[0].mxu0
      %v3974 = vadd.f32 0.0, %v3973
      %v3975 = vpop.f32.mrb[0].mxu0
      %3976 = vmatprep.mubr.f32.mxu0 0.0
      %3977 = vmatmul.mubr.f32.gmra.mrb[0].mxu0 %v3740
      %v3978 = vpop.f32.mrb[0].mxu0
      %v3979 = vadd.f32 0.0, %v3978
      %v3980 = vpop.f32.mrb[0].mxu0
      %3981 = vmatprep.mubr.f32.mxu0 0.0
      %3982 = vmatmul.mubr.f32.gmra.mrb[0].mxu0 %v3743
      %v3983 = vpop.f32.mrb[0].mxu0
      %v3984 = vadd.f32 0.0, %v3983
      %v3985 = vpop.f32.mrb[0].mxu0
      %3986 = vmatprep.mubr.f32.mxu0 0.0
      %3987 = vmatmul.mubr.f32.gmra.mrb[0].mxu0 %v3746
      %v3988 = vpop.f32.mrb[0].mxu0
      %v3989 = vadd.f32 0.0, %v3988
      %v3990 = vpop.f32.mrb[0].mxu0
      %3991 = vmatprep.mubr.f32.mxu0 0.0
      %3992 = vmatmul.mubr.f32.gmra.mrb[0].mxu0 %v3749
      %v3993 = vpop.f32.mrb[0].mxu0
      %v3994 = vadd.f32 0.0, %v3993
      %v3995 = vpop.f32.mrb[0].mxu0
      %3996 = vmatprep.mubr.f32.mxu0 0.0
      %3997 = vmatmul.mubr.f32.gmra.mrb[0].mxu0 %v3752
      %v3998 = vpop.f32.mrb[0].mxu0
      %v3999 = vadd.f32 0.0, %v3998
      %v4000 = vpop.f32.mrb[0].mxu0
      %4001 = vdwg.mxu0
      %v4002 = vadd.f32 %v3572, %v3824
      %v4003 = vadd.f32 %v3573, %v3829
      %v4004 = vadd.f32 %v3574, %v3834
      %v4005 = vadd.f32 %v3575, %v3839
      %v4006 = vadd.f32 %v3576, %v3844
      %v4007 = vadd.f32 %v3577, %v3849
      %v4008 = vadd.f32 %v3578, %v3854
      %v4009 = vadd.f32 %v3579, %v3859
      %v4010 = vadd.f32 %v3580, %v3864
      %v4011 = vadd.f32 %v3581, %v3869
      %v4012 = vadd.f32 %v3582, %v3874
      %v4013 = vadd.f32 %v3583, %v3879
      %v4014 = vadd.f32 %v3584, %v3884
      %v4015 = vadd.f32 %v3585, %v3889
      %v4016 = vadd.f32 %v3586, %v3894
      %v4017 = vadd.f32 %v3587, %v3899
      %v4018 = vadd.f32 %v3588, %v3904
      %v4019 = vadd.f32 %v3589, %v3909
      %v4020 = vadd.f32 %v3590, %v3914
      %v4021 = vadd.f32 %v3591, %v3919
      %v4022 = vadd.f32 %v3592, %v3924
      %v4023 = vadd.f32 %v3593, %v3929
      %v4024 = vadd.f32 %v3594, %v3934
      %v4025 = vadd.f32 %v3595, %v3939
      %v4026 = vadd.f32 %v3596, %v3944
      %v4027 = vadd.f32 %v3597, %v3949
      %v4028 = vadd.f32 %v3598, %v3954
      %v4029 = vadd.f32 %v3599, %v3959
      %v4030 = vadd.f32 %v3600, %v3964
      %v4031 = vadd.f32 %v3601, %v3969
      %v4032 = vadd.f32 %v3602, %v3974
      %v4033 = vadd.f32 %v3603, %v3979
      %v4034 = vadd.f32 %v3604, %v3984
      %v4035 = vadd.f32 %v3605, %v3989
      %v4036 = vadd.f32 %v3606, %v3994
      %v4037 = vadd.f32 %v3607, %v3999
      %vm4038 = vcmask 64512
      %4039 = vst.msk [vmem:[%s227] sm:$0xff] %vm4038, %v4002
      %4040 = vst.msk [vmem:[%s227 + $0x8] sm:$0xff] %vm4038, %v4003
      %4041 = vst.msk [vmem:[%s227 + $0x10] sm:$0xff] %vm4038, %v4004
      %4042 = vst.msk [vmem:[%s227 + $0x18] sm:$0xff] %vm4038, %v4005
      %4043 = vst.msk [vmem:[%s227 + $0x20] sm:$0xff] %vm4038, %v4006
      %4044 = vst.msk [vmem:[%s227 + $0x28] sm:$0xff] %vm4038, %v4007
      %4045 = vst.msk [vmem:[%s227 + $0x30] sm:$0xff] %vm4038, %v4008
      %4046 = vst.msk [vmem:[%s227 + $0x38] sm:$0xff] %vm4038, %v4009
      %4047 = vst.msk [vmem:[%s227 + $0x40] sm:$0xff] %vm4038, %v4010
      %4048 = vst.msk [vmem:[%s227 + $0x48] sm:$0xff] %vm4038, %v4011
      %4049 = vst.msk [vmem:[%s227 + $0x50] sm:$0xff] %vm4038, %v4012
      %4050 = vst.msk [vmem:[%s227 + $0x58] sm:$0xff] %vm4038, %v4013
      %4051 = vst.msk [vmem:[%s227 + $0x60] sm:$0xff] %vm4038, %v4014
      %4052 = vst.msk [vmem:[%s227 + $0x68] sm:$0xff] %vm4038, %v4015
      %4053 = vst.msk [vmem:[%s227 + $0x70] sm:$0xff] %vm4038, %v4016
      %4054 = vst.msk [vmem:[%s227 + $0x78] sm:$0xff] %vm4038, %v4017
      %4055 = vst.msk [vmem:[%s227 + $0x80] sm:$0xff] %vm4038, %v4018
      %4056 = vst.msk [vmem:[%s227 + $0x88] sm:$0xff] %vm4038, %v4019
      %4057 = vst.msk [vmem:[%s227 + $0x90] sm:$0xff] %vm4038, %v4020
      %4058 = vst.msk [vmem:[%s227 + $0x98] sm:$0xff] %vm4038, %v4021
      %4059 = vst.msk [vmem:[%s227 + $0xa0] sm:$0xff] %vm4038, %v4022
      %4060 = vst.msk [vmem:[%s227 + $0xa8] sm:$0xff] %vm4038, %v4023
      %4061 = vst.msk [vmem:[%s227 + $0xb0] sm:$0xff] %vm4038, %v4024
      %4062 = vst.msk [vmem:[%s227 + $0xb8] sm:$0xff] %vm4038, %v4025
      %4063 = vst.msk [vmem:[%s227 + $0xc0] sm:$0xff] %vm4038, %v4026
      %4064 = vst.msk [vmem:[%s227 + $0xc8] sm:$0xff] %vm4038, %v4027
      %4065 = vst.msk [vmem:[%s227 + $0xd0] sm:$0xff] %vm4038, %v4028
      %4066 = vst.msk [vmem:[%s227 + $0xd8] sm:$0xff] %vm4038, %v4029
      %4067 = vst.msk [vmem:[%s227 + $0xe0] sm:$0xff] %vm4038, %v4030
      %4068 = vst.msk [vmem:[%s227 + $0xe8] sm:$0xff] %vm4038, %v4031
      %4069 = vst.msk [vmem:[%s227 + $0xf0] sm:$0xff] %vm4038, %v4032
      %4070 = vst.msk [vmem:[%s227 + $0xf8] sm:$0xff] %vm4038, %v4033
      %4071 = vst.msk [vmem:[%s227 + $0x100] sm:$0xff] %vm4038, %v4034
      %4072 = vst.msk [vmem:[%s227 + $0x108] sm:$0xff] %vm4038, %v4035
      %4073 = vst.msk [vmem:[%s227 + $0x110] sm:$0xff] %vm4038, %v4036
      %4074 = vst.msk [vmem:[%s227 + $0x118] sm:$0xff] %vm4038, %v4037
      %v4075 = vld [vmem:[%s2] sm:$0xff]
      %v4076 = vld [vmem:[%s2 + $0x8] sm:$0xff]
      %v4077 = vld [vmem:[%s2 + $0x10] sm:$0xff]
      %v4078 = vld [vmem:[%s2 + $0x18] sm:$0xff]
      %v4079 = vld [vmem:[%s2 + $0x20] sm:$0xff]
      %v4080 = vld [vmem:[%s2 + $0x28] sm:$0xff]
      %v4081 = vld [vmem:[%s2 + $0x30] sm:$0xff]
      %v4082 = vld [vmem:[%s2 + $0x38] sm:$0xff]
      %v4083 = vld [vmem:[%s2 + $0x40] sm:$0xff]
      %v4084 = vld [vmem:[%s2 + $0x48] sm:$0xff]
      %v4085 = vld [vmem:[%s2 + $0x50] sm:$0xff]
      %v4086 = vld [vmem:[%s2 + $0x58] sm:$0xff]
      %v4087 = vld [vmem:[%s2 + $0x60] sm:$0xff]
      %v4088 = vld [vmem:[%s2 + $0x68] sm:$0xff]
      %v4089 = vld [vmem:[%s2 + $0x70] sm:$0xff]
      %v4090 = vld [vmem:[%s2 + $0x78] sm:$0xff]
      %v4091 = vld [vmem:[%s2 + $0x80] sm:$0xff]
      %v4092 = vld [vmem:[%s2 + $0x88] sm:$0xff]
      %v4093 = vld [vmem:[%s2 + $0x90] sm:$0xff]
      %v4094 = vld [vmem:[%s2 + $0x98] sm:$0xff]
      %v4095 = vld [vmem:[%s2 + $0xa0] sm:$0xff]
      %v4096 = vld [vmem:[%s2 + $0xa8] sm:$0xff]
      %v4097 = vld [vmem:[%s2 + $0xb0] sm:$0xff]
      %v4098 = vld [vmem:[%s2 + $0xb8] sm:$0xff]
      %v4099 = vld [vmem:[%s2 + $0xc0] sm:$0xff]
      %v4100 = vld [vmem:[%s2 + $0xc8] sm:$0xff]
      %v4101 = vld [vmem:[%s2 + $0xd0] sm:$0xff]
      %v4102 = vld [vmem:[%s2 + $0xd8] sm:$0xff]
      %v4103 = vld [vmem:[%s2 + $0xe0] sm:$0xff]
      %v4104 = vld [vmem:[%s2 + $0xe8] sm:$0xff]
      %v4105 = vld [vmem:[%s2 + $0xf0] sm:$0xff]
      %v4106 = vld [vmem:[%s2 + $0xf8] sm:$0xff]
      %v4107 = vld [vmem:[%s2 + $0x100] sm:$0xff]
      %v4108 = vld [vmem:[%s2 + $0x108] sm:$0xff]
      %v4109 = vld [vmem:[%s2 + $0x110] sm:$0xff]
      %v4110 = vld [vmem:[%s2 + $0x118] sm:$0xff]
      %4112 = vset.pattern.permute.xlu0 0
      %4113 = vperm.xlu0 %4112, %v4075
      %v4114 = vpop.permute.xlu0 %4113
      %4117 = vset.pattern.permute.xlu0 0
      %4118 = vperm.xlu0 %4117, %v4076
      %v4119 = vpop.permute.xlu0 %4118
      %4122 = vset.pattern.permute.xlu0 0
      %4123 = vperm.xlu0 %4122, %v4077
      %v4124 = vpop.permute.xlu0 %4123
      %4127 = vset.pattern.permute.xlu0 0
      %4128 = vperm.xlu0 %4127, %v4078
      %v4129 = vpop.permute.xlu0 %4128
      %4132 = vset.pattern.permute.xlu0 0
      %4133 = vperm.xlu0 %4132, %v4079
      %v4134 = vpop.permute.xlu0 %4133
      %4137 = vset.pattern.permute.xlu0 0
      %4138 = vperm.xlu0 %4137, %v4080
      %v4139 = vpop.permute.xlu0 %4138
      %4142 = vset.pattern.permute.xlu0 0
      %4143 = vperm.xlu0 %4142, %v4081
      %v4144 = vpop.permute.xlu0 %4143
      %4147 = vset.pattern.permute.xlu0 0
      %4148 = vperm.xlu0 %4147, %v4082
      %v4149 = vpop.permute.xlu0 %4148
      %4152 = vset.pattern.permute.xlu0 0
      %4153 = vperm.xlu0 %4152, %v4083
      %v4154 = vpop.permute.xlu0 %4153
      %4157 = vset.pattern.permute.xlu0 0
      %4158 = vperm.xlu0 %4157, %v4084
      %v4159 = vpop.permute.xlu0 %4158
      %4162 = vset.pattern.permute.xlu0 0
      %4163 = vperm.xlu0 %4162, %v4085
      %v4164 = vpop.permute.xlu0 %4163
      %4167 = vset.pattern.permute.xlu0 0
      %4168 = vperm.xlu0 %4167, %v4086
      %v4169 = vpop.permute.xlu0 %4168
      %4172 = vset.pattern.permute.xlu0 0
      %4173 = vperm.xlu0 %4172, %v4087
      %v4174 = vpop.permute.xlu0 %4173
      %4177 = vset.pattern.permute.xlu0 0
      %4178 = vperm.xlu0 %4177, %v4088
      %v4179 = vpop.permute.xlu0 %4178
      %4182 = vset.pattern.permute.xlu0 0
      %4183 = vperm.xlu0 %4182, %v4089
      %v4184 = vpop.permute.xlu0 %4183
      %4187 = vset.pattern.permute.xlu0 0
      %4188 = vperm.xlu0 %4187, %v4090
      %v4189 = vpop.permute.xlu0 %4188
      %4192 = vset.pattern.permute.xlu0 0
      %4193 = vperm.xlu0 %4192, %v4091
      %v4194 = vpop.permute.xlu0 %4193
      %4197 = vset.pattern.permute.xlu0 0
      %4198 = vperm.xlu0 %4197, %v4092
      %v4199 = vpop.permute.xlu0 %4198
      %4202 = vset.pattern.permute.xlu0 0
      %4203 = vperm.xlu0 %4202, %v4093
      %v4204 = vpop.permute.xlu0 %4203
      %4207 = vset.pattern.permute.xlu0 0
      %4208 = vperm.xlu0 %4207, %v4094
      %v4209 = vpop.permute.xlu0 %4208
      %4212 = vset.pattern.permute.xlu0 0
      %4213 = vperm.xlu0 %4212, %v4095
      %v4214 = vpop.permute.xlu0 %4213
      %4217 = vset.pattern.permute.xlu0 0
      %4218 = vperm.xlu0 %4217, %v4096
      %v4219 = vpop.permute.xlu0 %4218
      %4222 = vset.pattern.permute.xlu0 0
      %4223 = vperm.xlu0 %4222, %v4097
      %v4224 = vpop.permute.xlu0 %4223
      %4227 = vset.pattern.permute.xlu0 0
      %4228 = vperm.xlu0 %4227, %v4098
      %v4229 = vpop.permute.xlu0 %4228
      %4232 = vset.pattern.permute.xlu0 0
      %4233 = vperm.xlu0 %4232, %v4099
      %v4234 = vpop.permute.xlu0 %4233
      %4237 = vset.pattern.permute.xlu0 0
      %4238 = vperm.xlu0 %4237, %v4100
      %v4239 = vpop.permute.xlu0 %4238
      %4242 = vset.pattern.permute.xlu0 0
      %4243 = vperm.xlu0 %4242, %v4101
      %v4244 = vpop.permute.xlu0 %4243
      %4247 = vset.pattern.permute.xlu0 0
      %4248 = vperm.xlu0 %4247, %v4102
      %v4249 = vpop.permute.xlu0 %4248
      %4252 = vset.pattern.permute.xlu0 0
      %4253 = vperm.xlu0 %4252, %v4103
      %v4254 = vpop.permute.xlu0 %4253
      %4257 = vset.pattern.permute.xlu0 0
      %4258 = vperm.xlu0 %4257, %v4104
      %v4259 = vpop.permute.xlu0 %4258
      %4262 = vset.pattern.permute.xlu0 0
      %4263 = vperm.xlu0 %4262, %v4105
      %v4264 = vpop.permute.xlu0 %4263
      %4267 = vset.pattern.permute.xlu0 0
      %4268 = vperm.xlu0 %4267, %v4106
      %v4269 = vpop.permute.xlu0 %4268
      %4272 = vset.pattern.permute.xlu0 0
      %4273 = vperm.xlu0 %4272, %v4107
      %v4274 = vpop.permute.xlu0 %4273
      %4277 = vset.pattern.permute.xlu0 0
      %4278 = vperm.xlu0 %4277, %v4108
      %v4279 = vpop.permute.xlu0 %4278
      %4282 = vset.pattern.permute.xlu0 0
      %4283 = vperm.xlu0 %4282, %v4109
      %v4284 = vpop.permute.xlu0 %4283
      %4287 = vset.pattern.permute.xlu0 0
      %4288 = vperm.xlu0 %4287, %v4110
      %v4289 = vpop.permute.xlu0 %4288
      %v4291 = vmul.f32 %v4002, %v4114
      %v4292 = vmul.f32 %v4003, %v4119
      %v4293 = vmul.f32 %v4004, %v4124
      %v4294 = vmul.f32 %v4005, %v4129
      %v4295 = vmul.f32 %v4006, %v4134
      %v4296 = vmul.f32 %v4007, %v4139
      %v4297 = vmul.f32 %v4008, %v4144
      %v4298 = vmul.f32 %v4009, %v4149
      %v4299 = vmul.f32 %v4010, %v4154
      %v4300 = vmul.f32 %v4011, %v4159
      %v4301 = vmul.f32 %v4012, %v4164
      %v4302 = vmul.f32 %v4013, %v4169
      %v4303 = vmul.f32 %v4014, %v4174
      %v4304 = vmul.f32 %v4015, %v4179
      %v4305 = vmul.f32 %v4016, %v4184
      %v4306 = vmul.f32 %v4017, %v4189
      %v4307 = vmul.f32 %v4018, %v4194
      %v4308 = vmul.f32 %v4019, %v4199
      %v4309 = vmul.f32 %v4020, %v4204
      %v4310 = vmul.f32 %v4021, %v4209
      %v4311 = vmul.f32 %v4022, %v4214
      %v4312 = vmul.f32 %v4023, %v4219
      %v4313 = vmul.f32 %v4024, %v4224
      %v4314 = vmul.f32 %v4025, %v4229
      %v4315 = vmul.f32 %v4026, %v4234
      %v4316 = vmul.f32 %v4027, %v4239
      %v4317 = vmul.f32 %v4028, %v4244
      %v4318 = vmul.f32 %v4029, %v4249
      %v4319 = vmul.f32 %v4030, %v4254
      %v4320 = vmul.f32 %v4031, %v4259
      %v4321 = vmul.f32 %v4032, %v4264
      %v4322 = vmul.f32 %v4033, %v4269
      %v4323 = vmul.f32 %v4034, %v4274
      %v4324 = vmul.f32 %v4035, %v4279
      %v4325 = vmul.f32 %v4036, %v4284
      %v4326 = vmul.f32 %v4037, %v4289
      %v4327 = vld [vmem:[%s232] sm:$0x3]
      %v4328 = vsel %vm4038, %v4291, 0.0
      %v4329 = vsel %vm4038, %v4292, 0.0
      %v4330 = vadd.f32 %v4328, %v4329
      %v4331 = vsel %vm4038, %v4293, 0.0
      %v4332 = vadd.f32 %v4330, %v4331
      %v4333 = vsel %vm4038, %v4294, 0.0
      %v4334 = vadd.f32 %v4332, %v4333
      %v4335 = vsel %vm4038, %v4295, 0.0
      %v4336 = vadd.f32 %v4334, %v4335
      %v4337 = vsel %vm4038, %v4296, 0.0
      %v4338 = vadd.f32 %v4336, %v4337
      %v4339 = vsel %vm4038, %v4297, 0.0
      %v4340 = vadd.f32 %v4338, %v4339
      %v4341 = vsel %vm4038, %v4298, 0.0
      %v4342 = vadd.f32 %v4340, %v4341
      %v4343 = vsel %vm4038, %v4299, 0.0
      %v4344 = vadd.f32 %v4342, %v4343
      %v4345 = vsel %vm4038, %v4300, 0.0
      %v4346 = vadd.f32 %v4344, %v4345
      %v4347 = vsel %vm4038, %v4301, 0.0
      %v4348 = vadd.f32 %v4346, %v4347
      %v4349 = vsel %vm4038, %v4302, 0.0
      %v4350 = vadd.f32 %v4348, %v4349
      %v4351 = vsel %vm4038, %v4303, 0.0
      %v4352 = vadd.f32 %v4350, %v4351
      %v4353 = vsel %vm4038, %v4304, 0.0
      %v4354 = vadd.f32 %v4352, %v4353
      %v4355 = vsel %vm4038, %v4305, 0.0
      %v4356 = vadd.f32 %v4354, %v4355
      %v4357 = vsel %vm4038, %v4306, 0.0
      %v4358 = vadd.f32 %v4356, %v4357
      %v4359 = vsel %vm4038, %v4307, 0.0
      %v4360 = vadd.f32 %v4358, %v4359
      %v4361 = vsel %vm4038, %v4308, 0.0
      %v4362 = vadd.f32 %v4360, %v4361
      %v4363 = vsel %vm4038, %v4309, 0.0
      %v4364 = vadd.f32 %v4362, %v4363
      %v4365 = vsel %vm4038, %v4310, 0.0
      %v4366 = vadd.f32 %v4364, %v4365
      %v4367 = vsel %vm4038, %v4311, 0.0
      %v4368 = vadd.f32 %v4366, %v4367
      %v4369 = vsel %vm4038, %v4312, 0.0
      %v4370 = vadd.f32 %v4368, %v4369
      %v4371 = vsel %vm4038, %v4313, 0.0
      %v4372 = vadd.f32 %v4370, %v4371
      %v4373 = vsel %vm4038, %v4314, 0.0
      %v4374 = vadd.f32 %v4372, %v4373
      %v4375 = vsel %vm4038, %v4315, 0.0
      %v4376 = vadd.f32 %v4374, %v4375
      %v4377 = vsel %vm4038, %v4316, 0.0
      %v4378 = vadd.f32 %v4376, %v4377
      %v4379 = vsel %vm4038, %v4317, 0.0
      %v4380 = vadd.f32 %v4378, %v4379
      %v4381 = vsel %vm4038, %v4318, 0.0
      %v4382 = vadd.f32 %v4380, %v4381
      %v4383 = vsel %vm4038, %v4319, 0.0
      %v4384 = vadd.f32 %v4382, %v4383
      %v4385 = vsel %vm4038, %v4320, 0.0
      %v4386 = vadd.f32 %v4384, %v4385
      %v4387 = vsel %vm4038, %v4321, 0.0
      %v4388 = vadd.f32 %v4386, %v4387
      %v4389 = vsel %vm4038, %v4322, 0.0
      %v4390 = vadd.f32 %v4388, %v4389
      %v4391 = vsel %vm4038, %v4323, 0.0
      %v4392 = vadd.f32 %v4390, %v4391
      %v4393 = vsel %vm4038, %v4324, 0.0
      %v4394 = vadd.f32 %v4392, %v4393
      %v4395 = vsel %vm4038, %v4325, 0.0
      %v4396 = vadd.f32 %v4394, %v4395
      %v4397 = vsel %vm4038, %v4326, 0.0
      %v4398 = vadd.f32 %v4396, %v4397
      %v4399 = vrot.slane %v4398, 4
      %v4400 = vadd.f32 %v4398, %v4399
      %v4401 = vrot.slane %v4400, 2
      %v4402 = vadd.f32 %v4400, %v4401
      %v4403 = vrot.slane %v4402, 1
      %v4404 = vadd.f32 %v4402, %v4403
      %v4405 = vmul.f32 %v4291, %v4291
      %v4406 = vmul.f32 %v4292, %v4292
      %v4407 = vmul.f32 %v4293, %v4293
      %v4408 = vmul.f32 %v4294, %v4294
      %v4409 = vmul.f32 %v4295, %v4295
      %v4410 = vmul.f32 %v4296, %v4296
      %v4411 = vmul.f32 %v4297, %v4297
      %v4412 = vmul.f32 %v4298, %v4298
      %v4413 = vmul.f32 %v4299, %v4299
      %v4414 = vmul.f32 %v4300, %v4300
      %v4415 = vmul.f32 %v4301, %v4301
      %v4416 = vmul.f32 %v4302, %v4302
      %v4417 = vmul.f32 %v4303, %v4303
      %v4418 = vmul.f32 %v4304, %v4304
      %v4419 = vmul.f32 %v4305, %v4305
      %v4420 = vmul.f32 %v4306, %v4306
      %v4421 = vmul.f32 %v4307, %v4307
      %v4422 = vmul.f32 %v4308, %v4308
      %v4423 = vmul.f32 %v4309, %v4309
      %v4424 = vmul.f32 %v4310, %v4310
      %v4425 = vmul.f32 %v4311, %v4311
      %v4426 = vmul.f32 %v4312, %v4312
      %v4427 = vmul.f32 %v4313, %v4313
      %v4428 = vmul.f32 %v4314, %v4314
      %v4429 = vmul.f32 %v4315, %v4315
      %v4430 = vmul.f32 %v4316, %v4316
      %v4431 = vmul.f32 %v4317, %v4317
      %v4432 = vmul.f32 %v4318, %v4318
      %v4433 = vmul.f32 %v4319, %v4319
      %v4434 = vmul.f32 %v4320, %v4320
      %v4435 = vmul.f32 %v4321, %v4321
      %v4436 = vmul.f32 %v4322, %v4322
      %v4437 = vmul.f32 %v4323, %v4323
      %v4438 = vmul.f32 %v4324, %v4324
      %v4439 = vmul.f32 %v4325, %v4325
      %v4440 = vmul.f32 %v4326, %v4326
      %v4441 = vsel %vm4038, %v4405, 0.0
      %v4442 = vsel %vm4038, %v4406, 0.0
      %v4443 = vadd.f32 %v4441, %v4442
      %v4444 = vsel %vm4038, %v4407, 0.0
      %v4445 = vadd.f32 %v4443, %v4444
      %v4446 = vsel %vm4038, %v4408, 0.0
      %v4447 = vadd.f32 %v4445, %v4446
      %v4448 = vsel %vm4038, %v4409, 0.0
      %v4449 = vadd.f32 %v4447, %v4448
      %v4450 = vsel %vm4038, %v4410, 0.0
      %v4451 = vadd.f32 %v4449, %v4450
      %v4452 = vsel %vm4038, %v4411, 0.0
      %v4453 = vadd.f32 %v4451, %v4452
      %v4454 = vsel %vm4038, %v4412, 0.0
      %v4455 = vadd.f32 %v4453, %v4454
      %v4456 = vsel %vm4038, %v4413, 0.0
      %v4457 = vadd.f32 %v4455, %v4456
      %v4458 = vsel %vm4038, %v4414, 0.0
      %v4459 = vadd.f32 %v4457, %v4458
      %v4460 = vsel %vm4038, %v4415, 0.0
      %v4461 = vadd.f32 %v4459, %v4460
      %v4462 = vsel %vm4038, %v4416, 0.0
      %v4463 = vadd.f32 %v4461, %v4462
      %v4464 = vsel %vm4038, %v4417, 0.0
      %v4465 = vadd.f32 %v4463, %v4464
      %v4466 = vsel %vm4038, %v4418, 0.0
      %v4467 = vadd.f32 %v4465, %v4466
      %v4468 = vsel %vm4038, %v4419, 0.0
      %v4469 = vadd.f32 %v4467, %v4468
      %v4470 = vsel %vm4038, %v4420, 0.0
      %v4471 = vadd.f32 %v4469, %v4470
      %v4472 = vsel %vm4038, %v4421, 0.0
      %v4473 = vadd.f32 %v4471, %v4472
      %v4474 = vsel %vm4038, %v4422, 0.0
      %v4475 = vadd.f32 %v4473, %v4474
      %v4476 = vsel %vm4038, %v4423, 0.0
      %v4477 = vadd.f32 %v4475, %v4476
      %v4478 = vsel %vm4038, %v4424, 0.0
      %v4479 = vadd.f32 %v4477, %v4478
      %v4480 = vsel %vm4038, %v4425, 0.0
      %v4481 = vadd.f32 %v4479, %v4480
      %v4482 = vsel %vm4038, %v4426, 0.0
      %v4483 = vadd.f32 %v4481, %v4482
      %v4484 = vsel %vm4038, %v4427, 0.0
      %v4485 = vadd.f32 %v4483, %v4484
      %v4486 = vsel %vm4038, %v4428, 0.0
      %v4487 = vadd.f32 %v4485, %v4486
      %v4488 = vsel %vm4038, %v4429, 0.0
      %v4489 = vadd.f32 %v4487, %v4488
      %v4490 = vsel %vm4038, %v4430, 0.0
      %v4491 = vadd.f32 %v4489, %v4490
      %v4492 = vsel %vm4038, %v4431, 0.0
      %v4493 = vadd.f32 %v4491, %v4492
      %v4494 = vsel %vm4038, %v4432, 0.0
      %v4495 = vadd.f32 %v4493, %v4494
      %v4496 = vsel %vm4038, %v4433, 0.0
      %v4497 = vadd.f32 %v4495, %v4496
      %v4498 = vsel %vm4038, %v4434, 0.0
      %v4499 = vadd.f32 %v4497, %v4498
      %v4500 = vsel %vm4038, %v4435, 0.0
      %v4501 = vadd.f32 %v4499, %v4500
      %v4502 = vsel %vm4038, %v4436, 0.0
      %v4503 = vadd.f32 %v4501, %v4502
      %v4504 = vsel %vm4038, %v4437, 0.0
      %v4505 = vadd.f32 %v4503, %v4504
      %v4506 = vsel %vm4038, %v4438, 0.0
      %v4507 = vadd.f32 %v4505, %v4506
      %v4508 = vsel %vm4038, %v4439, 0.0
      %v4509 = vadd.f32 %v4507, %v4508
      %v4510 = vsel %vm4038, %v4440, 0.0
      %v4511 = vadd.f32 %v4509, %v4510
      %v4512 = vrot.slane %v4511, 4
      %v4513 = vadd.f32 %v4511, %v4512
      %v4514 = vrot.slane %v4513, 2
      %v4515 = vadd.f32 %v4513, %v4514
      %v4516 = vrot.slane %v4515, 1
      %v4517 = vadd.f32 %v4515, %v4516
      %vm4518 = vcmask 1040384
      %v4519 = vsel %vm4518, %v4404, %v4517
      %v4520 = vadd.f32 %v4327, %v4519
      %vm4521 = vcmask 58368
      %4522 = vst.msk [vmem:[%s232] sm:$0x3] %vm4521, %v4520
      %s4523 = sadd.s32 %s20, %s21
      %p4524 = scmp.lt.s32.totalorder %s4523, 1
      %s4525 = scalar_select %p4524, %s4523, 1
      %s4526 = smul.addr %s4525, 36
      %s4527 = smul.addr %s4526, 8
      %s4528 = scalar_lea.vmem %s3, %s4527
      %p4529 = scmp.lt.s32.totalorder %s20, 1
      %s4530 = scalar_select %p4529, %s20, 1
      %s4531 = smul.addr %s4530, 2
      %s4532 = scalar_lea.vmem %s4, %s4531
      // Predicated region
      $region37: #{cifar_basic_block_forward.3} parent=31 // pred_check
        %p4533 = pneg %p118
      $region38: #{cifar_basic_block_forward.3} parent=31 // pred_check_branch
        %4535 = sbr.rel (%p4533) target = $region40
      $region39: #{cifar_basic_block_forward.3} parent=31 // pred_region
        %s4536 = sadd.s32 %s20, %s21
      $region40: #{cifar_basic_block_forward.3} parent=31 // pred_fallthru
        _
      // Predicated region
      $region41: #{cifar_basic_block_forward.3} parent=31 // pred_check
        %p4537 = pneg %p144
      $region42: #{cifar_basic_block_forward.3} parent=31 // pred_check_branch
        %4539 = sbr.rel (%p4537) target = $region44
      $region43: #{cifar_basic_block_forward.3} parent=31 // pred_region
        _
      $region44: #{cifar_basic_block_forward.3} parent=31 // pred_fallthru
        _
    $region32: #{cifar_basic_block_forward.3} parent=5 // pred_fallthru
      _
    %p4540 = scmp.le.s32.totalorder 2, %s11
    // Predicated region
    $region45: #{cifar_basic_block_forward.3} parent=5 // pred_check
      %p4541 = pneg %p4540
    $region46: #{cifar_basic_block_forward.3} parent=5 // pred_check_branch
      %4543 = sbr.rel (%p4541) target = $region48
    $region47: #{cifar_basic_block_forward.3} parent=5 // pred_region
      %s4544 = ssub.s32 %s11, 2
      // Predicated region
      $region49: #{cifar_basic_block_forward.3} parent=47 // pred_check
        %p4545 = pneg %p124
      $region50: #{cifar_basic_block_forward.3} parent=47 // pred_check_branch
        %4547 = sbr.rel (%p4545) target = $region52
      $region51: #{cifar_basic_block_forward.3} parent=47 // pred_region
        %s4548 = sadd.s32 %s22, %s23
        %p4549 = scmp.lt.s32.totalorder %s4548, 1
        %s4550 = scalar_select %p4549, %s4548, 1
        %s4551 = smul.addr %s4550, 36
        %s4552 = smul.addr %s4551, 8
        %s4553 = scalar_lea.vmem %s3, %s4552
      $region52: #{cifar_basic_block_forward.3} parent=47 // pred_fallthru
        _
      // Predicated region
      $region53: #{cifar_basic_block_forward.3} parent=47 // pred_check
        %p4554 = pneg %p150
      $region54: #{cifar_basic_block_forward.3} parent=47 // pred_check_branch
        %4556 = sbr.rel (%p4554) target = $region56
      $region55: #{cifar_basic_block_forward.3} parent=47 // pred_region
        %p4557 = scmp.lt.s32.totalorder %s22, 1
        %s4558 = scalar_select %p4557, %s22, 1
        %s4559 = smul.addr %s4558, 2
        %s4560 = scalar_lea.vmem %s4, %s4559
      $region56: #{cifar_basic_block_forward.3} parent=47 // pred_fallthru
        _
    $region48: #{cifar_basic_block_forward.3} parent=5 // pred_fallthru
      _
  $region6: #{cifar_basic_block_forward.3} parent=0 // loop_footer
    %s15 = sadd.s32 1, %s11
  $region7: #{cifar_basic_block_forward.3} parent=0 // loop_footer_branch
    %10 = sbr.rel target = $region3
  $region8: #{cifar_basic_block_forward.3} parent=0 // loop_exit
    _

</llo_original>
